<compile_context>
chip_gen: v7x
topology: tpu7x:2x2x1
jax: 0.10.0
libtpu: 0.0.40
codegen_flags: <defaults>
</compile_context>

<pallas_src>
import jax
import jax.numpy as jnp
import numpy as np
from jax.experimental import pallas as pl
from jax.experimental.pallas import tpu as pltpu


# ----------------------------------------------------------------------------
# Fixed CNNModel geometry (48x48x3 input is implied by fc1 = 16*9*9).
# ----------------------------------------------------------------------------
C0, C1, C2 = 3, 6, 16
K = 5
H0 = W0 = 48
CONV1_W = H0 - K + 1        # 44   conv1 valid output size
POOL1_W = CONV1_W // 2      # 22   after 2x2 pool
CONV2_W = POOL1_W - K + 1   # 18   conv2 valid output size
POOL2_W = CONV2_W // 2      # 9    after 2x2 pool
NFC1, NFC2, NFC3 = 120, 60, 15
LANE = 128


# ----------------------------------------------------------------------------
# Fused forward kernel (one image per grid step)
# ----------------------------------------------------------------------------
def _cnn_kernel(x_ref, c1_ref, c1b_ref, pr1_ref, pc1_ref,
                c2_ref, c2b_ref, pr2_ref, pc2_ref,
                f1_ref, f1b_ref, f2_ref, f2b_ref, f3_ref, f3b_ref, o_ref):
    f32 = jnp.float32

    def band_conv(act, band_ref, n_rows):
        # sum over the K kernel rows: contiguous row slices @ banded weights
        acc = jnp.dot(act[0:n_rows], band_ref[0], preferred_element_type=f32)
        for ki in range(1, K):
            acc = acc + jnp.dot(act[ki:ki + n_rows], band_ref[ki],
                                preferred_element_type=f32)
        return acc

    def pool2x2(act, prow_ref, pcol_ref):
        # exact 0/1 selection matmuls; max of selections == selection of max
        z = jnp.maximum(jnp.dot(prow_ref[0], act, preferred_element_type=f32),
                        jnp.dot(prow_ref[1], act, preferred_element_type=f32))
        return jnp.maximum(jnp.dot(z, pcol_ref[0], preferred_element_type=f32),
                           jnp.dot(z, pcol_ref[1], preferred_element_type=f32))

    x = x_ref[0]                                            # (48, 144) f32

    # conv1 (5x5, 3->6, VALID) + bias + ReLU + 2x2 maxpool
    a = band_conv(x, c1_ref, CONV1_W)                       # (44, 264)
    a = jnp.maximum(a + c1b_ref[...], 0.0)
    a = pool2x2(a, pr1_ref, pc1_ref)                        # (22, 132)

    # conv2 (5x5, 6->16, VALID) + bias + ReLU + 2x2 maxpool
    a = band_conv(a, c2_ref, CONV2_W)                       # (18, 288)
    a = jnp.maximum(a + c2b_ref[...], 0.0)
    a = pool2x2(a, pr2_ref, pc2_ref)                        # (9, 144)

    # fc1: contraction over both dims of the (9, 144) pooled map; PyTorch's
    # (C,H,W) flatten order is folded into f1_ref's packing.
    h = jnp.dot(a[0:1], f1_ref[0], preferred_element_type=f32)
    for hh in range(1, POOL2_W):
        h = h + jnp.dot(a[hh:hh + 1], f1_ref[hh], preferred_element_type=f32)
    h = jnp.maximum(h + f1b_ref[...], 0.0)                  # (1, 128)

    # fc2 + ReLU, fc3
    h = jnp.maximum(jnp.dot(h, f2_ref[...], preferred_element_type=f32)
                    + f2b_ref[...], 0.0)
    y = jnp.dot(h, f3_ref[...], preferred_element_type=f32) + f3b_ref[...]
    o_ref[0] = y.astype(o_ref.dtype)


def cnn_forward(x_nchw, packed):
    """Forward matching CNNModel.forward.  x_nchw:(B,3,48,48) -> (B,15)."""
    B = x_nchw.shape[0]
    assert x_nchw.shape[1:] == (C0, H0, W0), x_nchw.shape
    # NHWC, then interleave (w, c) into the lane dim: lane = w*3 + c.
    x = jnp.transpose(x_nchw, (0, 2, 3, 1)).reshape(B, H0, W0 * C0)

    out = pl.pallas_call(
        _cnn_kernel,
        out_shape=jax.ShapeDtypeStruct((B, 1, LANE), jnp.float32),
        grid=(B,),
        in_specs=[
            pl.BlockSpec((1, H0, W0 * C0), lambda b: (b, 0, 0)),
            pl.BlockSpec(packed["conv1_band"].shape, lambda b: (0, 0, 0)),
            pl.BlockSpec(packed["conv1_bias"].shape, lambda b: (0, 0)),
            pl.BlockSpec(packed["pool1_row"].shape, lambda b: (0, 0, 0)),
            pl.BlockSpec(packed["pool1_col"].shape, lambda b: (0, 0, 0)),
            pl.BlockSpec(packed["conv2_band"].shape, lambda b: (0, 0, 0)),
            pl.BlockSpec(packed["conv2_bias"].shape, lambda b: (0, 0)),
            pl.BlockSpec(packed["pool2_row"].shape, lambda b: (0, 0, 0)),
            pl.BlockSpec(packed["pool2_col"].shape, lambda b: (0, 0, 0)),
            pl.BlockSpec(packed["fc1_w"].shape, lambda b: (0, 0, 0)),
            pl.BlockSpec(packed["fc1_b"].shape, lambda b: (0, 0)),
            pl.BlockSpec(packed["fc2_w"].shape, lambda b: (0, 0)),
            pl.BlockSpec(packed["fc2_b"].shape, lambda b: (0, 0)),
            pl.BlockSpec(packed["fc3_w"].shape, lambda b: (0, 0)),
            pl.BlockSpec(packed["fc3_b"].shape, lambda b: (0, 0)),
        ],
        out_specs=pl.BlockSpec((1, 1, LANE), lambda b: (b, 0, 0)),
        compiler_params=pltpu.CompilerParams(
            dimension_semantics=("arbitrary",)),
    )(x, packed["conv1_band"], packed["conv1_bias"], packed["pool1_row"],
      packed["pool1_col"], packed["conv2_band"], packed["conv2_bias"],
      packed["pool2_row"], packed["pool2_col"], packed["fc1_w"],
      packed["fc1_b"], packed["fc2_w"], packed["fc2_b"], packed["fc3_w"],
      packed["fc3_b"])

    return out.reshape(B, LANE)[:, :NFC3]


# ----------------------------------------------------------------------------
# Host-side parameter packing (structured matrices for the fused kernel)
# ----------------------------------------------------------------------------
def _band_matrix(w, cin, cout, wout):
    """(cout,cin,K,K) conv weight -> (K, (wout+K-1)*cin, wout*cout) banded mats.

    band[ki][(w+kj)*cin + ci, w*cout + co] = w[co, ci, ki, kj]
    so  slice(act, ki) @ band[ki] summed over ki == valid conv along width.
    """
    win = wout + K - 1
    band = np.zeros((K, win * cin, wout * cout), np.float32)
    w_idx = np.arange(wout)
    for ki in range(K):
        for kj in range(K):
            for ci in range(cin):
                for co in range(cout):
                    band[ki, (w_idx + kj) * cin + ci, w_idx * cout + co] = \
                        w[co, ci, ki, kj]
    return band


def _pool_selectors(hout, wout, c):
    """0/1 row / lane selection matrices implementing an exact 2x2 max-pool."""
    hin, win = 2 * hout, 2 * wout
    prow = np.zeros((2, hout, hin), np.float32)
    prow[0, np.arange(hout), 2 * np.arange(hout)] = 1.0
    prow[1, np.arange(hout), 2 * np.arange(hout) + 1] = 1.0
    pcol = np.zeros((2, win * c, wout * c), np.float32)
    ww = np.arange(wout)[:, None]
    cc = np.arange(c)[None, :]
    for par in range(2):
        pcol[par, ((2 * ww + par) * c + cc).ravel(), (ww * c + cc).ravel()] = 1.0
    return prow, pcol


def _pack_params(raw):
    bf16 = jnp.bfloat16
    f32 = jnp.float32

    band1 = _band_matrix(raw["w1"], C0, C1, CONV1_W)        # (5, 144, 264)
    band2 = _band_matrix(raw["w2"], C1, C2, CONV2_W)        # (5, 132, 288)
    pr1, pc1 = _pool_selectors(POOL1_W, POOL1_W, C1)        # (2,22,44)/(2,264,132)
    pr2, pc2 = _pool_selectors(POOL2_W, POOL2_W, C2)        # (2,9,18)/(2,288,144)

    # fc1: fold PyTorch's (C,H,W) flatten into a per-row (hh) weight stack so
    # the (9, 144) pooled activation is contracted with 9 row-dots in-kernel.
    f1 = raw["fc1w"].reshape(NFC1, C2, POOL2_W, POOL2_W)    # [n, co, hh, ww]
    f1 = np.transpose(f1, (2, 3, 1, 0)).reshape(POOL2_W, POOL2_W * C2, NFC1)
    f1 = np.pad(f1, ((0, 0), (0, 0), (0, LANE - NFC1)))     # (9, 144, 128)

    def pad2(a, r, c):
        return np.pad(a, ((0, r - a.shape[0]), (0, c - a.shape[1])))

    return dict(
        conv1_band=jnp.asarray(band1, bf16),
        conv1_bias=jnp.asarray(np.tile(raw["b1"], CONV1_W)[None, :], f32),
        pool1_row=jnp.asarray(pr1, bf16),
        pool1_col=jnp.asarray(pc1, bf16),
        conv2_band=jnp.asarray(band2, bf16),
        conv2_bias=jnp.asarray(np.tile(raw["b2"], CONV2_W)[None, :], f32),
        pool2_row=jnp.asarray(pr2, bf16),
        pool2_col=jnp.asarray(pc2, bf16),
        fc1_w=jnp.asarray(f1, bf16),
        fc1_b=jnp.asarray(np.pad(raw["fc1b"], (0, LANE - NFC1))[None, :], f32),
        fc2_w=jnp.asarray(pad2(raw["fc2w"].T, LANE, LANE), bf16),
        fc2_b=jnp.asarray(np.pad(raw["fc2b"], (0, LANE - NFC2))[None, :], f32),
        fc3_w=jnp.asarray(pad2(raw["fc3w"].T, LANE, LANE), bf16),
        fc3_b=jnp.asarray(np.pad(raw["fc3b"], (0, LANE - NFC3))[None, :], f32),
    )


def init_params(key):
    """Deterministic synthetic params; returns (raw PyTorch-shaped, packed)."""
    ks = jax.random.split(key, 10)

    def rnd(k, shape, scale):
        return jax.random.normal(k, shape, jnp.float32) * scale

    raw = dict(
        w1=rnd(ks[0], (C1, C0, K, K), 0.1),      b1=rnd(ks[1], (C1,), 0.1),
        w2=rnd(ks[2], (C2, C1, K, K), 0.1),      b2=rnd(ks[3], (C2,), 0.1),
        fc1w=rnd(ks[4], (NFC1, C2 * POOL2_W * POOL2_W), 0.03),
        fc1b=rnd(ks[5], (NFC1,), 0.03),
        fc2w=rnd(ks[6], (NFC2, NFC1), 0.1),      fc2b=rnd(ks[7], (NFC2,), 0.1),
        fc3w=rnd(ks[8], (NFC3, NFC2), 0.1),      fc3b=rnd(ks[9], (NFC3,), 0.1),
    )
    raw_np = {k: np.asarray(v) for k, v in raw.items()}
    return raw, _pack_params(raw_np)


# ----------------------------------------------------------------------------
# Pure-XLA reference with PyTorch semantics (for self-check)
# ----------------------------------------------------------------------------
def _ref_forward(x_nchw, raw):
    hi = jax.lax.Precision.HIGHEST

    def conv(x, w, b):
        y = jax.lax.conv_general_dilated(
            x, w, (1, 1), "VALID",
            dimension_numbers=("NCHW", "OIHW", "NCHW"), precision=hi)
        return y + b[None, :, None, None]

    def pool(x):
        return jax.lax.reduce_window(x, -jnp.inf, jax.lax.max,
                                     (1, 1, 2, 2), (1, 1, 2, 2), "VALID")

    h = pool(jax.nn.relu(conv(x_nchw, raw["w1"], raw["b1"])))
    h = pool(jax.nn.relu(conv(h, raw["w2"], raw["b2"])))
    h = h.reshape(h.shape[0], -1)
    h = jax.nn.relu(jnp.dot(h, raw["fc1w"].T, precision=hi) + raw["fc1b"])
    h = jax.nn.relu(jnp.dot(h, raw["fc2w"].T, precision=hi) + raw["fc2b"])
    return jnp.dot(h, raw["fc3w"].T, precision=hi) + raw["fc3b"]


# ----------------------------------------------------------------------------
if __name__ == "__main__":
    key = jax.random.PRNGKey(0)
    k_x, k_p = jax.random.split(key)

    B = 2
    x = jax.random.normal(k_x, (B, C0, H0, W0), jnp.float32)   # NCHW, as PyTorch
    raw, params = init_params(k_p)

    fwd = jax.jit(cnn_forward)
    out = jax.block_until_ready(fwd(x, params))

    assert out.shape == (B, NFC3), out.shape
    assert out.dtype == jnp.float32

    # Self-check against a pure-XLA f32 reference of the PyTorch forward pass.
    ref = jax.block_until_ready(_ref_forward(x, raw))
    max_err = float(jnp.max(jnp.abs(out - ref)))
    assert jnp.allclose(out, ref, rtol=2e-2, atol=2e-2), max_err

    print("KERNEL_OK")
</pallas_src>

<mosaic_0001>
module attributes {stable_mosaic.version = 11 : i64} {
  func.func @_cnn_kernel(%arg0: i32, %arg1: memref<1x48x144xf32, #tpu.memory_space<vmem>>, %arg2: memref<5x144x264xbf16, #tpu.memory_space<vmem>>, %arg3: memref<1x264xf32, #tpu.memory_space<vmem>>, %arg4: memref<2x22x44xbf16, #tpu.memory_space<vmem>>, %arg5: memref<2x264x132xbf16, #tpu.memory_space<vmem>>, %arg6: memref<5x132x288xbf16, #tpu.memory_space<vmem>>, %arg7: memref<1x288xf32, #tpu.memory_space<vmem>>, %arg8: memref<2x9x18xbf16, #tpu.memory_space<vmem>>, %arg9: memref<2x288x144xbf16, #tpu.memory_space<vmem>>, %arg10: memref<9x144x128xbf16, #tpu.memory_space<vmem>>, %arg11: memref<1x128xf32, #tpu.memory_space<vmem>>, %arg12: memref<128x128xbf16, #tpu.memory_space<vmem>>, %arg13: memref<1x128xf32, #tpu.memory_space<vmem>>, %arg14: memref<128x128xbf16, #tpu.memory_space<vmem>>, %arg15: memref<1x128xf32, #tpu.memory_space<vmem>>, %arg16: memref<1x1x128xf32, #tpu.memory_space<vmem>>) attributes {dimension_semantics = [#tpu.dimension_semantics<arbitrary>], iteration_bounds = array<i64: 2>, scalar_prefetch = 0 : i64, scratch_operands = 0 : i64, tpu.core_type = #tpu.core_type<tc>, window_params = [{transform_indices = @transform_0, window_bounds = array<i64: 1, 48, 144>}, {pipeline_mode = #tpu.pipeline_mode<synchronous>, transform_indices = @transform_1, window_bounds = array<i64: 5, 144, 264>}, {pipeline_mode = #tpu.pipeline_mode<synchronous>, transform_indices = @transform_2, window_bounds = array<i64: 1, 264>}, {pipeline_mode = #tpu.pipeline_mode<synchronous>, transform_indices = @transform_3, window_bounds = array<i64: 2, 22, 44>}, {pipeline_mode = #tpu.pipeline_mode<synchronous>, transform_indices = @transform_4, window_bounds = array<i64: 2, 264, 132>}, {pipeline_mode = #tpu.pipeline_mode<synchronous>, transform_indices = @transform_5, window_bounds = array<i64: 5, 132, 288>}, {pipeline_mode = #tpu.pipeline_mode<synchronous>, transform_indices = @transform_6, window_bounds = array<i64: 1, 288>}, {pipeline_mode = #tpu.pipeline_mode<synchronous>, transform_indices = @transform_7, window_bounds = array<i64: 2, 9, 18>}, {pipeline_mode = #tpu.pipeline_mode<synchronous>, transform_indices = @transform_8, window_bounds = array<i64: 2, 288, 144>}, {pipeline_mode = #tpu.pipeline_mode<synchronous>, transform_indices = @transform_9, window_bounds = array<i64: 9, 144, 128>}, {pipeline_mode = #tpu.pipeline_mode<synchronous>, transform_indices = @transform_10, window_bounds = array<i64: 1, 128>}, {pipeline_mode = #tpu.pipeline_mode<synchronous>, transform_indices = @transform_11, window_bounds = array<i64: 128, 128>}, {pipeline_mode = #tpu.pipeline_mode<synchronous>, transform_indices = @transform_12, window_bounds = array<i64: 1, 128>}, {pipeline_mode = #tpu.pipeline_mode<synchronous>, transform_indices = @transform_13, window_bounds = array<i64: 128, 128>}, {pipeline_mode = #tpu.pipeline_mode<synchronous>, transform_indices = @transform_14, window_bounds = array<i64: 1, 128>}, {transform_indices = @transform_15, window_bounds = array<i64: 1, 1, 128>}]} {
    %c0 = arith.constant 0 : index
    %c0_0 = arith.constant 0 : index
    %c0_1 = arith.constant 0 : index
    %0 = vector.load %arg1[%c0, %c0_0, %c0_1] : memref<1x48x144xf32, #tpu.memory_space<vmem>>, vector<1x48x144xf32>
    %1 = vector.shape_cast %0 : vector<1x48x144xf32> to vector<48x144xf32>
    %2 = vector.extract_strided_slice %1 {offsets = [0, 0], sizes = [44, 144], strides = [1, 1]} : vector<48x144xf32> to vector<44x144xf32>
    %c0_2 = arith.constant 0 : index
    %c0_3 = arith.constant 0 : index
    %c0_4 = arith.constant 0 : index
    %3 = vector.load %arg2[%c0_2, %c0_3, %c0_4] : memref<5x144x264xbf16, #tpu.memory_space<vmem>>, vector<1x144x264xbf16>
    %4 = vector.shape_cast %3 : vector<1x144x264xbf16> to vector<144x264xbf16>
    %cst = arith.constant dense<0.000000e+00> : vector<44x264xf32>
    %5 = tpu.matmul %2, %4, %cst {dimension_numbers = #tpu.dot_dimension_numbers<[1], [0], [0], [1], [0, 0, 1, 1], [], []>} : vector<44x144xf32>, vector<144x264xbf16>, vector<44x264xf32> -> vector<44x264xf32>
    %6 = vector.extract_strided_slice %1 {offsets = [1, 0], sizes = [44, 144], strides = [1, 1]} : vector<48x144xf32> to vector<44x144xf32>
    %c1 = arith.constant 1 : index
    %c0_5 = arith.constant 0 : index
    %c0_6 = arith.constant 0 : index
    %7 = vector.load %arg2[%c1, %c0_5, %c0_6] : memref<5x144x264xbf16, #tpu.memory_space<vmem>>, vector<1x144x264xbf16>
    %8 = vector.shape_cast %7 : vector<1x144x264xbf16> to vector<144x264xbf16>
    %cst_7 = arith.constant dense<0.000000e+00> : vector<44x264xf32>
    %9 = tpu.matmul %6, %8, %cst_7 {dimension_numbers = #tpu.dot_dimension_numbers<[1], [0], [0], [1], [0, 0, 1, 1], [], []>} : vector<44x144xf32>, vector<144x264xbf16>, vector<44x264xf32> -> vector<44x264xf32>
    %10 = arith.addf %5, %9 : vector<44x264xf32>
    %11 = vector.extract_strided_slice %1 {offsets = [2, 0], sizes = [44, 144], strides = [1, 1]} : vector<48x144xf32> to vector<44x144xf32>
    %c2 = arith.constant 2 : index
    %c0_8 = arith.constant 0 : index
    %c0_9 = arith.constant 0 : index
    %12 = vector.load %arg2[%c2, %c0_8, %c0_9] : memref<5x144x264xbf16, #tpu.memory_space<vmem>>, vector<1x144x264xbf16>
    %13 = vector.shape_cast %12 : vector<1x144x264xbf16> to vector<144x264xbf16>
    %cst_10 = arith.constant dense<0.000000e+00> : vector<44x264xf32>
    %14 = tpu.matmul %11, %13, %cst_10 {dimension_numbers = #tpu.dot_dimension_numbers<[1], [0], [0], [1], [0, 0, 1, 1], [], []>} : vector<44x144xf32>, vector<144x264xbf16>, vector<44x264xf32> -> vector<44x264xf32>
    %15 = arith.addf %10, %14 : vector<44x264xf32>
    %16 = vector.extract_strided_slice %1 {offsets = [3, 0], sizes = [44, 144], strides = [1, 1]} : vector<48x144xf32> to vector<44x144xf32>
    %c3 = arith.constant 3 : index
    %c0_11 = arith.constant 0 : index
    %c0_12 = arith.constant 0 : index
    %17 = vector.load %arg2[%c3, %c0_11, %c0_12] : memref<5x144x264xbf16, #tpu.memory_space<vmem>>, vector<1x144x264xbf16>
    %18 = vector.shape_cast %17 : vector<1x144x264xbf16> to vector<144x264xbf16>
    %cst_13 = arith.constant dense<0.000000e+00> : vector<44x264xf32>
    %19 = tpu.matmul %16, %18, %cst_13 {dimension_numbers = #tpu.dot_dimension_numbers<[1], [0], [0], [1], [0, 0, 1, 1], [], []>} : vector<44x144xf32>, vector<144x264xbf16>, vector<44x264xf32> -> vector<44x264xf32>
    %20 = arith.addf %15, %19 : vector<44x264xf32>
    %21 = vector.extract_strided_slice %1 {offsets = [4, 0], sizes = [44, 144], strides = [1, 1]} : vector<48x144xf32> to vector<44x144xf32>
    %c4 = arith.constant 4 : index
    %c0_14 = arith.constant 0 : index
    %c0_15 = arith.constant 0 : index
    %22 = vector.load %arg2[%c4, %c0_14, %c0_15] : memref<5x144x264xbf16, #tpu.memory_space<vmem>>, vector<1x144x264xbf16>
    %23 = vector.shape_cast %22 : vector<1x144x264xbf16> to vector<144x264xbf16>
    %cst_16 = arith.constant dense<0.000000e+00> : vector<44x264xf32>
    %24 = tpu.matmul %21, %23, %cst_16 {dimension_numbers = #tpu.dot_dimension_numbers<[1], [0], [0], [1], [0, 0, 1, 1], [], []>} : vector<44x144xf32>, vector<144x264xbf16>, vector<44x264xf32> -> vector<44x264xf32>
    %25 = arith.addf %20, %24 : vector<44x264xf32>
    %c0_17 = arith.constant 0 : index
    %c0_18 = arith.constant 0 : index
    %26 = vector.load %arg3[%c0_17, %c0_18] : memref<1x264xf32, #tpu.memory_space<vmem>>, vector<1x264xf32>
    %27 = vector.broadcast %26 : vector<1x264xf32> to vector<44x264xf32>
    %28 = arith.addf %25, %27 : vector<44x264xf32>
    %cst_19 = arith.constant 0.000000e+00 : f32
    %29 = vector.broadcast %cst_19 : f32 to vector<44x264xf32>
    %30 = arith.maximumf %28, %29 : vector<44x264xf32>
    %c0_20 = arith.constant 0 : index
    %c0_21 = arith.constant 0 : index
    %c0_22 = arith.constant 0 : index
    %31 = vector.load %arg4[%c0_20, %c0_21, %c0_22] : memref<2x22x44xbf16, #tpu.memory_space<vmem>>, vector<1x22x44xbf16>
    %32 = vector.shape_cast %31 : vector<1x22x44xbf16> to vector<22x44xbf16>
    %cst_23 = arith.constant dense<0.000000e+00> : vector<22x264xf32>
    %33 = tpu.matmul %32, %30, %cst_23 {dimension_numbers = #tpu.dot_dimension_numbers<[1], [0], [0], [1], [0, 0, 1, 1], [], []>} : vector<22x44xbf16>, vector<44x264xf32>, vector<22x264xf32> -> vector<22x264xf32>
    %c1_24 = arith.constant 1 : index
    %c0_25 = arith.constant 0 : index
    %c0_26 = arith.constant 0 : index
    %34 = vector.load %arg4[%c1_24, %c0_25, %c0_26] : memref<2x22x44xbf16, #tpu.memory_space<vmem>>, vector<1x22x44xbf16>
    %35 = vector.shape_cast %34 : vector<1x22x44xbf16> to vector<22x44xbf16>
    %cst_27 = arith.constant dense<0.000000e+00> : vector<22x264xf32>
    %36 = tpu.matmul %35, %30, %cst_27 {dimension_numbers = #tpu.dot_dimension_numbers<[1], [0], [0], [1], [0, 0, 1, 1], [], []>} : vector<22x44xbf16>, vector<44x264xf32>, vector<22x264xf32> -> vector<22x264xf32>
    %37 = arith.maximumf %33, %36 : vector<22x264xf32>
    %c0_28 = arith.constant 0 : index
    %c0_29 = arith.constant 0 : index
    %c0_30 = arith.constant 0 : index
    %38 = vector.load %arg5[%c0_28, %c0_29, %c0_30] : memref<2x264x132xbf16, #tpu.memory_space<vmem>>, vector<1x264x132xbf16>
    %39 = vector.shape_cast %38 : vector<1x264x132xbf16> to vector<264x132xbf16>
    %cst_31 = arith.constant dense<0.000000e+00> : vector<22x132xf32>
    %40 = tpu.matmul %37, %39, %cst_31 {dimension_numbers = #tpu.dot_dimension_numbers<[1], [0], [0], [1], [0, 0, 1, 1], [], []>} : vector<22x264xf32>, vector<264x132xbf16>, vector<22x132xf32> -> vector<22x132xf32>
    %c1_32 = arith.constant 1 : index
    %c0_33 = arith.constant 0 : index
    %c0_34 = arith.constant 0 : index
    %41 = vector.load %arg5[%c1_32, %c0_33, %c0_34] : memref<2x264x132xbf16, #tpu.memory_space<vmem>>, vector<1x264x132xbf16>
    %42 = vector.shape_cast %41 : vector<1x264x132xbf16> to vector<264x132xbf16>
    %cst_35 = arith.constant dense<0.000000e+00> : vector<22x132xf32>
    %43 = tpu.matmul %37, %42, %cst_35 {dimension_numbers = #tpu.dot_dimension_numbers<[1], [0], [0], [1], [0, 0, 1, 1], [], []>} : vector<22x264xf32>, vector<264x132xbf16>, vector<22x132xf32> -> vector<22x132xf32>
    %44 = arith.maximumf %40, %43 : vector<22x132xf32>
    %45 = vector.extract_strided_slice %44 {offsets = [0, 0], sizes = [18, 132], strides = [1, 1]} : vector<22x132xf32> to vector<18x132xf32>
    %c0_36 = arith.constant 0 : index
    %c0_37 = arith.constant 0 : index
    %c0_38 = arith.constant 0 : index
    %46 = vector.load %arg6[%c0_36, %c0_37, %c0_38] : memref<5x132x288xbf16, #tpu.memory_space<vmem>>, vector<1x132x288xbf16>
    %47 = vector.shape_cast %46 : vector<1x132x288xbf16> to vector<132x288xbf16>
    %cst_39 = arith.constant dense<0.000000e+00> : vector<18x288xf32>
    %48 = tpu.matmul %45, %47, %cst_39 {dimension_numbers = #tpu.dot_dimension_numbers<[1], [0], [0], [1], [0, 0, 1, 1], [], []>} : vector<18x132xf32>, vector<132x288xbf16>, vector<18x288xf32> -> vector<18x288xf32>
    %49 = vector.extract_strided_slice %44 {offsets = [1, 0], sizes = [18, 132], strides = [1, 1]} : vector<22x132xf32> to vector<18x132xf32>
    %c1_40 = arith.constant 1 : index
    %c0_41 = arith.constant 0 : index
    %c0_42 = arith.constant 0 : index
    %50 = vector.load %arg6[%c1_40, %c0_41, %c0_42] : memref<5x132x288xbf16, #tpu.memory_space<vmem>>, vector<1x132x288xbf16>
    %51 = vector.shape_cast %50 : vector<1x132x288xbf16> to vector<132x288xbf16>
    %cst_43 = arith.constant dense<0.000000e+00> : vector<18x288xf32>
    %52 = tpu.matmul %49, %51, %cst_43 {dimension_numbers = #tpu.dot_dimension_numbers<[1], [0], [0], [1], [0, 0, 1, 1], [], []>} : vector<18x132xf32>, vector<132x288xbf16>, vector<18x288xf32> -> vector<18x288xf32>
    %53 = arith.addf %48, %52 : vector<18x288xf32>
    %54 = vector.extract_strided_slice %44 {offsets = [2, 0], sizes = [18, 132], strides = [1, 1]} : vector<22x132xf32> to vector<18x132xf32>
    %c2_44 = arith.constant 2 : index
    %c0_45 = arith.constant 0 : index
    %c0_46 = arith.constant 0 : index
    %55 = vector.load %arg6[%c2_44, %c0_45, %c0_46] : memref<5x132x288xbf16, #tpu.memory_space<vmem>>, vector<1x132x288xbf16>
    %56 = vector.shape_cast %55 : vector<1x132x288xbf16> to vector<132x288xbf16>
    %cst_47 = arith.constant dense<0.000000e+00> : vector<18x288xf32>
    %57 = tpu.matmul %54, %56, %cst_47 {dimension_numbers = #tpu.dot_dimension_numbers<[1], [0], [0], [1], [0, 0, 1, 1], [], []>} : vector<18x132xf32>, vector<132x288xbf16>, vector<18x288xf32> -> vector<18x288xf32>
    %58 = arith.addf %53, %57 : vector<18x288xf32>
    %59 = vector.extract_strided_slice %44 {offsets = [3, 0], sizes = [18, 132], strides = [1, 1]} : vector<22x132xf32> to vector<18x132xf32>
    %c3_48 = arith.constant 3 : index
    %c0_49 = arith.constant 0 : index
    %c0_50 = arith.constant 0 : index
    %60 = vector.load %arg6[%c3_48, %c0_49, %c0_50] : memref<5x132x288xbf16, #tpu.memory_space<vmem>>, vector<1x132x288xbf16>
    %61 = vector.shape_cast %60 : vector<1x132x288xbf16> to vector<132x288xbf16>
    %cst_51 = arith.constant dense<0.000000e+00> : vector<18x288xf32>
    %62 = tpu.matmul %59, %61, %cst_51 {dimension_numbers = #tpu.dot_dimension_numbers<[1], [0], [0], [1], [0, 0, 1, 1], [], []>} : vector<18x132xf32>, vector<132x288xbf16>, vector<18x288xf32> -> vector<18x288xf32>
    %63 = arith.addf %58, %62 : vector<18x288xf32>
    %64 = vector.extract_strided_slice %44 {offsets = [4, 0], sizes = [18, 132], strides = [1, 1]} : vector<22x132xf32> to vector<18x132xf32>
    %c4_52 = arith.constant 4 : index
    %c0_53 = arith.constant 0 : index
    %c0_54 = arith.constant 0 : index
    %65 = vector.load %arg6[%c4_52, %c0_53, %c0_54] : memref<5x132x288xbf16, #tpu.memory_space<vmem>>, vector<1x132x288xbf16>
    %66 = vector.shape_cast %65 : vector<1x132x288xbf16> to vector<132x288xbf16>
    %cst_55 = arith.constant dense<0.000000e+00> : vector<18x288xf32>
    %67 = tpu.matmul %64, %66, %cst_55 {dimension_numbers = #tpu.dot_dimension_numbers<[1], [0], [0], [1], [0, 0, 1, 1], [], []>} : vector<18x132xf32>, vector<132x288xbf16>, vector<18x288xf32> -> vector<18x288xf32>
    %68 = arith.addf %63, %67 : vector<18x288xf32>
    %c0_56 = arith.constant 0 : index
    %c0_57 = arith.constant 0 : index
    %69 = vector.load %arg7[%c0_56, %c0_57] : memref<1x288xf32, #tpu.memory_space<vmem>>, vector<1x288xf32>
    %70 = vector.broadcast %69 : vector<1x288xf32> to vector<18x288xf32>
    %71 = arith.addf %68, %70 : vector<18x288xf32>
    %cst_58 = arith.constant 0.000000e+00 : f32
    %72 = vector.broadcast %cst_58 : f32 to vector<18x288xf32>
    %73 = arith.maximumf %71, %72 : vector<18x288xf32>
    %c0_59 = arith.constant 0 : index
    %c0_60 = arith.constant 0 : index
    %c0_61 = arith.constant 0 : index
    %74 = vector.load %arg8[%c0_59, %c0_60, %c0_61] : memref<2x9x18xbf16, #tpu.memory_space<vmem>>, vector<1x9x18xbf16>
    %75 = vector.shape_cast %74 : vector<1x9x18xbf16> to vector<9x18xbf16>
    %cst_62 = arith.constant dense<0.000000e+00> : vector<9x288xf32>
    %76 = tpu.matmul %75, %73, %cst_62 {dimension_numbers = #tpu.dot_dimension_numbers<[1], [0], [0], [1], [0, 0, 1, 1], [], []>} : vector<9x18xbf16>, vector<18x288xf32>, vector<9x288xf32> -> vector<9x288xf32>
    %c1_63 = arith.constant 1 : index
    %c0_64 = arith.constant 0 : index
    %c0_65 = arith.constant 0 : index
    %77 = vector.load %arg8[%c1_63, %c0_64, %c0_65] : memref<2x9x18xbf16, #tpu.memory_space<vmem>>, vector<1x9x18xbf16>
    %78 = vector.shape_cast %77 : vector<1x9x18xbf16> to vector<9x18xbf16>
    %cst_66 = arith.constant dense<0.000000e+00> : vector<9x288xf32>
    %79 = tpu.matmul %78, %73, %cst_66 {dimension_numbers = #tpu.dot_dimension_numbers<[1], [0], [0], [1], [0, 0, 1, 1], [], []>} : vector<9x18xbf16>, vector<18x288xf32>, vector<9x288xf32> -> vector<9x288xf32>
    %80 = arith.maximumf %76, %79 : vector<9x288xf32>
    %c0_67 = arith.constant 0 : index
    %c0_68 = arith.constant 0 : index
    %c0_69 = arith.constant 0 : index
    %81 = vector.load %arg9[%c0_67, %c0_68, %c0_69] : memref<2x288x144xbf16, #tpu.memory_space<vmem>>, vector<1x288x144xbf16>
    %82 = vector.shape_cast %81 : vector<1x288x144xbf16> to vector<288x144xbf16>
    %cst_70 = arith.constant dense<0.000000e+00> : vector<9x144xf32>
    %83 = tpu.matmul %80, %82, %cst_70 {dimension_numbers = #tpu.dot_dimension_numbers<[1], [0], [0], [1], [0, 0, 1, 1], [], []>} : vector<9x288xf32>, vector<288x144xbf16>, vector<9x144xf32> -> vector<9x144xf32>
    %c1_71 = arith.constant 1 : index
    %c0_72 = arith.constant 0 : index
    %c0_73 = arith.constant 0 : index
    %84 = vector.load %arg9[%c1_71, %c0_72, %c0_73] : memref<2x288x144xbf16, #tpu.memory_space<vmem>>, vector<1x288x144xbf16>
    %85 = vector.shape_cast %84 : vector<1x288x144xbf16> to vector<288x144xbf16>
    %cst_74 = arith.constant dense<0.000000e+00> : vector<9x144xf32>
    %86 = tpu.matmul %80, %85, %cst_74 {dimension_numbers = #tpu.dot_dimension_numbers<[1], [0], [0], [1], [0, 0, 1, 1], [], []>} : vector<9x288xf32>, vector<288x144xbf16>, vector<9x144xf32> -> vector<9x144xf32>
    %87 = arith.maximumf %83, %86 : vector<9x144xf32>
    %88 = vector.extract_strided_slice %87 {offsets = [0, 0], sizes = [1, 144], strides = [1, 1]} : vector<9x144xf32> to vector<1x144xf32>
    %c0_75 = arith.constant 0 : index
    %c0_76 = arith.constant 0 : index
    %c0_77 = arith.constant 0 : index
    %89 = vector.load %arg10[%c0_75, %c0_76, %c0_77] : memref<9x144x128xbf16, #tpu.memory_space<vmem>>, vector<1x144x128xbf16>
    %90 = vector.shape_cast %89 : vector<1x144x128xbf16> to vector<144x128xbf16>
    %cst_78 = arith.constant dense<0.000000e+00> : vector<1x128xf32>
    %91 = tpu.matmul %88, %90, %cst_78 {dimension_numbers = #tpu.dot_dimension_numbers<[1], [0], [0], [1], [0, 0, 1, 1], [], []>} : vector<1x144xf32>, vector<144x128xbf16>, vector<1x128xf32> -> vector<1x128xf32>
    %92 = vector.extract_strided_slice %87 {offsets = [1, 0], sizes = [1, 144], strides = [1, 1]} : vector<9x144xf32> to vector<1x144xf32>
    %c1_79 = arith.constant 1 : index
    %c0_80 = arith.constant 0 : index
    %c0_81 = arith.constant 0 : index
    %93 = vector.load %arg10[%c1_79, %c0_80, %c0_81] : memref<9x144x128xbf16, #tpu.memory_space<vmem>>, vector<1x144x128xbf16>
    %94 = vector.shape_cast %93 : vector<1x144x128xbf16> to vector<144x128xbf16>
    %cst_82 = arith.constant dense<0.000000e+00> : vector<1x128xf32>
    %95 = tpu.matmul %92, %94, %cst_82 {dimension_numbers = #tpu.dot_dimension_numbers<[1], [0], [0], [1], [0, 0, 1, 1], [], []>} : vector<1x144xf32>, vector<144x128xbf16>, vector<1x128xf32> -> vector<1x128xf32>
    %96 = arith.addf %91, %95 : vector<1x128xf32>
    %97 = vector.extract_strided_slice %87 {offsets = [2, 0], sizes = [1, 144], strides = [1, 1]} : vector<9x144xf32> to vector<1x144xf32>
    %c2_83 = arith.constant 2 : index
    %c0_84 = arith.constant 0 : index
    %c0_85 = arith.constant 0 : index
    %98 = vector.load %arg10[%c2_83, %c0_84, %c0_85] : memref<9x144x128xbf16, #tpu.memory_space<vmem>>, vector<1x144x128xbf16>
    %99 = vector.shape_cast %98 : vector<1x144x128xbf16> to vector<144x128xbf16>
    %cst_86 = arith.constant dense<0.000000e+00> : vector<1x128xf32>
    %100 = tpu.matmul %97, %99, %cst_86 {dimension_numbers = #tpu.dot_dimension_numbers<[1], [0], [0], [1], [0, 0, 1, 1], [], []>} : vector<1x144xf32>, vector<144x128xbf16>, vector<1x128xf32> -> vector<1x128xf32>
    %101 = arith.addf %96, %100 : vector<1x128xf32>
    %102 = vector.extract_strided_slice %87 {offsets = [3, 0], sizes = [1, 144], strides = [1, 1]} : vector<9x144xf32> to vector<1x144xf32>
    %c3_87 = arith.constant 3 : index
    %c0_88 = arith.constant 0 : index
    %c0_89 = arith.constant 0 : index
    %103 = vector.load %arg10[%c3_87, %c0_88, %c0_89] : memref<9x144x128xbf16, #tpu.memory_space<vmem>>, vector<1x144x128xbf16>
    %104 = vector.shape_cast %103 : vector<1x144x128xbf16> to vector<144x128xbf16>
    %cst_90 = arith.constant dense<0.000000e+00> : vector<1x128xf32>
    %105 = tpu.matmul %102, %104, %cst_90 {dimension_numbers = #tpu.dot_dimension_numbers<[1], [0], [0], [1], [0, 0, 1, 1], [], []>} : vector<1x144xf32>, vector<144x128xbf16>, vector<1x128xf32> -> vector<1x128xf32>
    %106 = arith.addf %101, %105 : vector<1x128xf32>
    %107 = vector.extract_strided_slice %87 {offsets = [4, 0], sizes = [1, 144], strides = [1, 1]} : vector<9x144xf32> to vector<1x144xf32>
    %c4_91 = arith.constant 4 : index
    %c0_92 = arith.constant 0 : index
    %c0_93 = arith.constant 0 : index
    %108 = vector.load %arg10[%c4_91, %c0_92, %c0_93] : memref<9x144x128xbf16, #tpu.memory_space<vmem>>, vector<1x144x128xbf16>
    %109 = vector.shape_cast %108 : vector<1x144x128xbf16> to vector<144x128xbf16>
    %cst_94 = arith.constant dense<0.000000e+00> : vector<1x128xf32>
    %110 = tpu.matmul %107, %109, %cst_94 {dimension_numbers = #tpu.dot_dimension_numbers<[1], [0], [0], [1], [0, 0, 1, 1], [], []>} : vector<1x144xf32>, vector<144x128xbf16>, vector<1x128xf32> -> vector<1x128xf32>
    %111 = arith.addf %106, %110 : vector<1x128xf32>
    %112 = vector.extract_strided_slice %87 {offsets = [5, 0], sizes = [1, 144], strides = [1, 1]} : vector<9x144xf32> to vector<1x144xf32>
    %c5 = arith.constant 5 : index
    %c0_95 = arith.constant 0 : index
    %c0_96 = arith.constant 0 : index
    %113 = vector.load %arg10[%c5, %c0_95, %c0_96] : memref<9x144x128xbf16, #tpu.memory_space<vmem>>, vector<1x144x128xbf16>
    %114 = vector.shape_cast %113 : vector<1x144x128xbf16> to vector<144x128xbf16>
    %cst_97 = arith.constant dense<0.000000e+00> : vector<1x128xf32>
    %115 = tpu.matmul %112, %114, %cst_97 {dimension_numbers = #tpu.dot_dimension_numbers<[1], [0], [0], [1], [0, 0, 1, 1], [], []>} : vector<1x144xf32>, vector<144x128xbf16>, vector<1x128xf32> -> vector<1x128xf32>
    %116 = arith.addf %111, %115 : vector<1x128xf32>
    %117 = vector.extract_strided_slice %87 {offsets = [6, 0], sizes = [1, 144], strides = [1, 1]} : vector<9x144xf32> to vector<1x144xf32>
    %c6 = arith.constant 6 : index
    %c0_98 = arith.constant 0 : index
    %c0_99 = arith.constant 0 : index
    %118 = vector.load %arg10[%c6, %c0_98, %c0_99] : memref<9x144x128xbf16, #tpu.memory_space<vmem>>, vector<1x144x128xbf16>
    %119 = vector.shape_cast %118 : vector<1x144x128xbf16> to vector<144x128xbf16>
    %cst_100 = arith.constant dense<0.000000e+00> : vector<1x128xf32>
    %120 = tpu.matmul %117, %119, %cst_100 {dimension_numbers = #tpu.dot_dimension_numbers<[1], [0], [0], [1], [0, 0, 1, 1], [], []>} : vector<1x144xf32>, vector<144x128xbf16>, vector<1x128xf32> -> vector<1x128xf32>
    %121 = arith.addf %116, %120 : vector<1x128xf32>
    %122 = vector.extract_strided_slice %87 {offsets = [7, 0], sizes = [1, 144], strides = [1, 1]} : vector<9x144xf32> to vector<1x144xf32>
    %c7 = arith.constant 7 : index
    %c0_101 = arith.constant 0 : index
    %c0_102 = arith.constant 0 : index
    %123 = vector.load %arg10[%c7, %c0_101, %c0_102] : memref<9x144x128xbf16, #tpu.memory_space<vmem>>, vector<1x144x128xbf16>
    %124 = vector.shape_cast %123 : vector<1x144x128xbf16> to vector<144x128xbf16>
    %cst_103 = arith.constant dense<0.000000e+00> : vector<1x128xf32>
    %125 = tpu.matmul %122, %124, %cst_103 {dimension_numbers = #tpu.dot_dimension_numbers<[1], [0], [0], [1], [0, 0, 1, 1], [], []>} : vector<1x144xf32>, vector<144x128xbf16>, vector<1x128xf32> -> vector<1x128xf32>
    %126 = arith.addf %121, %125 : vector<1x128xf32>
    %127 = vector.extract_strided_slice %87 {offsets = [8, 0], sizes = [1, 144], strides = [1, 1]} : vector<9x144xf32> to vector<1x144xf32>
    %c8 = arith.constant 8 : index
    %c0_104 = arith.constant 0 : index
    %c0_105 = arith.constant 0 : index
    %128 = vector.load %arg10[%c8, %c0_104, %c0_105] : memref<9x144x128xbf16, #tpu.memory_space<vmem>>, vector<1x144x128xbf16>
    %129 = vector.shape_cast %128 : vector<1x144x128xbf16> to vector<144x128xbf16>
    %cst_106 = arith.constant dense<0.000000e+00> : vector<1x128xf32>
    %130 = tpu.matmul %127, %129, %cst_106 {dimension_numbers = #tpu.dot_dimension_numbers<[1], [0], [0], [1], [0, 0, 1, 1], [], []>} : vector<1x144xf32>, vector<144x128xbf16>, vector<1x128xf32> -> vector<1x128xf32>
    %131 = arith.addf %126, %130 : vector<1x128xf32>
    %c0_107 = arith.constant 0 : index
    %c0_108 = arith.constant 0 : index
    %132 = vector.load %arg11[%c0_107, %c0_108] : memref<1x128xf32, #tpu.memory_space<vmem>>, vector<1x128xf32>
    %133 = arith.addf %131, %132 : vector<1x128xf32>
    %cst_109 = arith.constant 0.000000e+00 : f32
    %134 = vector.broadcast %cst_109 : f32 to vector<1x128xf32>
    %135 = arith.maximumf %133, %134 : vector<1x128xf32>
    %c0_110 = arith.constant 0 : index
    %c0_111 = arith.constant 0 : index
    %136 = vector.load %arg12[%c0_110, %c0_111] : memref<128x128xbf16, #tpu.memory_space<vmem>>, vector<128x128xbf16>
    %cst_112 = arith.constant dense<0.000000e+00> : vector<1x128xf32>
    %137 = tpu.matmul %135, %136, %cst_112 {dimension_numbers = #tpu.dot_dimension_numbers<[1], [0], [0], [1], [0, 0, 1, 1], [], []>} : vector<1x128xf32>, vector<128x128xbf16>, vector<1x128xf32> -> vector<1x128xf32>
    %c0_113 = arith.constant 0 : index
    %c0_114 = arith.constant 0 : index
    %138 = vector.load %arg13[%c0_113, %c0_114] : memref<1x128xf32, #tpu.memory_space<vmem>>, vector<1x128xf32>
    %139 = arith.addf %137, %138 : vector<1x128xf32>
    %cst_115 = arith.constant 0.000000e+00 : f32
    %140 = vector.broadcast %cst_115 : f32 to vector<1x128xf32>
    %141 = arith.maximumf %139, %140 : vector<1x128xf32>
    %c0_116 = arith.constant 0 : index
    %c0_117 = arith.constant 0 : index
    %142 = vector.load %arg14[%c0_116, %c0_117] : memref<128x128xbf16, #tpu.memory_space<vmem>>, vector<128x128xbf16>
    %cst_118 = arith.constant dense<0.000000e+00> : vector<1x128xf32>
    %143 = tpu.matmul %141, %142, %cst_118 {dimension_numbers = #tpu.dot_dimension_numbers<[1], [0], [0], [1], [0, 0, 1, 1], [], []>} : vector<1x128xf32>, vector<128x128xbf16>, vector<1x128xf32> -> vector<1x128xf32>
    %c0_119 = arith.constant 0 : index
    %c0_120 = arith.constant 0 : index
    %144 = vector.load %arg15[%c0_119, %c0_120] : memref<1x128xf32, #tpu.memory_space<vmem>>, vector<1x128xf32>
    %145 = arith.addf %143, %144 : vector<1x128xf32>
    %c0_121 = arith.constant 0 : index
    %c0_122 = arith.constant 0 : index
    %c0_123 = arith.constant 0 : index
    %146 = vector.load %arg16[%c0_121, %c0_122, %c0_123] : memref<1x1x128xf32, #tpu.memory_space<vmem>>, vector<1x1x128xf32>
    %147 = vector.shape_cast %146 : vector<1x1x128xf32> to vector<1x128xf32>
    %148 = vector.shape_cast %145 : vector<1x128xf32> to vector<1x1x128xf32>
    tpu.vector_store %arg16[%c0_121, %c0_122, %c0_123], %148 {strides = array<i32>} : memref<1x1x128xf32, #tpu.memory_space<vmem>>, vector<1x1x128xf32>,
    return
  }
  func.func @transform_0(%arg0: i32) -> (i32, i32, i32) {
    %c0_i32 = arith.constant 0 : i32
    %c0_i32_0 = arith.constant 0 : i32
    %c0_i32_1 = arith.constant 0 : i32
    return %arg0, %c0_i32, %c0_i32_0 : i32, i32, i32
  }
  func.func @transform_1(%arg0: i32) -> (i32, i32, i32) {
    %c0_i32 = arith.constant 0 : i32
    %c0_i32_0 = arith.constant 0 : i32
    %c0_i32_1 = arith.constant 0 : i32
    %c0_i32_2 = arith.constant 0 : i32
    return %c0_i32, %c0_i32_0, %c0_i32_1 : i32, i32, i32
  }
  func.func @transform_2(%arg0: i32) -> (i32, i32) {
    %c0_i32 = arith.constant 0 : i32
    %c0_i32_0 = arith.constant 0 : i32
    %c0_i32_1 = arith.constant 0 : i32
    return %c0_i32, %c0_i32_0 : i32, i32
  }
  func.func @transform_3(%arg0: i32) -> (i32, i32, i32) {
    %c0_i32 = arith.constant 0 : i32
    %c0_i32_0 = arith.constant 0 : i32
    %c0_i32_1 = arith.constant 0 : i32
    %c0_i32_2 = arith.constant 0 : i32
    return %c0_i32, %c0_i32_0, %c0_i32_1 : i32, i32, i32
  }
  func.func @transform_4(%arg0: i32) -> (i32, i32, i32) {
    %c0_i32 = arith.constant 0 : i32
    %c0_i32_0 = arith.constant 0 : i32
    %c0_i32_1 = arith.constant 0 : i32
    %c0_i32_2 = arith.constant 0 : i32
    return %c0_i32, %c0_i32_0, %c0_i32_1 : i32, i32, i32
  }
  func.func @transform_5(%arg0: i32) -> (i32, i32, i32) {
    %c0_i32 = arith.constant 0 : i32
    %c0_i32_0 = arith.constant 0 : i32
    %c0_i32_1 = arith.constant 0 : i32
    %c0_i32_2 = arith.constant 0 : i32
    return %c0_i32, %c0_i32_0, %c0_i32_1 : i32, i32, i32
  }
  func.func @transform_6(%arg0: i32) -> (i32, i32) {
    %c0_i32 = arith.constant 0 : i32
    %c0_i32_0 = arith.constant 0 : i32
    %c0_i32_1 = arith.constant 0 : i32
    return %c0_i32, %c0_i32_0 : i32, i32
  }
  func.func @transform_7(%arg0: i32) -> (i32, i32, i32) {
    %c0_i32 = arith.constant 0 : i32
    %c0_i32_0 = arith.constant 0 : i32
    %c0_i32_1 = arith.constant 0 : i32
    %c0_i32_2 = arith.constant 0 : i32
    return %c0_i32, %c0_i32_0, %c0_i32_1 : i32, i32, i32
  }
  func.func @transform_8(%arg0: i32) -> (i32, i32, i32) {
    %c0_i32 = arith.constant 0 : i32
    %c0_i32_0 = arith.constant 0 : i32
    %c0_i32_1 = arith.constant 0 : i32
    %c0_i32_2 = arith.constant 0 : i32
    return %c0_i32, %c0_i32_0, %c0_i32_1 : i32, i32, i32
  }
  func.func @transform_9(%arg0: i32) -> (i32, i32, i32) {
    %c0_i32 = arith.constant 0 : i32
    %c0_i32_0 = arith.constant 0 : i32
    %c0_i32_1 = arith.constant 0 : i32
    %c0_i32_2 = arith.constant 0 : i32
    return %c0_i32, %c0_i32_0, %c0_i32_1 : i32, i32, i32
  }
  func.func @transform_10(%arg0: i32) -> (i32, i32) {
    %c0_i32 = arith.constant 0 : i32
    %c0_i32_0 = arith.constant 0 : i32
    %c0_i32_1 = arith.constant 0 : i32
    return %c0_i32, %c0_i32_0 : i32, i32
  }
  func.func @transform_11(%arg0: i32) -> (i32, i32) {
    %c0_i32 = arith.constant 0 : i32
    %c0_i32_0 = arith.constant 0 : i32
    %c0_i32_1 = arith.constant 0 : i32
    return %c0_i32, %c0_i32_0 : i32, i32
  }
  func.func @transform_12(%arg0: i32) -> (i32, i32) {
    %c0_i32 = arith.constant 0 : i32
    %c0_i32_0 = arith.constant 0 : i32
    %c0_i32_1 = arith.constant 0 : i32
    return %c0_i32, %c0_i32_0 : i32, i32
  }
  func.func @transform_13(%arg0: i32) -> (i32, i32) {
    %c0_i32 = arith.constant 0 : i32
    %c0_i32_0 = arith.constant 0 : i32
    %c0_i32_1 = arith.constant 0 : i32
    return %c0_i32, %c0_i32_0 : i32, i32
  }
  func.func @transform_14(%arg0: i32) -> (i32, i32) {
    %c0_i32 = arith.constant 0 : i32
    %c0_i32_0 = arith.constant 0 : i32
    %c0_i32_1 = arith.constant 0 : i32
    return %c0_i32, %c0_i32_0 : i32, i32
  }
  func.func @transform_15(%arg0: i32) -> (i32, i32, i32) {
    %c0_i32 = arith.constant 0 : i32
    %c0_i32_0 = arith.constant 0 : i32
    %c0_i32_1 = arith.constant 0 : i32
    return %arg0, %c0_i32, %c0_i32_0 : i32, i32, i32
  }
}

</mosaic_0001>

<llo_original>
// kernel: cnn_forward.1
$region0: #{cnn_forward.1}
  #allocation0 [shape = 'u32[]', space=smem, size = 0x4, offset = 0x4, fixed_abs, tag = 'smem constant byte address 0x4 - core index']
  #allocation1 [shape = 'u32[144,128]{1,0:T(1,128)}', space=vmem, size = 0x12000, scoped, tag = 'internal scratch']
  %s0 = inlined_call_operand.vmem [shape: f32[2,48,144], index: 0, kind: input, shape index: {}]
  %s1 = inlined_call_operand.vmem [shape: bf16[5,144,264], index: 1, kind: input, shape index: {}]
  %s2 = inlined_call_operand.vmem [shape: f32[1,264], index: 2, kind: input, shape index: {}]
  %s3 = inlined_call_operand.vmem [shape: bf16[2,22,44], index: 3, kind: input, shape index: {}]
  %s4 = inlined_call_operand.vmem [shape: bf16[2,264,132], index: 4, kind: input, shape index: {}]
  %s5 = inlined_call_operand.vmem [shape: bf16[5,132,288], index: 5, kind: input, shape index: {}]
  %s6 = inlined_call_operand.vmem [shape: f32[1,288], index: 6, kind: input, shape index: {}]
  %s7 = inlined_call_operand.vmem [shape: bf16[2,9,18], index: 7, kind: input, shape index: {}]
  %s8 = inlined_call_operand.vmem [shape: bf16[2,288,144], index: 8, kind: input, shape index: {}]
  %s9 = inlined_call_operand.vmem [shape: bf16[9,144,128], index: 9, kind: input, shape index: {}]
  %s10 = inlined_call_operand.vmem [shape: f32[1,128], index: 10, kind: input, shape index: {}]
  %s11 = inlined_call_operand.vmem [shape: bf16[128,128], index: 11, kind: input, shape index: {}]
  %s12 = inlined_call_operand.vmem [shape: f32[1,128], index: 12, kind: input, shape index: {}]
  %s13 = inlined_call_operand.vmem [shape: bf16[128,128], index: 13, kind: input, shape index: {}]
  %s14 = inlined_call_operand.vmem [shape: f32[1,128], index: 14, kind: input, shape index: {}]
  %s15 = inlined_call_operand.hbm [shape: f32[2,1,128], index: 15, kind: output, shape index: {}]
  %s16 = sld [smem:[#allocation0]]
  $region93: #{cnn_forward.1} parent=0
    _
  %s18 = ssub.s32 1, %s16
  %s19 = scalar_select 0, %s18, %s16
  $region1: #{cnn_forward.1} parent=0
    #allocation2 [shape = 'u8[1024]{0}', space=vmem, size = 0x400, scoped, tag = 'output window, operand 0']
    #allocation3 [shape = 's32[2]{0}', space=sflag, size = 0x8, scoped, tag = 'scoped memory for cnn_forward.1']
    %20 = vsyncpa [#allocation3], 0
    %s21 = scalar_lea.sflag [#allocation3], 1
    %22 = vsyncpa %s21, 0
    loop: start=0, step=1, limit=4
    $region2: #{cnn_forward.1} parent=1 // loop_pre_header
      _
    $region3: #{cnn_forward.1} parent=1 // loop_header
      %s24 = sphi 0, %s28
      %p25 = scmp.ge.s32.totalorder %s24, 4
      %s34 = sphi 0, %s36
      %s37 = sphi 0, %s34
      %s38 = sphi 0, %s37
      %s54 = sphi 0, %s38
      %s58 = sphi 0, %s58
      %s60 = sphi 0, %s58
      %s61 = sphi 0, %s60
      %s75 = sphi 0, %s61
      %s79 = sphi 0, %s79
      %s81 = sphi 0, %s79
      %s82 = sphi 0, %s81
      %s96 = sphi 0, %s82
      %s100 = sphi 0, %s100
      %s102 = sphi 0, %s100
      %s103 = sphi 0, %s102
      %s117 = sphi 0, %s103
      %s121 = sphi 0, %s121
      %s123 = sphi 0, %s121
      %s124 = sphi 0, %s123
      %s138 = sphi 0, %s124
      %s142 = sphi 0, %s142
      %s144 = sphi 0, %s142
      %s145 = sphi 0, %s144
      %s159 = sphi 0, %s145
      %s163 = sphi 0, %s163
      %s165 = sphi 0, %s163
      %s166 = sphi 0, %s165
      %s180 = sphi 0, %s166
      %s184 = sphi 0, %s184
      %s186 = sphi 0, %s184
      %s187 = sphi 0, %s186
      %s201 = sphi 0, %s187
      %s205 = sphi 0, %s205
      %s207 = sphi 0, %s205
      %s208 = sphi 0, %s207
      %s222 = sphi 0, %s208
      %s226 = sphi 0, %s226
      %s228 = sphi 0, %s226
      %s229 = sphi 0, %s228
      %s243 = sphi 0, %s229
      %s247 = sphi 0, %s247
      %s249 = sphi 0, %s247
      %s250 = sphi 0, %s249
      %s264 = sphi 0, %s250
      %s268 = sphi 0, %s268
      %s270 = sphi 0, %s268
      %s271 = sphi 0, %s270
      %s285 = sphi 0, %s271
      %s289 = sphi 0, %s289
      %s291 = sphi 0, %s289
      %s292 = sphi 0, %s291
      %s306 = sphi 0, %s292
      %s310 = sphi 0, %s310
      %s312 = sphi 0, %s310
      %s313 = sphi 0, %s312
      %s327 = sphi 0, %s313
      %s331 = sphi 0, %s331
      %s333 = sphi 0, %s331
      %s334 = sphi 0, %s333
      %s348 = sphi 0, %s334
      %s354 = sphi 0, %s356
      %s357 = sphi 0, %s354
      %s358 = sphi 0, %s357
      %s374 = sphi 0, %s358
    $region4: #{cnn_forward.1} parent=1 // loop_header_branch
      %27 = sbr.rel (%p25) target = $region8
    $region5: #{cnn_forward.1} parent=1 // loop_body
      %s29 = ssub.s32 %s24, 1
      %s30 = ssub.s32 %s24, 2
      %s31 = sadd.s32 %s24, 1
      %s32 = ssub.s32 %s24, %s31
      %p33 = scmp.eq.s32.totalorder %s32, 0
      %s35 = sadd.s32 %s34, 1
      %s36 = scalar_select %p33, %s34, %s35
      %p39 = pneg %p33
      %p40 = scmp.eq.s32.totalorder %s24, 1
      %p41 = por %p39, %p40
      %p42 = scmp.ne.s32.totalorder %s34, %s37
      %p43 = scmp.eq.s32.totalorder %s24, 0
      %p44 = por %p42, %p43
      %p45 = scmp.ne.s32.totalorder %s34, %s37
      %p46 = scmp.eq.s32.totalorder %s29, 1
      %p47 = por %p45, %p46
      %p48 = scmp.ne.s32.totalorder %s37, %s38
      %p49 = scmp.eq.s32.totalorder %s29, 0
      %p50 = por %p48, %p49
      %p51 = scmp.ne.s32.totalorder %s37, %s38
      %p52 = scmp.eq.s32.totalorder %s30, 1
      %p53 = por %p51, %p52
      %p55 = scmp.ne.s32.totalorder %s38, %s54
      %p56 = scmp.eq.s32.totalorder %s30, 0
      %p57 = por %p55, %p56
      %s59 = sadd.s32 %s58, 1
      %p62 = scmp.eq.s32.totalorder %s24, 1
      %p63 = scmp.ne.s32.totalorder %s58, %s60
      %p64 = scmp.eq.s32.totalorder %s24, 0
      %p65 = por %p63, %p64
      %p66 = scmp.ne.s32.totalorder %s58, %s60
      %p67 = scmp.eq.s32.totalorder %s29, 1
      %p68 = por %p66, %p67
      %p69 = scmp.ne.s32.totalorder %s60, %s61
      %p70 = scmp.eq.s32.totalorder %s29, 0
      %p71 = por %p69, %p70
      %p72 = scmp.ne.s32.totalorder %s60, %s61
      %p73 = scmp.eq.s32.totalorder %s30, 1
      %p74 = por %p72, %p73
      %p76 = scmp.ne.s32.totalorder %s61, %s75
      %p77 = scmp.eq.s32.totalorder %s30, 0
      %p78 = por %p76, %p77
      %s80 = sadd.s32 %s79, 1
      %p83 = scmp.eq.s32.totalorder %s24, 1
      %p84 = scmp.ne.s32.totalorder %s79, %s81
      %p85 = scmp.eq.s32.totalorder %s24, 0
      %p86 = por %p84, %p85
      %p87 = scmp.ne.s32.totalorder %s79, %s81
      %p88 = scmp.eq.s32.totalorder %s29, 1
      %p89 = por %p87, %p88
      %p90 = scmp.ne.s32.totalorder %s81, %s82
      %p91 = scmp.eq.s32.totalorder %s29, 0
      %p92 = por %p90, %p91
      %p93 = scmp.ne.s32.totalorder %s81, %s82
      %p94 = scmp.eq.s32.totalorder %s30, 1
      %p95 = por %p93, %p94
      %p97 = scmp.ne.s32.totalorder %s82, %s96
      %p98 = scmp.eq.s32.totalorder %s30, 0
      %p99 = por %p97, %p98
      %s101 = sadd.s32 %s100, 1
      %p104 = scmp.eq.s32.totalorder %s24, 1
      %p105 = scmp.ne.s32.totalorder %s100, %s102
      %p106 = scmp.eq.s32.totalorder %s24, 0
      %p107 = por %p105, %p106
      %p108 = scmp.ne.s32.totalorder %s100, %s102
      %p109 = scmp.eq.s32.totalorder %s29, 1
      %p110 = por %p108, %p109
      %p111 = scmp.ne.s32.totalorder %s102, %s103
      %p112 = scmp.eq.s32.totalorder %s29, 0
      %p113 = por %p111, %p112
      %p114 = scmp.ne.s32.totalorder %s102, %s103
      %p115 = scmp.eq.s32.totalorder %s30, 1
      %p116 = por %p114, %p115
      %p118 = scmp.ne.s32.totalorder %s103, %s117
      %p119 = scmp.eq.s32.totalorder %s30, 0
      %p120 = por %p118, %p119
      %s122 = sadd.s32 %s121, 1
      %p125 = scmp.eq.s32.totalorder %s24, 1
      %p126 = scmp.ne.s32.totalorder %s121, %s123
      %p127 = scmp.eq.s32.totalorder %s24, 0
      %p128 = por %p126, %p127
      %p129 = scmp.ne.s32.totalorder %s121, %s123
      %p130 = scmp.eq.s32.totalorder %s29, 1
      %p131 = por %p129, %p130
      %p132 = scmp.ne.s32.totalorder %s123, %s124
      %p133 = scmp.eq.s32.totalorder %s29, 0
      %p134 = por %p132, %p133
      %p135 = scmp.ne.s32.totalorder %s123, %s124
      %p136 = scmp.eq.s32.totalorder %s30, 1
      %p137 = por %p135, %p136
      %p139 = scmp.ne.s32.totalorder %s124, %s138
      %p140 = scmp.eq.s32.totalorder %s30, 0
      %p141 = por %p139, %p140
      %s143 = sadd.s32 %s142, 1
      %p146 = scmp.eq.s32.totalorder %s24, 1
      %p147 = scmp.ne.s32.totalorder %s142, %s144
      %p148 = scmp.eq.s32.totalorder %s24, 0
      %p149 = por %p147, %p148
      %p150 = scmp.ne.s32.totalorder %s142, %s144
      %p151 = scmp.eq.s32.totalorder %s29, 1
      %p152 = por %p150, %p151
      %p153 = scmp.ne.s32.totalorder %s144, %s145
      %p154 = scmp.eq.s32.totalorder %s29, 0
      %p155 = por %p153, %p154
      %p156 = scmp.ne.s32.totalorder %s144, %s145
      %p157 = scmp.eq.s32.totalorder %s30, 1
      %p158 = por %p156, %p157
      %p160 = scmp.ne.s32.totalorder %s145, %s159
      %p161 = scmp.eq.s32.totalorder %s30, 0
      %p162 = por %p160, %p161
      %s164 = sadd.s32 %s163, 1
      %p167 = scmp.eq.s32.totalorder %s24, 1
      %p168 = scmp.ne.s32.totalorder %s163, %s165
      %p169 = scmp.eq.s32.totalorder %s24, 0
      %p170 = por %p168, %p169
      %p171 = scmp.ne.s32.totalorder %s163, %s165
      %p172 = scmp.eq.s32.totalorder %s29, 1
      %p173 = por %p171, %p172
      %p174 = scmp.ne.s32.totalorder %s165, %s166
      %p175 = scmp.eq.s32.totalorder %s29, 0
      %p176 = por %p174, %p175
      %p177 = scmp.ne.s32.totalorder %s165, %s166
      %p178 = scmp.eq.s32.totalorder %s30, 1
      %p179 = por %p177, %p178
      %p181 = scmp.ne.s32.totalorder %s166, %s180
      %p182 = scmp.eq.s32.totalorder %s30, 0
      %p183 = por %p181, %p182
      %s185 = sadd.s32 %s184, 1
      %p188 = scmp.eq.s32.totalorder %s24, 1
      %p189 = scmp.ne.s32.totalorder %s184, %s186
      %p190 = scmp.eq.s32.totalorder %s24, 0
      %p191 = por %p189, %p190
      %p192 = scmp.ne.s32.totalorder %s184, %s186
      %p193 = scmp.eq.s32.totalorder %s29, 1
      %p194 = por %p192, %p193
      %p195 = scmp.ne.s32.totalorder %s186, %s187
      %p196 = scmp.eq.s32.totalorder %s29, 0
      %p197 = por %p195, %p196
      %p198 = scmp.ne.s32.totalorder %s186, %s187
      %p199 = scmp.eq.s32.totalorder %s30, 1
      %p200 = por %p198, %p199
      %p202 = scmp.ne.s32.totalorder %s187, %s201
      %p203 = scmp.eq.s32.totalorder %s30, 0
      %p204 = por %p202, %p203
      %s206 = sadd.s32 %s205, 1
      %p209 = scmp.eq.s32.totalorder %s24, 1
      %p210 = scmp.ne.s32.totalorder %s205, %s207
      %p211 = scmp.eq.s32.totalorder %s24, 0
      %p212 = por %p210, %p211
      %p213 = scmp.ne.s32.totalorder %s205, %s207
      %p214 = scmp.eq.s32.totalorder %s29, 1
      %p215 = por %p213, %p214
      %p216 = scmp.ne.s32.totalorder %s207, %s208
      %p217 = scmp.eq.s32.totalorder %s29, 0
      %p218 = por %p216, %p217
      %p219 = scmp.ne.s32.totalorder %s207, %s208
      %p220 = scmp.eq.s32.totalorder %s30, 1
      %p221 = por %p219, %p220
      %p223 = scmp.ne.s32.totalorder %s208, %s222
      %p224 = scmp.eq.s32.totalorder %s30, 0
      %p225 = por %p223, %p224
      %s227 = sadd.s32 %s226, 1
      %p230 = scmp.eq.s32.totalorder %s24, 1
      %p231 = scmp.ne.s32.totalorder %s226, %s228
      %p232 = scmp.eq.s32.totalorder %s24, 0
      %p233 = por %p231, %p232
      %p234 = scmp.ne.s32.totalorder %s226, %s228
      %p235 = scmp.eq.s32.totalorder %s29, 1
      %p236 = por %p234, %p235
      %p237 = scmp.ne.s32.totalorder %s228, %s229
      %p238 = scmp.eq.s32.totalorder %s29, 0
      %p239 = por %p237, %p238
      %p240 = scmp.ne.s32.totalorder %s228, %s229
      %p241 = scmp.eq.s32.totalorder %s30, 1
      %p242 = por %p240, %p241
      %p244 = scmp.ne.s32.totalorder %s229, %s243
      %p245 = scmp.eq.s32.totalorder %s30, 0
      %p246 = por %p244, %p245
      %s248 = sadd.s32 %s247, 1
      %p251 = scmp.eq.s32.totalorder %s24, 1
      %p252 = scmp.ne.s32.totalorder %s247, %s249
      %p253 = scmp.eq.s32.totalorder %s24, 0
      %p254 = por %p252, %p253
      %p255 = scmp.ne.s32.totalorder %s247, %s249
      %p256 = scmp.eq.s32.totalorder %s29, 1
      %p257 = por %p255, %p256
      %p258 = scmp.ne.s32.totalorder %s249, %s250
      %p259 = scmp.eq.s32.totalorder %s29, 0
      %p260 = por %p258, %p259
      %p261 = scmp.ne.s32.totalorder %s249, %s250
      %p262 = scmp.eq.s32.totalorder %s30, 1
      %p263 = por %p261, %p262
      %p265 = scmp.ne.s32.totalorder %s250, %s264
      %p266 = scmp.eq.s32.totalorder %s30, 0
      %p267 = por %p265, %p266
      %s269 = sadd.s32 %s268, 1
      %p272 = scmp.eq.s32.totalorder %s24, 1
      %p273 = scmp.ne.s32.totalorder %s268, %s270
      %p274 = scmp.eq.s32.totalorder %s24, 0
      %p275 = por %p273, %p274
      %p276 = scmp.ne.s32.totalorder %s268, %s270
      %p277 = scmp.eq.s32.totalorder %s29, 1
      %p278 = por %p276, %p277
      %p279 = scmp.ne.s32.totalorder %s270, %s271
      %p280 = scmp.eq.s32.totalorder %s29, 0
      %p281 = por %p279, %p280
      %p282 = scmp.ne.s32.totalorder %s270, %s271
      %p283 = scmp.eq.s32.totalorder %s30, 1
      %p284 = por %p282, %p283
      %p286 = scmp.ne.s32.totalorder %s271, %s285
      %p287 = scmp.eq.s32.totalorder %s30, 0
      %p288 = por %p286, %p287
      %s290 = sadd.s32 %s289, 1
      %p293 = scmp.eq.s32.totalorder %s24, 1
      %p294 = scmp.ne.s32.totalorder %s289, %s291
      %p295 = scmp.eq.s32.totalorder %s24, 0
      %p296 = por %p294, %p295
      %p297 = scmp.ne.s32.totalorder %s289, %s291
      %p298 = scmp.eq.s32.totalorder %s29, 1
      %p299 = por %p297, %p298
      %p300 = scmp.ne.s32.totalorder %s291, %s292
      %p301 = scmp.eq.s32.totalorder %s29, 0
      %p302 = por %p300, %p301
      %p303 = scmp.ne.s32.totalorder %s291, %s292
      %p304 = scmp.eq.s32.totalorder %s30, 1
      %p305 = por %p303, %p304
      %p307 = scmp.ne.s32.totalorder %s292, %s306
      %p308 = scmp.eq.s32.totalorder %s30, 0
      %p309 = por %p307, %p308
      %s311 = sadd.s32 %s310, 1
      %p314 = scmp.eq.s32.totalorder %s24, 1
      %p315 = scmp.ne.s32.totalorder %s310, %s312
      %p316 = scmp.eq.s32.totalorder %s24, 0
      %p317 = por %p315, %p316
      %p318 = scmp.ne.s32.totalorder %s310, %s312
      %p319 = scmp.eq.s32.totalorder %s29, 1
      %p320 = por %p318, %p319
      %p321 = scmp.ne.s32.totalorder %s312, %s313
      %p322 = scmp.eq.s32.totalorder %s29, 0
      %p323 = por %p321, %p322
      %p324 = scmp.ne.s32.totalorder %s312, %s313
      %p325 = scmp.eq.s32.totalorder %s30, 1
      %p326 = por %p324, %p325
      %p328 = scmp.ne.s32.totalorder %s313, %s327
      %p329 = scmp.eq.s32.totalorder %s30, 0
      %p330 = por %p328, %p329
      %s332 = sadd.s32 %s331, 1
      %p335 = scmp.eq.s32.totalorder %s24, 1
      %p336 = scmp.ne.s32.totalorder %s331, %s333
      %p337 = scmp.eq.s32.totalorder %s24, 0
      %p338 = por %p336, %p337
      %p339 = scmp.ne.s32.totalorder %s331, %s333
      %p340 = scmp.eq.s32.totalorder %s29, 1
      %p341 = por %p339, %p340
      %p342 = scmp.ne.s32.totalorder %s333, %s334
      %p343 = scmp.eq.s32.totalorder %s29, 0
      %p344 = por %p342, %p343
      %p345 = scmp.ne.s32.totalorder %s333, %s334
      %p346 = scmp.eq.s32.totalorder %s30, 1
      %p347 = por %p345, %p346
      %p349 = scmp.ne.s32.totalorder %s334, %s348
      %p350 = scmp.eq.s32.totalorder %s30, 0
      %p351 = por %p349, %p350
      %s352 = ssub.s32 %s24, %s31
      %p353 = scmp.eq.s32.totalorder %s352, 0
      %s355 = sadd.s32 %s354, 1
      %s356 = scalar_select %p353, %s354, %s355
      %p359 = pneg %p353
      %p360 = scmp.eq.s32.totalorder %s24, 1
      %p361 = por %p359, %p360
      %p362 = scmp.ne.s32.totalorder %s354, %s357
      %p363 = scmp.eq.s32.totalorder %s24, 0
      %p364 = por %p362, %p363
      %p365 = scmp.ne.s32.totalorder %s354, %s357
      %p366 = scmp.eq.s32.totalorder %s29, 1
      %p367 = por %p365, %p366
      %p368 = scmp.ne.s32.totalorder %s357, %s358
      %p369 = scmp.eq.s32.totalorder %s29, 0
      %p370 = por %p368, %p369
      %p371 = scmp.ne.s32.totalorder %s357, %s358
      %p372 = scmp.eq.s32.totalorder %s30, 1
      %p373 = por %p371, %p372
      %p375 = scmp.ne.s32.totalorder %s358, %s374
      %p376 = scmp.eq.s32.totalorder %s30, 0
      %p377 = por %p375, %p376
      %p378 = scmp.le.s32.totalorder 1, %s24
      %p379 = scmp.lt.s32.totalorder %s24, 3
      %p380 = pnand %p378, %p379
      %p381 = pneg %p380
      // Predicated region
      $region9: #{cnn_forward.1} parent=5 // pred_check
        _
      $region10: #{cnn_forward.1} parent=5 // pred_check_branch
        %383 = sbr.rel (%p380) target = $region12
      $region11: #{cnn_forward.1} parent=5 // pred_region
        %s384 = ssub.s32 %s24, 1
        // Predicated region
        $region13: #{cnn_forward.1} parent=11 // pred_check
          %p385 = pneg %p71
        $region14: #{cnn_forward.1} parent=11 // pred_check_branch
          %387 = sbr.rel (%p385) target = $region16
        $region15: #{cnn_forward.1} parent=11 // pred_region
          _
        $region16: #{cnn_forward.1} parent=11 // pred_fallthru
          _
        // Predicated region
        $region17: #{cnn_forward.1} parent=11 // pred_check
          %p388 = pneg %p92
        $region18: #{cnn_forward.1} parent=11 // pred_check_branch
          %390 = sbr.rel (%p388) target = $region20
        $region19: #{cnn_forward.1} parent=11 // pred_region
          _
        $region20: #{cnn_forward.1} parent=11 // pred_fallthru
          _
        // Predicated region
        $region21: #{cnn_forward.1} parent=11 // pred_check
          %p391 = pneg %p113
        $region22: #{cnn_forward.1} parent=11 // pred_check_branch
          %393 = sbr.rel (%p391) target = $region24
        $region23: #{cnn_forward.1} parent=11 // pred_region
          _
        $region24: #{cnn_forward.1} parent=11 // pred_fallthru
          _
        // Predicated region
        $region25: #{cnn_forward.1} parent=11 // pred_check
          %p394 = pneg %p134
        $region26: #{cnn_forward.1} parent=11 // pred_check_branch
          %396 = sbr.rel (%p394) target = $region28
        $region27: #{cnn_forward.1} parent=11 // pred_region
          _
        $region28: #{cnn_forward.1} parent=11 // pred_fallthru
          _
        // Predicated region
        $region29: #{cnn_forward.1} parent=11 // pred_check
          %p397 = pneg %p155
        $region30: #{cnn_forward.1} parent=11 // pred_check_branch
          %399 = sbr.rel (%p397) target = $region32
        $region31: #{cnn_forward.1} parent=11 // pred_region
          _
        $region32: #{cnn_forward.1} parent=11 // pred_fallthru
          _
        // Predicated region
        $region33: #{cnn_forward.1} parent=11 // pred_check
          %p400 = pneg %p176
        $region34: #{cnn_forward.1} parent=11 // pred_check_branch
          %402 = sbr.rel (%p400) target = $region36
        $region35: #{cnn_forward.1} parent=11 // pred_region
          _
        $region36: #{cnn_forward.1} parent=11 // pred_fallthru
          _
        // Predicated region
        $region37: #{cnn_forward.1} parent=11 // pred_check
          %p403 = pneg %p197
        $region38: #{cnn_forward.1} parent=11 // pred_check_branch
          %405 = sbr.rel (%p403) target = $region40
        $region39: #{cnn_forward.1} parent=11 // pred_region
          _
        $region40: #{cnn_forward.1} parent=11 // pred_fallthru
          _
        // Predicated region
        $region41: #{cnn_forward.1} parent=11 // pred_check
          %p406 = pneg %p218
        $region42: #{cnn_forward.1} parent=11 // pred_check_branch
          %408 = sbr.rel (%p406) target = $region44
        $region43: #{cnn_forward.1} parent=11 // pred_region
          _
        $region44: #{cnn_forward.1} parent=11 // pred_fallthru
          _
        // Predicated region
        $region45: #{cnn_forward.1} parent=11 // pred_check
          %p409 = pneg %p239
        $region46: #{cnn_forward.1} parent=11 // pred_check_branch
          %411 = sbr.rel (%p409) target = $region48
        $region47: #{cnn_forward.1} parent=11 // pred_region
          _
        $region48: #{cnn_forward.1} parent=11 // pred_fallthru
          _
        // Predicated region
        $region49: #{cnn_forward.1} parent=11 // pred_check
          %p412 = pneg %p260
        $region50: #{cnn_forward.1} parent=11 // pred_check_branch
          %414 = sbr.rel (%p412) target = $region52
        $region51: #{cnn_forward.1} parent=11 // pred_region
          _
        $region52: #{cnn_forward.1} parent=11 // pred_fallthru
          _
        // Predicated region
        $region53: #{cnn_forward.1} parent=11 // pred_check
          %p415 = pneg %p281
        $region54: #{cnn_forward.1} parent=11 // pred_check_branch
          %417 = sbr.rel (%p415) target = $region56
        $region55: #{cnn_forward.1} parent=11 // pred_region
          _
        $region56: #{cnn_forward.1} parent=11 // pred_fallthru
          _
        // Predicated region
        $region57: #{cnn_forward.1} parent=11 // pred_check
          %p418 = pneg %p302
        $region58: #{cnn_forward.1} parent=11 // pred_check_branch
          %420 = sbr.rel (%p418) target = $region60
        $region59: #{cnn_forward.1} parent=11 // pred_region
          _
        $region60: #{cnn_forward.1} parent=11 // pred_fallthru
          _
        // Predicated region
        $region61: #{cnn_forward.1} parent=11 // pred_check
          %p421 = pneg %p323
        $region62: #{cnn_forward.1} parent=11 // pred_check_branch
          %423 = sbr.rel (%p421) target = $region64
        $region63: #{cnn_forward.1} parent=11 // pred_region
          _
        $region64: #{cnn_forward.1} parent=11 // pred_fallthru
          _
        // Predicated region
        $region65: #{cnn_forward.1} parent=11 // pred_check
          %p424 = pneg %p344
        $region66: #{cnn_forward.1} parent=11 // pred_check_branch
          %426 = sbr.rel (%p424) target = $region68
        $region67: #{cnn_forward.1} parent=11 // pred_region
          _
        $region68: #{cnn_forward.1} parent=11 // pred_fallthru
          _
      $region12: #{cnn_forward.1} parent=5 // pred_fallthru
        _
      %p427 = scmp.lt.s32.totalorder %s24, 2
      // Predicated region
      $region69: #{cnn_forward.1} parent=5 // pred_check
        %p428 = pneg %p427
      $region70: #{cnn_forward.1} parent=5 // pred_check_branch
        %430 = sbr.rel (%p428) target = $region72
      $region71: #{cnn_forward.1} parent=5 // pred_region
        // Predicated region
        $region73: #{cnn_forward.1} parent=71 // pred_check
          %p431 = pneg %p44
        $region74: #{cnn_forward.1} parent=71 // pred_check_branch
          %433 = sbr.rel (%p431) target = $region76
        $region75: #{cnn_forward.1} parent=71 // pred_region
          %p434 = scmp.lt.s32.totalorder %s24, 1
          %s435 = scalar_select %p434, %s24, 1
          %s436 = smul.addr %s435, 12
          %s437 = smul.addr %s436, 8
          %s438 = scalar_lea.vmem %s0, %s437
        $region76: #{cnn_forward.1} parent=71 // pred_fallthru
          _
      $region72: #{cnn_forward.1} parent=5 // pred_fallthru
        _
      %p439 = scmp.le.s32.totalorder 1, %s24
      %p440 = scmp.lt.s32.totalorder %s24, 3
      %p441 = pnand %p439, %p440
      %p442 = pneg %p441
      // Predicated region
      $region77: #{cnn_forward.1} parent=5 // pred_check
        _
      $region78: #{cnn_forward.1} parent=5 // pred_check_branch
        %444 = sbr.rel (%p441) target = $region80
      $region79: #{cnn_forward.1} parent=5 // pred_region
        %s445 = ssub.s32 %s24, 1
        %p446 = scmp.lt.s32.totalorder %s29, 1
        %s447 = scalar_select %p446, %s29, 1
        %s448 = smul.addr %s447, 12
        %s449 = smul.addr %s448, 8
        %s450 = scalar_lea.vmem %s0, %s449
        %p451 = pneg %p50
        %p452 = pneg %p47
        %p453 = pneg %p71
        %p454 = pneg %p68
        %p455 = pneg %p92
        %p456 = pneg %p89
        %p457 = pneg %p113
        %p458 = pneg %p110
        %p459 = pneg %p134
        %p460 = pneg %p131
        %p461 = pneg %p155
        %p462 = pneg %p152
        %p463 = pneg %p176
        %p464 = pneg %p173
        %p465 = pneg %p197
        %p466 = pneg %p194
        %p467 = pneg %p218
        %p468 = pneg %p215
        %p469 = pneg %p239
        %p470 = pneg %p236
        %p471 = pneg %p260
        %p472 = pneg %p257
        %p473 = pneg %p281
        %p474 = pneg %p278
        %p475 = pneg %p302
        %p476 = pneg %p299
        %p477 = pneg %p323
        %p478 = pneg %p320
        %p479 = pneg %p344
        %p480 = pneg %p341
        %p481 = pneg %p370
        %p482 = pneg %p367
        %s483 = sand.u32 %s357, 1
        %s484 = scalar_lea.sflag [#allocation3], %s483
        %s485 = sand.u32 %s357, 1
        %s486 = scalar_lea.vmem [#allocation2], %s485
        %p487 = scmp.lt.s32.totalorder %s29, 1
        %s488 = scalar_select %p487, %s29, 1
        %s489 = smul.addr %s488, 12
        %s490 = smul.addr %s489, 8
        %s491 = scalar_lea.vmem %s0, %s490
        %v493 = vld [vmem:[%s491] sm:$0xff]
        %v494 = vld [vmem:[%s491 + $0x8] sm:$0xff]
        %v495 = vld [vmem:[%s491 + $0x10] sm:$0xff]
        %v496 = vld [vmem:[%s491 + $0x18] sm:$0xff]
        %v497 = vld [vmem:[%s491 + $0x20] sm:$0xff]
        %v498 = vld [vmem:[%s491 + $0x28] sm:$0xff]
        %v499 = vld [vmem:[%s491 + $0x30] sm:$0xff]
        %v500 = vld [vmem:[%s491 + $0x38] sm:$0xff]
        %v501 = vld [vmem:[%s491 + $0x40] sm:$0xff]
        %v502 = vld [vmem:[%s491 + $0x48] sm:$0xff]
        %v503 = vld [vmem:[%s491 + $0x50] sm:$0xff]
        %v504 = vld [vmem:[%s491 + $0x58] sm:$0xff]
        %v505 = vld [vmem:[%s1] sm:$0xff]
        %v506 = vld [vmem:[%s1 + $0x8] sm:$0xf]
        %v507 = vld [vmem:[%s1 + $0xc] sm:$0xff]
        %v508 = vld [vmem:[%s1 + $0x14] sm:$0xf]
        %v509 = vld [vmem:[%s1 + $0x18] sm:$0xff]
        %v510 = vld [vmem:[%s1 + $0x20] sm:$0xf]
        %v511 = vld [vmem:[%s1 + $0x24] sm:$0xff]
        %v512 = vld [vmem:[%s1 + $0x2c] sm:$0xf]
        %v513 = vld [vmem:[%s1 + $0x30] sm:$0xff]
        %v514 = vld [vmem:[%s1 + $0x38] sm:$0xf]
        %v515 = vld [vmem:[%s1 + $0x3c] sm:$0xff]
        %v516 = vld [vmem:[%s1 + $0x44] sm:$0xf]
        %v517 = vld [vmem:[%s1 + $0x48] sm:$0xff]
        %v518 = vld [vmem:[%s1 + $0x50] sm:$0xf]
        %v519 = vld [vmem:[%s1 + $0x54] sm:$0xff]
        %v520 = vld [vmem:[%s1 + $0x5c] sm:$0xf]
        %v521 = vld [vmem:[%s1 + $0x60] sm:$0xff]
        %v522 = vld [vmem:[%s1 + $0x68] sm:$0xf]
        %v523 = vld [vmem:[%s1 + $0x6c] sm:$0xff]
        %v524 = vld [vmem:[%s1 + $0x74] sm:$0xf]
        %v525 = vld [vmem:[%s1 + $0x78] sm:$0xff]
        %v526 = vld [vmem:[%s1 + $0x80] sm:$0xf]
        %v527 = vld [vmem:[%s1 + $0x84] sm:$0xff]
        %v528 = vld [vmem:[%s1 + $0x8c] sm:$0xf]
        %v529 = vld [vmem:[%s1 + $0x90] sm:$0xff]
        %v530 = vld [vmem:[%s1 + $0x98] sm:$0xf]
        %v531 = vld [vmem:[%s1 + $0x9c] sm:$0xff]
        %v532 = vld [vmem:[%s1 + $0xa4] sm:$0xf]
        %v533 = vld [vmem:[%s1 + $0xa8] sm:$0xff]
        %v534 = vld [vmem:[%s1 + $0xb0] sm:$0xf]
        %v535 = vld [vmem:[%s1 + $0xb4] sm:$0xff]
        %v536 = vld [vmem:[%s1 + $0xbc] sm:$0xf]
        %v537 = vld [vmem:[%s1 + $0xc0] sm:$0xff]
        %v538 = vld [vmem:[%s1 + $0xc8] sm:$0xf]
        %v539 = vld [vmem:[%s1 + $0xcc] sm:$0xff]
        %v540 = vld [vmem:[%s1 + $0xd4] sm:$0xf]
        %s541 = scalar_lea.vmem %s1, 216
        %v542 = vld [vmem:[%s541] sm:$0xff]
        %v543 = vld [vmem:[%s541 + $0x8] sm:$0xf]
        %v544 = vld [vmem:[%s541 + $0xc] sm:$0xff]
        %v545 = vld [vmem:[%s541 + $0x14] sm:$0xf]
        %v546 = vld [vmem:[%s541 + $0x18] sm:$0xff]
        %v547 = vld [vmem:[%s541 + $0x20] sm:$0xf]
        %v548 = vld [vmem:[%s541 + $0x24] sm:$0xff]
        %v549 = vld [vmem:[%s541 + $0x2c] sm:$0xf]
        %v550 = vld [vmem:[%s541 + $0x30] sm:$0xff]
        %v551 = vld [vmem:[%s541 + $0x38] sm:$0xf]
        %v552 = vld [vmem:[%s541 + $0x3c] sm:$0xff]
        %v553 = vld [vmem:[%s541 + $0x44] sm:$0xf]
        %v554 = vld [vmem:[%s541 + $0x48] sm:$0xff]
        %v555 = vld [vmem:[%s541 + $0x50] sm:$0xf]
        %v556 = vld [vmem:[%s541 + $0x54] sm:$0xff]
        %v557 = vld [vmem:[%s541 + $0x5c] sm:$0xf]
        %v558 = vld [vmem:[%s541 + $0x60] sm:$0xff]
        %v559 = vld [vmem:[%s541 + $0x68] sm:$0xf]
        %v560 = vld [vmem:[%s541 + $0x6c] sm:$0xff]
        %v561 = vld [vmem:[%s541 + $0x74] sm:$0xf]
        %v562 = vld [vmem:[%s541 + $0x78] sm:$0xff]
        %v563 = vld [vmem:[%s541 + $0x80] sm:$0xf]
        %v564 = vld [vmem:[%s541 + $0x84] sm:$0xff]
        %v565 = vld [vmem:[%s541 + $0x8c] sm:$0xf]
        %v566 = vld [vmem:[%s541 + $0x90] sm:$0xff]
        %v567 = vld [vmem:[%s541 + $0x98] sm:$0xf]
        %v568 = vld [vmem:[%s541 + $0x9c] sm:$0xff]
        %v569 = vld [vmem:[%s541 + $0xa4] sm:$0xf]
        %v570 = vld [vmem:[%s541 + $0xa8] sm:$0xff]
        %v571 = vld [vmem:[%s541 + $0xb0] sm:$0xf]
        %v572 = vld [vmem:[%s541 + $0xb4] sm:$0xff]
        %v573 = vld [vmem:[%s541 + $0xbc] sm:$0xf]
        %v574 = vld [vmem:[%s541 + $0xc0] sm:$0xff]
        %v575 = vld [vmem:[%s541 + $0xc8] sm:$0xf]
        %v576 = vld [vmem:[%s541 + $0xcc] sm:$0xff]
        %v577 = vld [vmem:[%s541 + $0xd4] sm:$0xf]
        %vm590 = vcmask 1046528
        %v591 = vrot.slane %v493, 1
        %v592 = vrot.slane %v495, 1
        %v593 = vsel %vm590, %v591, %v592
        %v594 = vrot.slane %v494, 1
        %v595 = vrot.slane %v496, 1
        %v596 = vsel %vm590, %v594, %v595
        %v597 = vrot.slane %v497, 1
        %v598 = vsel %vm590, %v592, %v597
        %v599 = vrot.slane %v498, 1
        %v600 = vsel %vm590, %v595, %v599
        %v601 = vrot.slane %v499, 1
        %v602 = vsel %vm590, %v597, %v601
        %v603 = vrot.slane %v500, 1
        %v604 = vsel %vm590, %v599, %v603
        %v605 = vrot.slane %v501, 1
        %v606 = vsel %vm590, %v601, %v605
        %v607 = vrot.slane %v502, 1
        %v608 = vsel %vm590, %v603, %v607
        %v609 = vrot.slane %v503, 1
        %v610 = vsel %vm590, %v605, %v609
        %v611 = vrot.slane %v504, 1
        %v612 = vsel %vm590, %v607, %v611
        %v655 = vunpack.c.l.b16 %v542
        %v656 = vunpack.c.h.b16 %v542
        %v657 = vunpack.c.l.b16 %v543
        %v658 = vunpack.c.l.b16 %v544
        %v659 = vunpack.c.h.b16 %v544
        %v660 = vunpack.c.l.b16 %v545
        %v661 = vunpack.c.l.b16 %v546
        %v662 = vunpack.c.h.b16 %v546
        %v663 = vunpack.c.l.b16 %v547
        %v664 = vunpack.c.l.b16 %v548
        %v665 = vunpack.c.h.b16 %v548
        %v666 = vunpack.c.l.b16 %v549
        %v667 = vunpack.c.l.b16 %v550
        %v668 = vunpack.c.h.b16 %v550
        %v669 = vunpack.c.l.b16 %v551
        %v670 = vunpack.c.l.b16 %v552
        %v671 = vunpack.c.h.b16 %v552
        %v672 = vunpack.c.l.b16 %v553
        %v673 = vunpack.c.l.b16 %v554
        %v674 = vunpack.c.h.b16 %v554
        %v675 = vunpack.c.l.b16 %v555
        %v676 = vunpack.c.l.b16 %v556
        %v677 = vunpack.c.h.b16 %v556
        %v678 = vunpack.c.l.b16 %v557
        %v679 = vunpack.c.l.b16 %v558
        %v680 = vunpack.c.h.b16 %v558
        %v681 = vunpack.c.l.b16 %v559
        %v682 = vunpack.c.l.b16 %v560
        %v683 = vunpack.c.h.b16 %v560
        %v684 = vunpack.c.l.b16 %v561
        %v685 = vunpack.c.l.b16 %v562
        %v686 = vunpack.c.h.b16 %v562
        %v687 = vunpack.c.l.b16 %v563
        %v688 = vunpack.c.l.b16 %v564
        %v689 = vunpack.c.h.b16 %v564
        %v690 = vunpack.c.l.b16 %v565
        %v691 = vunpack.c.l.b16 %v566
        %v692 = vunpack.c.h.b16 %v566
        %v693 = vunpack.c.l.b16 %v567
        %v694 = vunpack.c.l.b16 %v568
        %v695 = vunpack.c.h.b16 %v568
        %v696 = vunpack.c.l.b16 %v569
        %v697 = vunpack.c.l.b16 %v570
        %v698 = vunpack.c.h.b16 %v570
        %v699 = vunpack.c.l.b16 %v571
        %v700 = vunpack.c.l.b16 %v572
        %v701 = vunpack.c.h.b16 %v572
        %v702 = vunpack.c.l.b16 %v573
        %v703 = vunpack.c.l.b16 %v574
        %v704 = vunpack.c.h.b16 %v574
        %v705 = vunpack.c.l.b16 %v575
        %v706 = vunpack.c.l.b16 %v576
        %v707 = vunpack.c.h.b16 %v576
        %v708 = vunpack.c.l.b16 %v577
        %v709 = vpack.c.b16 %v658, %v655
        %v710 = vpack.c.b16 %v659, %v656
        %v711 = vpack.c.b16 %v660, %v657
        %v712 = vpack.c.b16 %v664, %v661
        %v713 = vpack.c.b16 %v665, %v662
        %v714 = vpack.c.b16 %v666, %v663
        %v715 = vpack.c.b16 %v670, %v667
        %v716 = vpack.c.b16 %v671, %v668
        %v717 = vpack.c.b16 %v672, %v669
        %v718 = vpack.c.b16 %v676, %v673
        %v719 = vpack.c.b16 %v677, %v674
        %v720 = vpack.c.b16 %v678, %v675
        %v721 = vpack.c.b16 %v682, %v679
        %v722 = vpack.c.b16 %v683, %v680
        %v723 = vpack.c.b16 %v684, %v681
        %v724 = vpack.c.b16 %v688, %v685
        %v725 = vpack.c.b16 %v689, %v686
        %v726 = vpack.c.b16 %v690, %v687
        %v727 = vpack.c.b16 %v694, %v691
        %v728 = vpack.c.b16 %v695, %v692
        %v729 = vpack.c.b16 %v696, %v693
        %v730 = vpack.c.b16 %v700, %v697
        %v731 = vpack.c.b16 %v701, %v698
        %v732 = vpack.c.b16 %v702, %v699
        %v733 = vpack.c.b16 %v706, %v703
        %v734 = vpack.c.b16 %v707, %v704
        %v735 = vpack.c.b16 %v708, %v705
        %vm763 = vcmask 130048
        %v764 = vsel %vm763, %v596, 0
        %v766 = vsel %vm763, %v600, 0
        %v768 = vsel %vm763, %v604, 0
        %v770 = vsel %vm763, %v608, 0
        %v772 = vsel %vm763, %v612, 0
        %v774 = vsel %vm763, %v611, 0
        %776 = vmatprep.subr.bf16.mxu0 %v710
        %777 = vmatpush1.bf16.msra.mxu0 %v709
        %778 = vmatprep.subr.bf16.mxu0 %v713
        %779 = vmatpush1.bf16.msra.mxu0 %v712
        %780 = vmatprep.subr.bf16.mxu0 %v716
        %781 = vmatpush1.bf16.msra.mxu0 %v715
        %782 = vmatprep.subr.bf16.mxu0 %v719
        %783 = vmatpush1.bf16.msra.mxu0 %v718
        %784 = vmatprep.subr.bf16.mxu0 %v722
        %785 = vmatpush1.bf16.msra.mxu0 %v721
        %786 = vmatprep.subr.bf16.mxu0 %v725
        %787 = vmatpush1.bf16.msra.mxu0 %v724
        %788 = vmatprep.subr.bf16.mxu0 %v728
        %789 = vmatpush1.bf16.msra.mxu0 %v727
        %790 = vmatprep.subr.bf16.mxu0 %v731
        %791 = vmatpush1.bf16.msra.mxu0 %v730
        %792 = vmatprep.subr.bf16.mxu0 %v734
        %793 = vmatpush1.bf16.msra.mxu0 %v733
        %794 = vmatprep.subr.bf16.mxu0 0
        %795 = vmatpush1.bf16.msra.mxu0 0
        %796 = vmatprep.subr.bf16.mxu0 0
        %797 = vmatpush1.bf16.msra.mxu0 0
        %798 = vmatprep.subr.bf16.mxu0 0
        %799 = vmatpush1.bf16.msra.mxu0 0
        %800 = vmatprep.subr.bf16.mxu0 0
        %801 = vmatpush1.bf16.msra.mxu0 0
        %802 = vmatprep.subr.bf16.mxu0 0
        %803 = vmatpush1.bf16.msra.mxu0 0
        %804 = vmatprep.subr.bf16.mxu0 0
        %805 = vmatpush1.bf16.msra.mxu0 0
        %806 = vmatprep.subr.bf16.mxu0 0
        %807 = vmatpush1.bf16.msra.mxu0 0
        %808 = vmatprep.mubr.f32.mxu0 %v764
        %809 = vmatmul.mubr.f32.gmra.mrb[0].mxu0 %v593
        %v810 = vpop.f32.mrb[0].mxu0
        %v811 = vadd.f32 0.0, %v810
        %v812 = vpop.f32.mrb[0].mxu0
        %v813 = vadd.f32 0.0, %v812
        %814 = vmatprep.mubr.f32.mxu0 %v766
        %815 = vmatmul.mubr.f32.gmra.mrb[0].mxu0 %v598
        %v816 = vpop.f32.mrb[0].mxu0
        %v817 = vadd.f32 0.0, %v816
        %v818 = vpop.f32.mrb[0].mxu0
        %v819 = vadd.f32 0.0, %v818
        %820 = vmatprep.mubr.f32.mxu0 %v768
        %821 = vmatmul.mubr.f32.gmra.mrb[0].mxu0 %v602
        %v822 = vpop.f32.mrb[0].mxu0
        %v823 = vadd.f32 0.0, %v822
        %v824 = vpop.f32.mrb[0].mxu0
        %v825 = vadd.f32 0.0, %v824
        %826 = vmatprep.mubr.f32.mxu0 %v770
        %827 = vmatmul.mubr.f32.gmra.mrb[0].mxu0 %v606
        %v828 = vpop.f32.mrb[0].mxu0
        %v829 = vadd.f32 0.0, %v828
        %v830 = vpop.f32.mrb[0].mxu0
        %v831 = vadd.f32 0.0, %v830
        %832 = vmatprep.mubr.f32.mxu0 %v772
        %833 = vmatmul.mubr.f32.gmra.mrb[0].mxu0 %v610
        %v834 = vpop.f32.mrb[0].mxu0
        %v835 = vadd.f32 0.0, %v834
        %v836 = vpop.f32.mrb[0].mxu0
        %v837 = vadd.f32 0.0, %v836
        %838 = vmatprep.mubr.f32.mxu0 %v774
        %839 = vmatmul.mubr.f32.gmra.mrb[0].mxu0 %v609
        %v840 = vpop.f32.mrb[0].mxu0
        %v841 = vadd.f32 0.0, %v840
        %v842 = vpop.f32.mrb[0].mxu0
        %v843 = vadd.f32 0.0, %v842
        %844 = vdwg.mxu0
        %845 = vmatprep.subr.bf16.mxu0 0
        %846 = vmatpush1.bf16.msra.mxu0 %v711
        %847 = vmatprep.subr.bf16.mxu0 0
        %848 = vmatpush1.bf16.msra.mxu0 %v714
        %849 = vmatprep.subr.bf16.mxu0 0
        %850 = vmatpush1.bf16.msra.mxu0 %v717
        %851 = vmatprep.subr.bf16.mxu0 0
        %852 = vmatpush1.bf16.msra.mxu0 %v720
        %853 = vmatprep.subr.bf16.mxu0 0
        %854 = vmatpush1.bf16.msra.mxu0 %v723
        %855 = vmatprep.subr.bf16.mxu0 0
        %856 = vmatpush1.bf16.msra.mxu0 %v726
        %857 = vmatprep.subr.bf16.mxu0 0
        %858 = vmatpush1.bf16.msra.mxu0 %v729
        %859 = vmatprep.subr.bf16.mxu0 0
        %860 = vmatpush1.bf16.msra.mxu0 %v732
        %861 = vmatprep.subr.bf16.mxu0 0
        %862 = vmatpush1.bf16.msra.mxu0 %v735
        %863 = vmatprep.subr.bf16.mxu0 0
        %864 = vmatpush1.bf16.msra.mxu0 0
        %865 = vmatprep.subr.bf16.mxu0 0
        %866 = vmatpush1.bf16.msra.mxu0 0
        %867 = vmatprep.subr.bf16.mxu0 0
        %868 = vmatpush1.bf16.msra.mxu0 0
        %869 = vmatprep.subr.bf16.mxu0 0
        %870 = vmatpush1.bf16.msra.mxu0 0
        %871 = vmatprep.subr.bf16.mxu0 0
        %872 = vmatpush1.bf16.msra.mxu0 0
        %873 = vmatprep.subr.bf16.mxu0 0
        %874 = vmatpush1.bf16.msra.mxu0 0
        %875 = vmatprep.subr.bf16.mxu0 0
        %876 = vmatpush1.bf16.msra.mxu0 0
        %877 = vmatprep.mubr.f32.mxu0 %v764
        %878 = vmatmul.mubr.f32.gmra.mrb[0].mxu0 %v593
        %v879 = vpop.f32.mrb[0].mxu0
        %v880 = vadd.f32 0.0, %v879
        %v881 = vpop.f32.mrb[0].mxu0
        %882 = vmatprep.mubr.f32.mxu0 %v766
        %883 = vmatmul.mubr.f32.gmra.mrb[0].mxu0 %v598
        %v884 = vpop.f32.mrb[0].mxu0
        %v885 = vadd.f32 0.0, %v884
        %v886 = vpop.f32.mrb[0].mxu0
        %887 = vmatprep.mubr.f32.mxu0 %v768
        %888 = vmatmul.mubr.f32.gmra.mrb[0].mxu0 %v602
        %v889 = vpop.f32.mrb[0].mxu0
        %v890 = vadd.f32 0.0, %v889
        %v891 = vpop.f32.mrb[0].mxu0
        %892 = vmatprep.mubr.f32.mxu0 %v770
        %893 = vmatmul.mubr.f32.gmra.mrb[0].mxu0 %v606
        %v894 = vpop.f32.mrb[0].mxu0
        %v895 = vadd.f32 0.0, %v894
        %v896 = vpop.f32.mrb[0].mxu0
        %897 = vmatprep.mubr.f32.mxu0 %v772
        %898 = vmatmul.mubr.f32.gmra.mrb[0].mxu0 %v610
        %v899 = vpop.f32.mrb[0].mxu0
        %v900 = vadd.f32 0.0, %v899
        %v901 = vpop.f32.mrb[0].mxu0
        %902 = vmatprep.mubr.f32.mxu0 %v774
        %903 = vmatmul.mubr.f32.gmra.mrb[0].mxu0 %v609
        %v904 = vpop.f32.mrb[0].mxu0
        %v905 = vadd.f32 0.0, %v904
        %v906 = vpop.f32.mrb[0].mxu0
        %907 = vdwg.mxu0
        %v944 = vunpack.c.l.b16 %v505
        %v945 = vunpack.c.h.b16 %v505
        %v946 = vunpack.c.l.b16 %v506
        %v947 = vunpack.c.l.b16 %v507
        %v948 = vunpack.c.h.b16 %v507
        %v949 = vunpack.c.l.b16 %v508
        %v950 = vunpack.c.l.b16 %v509
        %v951 = vunpack.c.h.b16 %v509
        %v952 = vunpack.c.l.b16 %v510
        %v953 = vunpack.c.l.b16 %v511
        %v954 = vunpack.c.h.b16 %v511
        %v955 = vunpack.c.l.b16 %v512
        %v956 = vunpack.c.l.b16 %v513
        %v957 = vunpack.c.h.b16 %v513
        %v958 = vunpack.c.l.b16 %v514
        %v959 = vunpack.c.l.b16 %v515
        %v960 = vunpack.c.h.b16 %v515
        %v961 = vunpack.c.l.b16 %v516
        %v962 = vunpack.c.l.b16 %v517
        %v963 = vunpack.c.h.b16 %v517
        %v964 = vunpack.c.l.b16 %v518
        %v965 = vunpack.c.l.b16 %v519
        %v966 = vunpack.c.h.b16 %v519
        %v967 = vunpack.c.l.b16 %v520
        %v968 = vunpack.c.l.b16 %v521
        %v969 = vunpack.c.h.b16 %v521
        %v970 = vunpack.c.l.b16 %v522
        %v971 = vunpack.c.l.b16 %v523
        %v972 = vunpack.c.h.b16 %v523
        %v973 = vunpack.c.l.b16 %v524
        %v974 = vunpack.c.l.b16 %v525
        %v975 = vunpack.c.h.b16 %v525
        %v976 = vunpack.c.l.b16 %v526
        %v977 = vunpack.c.l.b16 %v527
        %v978 = vunpack.c.h.b16 %v527
        %v979 = vunpack.c.l.b16 %v528
        %v980 = vunpack.c.l.b16 %v529
        %v981 = vunpack.c.h.b16 %v529
        %v982 = vunpack.c.l.b16 %v530
        %v983 = vunpack.c.l.b16 %v531
        %v984 = vunpack.c.h.b16 %v531
        %v985 = vunpack.c.l.b16 %v532
        %v986 = vunpack.c.l.b16 %v533
        %v987 = vunpack.c.h.b16 %v533
        %v988 = vunpack.c.l.b16 %v534
        %v989 = vunpack.c.l.b16 %v535
        %v990 = vunpack.c.h.b16 %v535
        %v991 = vunpack.c.l.b16 %v536
        %v992 = vunpack.c.l.b16 %v537
        %v993 = vunpack.c.h.b16 %v537
        %v994 = vunpack.c.l.b16 %v538
        %v995 = vunpack.c.l.b16 %v539
        %v996 = vunpack.c.h.b16 %v539
        %v997 = vunpack.c.l.b16 %v540
        %v998 = vpack.c.b16 %v947, %v944
        %v999 = vpack.c.b16 %v948, %v945
        %v1000 = vpack.c.b16 %v949, %v946
        %v1001 = vpack.c.b16 %v953, %v950
        %v1002 = vpack.c.b16 %v954, %v951
        %v1003 = vpack.c.b16 %v955, %v952
        %v1004 = vpack.c.b16 %v959, %v956
        %v1005 = vpack.c.b16 %v960, %v957
        %v1006 = vpack.c.b16 %v961, %v958
        %v1007 = vpack.c.b16 %v965, %v962
        %v1008 = vpack.c.b16 %v966, %v963
        %v1009 = vpack.c.b16 %v967, %v964
        %v1010 = vpack.c.b16 %v971, %v968
        %v1011 = vpack.c.b16 %v972, %v969
        %v1012 = vpack.c.b16 %v973, %v970
        %v1013 = vpack.c.b16 %v977, %v974
        %v1014 = vpack.c.b16 %v978, %v975
        %v1015 = vpack.c.b16 %v979, %v976
        %v1016 = vpack.c.b16 %v983, %v980
        %v1017 = vpack.c.b16 %v984, %v981
        %v1018 = vpack.c.b16 %v985, %v982
        %v1019 = vpack.c.b16 %v989, %v986
        %v1020 = vpack.c.b16 %v990, %v987
        %v1021 = vpack.c.b16 %v991, %v988
        %v1022 = vpack.c.b16 %v995, %v992
        %v1023 = vpack.c.b16 %v996, %v993
        %v1024 = vpack.c.b16 %v997, %v994
        %v1052 = vsel %vm763, %v494, 0
        %v1054 = vsel %vm763, %v496, 0
        %v1056 = vsel %vm763, %v498, 0
        %v1058 = vsel %vm763, %v500, 0
        %v1060 = vsel %vm763, %v502, 0
        %v1062 = vsel %vm763, %v504, 0
        %1064 = vmatprep.subr.bf16.mxu0 %v999
        %1065 = vmatpush1.bf16.msra.mxu0 %v998
        %1066 = vmatprep.subr.bf16.mxu0 %v1002
        %1067 = vmatpush1.bf16.msra.mxu0 %v1001
        %1068 = vmatprep.subr.bf16.mxu0 %v1005
        %1069 = vmatpush1.bf16.msra.mxu0 %v1004
        %1070 = vmatprep.subr.bf16.mxu0 %v1008
        %1071 = vmatpush1.bf16.msra.mxu0 %v1007
        %1072 = vmatprep.subr.bf16.mxu0 %v1011
        %1073 = vmatpush1.bf16.msra.mxu0 %v1010
        %1074 = vmatprep.subr.bf16.mxu0 %v1014
        %1075 = vmatpush1.bf16.msra.mxu0 %v1013
        %1076 = vmatprep.subr.bf16.mxu0 %v1017
        %1077 = vmatpush1.bf16.msra.mxu0 %v1016
        %1078 = vmatprep.subr.bf16.mxu0 %v1020
        %1079 = vmatpush1.bf16.msra.mxu0 %v1019
        %1080 = vmatprep.subr.bf16.mxu0 %v1023
        %1081 = vmatpush1.bf16.msra.mxu0 %v1022
        %1082 = vmatprep.subr.bf16.mxu0 0
        %1083 = vmatpush1.bf16.msra.mxu0 0
        %1084 = vmatprep.subr.bf16.mxu0 0
        %1085 = vmatpush1.bf16.msra.mxu0 0
        %1086 = vmatprep.subr.bf16.mxu0 0
        %1087 = vmatpush1.bf16.msra.mxu0 0
        %1088 = vmatprep.subr.bf16.mxu0 0
        %1089 = vmatpush1.bf16.msra.mxu0 0
        %1090 = vmatprep.subr.bf16.mxu0 0
        %1091 = vmatpush1.bf16.msra.mxu0 0
        %1092 = vmatprep.subr.bf16.mxu0 0
        %1093 = vmatpush1.bf16.msra.mxu0 0
        %1094 = vmatprep.subr.bf16.mxu0 0
        %1095 = vmatpush1.bf16.msra.mxu0 0
        %1096 = vmatprep.mubr.f32.mxu0 %v1052
        %1097 = vmatmul.mubr.f32.gmra.mrb[0].mxu0 %v493
        %v1098 = vpop.f32.mrb[0].mxu0
        %v1099 = vadd.f32 %v811, %v1098
        %v1100 = vpop.f32.mrb[0].mxu0
        %v1101 = vadd.f32 %v813, %v1100
        %1102 = vmatprep.mubr.f32.mxu0 %v1054
        %1103 = vmatmul.mubr.f32.gmra.mrb[0].mxu0 %v495
        %v1104 = vpop.f32.mrb[0].mxu0
        %v1105 = vadd.f32 %v817, %v1104
        %v1106 = vpop.f32.mrb[0].mxu0
        %v1107 = vadd.f32 %v819, %v1106
        %1108 = vmatprep.mubr.f32.mxu0 %v1056
        %1109 = vmatmul.mubr.f32.gmra.mrb[0].mxu0 %v497
        %v1110 = vpop.f32.mrb[0].mxu0
        %v1111 = vadd.f32 %v823, %v1110
        %v1112 = vpop.f32.mrb[0].mxu0
        %v1113 = vadd.f32 %v825, %v1112
        %1114 = vmatprep.mubr.f32.mxu0 %v1058
        %1115 = vmatmul.mubr.f32.gmra.mrb[0].mxu0 %v499
        %v1116 = vpop.f32.mrb[0].mxu0
        %v1117 = vadd.f32 %v829, %v1116
        %v1118 = vpop.f32.mrb[0].mxu0
        %v1119 = vadd.f32 %v831, %v1118
        %1120 = vmatprep.mubr.f32.mxu0 %v1060
        %1121 = vmatmul.mubr.f32.gmra.mrb[0].mxu0 %v501
        %v1122 = vpop.f32.mrb[0].mxu0
        %v1123 = vadd.f32 %v835, %v1122
        %v1124 = vpop.f32.mrb[0].mxu0
        %v1125 = vadd.f32 %v837, %v1124
        %1126 = vmatprep.mubr.f32.mxu0 %v1062
        %1127 = vmatmul.mubr.f32.gmra.mrb[0].mxu0 %v503
        %v1128 = vpop.f32.mrb[0].mxu0
        %v1129 = vadd.f32 %v841, %v1128
        %v1130 = vpop.f32.mrb[0].mxu0
        %v1131 = vadd.f32 %v843, %v1130
        %1132 = vdwg.mxu0
        %1133 = vmatprep.subr.bf16.mxu0 0
        %1134 = vmatpush1.bf16.msra.mxu0 %v1000
        %1135 = vmatprep.subr.bf16.mxu0 0
        %1136 = vmatpush1.bf16.msra.mxu0 %v1003
        %1137 = vmatprep.subr.bf16.mxu0 0
        %1138 = vmatpush1.bf16.msra.mxu0 %v1006
        %1139 = vmatprep.subr.bf16.mxu0 0
        %1140 = vmatpush1.bf16.msra.mxu0 %v1009
        %1141 = vmatprep.subr.bf16.mxu0 0
        %1142 = vmatpush1.bf16.msra.mxu0 %v1012
        %1143 = vmatprep.subr.bf16.mxu0 0
        %1144 = vmatpush1.bf16.msra.mxu0 %v1015
        %1145 = vmatprep.subr.bf16.mxu0 0
        %1146 = vmatpush1.bf16.msra.mxu0 %v1018
        %1147 = vmatprep.subr.bf16.mxu0 0
        %1148 = vmatpush1.bf16.msra.mxu0 %v1021
        %1149 = vmatprep.subr.bf16.mxu0 0
        %1150 = vmatpush1.bf16.msra.mxu0 %v1024
        %1151 = vmatprep.subr.bf16.mxu0 0
        %1152 = vmatpush1.bf16.msra.mxu0 0
        %1153 = vmatprep.subr.bf16.mxu0 0
        %1154 = vmatpush1.bf16.msra.mxu0 0
        %1155 = vmatprep.subr.bf16.mxu0 0
        %1156 = vmatpush1.bf16.msra.mxu0 0
        %1157 = vmatprep.subr.bf16.mxu0 0
        %1158 = vmatpush1.bf16.msra.mxu0 0
        %1159 = vmatprep.subr.bf16.mxu0 0
        %1160 = vmatpush1.bf16.msra.mxu0 0
        %1161 = vmatprep.subr.bf16.mxu0 0
        %1162 = vmatpush1.bf16.msra.mxu0 0
        %1163 = vmatprep.subr.bf16.mxu0 0
        %1164 = vmatpush1.bf16.msra.mxu0 0
        %1165 = vmatprep.mubr.f32.mxu0 %v1052
        %1166 = vmatmul.mubr.f32.gmra.mrb[0].mxu0 %v493
        %v1167 = vpop.f32.mrb[0].mxu0
        %v1168 = vadd.f32 %v880, %v1167
        %v1169 = vpop.f32.mrb[0].mxu0
        %1170 = vmatprep.mubr.f32.mxu0 %v1054
        %1171 = vmatmul.mubr.f32.gmra.mrb[0].mxu0 %v495
        %v1172 = vpop.f32.mrb[0].mxu0
        %v1173 = vadd.f32 %v885, %v1172
        %v1174 = vpop.f32.mrb[0].mxu0
        %1175 = vmatprep.mubr.f32.mxu0 %v1056
        %1176 = vmatmul.mubr.f32.gmra.mrb[0].mxu0 %v497
        %v1177 = vpop.f32.mrb[0].mxu0
        %v1178 = vadd.f32 %v890, %v1177
        %v1179 = vpop.f32.mrb[0].mxu0
        %1180 = vmatprep.mubr.f32.mxu0 %v1058
        %1181 = vmatmul.mubr.f32.gmra.mrb[0].mxu0 %v499
        %v1182 = vpop.f32.mrb[0].mxu0
        %v1183 = vadd.f32 %v895, %v1182
        %v1184 = vpop.f32.mrb[0].mxu0
        %1185 = vmatprep.mubr.f32.mxu0 %v1060
        %1186 = vmatmul.mubr.f32.gmra.mrb[0].mxu0 %v501
        %v1187 = vpop.f32.mrb[0].mxu0
        %v1188 = vadd.f32 %v900, %v1187
        %v1189 = vpop.f32.mrb[0].mxu0
        %1190 = vmatprep.mubr.f32.mxu0 %v1062
        %1191 = vmatmul.mubr.f32.gmra.mrb[0].mxu0 %v503
        %v1192 = vpop.f32.mrb[0].mxu0
        %v1193 = vadd.f32 %v905, %v1192
        %v1194 = vpop.f32.mrb[0].mxu0
        %1195 = vdwg.mxu0
        %s1196 = scalar_lea.vmem %s1, 432
        %v1197 = vld [vmem:[%s1196] sm:$0xff]
        %v1198 = vld [vmem:[%s1196 + $0x8] sm:$0xf]
        %v1199 = vld [vmem:[%s1196 + $0xc] sm:$0xff]
        %v1200 = vld [vmem:[%s1196 + $0x14] sm:$0xf]
        %v1201 = vld [vmem:[%s1196 + $0x18] sm:$0xff]
        %v1202 = vld [vmem:[%s1196 + $0x20] sm:$0xf]
        %v1203 = vld [vmem:[%s1196 + $0x24] sm:$0xff]
        %v1204 = vld [vmem:[%s1196 + $0x2c] sm:$0xf]
        %v1205 = vld [vmem:[%s1196 + $0x30] sm:$0xff]
        %v1206 = vld [vmem:[%s1196 + $0x38] sm:$0xf]
        %v1207 = vld [vmem:[%s1196 + $0x3c] sm:$0xff]
        %v1208 = vld [vmem:[%s1196 + $0x44] sm:$0xf]
        %v1209 = vld [vmem:[%s1196 + $0x48] sm:$0xff]
        %v1210 = vld [vmem:[%s1196 + $0x50] sm:$0xf]
        %v1211 = vld [vmem:[%s1196 + $0x54] sm:$0xff]
        %v1212 = vld [vmem:[%s1196 + $0x5c] sm:$0xf]
        %v1213 = vld [vmem:[%s1196 + $0x60] sm:$0xff]
        %v1214 = vld [vmem:[%s1196 + $0x68] sm:$0xf]
        %v1215 = vld [vmem:[%s1196 + $0x6c] sm:$0xff]
        %v1216 = vld [vmem:[%s1196 + $0x74] sm:$0xf]
        %v1217 = vld [vmem:[%s1196 + $0x78] sm:$0xff]
        %v1218 = vld [vmem:[%s1196 + $0x80] sm:$0xf]
        %v1219 = vld [vmem:[%s1196 + $0x84] sm:$0xff]
        %v1220 = vld [vmem:[%s1196 + $0x8c] sm:$0xf]
        %v1221 = vld [vmem:[%s1196 + $0x90] sm:$0xff]
        %v1222 = vld [vmem:[%s1196 + $0x98] sm:$0xf]
        %v1223 = vld [vmem:[%s1196 + $0x9c] sm:$0xff]
        %v1224 = vld [vmem:[%s1196 + $0xa4] sm:$0xf]
        %v1225 = vld [vmem:[%s1196 + $0xa8] sm:$0xff]
        %v1226 = vld [vmem:[%s1196 + $0xb0] sm:$0xf]
        %v1227 = vld [vmem:[%s1196 + $0xb4] sm:$0xff]
        %v1228 = vld [vmem:[%s1196 + $0xbc] sm:$0xf]
        %v1229 = vld [vmem:[%s1196 + $0xc0] sm:$0xff]
        %v1230 = vld [vmem:[%s1196 + $0xc8] sm:$0xf]
        %v1231 = vld [vmem:[%s1196 + $0xcc] sm:$0xff]
        %v1232 = vld [vmem:[%s1196 + $0xd4] sm:$0xf]
        %vm1233 = vcmask 1045504
        %v1234 = vrot.slane %v493, 2
        %v1235 = vrot.slane %v495, 2
        %v1236 = vsel %vm1233, %v1234, %v1235
        %v1237 = vrot.slane %v494, 2
        %v1238 = vrot.slane %v496, 2
        %v1239 = vsel %vm1233, %v1237, %v1238
        %v1240 = vrot.slane %v497, 2
        %v1241 = vsel %vm1233, %v1235, %v1240
        %v1242 = vrot.slane %v498, 2
        %v1243 = vsel %vm1233, %v1238, %v1242
        %v1244 = vrot.slane %v499, 2
        %v1245 = vsel %vm1233, %v1240, %v1244
        %v1246 = vrot.slane %v500, 2
        %v1247 = vsel %vm1233, %v1242, %v1246
        %v1248 = vrot.slane %v501, 2
        %v1249 = vsel %vm1233, %v1244, %v1248
        %v1250 = vrot.slane %v502, 2
        %v1251 = vsel %vm1233, %v1246, %v1250
        %v1252 = vrot.slane %v503, 2
        %v1253 = vsel %vm1233, %v1248, %v1252
        %v1254 = vrot.slane %v504, 2
        %v1255 = vsel %vm1233, %v1250, %v1254
        %v1298 = vunpack.c.l.b16 %v1197
        %v1299 = vunpack.c.h.b16 %v1197
        %v1300 = vunpack.c.l.b16 %v1198
        %v1301 = vunpack.c.l.b16 %v1199
        %v1302 = vunpack.c.h.b16 %v1199
        %v1303 = vunpack.c.l.b16 %v1200
        %v1304 = vunpack.c.l.b16 %v1201
        %v1305 = vunpack.c.h.b16 %v1201
        %v1306 = vunpack.c.l.b16 %v1202
        %v1307 = vunpack.c.l.b16 %v1203
        %v1308 = vunpack.c.h.b16 %v1203
        %v1309 = vunpack.c.l.b16 %v1204
        %v1310 = vunpack.c.l.b16 %v1205
        %v1311 = vunpack.c.h.b16 %v1205
        %v1312 = vunpack.c.l.b16 %v1206
        %v1313 = vunpack.c.l.b16 %v1207
        %v1314 = vunpack.c.h.b16 %v1207
        %v1315 = vunpack.c.l.b16 %v1208
        %v1316 = vunpack.c.l.b16 %v1209
        %v1317 = vunpack.c.h.b16 %v1209
        %v1318 = vunpack.c.l.b16 %v1210
        %v1319 = vunpack.c.l.b16 %v1211
        %v1320 = vunpack.c.h.b16 %v1211
        %v1321 = vunpack.c.l.b16 %v1212
        %v1322 = vunpack.c.l.b16 %v1213
        %v1323 = vunpack.c.h.b16 %v1213
        %v1324 = vunpack.c.l.b16 %v1214
        %v1325 = vunpack.c.l.b16 %v1215
        %v1326 = vunpack.c.h.b16 %v1215
        %v1327 = vunpack.c.l.b16 %v1216
        %v1328 = vunpack.c.l.b16 %v1217
        %v1329 = vunpack.c.h.b16 %v1217
        %v1330 = vunpack.c.l.b16 %v1218
        %v1331 = vunpack.c.l.b16 %v1219
        %v1332 = vunpack.c.h.b16 %v1219
        %v1333 = vunpack.c.l.b16 %v1220
        %v1334 = vunpack.c.l.b16 %v1221
        %v1335 = vunpack.c.h.b16 %v1221
        %v1336 = vunpack.c.l.b16 %v1222
        %v1337 = vunpack.c.l.b16 %v1223
        %v1338 = vunpack.c.h.b16 %v1223
        %v1339 = vunpack.c.l.b16 %v1224
        %v1340 = vunpack.c.l.b16 %v1225
        %v1341 = vunpack.c.h.b16 %v1225
        %v1342 = vunpack.c.l.b16 %v1226
        %v1343 = vunpack.c.l.b16 %v1227
        %v1344 = vunpack.c.h.b16 %v1227
        %v1345 = vunpack.c.l.b16 %v1228
        %v1346 = vunpack.c.l.b16 %v1229
        %v1347 = vunpack.c.h.b16 %v1229
        %v1348 = vunpack.c.l.b16 %v1230
        %v1349 = vunpack.c.l.b16 %v1231
        %v1350 = vunpack.c.h.b16 %v1231
        %v1351 = vunpack.c.l.b16 %v1232
        %v1352 = vpack.c.b16 %v1301, %v1298
        %v1353 = vpack.c.b16 %v1302, %v1299
        %v1354 = vpack.c.b16 %v1303, %v1300
        %v1355 = vpack.c.b16 %v1307, %v1304
        %v1356 = vpack.c.b16 %v1308, %v1305
        %v1357 = vpack.c.b16 %v1309, %v1306
        %v1358 = vpack.c.b16 %v1313, %v1310
        %v1359 = vpack.c.b16 %v1314, %v1311
        %v1360 = vpack.c.b16 %v1315, %v1312
        %v1361 = vpack.c.b16 %v1319, %v1316
        %v1362 = vpack.c.b16 %v1320, %v1317
        %v1363 = vpack.c.b16 %v1321, %v1318
        %v1364 = vpack.c.b16 %v1325, %v1322
        %v1365 = vpack.c.b16 %v1326, %v1323
        %v1366 = vpack.c.b16 %v1327, %v1324
        %v1367 = vpack.c.b16 %v1331, %v1328
        %v1368 = vpack.c.b16 %v1332, %v1329
        %v1369 = vpack.c.b16 %v1333, %v1330
        %v1370 = vpack.c.b16 %v1337, %v1334
        %v1371 = vpack.c.b16 %v1338, %v1335
        %v1372 = vpack.c.b16 %v1339, %v1336
        %v1373 = vpack.c.b16 %v1343, %v1340
        %v1374 = vpack.c.b16 %v1344, %v1341
        %v1375 = vpack.c.b16 %v1345, %v1342
        %v1376 = vpack.c.b16 %v1349, %v1346
        %v1377 = vpack.c.b16 %v1350, %v1347
        %v1378 = vpack.c.b16 %v1351, %v1348
        %v1406 = vsel %vm763, %v1239, 0
        %v1408 = vsel %vm763, %v1243, 0
        %v1410 = vsel %vm763, %v1247, 0
        %v1412 = vsel %vm763, %v1251, 0
        %v1414 = vsel %vm763, %v1255, 0
        %v1416 = vsel %vm763, %v1254, 0
        %1418 = vmatprep.subr.bf16.mxu0 %v1353
        %1419 = vmatpush1.bf16.msra.mxu0 %v1352
        %1420 = vmatprep.subr.bf16.mxu0 %v1356
        %1421 = vmatpush1.bf16.msra.mxu0 %v1355
        %1422 = vmatprep.subr.bf16.mxu0 %v1359
        %1423 = vmatpush1.bf16.msra.mxu0 %v1358
        %1424 = vmatprep.subr.bf16.mxu0 %v1362
        %1425 = vmatpush1.bf16.msra.mxu0 %v1361
        %1426 = vmatprep.subr.bf16.mxu0 %v1365
        %1427 = vmatpush1.bf16.msra.mxu0 %v1364
        %1428 = vmatprep.subr.bf16.mxu0 %v1368
        %1429 = vmatpush1.bf16.msra.mxu0 %v1367
        %1430 = vmatprep.subr.bf16.mxu0 %v1371
        %1431 = vmatpush1.bf16.msra.mxu0 %v1370
        %1432 = vmatprep.subr.bf16.mxu0 %v1374
        %1433 = vmatpush1.bf16.msra.mxu0 %v1373
        %1434 = vmatprep.subr.bf16.mxu0 %v1377
        %1435 = vmatpush1.bf16.msra.mxu0 %v1376
        %1436 = vmatprep.subr.bf16.mxu0 0
        %1437 = vmatpush1.bf16.msra.mxu0 0
        %1438 = vmatprep.subr.bf16.mxu0 0
        %1439 = vmatpush1.bf16.msra.mxu0 0
        %1440 = vmatprep.subr.bf16.mxu0 0
        %1441 = vmatpush1.bf16.msra.mxu0 0
        %1442 = vmatprep.subr.bf16.mxu0 0
        %1443 = vmatpush1.bf16.msra.mxu0 0
        %1444 = vmatprep.subr.bf16.mxu0 0
        %1445 = vmatpush1.bf16.msra.mxu0 0
        %1446 = vmatprep.subr.bf16.mxu0 0
        %1447 = vmatpush1.bf16.msra.mxu0 0
        %1448 = vmatprep.subr.bf16.mxu0 0
        %1449 = vmatpush1.bf16.msra.mxu0 0
        %1450 = vmatprep.mubr.f32.mxu0 %v1406
        %1451 = vmatmul.mubr.f32.gmra.mrb[0].mxu0 %v1236
        %v1452 = vpop.f32.mrb[0].mxu0
        %v1453 = vadd.f32 0.0, %v1452
        %v1454 = vpop.f32.mrb[0].mxu0
        %v1455 = vadd.f32 0.0, %v1454
        %1456 = vmatprep.mubr.f32.mxu0 %v1408
        %1457 = vmatmul.mubr.f32.gmra.mrb[0].mxu0 %v1241
        %v1458 = vpop.f32.mrb[0].mxu0
        %v1459 = vadd.f32 0.0, %v1458
        %v1460 = vpop.f32.mrb[0].mxu0
        %v1461 = vadd.f32 0.0, %v1460
        %1462 = vmatprep.mubr.f32.mxu0 %v1410
        %1463 = vmatmul.mubr.f32.gmra.mrb[0].mxu0 %v1245
        %v1464 = vpop.f32.mrb[0].mxu0
        %v1465 = vadd.f32 0.0, %v1464
        %v1466 = vpop.f32.mrb[0].mxu0
        %v1467 = vadd.f32 0.0, %v1466
        %1468 = vmatprep.mubr.f32.mxu0 %v1412
        %1469 = vmatmul.mubr.f32.gmra.mrb[0].mxu0 %v1249
        %v1470 = vpop.f32.mrb[0].mxu0
        %v1471 = vadd.f32 0.0, %v1470
        %v1472 = vpop.f32.mrb[0].mxu0
        %v1473 = vadd.f32 0.0, %v1472
        %1474 = vmatprep.mubr.f32.mxu0 %v1414
        %1475 = vmatmul.mubr.f32.gmra.mrb[0].mxu0 %v1253
        %v1476 = vpop.f32.mrb[0].mxu0
        %v1477 = vadd.f32 0.0, %v1476
        %v1478 = vpop.f32.mrb[0].mxu0
        %v1479 = vadd.f32 0.0, %v1478
        %1480 = vmatprep.mubr.f32.mxu0 %v1416
        %1481 = vmatmul.mubr.f32.gmra.mrb[0].mxu0 %v1252
        %v1482 = vpop.f32.mrb[0].mxu0
        %v1483 = vadd.f32 0.0, %v1482
        %v1484 = vpop.f32.mrb[0].mxu0
        %v1485 = vadd.f32 0.0, %v1484
        %1486 = vdwg.mxu0
        %1487 = vmatprep.subr.bf16.mxu0 0
        %1488 = vmatpush1.bf16.msra.mxu0 %v1354
        %1489 = vmatprep.subr.bf16.mxu0 0
        %1490 = vmatpush1.bf16.msra.mxu0 %v1357
        %1491 = vmatprep.subr.bf16.mxu0 0
        %1492 = vmatpush1.bf16.msra.mxu0 %v1360
        %1493 = vmatprep.subr.bf16.mxu0 0
        %1494 = vmatpush1.bf16.msra.mxu0 %v1363
        %1495 = vmatprep.subr.bf16.mxu0 0
        %1496 = vmatpush1.bf16.msra.mxu0 %v1366
        %1497 = vmatprep.subr.bf16.mxu0 0
        %1498 = vmatpush1.bf16.msra.mxu0 %v1369
        %1499 = vmatprep.subr.bf16.mxu0 0
        %1500 = vmatpush1.bf16.msra.mxu0 %v1372
        %1501 = vmatprep.subr.bf16.mxu0 0
        %1502 = vmatpush1.bf16.msra.mxu0 %v1375
        %1503 = vmatprep.subr.bf16.mxu0 0
        %1504 = vmatpush1.bf16.msra.mxu0 %v1378
        %1505 = vmatprep.subr.bf16.mxu0 0
        %1506 = vmatpush1.bf16.msra.mxu0 0
        %1507 = vmatprep.subr.bf16.mxu0 0
        %1508 = vmatpush1.bf16.msra.mxu0 0
        %1509 = vmatprep.subr.bf16.mxu0 0
        %1510 = vmatpush1.bf16.msra.mxu0 0
        %1511 = vmatprep.subr.bf16.mxu0 0
        %1512 = vmatpush1.bf16.msra.mxu0 0
        %1513 = vmatprep.subr.bf16.mxu0 0
        %1514 = vmatpush1.bf16.msra.mxu0 0
        %1515 = vmatprep.subr.bf16.mxu0 0
        %1516 = vmatpush1.bf16.msra.mxu0 0
        %1517 = vmatprep.subr.bf16.mxu0 0
        %1518 = vmatpush1.bf16.msra.mxu0 0
        %1519 = vmatprep.mubr.f32.mxu0 %v1406
        %1520 = vmatmul.mubr.f32.gmra.mrb[0].mxu0 %v1236
        %v1521 = vpop.f32.mrb[0].mxu0
        %v1522 = vadd.f32 0.0, %v1521
        %v1523 = vpop.f32.mrb[0].mxu0
        %1524 = vmatprep.mubr.f32.mxu0 %v1408
        %1525 = vmatmul.mubr.f32.gmra.mrb[0].mxu0 %v1241
        %v1526 = vpop.f32.mrb[0].mxu0
        %v1527 = vadd.f32 0.0, %v1526
        %v1528 = vpop.f32.mrb[0].mxu0
        %1529 = vmatprep.mubr.f32.mxu0 %v1410
        %1530 = vmatmul.mubr.f32.gmra.mrb[0].mxu0 %v1245
        %v1531 = vpop.f32.mrb[0].mxu0
        %v1532 = vadd.f32 0.0, %v1531
        %v1533 = vpop.f32.mrb[0].mxu0
        %1534 = vmatprep.mubr.f32.mxu0 %v1412
        %1535 = vmatmul.mubr.f32.gmra.mrb[0].mxu0 %v1249
        %v1536 = vpop.f32.mrb[0].mxu0
        %v1537 = vadd.f32 0.0, %v1536
        %v1538 = vpop.f32.mrb[0].mxu0
        %1539 = vmatprep.mubr.f32.mxu0 %v1414
        %1540 = vmatmul.mubr.f32.gmra.mrb[0].mxu0 %v1253
        %v1541 = vpop.f32.mrb[0].mxu0
        %v1542 = vadd.f32 0.0, %v1541
        %v1543 = vpop.f32.mrb[0].mxu0
        %1544 = vmatprep.mubr.f32.mxu0 %v1416
        %1545 = vmatmul.mubr.f32.gmra.mrb[0].mxu0 %v1252
        %v1546 = vpop.f32.mrb[0].mxu0
        %v1547 = vadd.f32 0.0, %v1546
        %v1548 = vpop.f32.mrb[0].mxu0
        %1549 = vdwg.mxu0
        %v1550 = vadd.f32 %v1099, %v1453
        %v1551 = vadd.f32 %v1101, %v1455
        %v1552 = vadd.f32 %v1168, %v1522
        %v1553 = vadd.f32 %v1105, %v1459
        %v1554 = vadd.f32 %v1107, %v1461
        %v1555 = vadd.f32 %v1173, %v1527
        %v1556 = vadd.f32 %v1111, %v1465
        %v1557 = vadd.f32 %v1113, %v1467
        %v1558 = vadd.f32 %v1178, %v1532
        %v1559 = vadd.f32 %v1117, %v1471
        %v1560 = vadd.f32 %v1119, %v1473
        %v1561 = vadd.f32 %v1183, %v1537
        %v1562 = vadd.f32 %v1123, %v1477
        %v1563 = vadd.f32 %v1125, %v1479
        %v1564 = vadd.f32 %v1188, %v1542
        %v1565 = vadd.f32 %v1129, %v1483
        %v1566 = vadd.f32 %v1131, %v1485
        %v1567 = vadd.f32 %v1193, %v1547
        %s1568 = scalar_lea.vmem %s1, 648
        %v1569 = vld [vmem:[%s1568] sm:$0xff]
        %v1570 = vld [vmem:[%s1568 + $0x8] sm:$0xf]
        %v1571 = vld [vmem:[%s1568 + $0xc] sm:$0xff]
        %v1572 = vld [vmem:[%s1568 + $0x14] sm:$0xf]
        %v1573 = vld [vmem:[%s1568 + $0x18] sm:$0xff]
        %v1574 = vld [vmem:[%s1568 + $0x20] sm:$0xf]
        %v1575 = vld [vmem:[%s1568 + $0x24] sm:$0xff]
        %v1576 = vld [vmem:[%s1568 + $0x2c] sm:$0xf]
        %v1577 = vld [vmem:[%s1568 + $0x30] sm:$0xff]
        %v1578 = vld [vmem:[%s1568 + $0x38] sm:$0xf]
        %v1579 = vld [vmem:[%s1568 + $0x3c] sm:$0xff]
        %v1580 = vld [vmem:[%s1568 + $0x44] sm:$0xf]
        %v1581 = vld [vmem:[%s1568 + $0x48] sm:$0xff]
        %v1582 = vld [vmem:[%s1568 + $0x50] sm:$0xf]
        %v1583 = vld [vmem:[%s1568 + $0x54] sm:$0xff]
        %v1584 = vld [vmem:[%s1568 + $0x5c] sm:$0xf]
        %v1585 = vld [vmem:[%s1568 + $0x60] sm:$0xff]
        %v1586 = vld [vmem:[%s1568 + $0x68] sm:$0xf]
        %v1587 = vld [vmem:[%s1568 + $0x6c] sm:$0xff]
        %v1588 = vld [vmem:[%s1568 + $0x74] sm:$0xf]
        %v1589 = vld [vmem:[%s1568 + $0x78] sm:$0xff]
        %v1590 = vld [vmem:[%s1568 + $0x80] sm:$0xf]
        %v1591 = vld [vmem:[%s1568 + $0x84] sm:$0xff]
        %v1592 = vld [vmem:[%s1568 + $0x8c] sm:$0xf]
        %v1593 = vld [vmem:[%s1568 + $0x90] sm:$0xff]
        %v1594 = vld [vmem:[%s1568 + $0x98] sm:$0xf]
        %v1595 = vld [vmem:[%s1568 + $0x9c] sm:$0xff]
        %v1596 = vld [vmem:[%s1568 + $0xa4] sm:$0xf]
        %v1597 = vld [vmem:[%s1568 + $0xa8] sm:$0xff]
        %v1598 = vld [vmem:[%s1568 + $0xb0] sm:$0xf]
        %v1599 = vld [vmem:[%s1568 + $0xb4] sm:$0xff]
        %v1600 = vld [vmem:[%s1568 + $0xbc] sm:$0xf]
        %v1601 = vld [vmem:[%s1568 + $0xc0] sm:$0xff]
        %v1602 = vld [vmem:[%s1568 + $0xc8] sm:$0xf]
        %v1603 = vld [vmem:[%s1568 + $0xcc] sm:$0xff]
        %v1604 = vld [vmem:[%s1568 + $0xd4] sm:$0xf]
        %vm1605 = vcmask 1044480
        %v1606 = vrot.slane %v493, 3
        %v1607 = vrot.slane %v495, 3
        %v1608 = vsel %vm1605, %v1606, %v1607
        %v1609 = vrot.slane %v494, 3
        %v1610 = vrot.slane %v496, 3
        %v1611 = vsel %vm1605, %v1609, %v1610
        %v1612 = vrot.slane %v497, 3
        %v1613 = vsel %vm1605, %v1607, %v1612
        %v1614 = vrot.slane %v498, 3
        %v1615 = vsel %vm1605, %v1610, %v1614
        %v1616 = vrot.slane %v499, 3
        %v1617 = vsel %vm1605, %v1612, %v1616
        %v1618 = vrot.slane %v500, 3
        %v1619 = vsel %vm1605, %v1614, %v1618
        %v1620 = vrot.slane %v501, 3
        %v1621 = vsel %vm1605, %v1616, %v1620
        %v1622 = vrot.slane %v502, 3
        %v1623 = vsel %vm1605, %v1618, %v1622
        %v1624 = vrot.slane %v503, 3
        %v1625 = vsel %vm1605, %v1620, %v1624
        %v1626 = vrot.slane %v504, 3
        %v1627 = vsel %vm1605, %v1622, %v1626
        %v1670 = vunpack.c.l.b16 %v1569
        %v1671 = vunpack.c.h.b16 %v1569
        %v1672 = vunpack.c.l.b16 %v1570
        %v1673 = vunpack.c.l.b16 %v1571
        %v1674 = vunpack.c.h.b16 %v1571
        %v1675 = vunpack.c.l.b16 %v1572
        %v1676 = vunpack.c.l.b16 %v1573
        %v1677 = vunpack.c.h.b16 %v1573
        %v1678 = vunpack.c.l.b16 %v1574
        %v1679 = vunpack.c.l.b16 %v1575
        %v1680 = vunpack.c.h.b16 %v1575
        %v1681 = vunpack.c.l.b16 %v1576
        %v1682 = vunpack.c.l.b16 %v1577
        %v1683 = vunpack.c.h.b16 %v1577
        %v1684 = vunpack.c.l.b16 %v1578
        %v1685 = vunpack.c.l.b16 %v1579
        %v1686 = vunpack.c.h.b16 %v1579
        %v1687 = vunpack.c.l.b16 %v1580
        %v1688 = vunpack.c.l.b16 %v1581
        %v1689 = vunpack.c.h.b16 %v1581
        %v1690 = vunpack.c.l.b16 %v1582
        %v1691 = vunpack.c.l.b16 %v1583
        %v1692 = vunpack.c.h.b16 %v1583
        %v1693 = vunpack.c.l.b16 %v1584
        %v1694 = vunpack.c.l.b16 %v1585
        %v1695 = vunpack.c.h.b16 %v1585
        %v1696 = vunpack.c.l.b16 %v1586
        %v1697 = vunpack.c.l.b16 %v1587
        %v1698 = vunpack.c.h.b16 %v1587
        %v1699 = vunpack.c.l.b16 %v1588
        %v1700 = vunpack.c.l.b16 %v1589
        %v1701 = vunpack.c.h.b16 %v1589
        %v1702 = vunpack.c.l.b16 %v1590
        %v1703 = vunpack.c.l.b16 %v1591
        %v1704 = vunpack.c.h.b16 %v1591
        %v1705 = vunpack.c.l.b16 %v1592
        %v1706 = vunpack.c.l.b16 %v1593
        %v1707 = vunpack.c.h.b16 %v1593
        %v1708 = vunpack.c.l.b16 %v1594
        %v1709 = vunpack.c.l.b16 %v1595
        %v1710 = vunpack.c.h.b16 %v1595
        %v1711 = vunpack.c.l.b16 %v1596
        %v1712 = vunpack.c.l.b16 %v1597
        %v1713 = vunpack.c.h.b16 %v1597
        %v1714 = vunpack.c.l.b16 %v1598
        %v1715 = vunpack.c.l.b16 %v1599
        %v1716 = vunpack.c.h.b16 %v1599
        %v1717 = vunpack.c.l.b16 %v1600
        %v1718 = vunpack.c.l.b16 %v1601
        %v1719 = vunpack.c.h.b16 %v1601
        %v1720 = vunpack.c.l.b16 %v1602
        %v1721 = vunpack.c.l.b16 %v1603
        %v1722 = vunpack.c.h.b16 %v1603
        %v1723 = vunpack.c.l.b16 %v1604
        %v1724 = vpack.c.b16 %v1673, %v1670
        %v1725 = vpack.c.b16 %v1674, %v1671
        %v1726 = vpack.c.b16 %v1675, %v1672
        %v1727 = vpack.c.b16 %v1679, %v1676
        %v1728 = vpack.c.b16 %v1680, %v1677
        %v1729 = vpack.c.b16 %v1681, %v1678
        %v1730 = vpack.c.b16 %v1685, %v1682
        %v1731 = vpack.c.b16 %v1686, %v1683
        %v1732 = vpack.c.b16 %v1687, %v1684
        %v1733 = vpack.c.b16 %v1691, %v1688
        %v1734 = vpack.c.b16 %v1692, %v1689
        %v1735 = vpack.c.b16 %v1693, %v1690
        %v1736 = vpack.c.b16 %v1697, %v1694
        %v1737 = vpack.c.b16 %v1698, %v1695
        %v1738 = vpack.c.b16 %v1699, %v1696
        %v1739 = vpack.c.b16 %v1703, %v1700
        %v1740 = vpack.c.b16 %v1704, %v1701
        %v1741 = vpack.c.b16 %v1705, %v1702
        %v1742 = vpack.c.b16 %v1709, %v1706
        %v1743 = vpack.c.b16 %v1710, %v1707
        %v1744 = vpack.c.b16 %v1711, %v1708
        %v1745 = vpack.c.b16 %v1715, %v1712
        %v1746 = vpack.c.b16 %v1716, %v1713
        %v1747 = vpack.c.b16 %v1717, %v1714
        %v1748 = vpack.c.b16 %v1721, %v1718
        %v1749 = vpack.c.b16 %v1722, %v1719
        %v1750 = vpack.c.b16 %v1723, %v1720
        %v1778 = vsel %vm763, %v1611, 0
        %v1780 = vsel %vm763, %v1615, 0
        %v1782 = vsel %vm763, %v1619, 0
        %v1784 = vsel %vm763, %v1623, 0
        %v1786 = vsel %vm763, %v1627, 0
        %v1788 = vsel %vm763, %v1626, 0
        %1790 = vmatprep.subr.bf16.mxu0 %v1725
        %1791 = vmatpush1.bf16.msra.mxu0 %v1724
        %1792 = vmatprep.subr.bf16.mxu0 %v1728
        %1793 = vmatpush1.bf16.msra.mxu0 %v1727
        %1794 = vmatprep.subr.bf16.mxu0 %v1731
        %1795 = vmatpush1.bf16.msra.mxu0 %v1730
        %1796 = vmatprep.subr.bf16.mxu0 %v1734
        %1797 = vmatpush1.bf16.msra.mxu0 %v1733
        %1798 = vmatprep.subr.bf16.mxu0 %v1737
        %1799 = vmatpush1.bf16.msra.mxu0 %v1736
        %1800 = vmatprep.subr.bf16.mxu0 %v1740
        %1801 = vmatpush1.bf16.msra.mxu0 %v1739
        %1802 = vmatprep.subr.bf16.mxu0 %v1743
        %1803 = vmatpush1.bf16.msra.mxu0 %v1742
        %1804 = vmatprep.subr.bf16.mxu0 %v1746
        %1805 = vmatpush1.bf16.msra.mxu0 %v1745
        %1806 = vmatprep.subr.bf16.mxu0 %v1749
        %1807 = vmatpush1.bf16.msra.mxu0 %v1748
        %1808 = vmatprep.subr.bf16.mxu0 0
        %1809 = vmatpush1.bf16.msra.mxu0 0
        %1810 = vmatprep.subr.bf16.mxu0 0
        %1811 = vmatpush1.bf16.msra.mxu0 0
        %1812 = vmatprep.subr.bf16.mxu0 0
        %1813 = vmatpush1.bf16.msra.mxu0 0
        %1814 = vmatprep.subr.bf16.mxu0 0
        %1815 = vmatpush1.bf16.msra.mxu0 0
        %1816 = vmatprep.subr.bf16.mxu0 0
        %1817 = vmatpush1.bf16.msra.mxu0 0
        %1818 = vmatprep.subr.bf16.mxu0 0
        %1819 = vmatpush1.bf16.msra.mxu0 0
        %1820 = vmatprep.subr.bf16.mxu0 0
        %1821 = vmatpush1.bf16.msra.mxu0 0
        %1822 = vmatprep.mubr.f32.mxu0 %v1778
        %1823 = vmatmul.mubr.f32.gmra.mrb[0].mxu0 %v1608
        %v1824 = vpop.f32.mrb[0].mxu0
        %v1825 = vadd.f32 0.0, %v1824
        %v1826 = vpop.f32.mrb[0].mxu0
        %v1827 = vadd.f32 0.0, %v1826
        %1828 = vmatprep.mubr.f32.mxu0 %v1780
        %1829 = vmatmul.mubr.f32.gmra.mrb[0].mxu0 %v1613
        %v1830 = vpop.f32.mrb[0].mxu0
        %v1831 = vadd.f32 0.0, %v1830
        %v1832 = vpop.f32.mrb[0].mxu0
        %v1833 = vadd.f32 0.0, %v1832
        %1834 = vmatprep.mubr.f32.mxu0 %v1782
        %1835 = vmatmul.mubr.f32.gmra.mrb[0].mxu0 %v1617
        %v1836 = vpop.f32.mrb[0].mxu0
        %v1837 = vadd.f32 0.0, %v1836
        %v1838 = vpop.f32.mrb[0].mxu0
        %v1839 = vadd.f32 0.0, %v1838
        %1840 = vmatprep.mubr.f32.mxu0 %v1784
        %1841 = vmatmul.mubr.f32.gmra.mrb[0].mxu0 %v1621
        %v1842 = vpop.f32.mrb[0].mxu0
        %v1843 = vadd.f32 0.0, %v1842
        %v1844 = vpop.f32.mrb[0].mxu0
        %v1845 = vadd.f32 0.0, %v1844
        %1846 = vmatprep.mubr.f32.mxu0 %v1786
        %1847 = vmatmul.mubr.f32.gmra.mrb[0].mxu0 %v1625
        %v1848 = vpop.f32.mrb[0].mxu0
        %v1849 = vadd.f32 0.0, %v1848
        %v1850 = vpop.f32.mrb[0].mxu0
        %v1851 = vadd.f32 0.0, %v1850
        %1852 = vmatprep.mubr.f32.mxu0 %v1788
        %1853 = vmatmul.mubr.f32.gmra.mrb[0].mxu0 %v1624
        %v1854 = vpop.f32.mrb[0].mxu0
        %v1855 = vadd.f32 0.0, %v1854
        %v1856 = vpop.f32.mrb[0].mxu0
        %v1857 = vadd.f32 0.0, %v1856
        %1858 = vdwg.mxu0
        %1859 = vmatprep.subr.bf16.mxu0 0
        %1860 = vmatpush1.bf16.msra.mxu0 %v1726
        %1861 = vmatprep.subr.bf16.mxu0 0
        %1862 = vmatpush1.bf16.msra.mxu0 %v1729
        %1863 = vmatprep.subr.bf16.mxu0 0
        %1864 = vmatpush1.bf16.msra.mxu0 %v1732
        %1865 = vmatprep.subr.bf16.mxu0 0
        %1866 = vmatpush1.bf16.msra.mxu0 %v1735
        %1867 = vmatprep.subr.bf16.mxu0 0
        %1868 = vmatpush1.bf16.msra.mxu0 %v1738
        %1869 = vmatprep.subr.bf16.mxu0 0
        %1870 = vmatpush1.bf16.msra.mxu0 %v1741
        %1871 = vmatprep.subr.bf16.mxu0 0
        %1872 = vmatpush1.bf16.msra.mxu0 %v1744
        %1873 = vmatprep.subr.bf16.mxu0 0
        %1874 = vmatpush1.bf16.msra.mxu0 %v1747
        %1875 = vmatprep.subr.bf16.mxu0 0
        %1876 = vmatpush1.bf16.msra.mxu0 %v1750
        %1877 = vmatprep.subr.bf16.mxu0 0
        %1878 = vmatpush1.bf16.msra.mxu0 0
        %1879 = vmatprep.subr.bf16.mxu0 0
        %1880 = vmatpush1.bf16.msra.mxu0 0
        %1881 = vmatprep.subr.bf16.mxu0 0
        %1882 = vmatpush1.bf16.msra.mxu0 0
        %1883 = vmatprep.subr.bf16.mxu0 0
        %1884 = vmatpush1.bf16.msra.mxu0 0
        %1885 = vmatprep.subr.bf16.mxu0 0
        %1886 = vmatpush1.bf16.msra.mxu0 0
        %1887 = vmatprep.subr.bf16.mxu0 0
        %1888 = vmatpush1.bf16.msra.mxu0 0
        %1889 = vmatprep.subr.bf16.mxu0 0
        %1890 = vmatpush1.bf16.msra.mxu0 0
        %1891 = vmatprep.mubr.f32.mxu0 %v1778
        %1892 = vmatmul.mubr.f32.gmra.mrb[0].mxu0 %v1608
        %v1893 = vpop.f32.mrb[0].mxu0
        %v1894 = vadd.f32 0.0, %v1893
        %v1895 = vpop.f32.mrb[0].mxu0
        %1896 = vmatprep.mubr.f32.mxu0 %v1780
        %1897 = vmatmul.mubr.f32.gmra.mrb[0].mxu0 %v1613
        %v1898 = vpop.f32.mrb[0].mxu0
        %v1899 = vadd.f32 0.0, %v1898
        %v1900 = vpop.f32.mrb[0].mxu0
        %1901 = vmatprep.mubr.f32.mxu0 %v1782
        %1902 = vmatmul.mubr.f32.gmra.mrb[0].mxu0 %v1617
        %v1903 = vpop.f32.mrb[0].mxu0
        %v1904 = vadd.f32 0.0, %v1903
        %v1905 = vpop.f32.mrb[0].mxu0
        %1906 = vmatprep.mubr.f32.mxu0 %v1784
        %1907 = vmatmul.mubr.f32.gmra.mrb[0].mxu0 %v1621
        %v1908 = vpop.f32.mrb[0].mxu0
        %v1909 = vadd.f32 0.0, %v1908
        %v1910 = vpop.f32.mrb[0].mxu0
        %1911 = vmatprep.mubr.f32.mxu0 %v1786
        %1912 = vmatmul.mubr.f32.gmra.mrb[0].mxu0 %v1625
        %v1913 = vpop.f32.mrb[0].mxu0
        %v1914 = vadd.f32 0.0, %v1913
        %v1915 = vpop.f32.mrb[0].mxu0
        %1916 = vmatprep.mubr.f32.mxu0 %v1788
        %1917 = vmatmul.mubr.f32.gmra.mrb[0].mxu0 %v1624
        %v1918 = vpop.f32.mrb[0].mxu0
        %v1919 = vadd.f32 0.0, %v1918
        %v1920 = vpop.f32.mrb[0].mxu0
        %1921 = vdwg.mxu0
        %v1922 = vadd.f32 %v1550, %v1825
        %v1923 = vadd.f32 %v1551, %v1827
        %v1924 = vadd.f32 %v1552, %v1894
        %v1925 = vadd.f32 %v1553, %v1831
        %v1926 = vadd.f32 %v1554, %v1833
        %v1927 = vadd.f32 %v1555, %v1899
        %v1928 = vadd.f32 %v1556, %v1837
        %v1929 = vadd.f32 %v1557, %v1839
        %v1930 = vadd.f32 %v1558, %v1904
        %v1931 = vadd.f32 %v1559, %v1843
        %v1932 = vadd.f32 %v1560, %v1845
        %v1933 = vadd.f32 %v1561, %v1909
        %v1934 = vadd.f32 %v1562, %v1849
        %v1935 = vadd.f32 %v1563, %v1851
        %v1936 = vadd.f32 %v1564, %v1914
        %v1937 = vadd.f32 %v1565, %v1855
        %v1938 = vadd.f32 %v1566, %v1857
        %v1939 = vadd.f32 %v1567, %v1919
        %s1940 = scalar_lea.vmem %s1, 864
        %v1941 = vld [vmem:[%s1940] sm:$0xff]
        %v1942 = vld [vmem:[%s1940 + $0x8] sm:$0xf]
        %v1943 = vld [vmem:[%s1940 + $0xc] sm:$0xff]
        %v1944 = vld [vmem:[%s1940 + $0x14] sm:$0xf]
        %v1945 = vld [vmem:[%s1940 + $0x18] sm:$0xff]
        %v1946 = vld [vmem:[%s1940 + $0x20] sm:$0xf]
        %v1947 = vld [vmem:[%s1940 + $0x24] sm:$0xff]
        %v1948 = vld [vmem:[%s1940 + $0x2c] sm:$0xf]
        %v1949 = vld [vmem:[%s1940 + $0x30] sm:$0xff]
        %v1950 = vld [vmem:[%s1940 + $0x38] sm:$0xf]
        %v1951 = vld [vmem:[%s1940 + $0x3c] sm:$0xff]
        %v1952 = vld [vmem:[%s1940 + $0x44] sm:$0xf]
        %v1953 = vld [vmem:[%s1940 + $0x48] sm:$0xff]
        %v1954 = vld [vmem:[%s1940 + $0x50] sm:$0xf]
        %v1955 = vld [vmem:[%s1940 + $0x54] sm:$0xff]
        %v1956 = vld [vmem:[%s1940 + $0x5c] sm:$0xf]
        %v1957 = vld [vmem:[%s1940 + $0x60] sm:$0xff]
        %v1958 = vld [vmem:[%s1940 + $0x68] sm:$0xf]
        %v1959 = vld [vmem:[%s1940 + $0x6c] sm:$0xff]
        %v1960 = vld [vmem:[%s1940 + $0x74] sm:$0xf]
        %v1961 = vld [vmem:[%s1940 + $0x78] sm:$0xff]
        %v1962 = vld [vmem:[%s1940 + $0x80] sm:$0xf]
        %v1963 = vld [vmem:[%s1940 + $0x84] sm:$0xff]
        %v1964 = vld [vmem:[%s1940 + $0x8c] sm:$0xf]
        %v1965 = vld [vmem:[%s1940 + $0x90] sm:$0xff]
        %v1966 = vld [vmem:[%s1940 + $0x98] sm:$0xf]
        %v1967 = vld [vmem:[%s1940 + $0x9c] sm:$0xff]
        %v1968 = vld [vmem:[%s1940 + $0xa4] sm:$0xf]
        %v1969 = vld [vmem:[%s1940 + $0xa8] sm:$0xff]
        %v1970 = vld [vmem:[%s1940 + $0xb0] sm:$0xf]
        %v1971 = vld [vmem:[%s1940 + $0xb4] sm:$0xff]
        %v1972 = vld [vmem:[%s1940 + $0xbc] sm:$0xf]
        %v1973 = vld [vmem:[%s1940 + $0xc0] sm:$0xff]
        %v1974 = vld [vmem:[%s1940 + $0xc8] sm:$0xf]
        %v1975 = vld [vmem:[%s1940 + $0xcc] sm:$0xff]
        %v1976 = vld [vmem:[%s1940 + $0xd4] sm:$0xf]
        %vm1977 = vcmask 1043456
        %v1978 = vrot.slane %v493, 4
        %v1979 = vrot.slane %v495, 4
        %v1980 = vsel %vm1977, %v1978, %v1979
        %v1981 = vrot.slane %v494, 4
        %v1982 = vrot.slane %v496, 4
        %v1983 = vsel %vm1977, %v1981, %v1982
        %v1984 = vrot.slane %v497, 4
        %v1985 = vsel %vm1977, %v1979, %v1984
        %v1986 = vrot.slane %v498, 4
        %v1987 = vsel %vm1977, %v1982, %v1986
        %v1988 = vrot.slane %v499, 4
        %v1989 = vsel %vm1977, %v1984, %v1988
        %v1990 = vrot.slane %v500, 4
        %v1991 = vsel %vm1977, %v1986, %v1990
        %v1992 = vrot.slane %v501, 4
        %v1993 = vsel %vm1977, %v1988, %v1992
        %v1994 = vrot.slane %v502, 4
        %v1995 = vsel %vm1977, %v1990, %v1994
        %v1996 = vrot.slane %v503, 4
        %v1997 = vsel %vm1977, %v1992, %v1996
        %v1998 = vrot.slane %v504, 4
        %v1999 = vsel %vm1977, %v1994, %v1998
        %v2042 = vunpack.c.l.b16 %v1941
        %v2043 = vunpack.c.h.b16 %v1941
        %v2044 = vunpack.c.l.b16 %v1942
        %v2045 = vunpack.c.l.b16 %v1943
        %v2046 = vunpack.c.h.b16 %v1943
        %v2047 = vunpack.c.l.b16 %v1944
        %v2048 = vunpack.c.l.b16 %v1945
        %v2049 = vunpack.c.h.b16 %v1945
        %v2050 = vunpack.c.l.b16 %v1946
        %v2051 = vunpack.c.l.b16 %v1947
        %v2052 = vunpack.c.h.b16 %v1947
        %v2053 = vunpack.c.l.b16 %v1948
        %v2054 = vunpack.c.l.b16 %v1949
        %v2055 = vunpack.c.h.b16 %v1949
        %v2056 = vunpack.c.l.b16 %v1950
        %v2057 = vunpack.c.l.b16 %v1951
        %v2058 = vunpack.c.h.b16 %v1951
        %v2059 = vunpack.c.l.b16 %v1952
        %v2060 = vunpack.c.l.b16 %v1953
        %v2061 = vunpack.c.h.b16 %v1953
        %v2062 = vunpack.c.l.b16 %v1954
        %v2063 = vunpack.c.l.b16 %v1955
        %v2064 = vunpack.c.h.b16 %v1955
        %v2065 = vunpack.c.l.b16 %v1956
        %v2066 = vunpack.c.l.b16 %v1957
        %v2067 = vunpack.c.h.b16 %v1957
        %v2068 = vunpack.c.l.b16 %v1958
        %v2069 = vunpack.c.l.b16 %v1959
        %v2070 = vunpack.c.h.b16 %v1959
        %v2071 = vunpack.c.l.b16 %v1960
        %v2072 = vunpack.c.l.b16 %v1961
        %v2073 = vunpack.c.h.b16 %v1961
        %v2074 = vunpack.c.l.b16 %v1962
        %v2075 = vunpack.c.l.b16 %v1963
        %v2076 = vunpack.c.h.b16 %v1963
        %v2077 = vunpack.c.l.b16 %v1964
        %v2078 = vunpack.c.l.b16 %v1965
        %v2079 = vunpack.c.h.b16 %v1965
        %v2080 = vunpack.c.l.b16 %v1966
        %v2081 = vunpack.c.l.b16 %v1967
        %v2082 = vunpack.c.h.b16 %v1967
        %v2083 = vunpack.c.l.b16 %v1968
        %v2084 = vunpack.c.l.b16 %v1969
        %v2085 = vunpack.c.h.b16 %v1969
        %v2086 = vunpack.c.l.b16 %v1970
        %v2087 = vunpack.c.l.b16 %v1971
        %v2088 = vunpack.c.h.b16 %v1971
        %v2089 = vunpack.c.l.b16 %v1972
        %v2090 = vunpack.c.l.b16 %v1973
        %v2091 = vunpack.c.h.b16 %v1973
        %v2092 = vunpack.c.l.b16 %v1974
        %v2093 = vunpack.c.l.b16 %v1975
        %v2094 = vunpack.c.h.b16 %v1975
        %v2095 = vunpack.c.l.b16 %v1976
        %v2096 = vpack.c.b16 %v2045, %v2042
        %v2097 = vpack.c.b16 %v2046, %v2043
        %v2098 = vpack.c.b16 %v2047, %v2044
        %v2099 = vpack.c.b16 %v2051, %v2048
        %v2100 = vpack.c.b16 %v2052, %v2049
        %v2101 = vpack.c.b16 %v2053, %v2050
        %v2102 = vpack.c.b16 %v2057, %v2054
        %v2103 = vpack.c.b16 %v2058, %v2055
        %v2104 = vpack.c.b16 %v2059, %v2056
        %v2105 = vpack.c.b16 %v2063, %v2060
        %v2106 = vpack.c.b16 %v2064, %v2061
        %v2107 = vpack.c.b16 %v2065, %v2062
        %v2108 = vpack.c.b16 %v2069, %v2066
        %v2109 = vpack.c.b16 %v2070, %v2067
        %v2110 = vpack.c.b16 %v2071, %v2068
        %v2111 = vpack.c.b16 %v2075, %v2072
        %v2112 = vpack.c.b16 %v2076, %v2073
        %v2113 = vpack.c.b16 %v2077, %v2074
        %v2114 = vpack.c.b16 %v2081, %v2078
        %v2115 = vpack.c.b16 %v2082, %v2079
        %v2116 = vpack.c.b16 %v2083, %v2080
        %v2117 = vpack.c.b16 %v2087, %v2084
        %v2118 = vpack.c.b16 %v2088, %v2085
        %v2119 = vpack.c.b16 %v2089, %v2086
        %v2120 = vpack.c.b16 %v2093, %v2090
        %v2121 = vpack.c.b16 %v2094, %v2091
        %v2122 = vpack.c.b16 %v2095, %v2092
        %v2150 = vsel %vm763, %v1983, 0
        %v2152 = vsel %vm763, %v1987, 0
        %v2154 = vsel %vm763, %v1991, 0
        %v2156 = vsel %vm763, %v1995, 0
        %v2158 = vsel %vm763, %v1999, 0
        %v2160 = vsel %vm763, %v1998, 0
        %2162 = vmatprep.subr.bf16.mxu0 %v2097
        %2163 = vmatpush1.bf16.msra.mxu0 %v2096
        %2164 = vmatprep.subr.bf16.mxu0 %v2100
        %2165 = vmatpush1.bf16.msra.mxu0 %v2099
        %2166 = vmatprep.subr.bf16.mxu0 %v2103
        %2167 = vmatpush1.bf16.msra.mxu0 %v2102
        %2168 = vmatprep.subr.bf16.mxu0 %v2106
        %2169 = vmatpush1.bf16.msra.mxu0 %v2105
        %2170 = vmatprep.subr.bf16.mxu0 %v2109
        %2171 = vmatpush1.bf16.msra.mxu0 %v2108
        %2172 = vmatprep.subr.bf16.mxu0 %v2112
        %2173 = vmatpush1.bf16.msra.mxu0 %v2111
        %2174 = vmatprep.subr.bf16.mxu0 %v2115
        %2175 = vmatpush1.bf16.msra.mxu0 %v2114
        %2176 = vmatprep.subr.bf16.mxu0 %v2118
        %2177 = vmatpush1.bf16.msra.mxu0 %v2117
        %2178 = vmatprep.subr.bf16.mxu0 %v2121
        %2179 = vmatpush1.bf16.msra.mxu0 %v2120
        %2180 = vmatprep.subr.bf16.mxu0 0
        %2181 = vmatpush1.bf16.msra.mxu0 0
        %2182 = vmatprep.subr.bf16.mxu0 0
        %2183 = vmatpush1.bf16.msra.mxu0 0
        %2184 = vmatprep.subr.bf16.mxu0 0
        %2185 = vmatpush1.bf16.msra.mxu0 0
        %2186 = vmatprep.subr.bf16.mxu0 0
        %2187 = vmatpush1.bf16.msra.mxu0 0
        %2188 = vmatprep.subr.bf16.mxu0 0
        %2189 = vmatpush1.bf16.msra.mxu0 0
        %2190 = vmatprep.subr.bf16.mxu0 0
        %2191 = vmatpush1.bf16.msra.mxu0 0
        %2192 = vmatprep.subr.bf16.mxu0 0
        %2193 = vmatpush1.bf16.msra.mxu0 0
        %2194 = vmatprep.mubr.f32.mxu0 %v2150
        %2195 = vmatmul.mubr.f32.gmra.mrb[0].mxu0 %v1980
        %v2196 = vpop.f32.mrb[0].mxu0
        %v2197 = vadd.f32 0.0, %v2196
        %v2198 = vpop.f32.mrb[0].mxu0
        %v2199 = vadd.f32 0.0, %v2198
        %2200 = vmatprep.mubr.f32.mxu0 %v2152
        %2201 = vmatmul.mubr.f32.gmra.mrb[0].mxu0 %v1985
        %v2202 = vpop.f32.mrb[0].mxu0
        %v2203 = vadd.f32 0.0, %v2202
        %v2204 = vpop.f32.mrb[0].mxu0
        %v2205 = vadd.f32 0.0, %v2204
        %2206 = vmatprep.mubr.f32.mxu0 %v2154
        %2207 = vmatmul.mubr.f32.gmra.mrb[0].mxu0 %v1989
        %v2208 = vpop.f32.mrb[0].mxu0
        %v2209 = vadd.f32 0.0, %v2208
        %v2210 = vpop.f32.mrb[0].mxu0
        %v2211 = vadd.f32 0.0, %v2210
        %2212 = vmatprep.mubr.f32.mxu0 %v2156
        %2213 = vmatmul.mubr.f32.gmra.mrb[0].mxu0 %v1993
        %v2214 = vpop.f32.mrb[0].mxu0
        %v2215 = vadd.f32 0.0, %v2214
        %v2216 = vpop.f32.mrb[0].mxu0
        %v2217 = vadd.f32 0.0, %v2216
        %2218 = vmatprep.mubr.f32.mxu0 %v2158
        %2219 = vmatmul.mubr.f32.gmra.mrb[0].mxu0 %v1997
        %v2220 = vpop.f32.mrb[0].mxu0
        %v2221 = vadd.f32 0.0, %v2220
        %v2222 = vpop.f32.mrb[0].mxu0
        %v2223 = vadd.f32 0.0, %v2222
        %2224 = vmatprep.mubr.f32.mxu0 %v2160
        %2225 = vmatmul.mubr.f32.gmra.mrb[0].mxu0 %v1996
        %v2226 = vpop.f32.mrb[0].mxu0
        %v2227 = vadd.f32 0.0, %v2226
        %v2228 = vpop.f32.mrb[0].mxu0
        %v2229 = vadd.f32 0.0, %v2228
        %2230 = vdwg.mxu0
        %2231 = vmatprep.subr.bf16.mxu0 0
        %2232 = vmatpush1.bf16.msra.mxu0 %v2098
        %2233 = vmatprep.subr.bf16.mxu0 0
        %2234 = vmatpush1.bf16.msra.mxu0 %v2101
        %2235 = vmatprep.subr.bf16.mxu0 0
        %2236 = vmatpush1.bf16.msra.mxu0 %v2104
        %2237 = vmatprep.subr.bf16.mxu0 0
        %2238 = vmatpush1.bf16.msra.mxu0 %v2107
        %2239 = vmatprep.subr.bf16.mxu0 0
        %2240 = vmatpush1.bf16.msra.mxu0 %v2110
        %2241 = vmatprep.subr.bf16.mxu0 0
        %2242 = vmatpush1.bf16.msra.mxu0 %v2113
        %2243 = vmatprep.subr.bf16.mxu0 0
        %2244 = vmatpush1.bf16.msra.mxu0 %v2116
        %2245 = vmatprep.subr.bf16.mxu0 0
        %2246 = vmatpush1.bf16.msra.mxu0 %v2119
        %2247 = vmatprep.subr.bf16.mxu0 0
        %2248 = vmatpush1.bf16.msra.mxu0 %v2122
        %2249 = vmatprep.subr.bf16.mxu0 0
        %2250 = vmatpush1.bf16.msra.mxu0 0
        %2251 = vmatprep.subr.bf16.mxu0 0
        %2252 = vmatpush1.bf16.msra.mxu0 0
        %2253 = vmatprep.subr.bf16.mxu0 0
        %2254 = vmatpush1.bf16.msra.mxu0 0
        %2255 = vmatprep.subr.bf16.mxu0 0
        %2256 = vmatpush1.bf16.msra.mxu0 0
        %2257 = vmatprep.subr.bf16.mxu0 0
        %2258 = vmatpush1.bf16.msra.mxu0 0
        %2259 = vmatprep.subr.bf16.mxu0 0
        %2260 = vmatpush1.bf16.msra.mxu0 0
        %2261 = vmatprep.subr.bf16.mxu0 0
        %2262 = vmatpush1.bf16.msra.mxu0 0
        %2263 = vmatprep.mubr.f32.mxu0 %v2150
        %2264 = vmatmul.mubr.f32.gmra.mrb[0].mxu0 %v1980
        %v2265 = vpop.f32.mrb[0].mxu0
        %v2266 = vadd.f32 0.0, %v2265
        %v2267 = vpop.f32.mrb[0].mxu0
        %2268 = vmatprep.mubr.f32.mxu0 %v2152
        %2269 = vmatmul.mubr.f32.gmra.mrb[0].mxu0 %v1985
        %v2270 = vpop.f32.mrb[0].mxu0
        %v2271 = vadd.f32 0.0, %v2270
        %v2272 = vpop.f32.mrb[0].mxu0
        %2273 = vmatprep.mubr.f32.mxu0 %v2154
        %2274 = vmatmul.mubr.f32.gmra.mrb[0].mxu0 %v1989
        %v2275 = vpop.f32.mrb[0].mxu0
        %v2276 = vadd.f32 0.0, %v2275
        %v2277 = vpop.f32.mrb[0].mxu0
        %2278 = vmatprep.mubr.f32.mxu0 %v2156
        %2279 = vmatmul.mubr.f32.gmra.mrb[0].mxu0 %v1993
        %v2280 = vpop.f32.mrb[0].mxu0
        %v2281 = vadd.f32 0.0, %v2280
        %v2282 = vpop.f32.mrb[0].mxu0
        %2283 = vmatprep.mubr.f32.mxu0 %v2158
        %2284 = vmatmul.mubr.f32.gmra.mrb[0].mxu0 %v1997
        %v2285 = vpop.f32.mrb[0].mxu0
        %v2286 = vadd.f32 0.0, %v2285
        %v2287 = vpop.f32.mrb[0].mxu0
        %2288 = vmatprep.mubr.f32.mxu0 %v2160
        %2289 = vmatmul.mubr.f32.gmra.mrb[0].mxu0 %v1996
        %v2290 = vpop.f32.mrb[0].mxu0
        %v2291 = vadd.f32 0.0, %v2290
        %v2292 = vpop.f32.mrb[0].mxu0
        %2293 = vdwg.mxu0
        %v2294 = vadd.f32 %v1922, %v2197
        %v2295 = vadd.f32 %v1923, %v2199
        %v2296 = vadd.f32 %v1924, %v2266
        %v2297 = vadd.f32 %v1925, %v2203
        %v2298 = vadd.f32 %v1926, %v2205
        %v2299 = vadd.f32 %v1927, %v2271
        %v2300 = vadd.f32 %v1928, %v2209
        %v2301 = vadd.f32 %v1929, %v2211
        %v2302 = vadd.f32 %v1930, %v2276
        %v2303 = vadd.f32 %v1931, %v2215
        %v2304 = vadd.f32 %v1932, %v2217
        %v2305 = vadd.f32 %v1933, %v2281
        %v2306 = vadd.f32 %v1934, %v2221
        %v2307 = vadd.f32 %v1935, %v2223
        %v2308 = vadd.f32 %v1936, %v2286
        %v2309 = vadd.f32 %v1937, %v2227
        %v2310 = vadd.f32 %v1938, %v2229
        %v2311 = vadd.f32 %v1939, %v2291
        %v2312 = vld [vmem:[%s2] sm:$0x7]
        %v2314 = vlaneseq
        %v2315 = vshrl.u32 %v2314, 7
        %v2316 = vsub.s32 0, %v2315
        %v2317 = vrot.slane %v2312, %v2316
        %v2318 = vlaneseq
        %v2319 = vshrl.u32 %v2318, 7
        %v2320 = vsub.s32 1, %v2319
        %v2321 = vrot.slane %v2312, %v2320
        %v2322 = vlaneseq
        %v2323 = vshrl.u32 %v2322, 7
        %v2324 = vsub.s32 2, %v2323
        %v2325 = vrot.slane %v2312, %v2324
        %v2329 = vadd.f32 %v2294, %v2317
        %v2330 = vadd.f32 %v2295, %v2321
        %v2331 = vadd.f32 %v2296, %v2325
        %v2332 = vadd.f32 %v2297, %v2317
        %v2333 = vadd.f32 %v2298, %v2321
        %v2334 = vadd.f32 %v2299, %v2325
        %v2335 = vadd.f32 %v2300, %v2317
        %v2336 = vadd.f32 %v2301, %v2321
        %v2337 = vadd.f32 %v2302, %v2325
        %v2338 = vadd.f32 %v2303, %v2317
        %v2339 = vadd.f32 %v2304, %v2321
        %v2340 = vadd.f32 %v2305, %v2325
        %v2341 = vadd.f32 %v2306, %v2317
        %v2342 = vadd.f32 %v2307, %v2321
        %v2343 = vadd.f32 %v2308, %v2325
        %v2344 = vadd.f32 %v2309, %v2317
        %v2345 = vadd.f32 %v2310, %v2321
        %v2346 = vadd.f32 %v2311, %v2325
        %v2347 = vmax.f32 %v2329, 0.0
        %v2348 = vmax.f32 %v2330, 0.0
        %v2349 = vmax.f32 %v2331, 0.0
        %v2350 = vmax.f32 %v2332, 0.0
        %v2351 = vmax.f32 %v2333, 0.0
        %v2352 = vmax.f32 %v2334, 0.0
        %v2353 = vmax.f32 %v2335, 0.0
        %v2354 = vmax.f32 %v2336, 0.0
        %v2355 = vmax.f32 %v2337, 0.0
        %v2356 = vmax.f32 %v2338, 0.0
        %v2357 = vmax.f32 %v2339, 0.0
        %v2358 = vmax.f32 %v2340, 0.0
        %v2359 = vmax.f32 %v2341, 0.0
        %v2360 = vmax.f32 %v2342, 0.0
        %v2361 = vmax.f32 %v2343, 0.0
        %v2362 = vmax.f32 %v2344, 0.0
        %v2363 = vmax.f32 %v2345, 0.0
        %v2364 = vmax.f32 %v2346, 0.0
        %v2365 = vld [vmem:[%s3] sm:$0xf]
        %v2366 = vld [vmem:[%s3 + $0x4] sm:$0xf]
        %v2367 = vld [vmem:[%s3 + $0x8] sm:$0x7]
        %v2371 = vunpack.c.l.b16 %v2365
        %v2372 = vunpack.c.l.b16 %v2366
        %v2373 = vunpack.c.l.b16 %v2367
        %v2374 = vpack.c.b16 %v2372, %v2371
        %v2375 = vpack.c.b16 %v2373, %v2373
        %vm2376 = vcmask 359424
        %v2378 = vsel %vm2376, %v2374, 0
        %v2381 = vsel %vm2376, %v2375, 0
        %v2384 = vsel %vm1977, %v2362, 0
        %v2387 = vsel %vm1977, %v2363, 0
        %v2390 = vsel %vm1977, %v2364, 0
        %2392 = vmatprep.subr.mxu0 %v2348
        %2393 = vmatpush1.msra.mxu0 %v2347
        %2394 = vmatprep.subr.mxu0 %v2351
        %2395 = vmatpush1.msra.mxu0 %v2350
        %2396 = vmatprep.subr.mxu0 %v2354
        %2397 = vmatpush1.msra.mxu0 %v2353
        %2398 = vmatprep.subr.mxu0 %v2357
        %2399 = vmatpush1.msra.mxu0 %v2356
        %2400 = vmatprep.subr.mxu0 %v2360
        %2401 = vmatpush1.msra.mxu0 %v2359
        %2402 = vmatprep.subr.mxu0 %v2387
        %2403 = vmatpush1.msra.mxu0 %v2384
        %2404 = vmatprep.subr.mxu0 0.0
        %2405 = vmatpush1.msra.mxu0 0.0
        %2406 = vmatprep.subr.mxu0 0.0
        %2407 = vmatpush1.msra.mxu0 0.0
        %2408 = vmatprep.subr.mxu0 0.0
        %2409 = vmatpush1.msra.mxu0 0.0
        %2410 = vmatprep.subr.mxu0 0.0
        %2411 = vmatpush1.msra.mxu0 0.0
        %2412 = vmatprep.subr.mxu0 0.0
        %2413 = vmatpush1.msra.mxu0 0.0
        %2414 = vmatprep.subr.mxu0 0.0
        %2415 = vmatpush1.msra.mxu0 0.0
        %2416 = vmatprep.subr.mxu0 0.0
        %2417 = vmatpush1.msra.mxu0 0.0
        %2418 = vmatprep.subr.mxu0 0.0
        %2419 = vmatpush1.msra.mxu0 0.0
        %2420 = vmatprep.subr.mxu0 0.0
        %2421 = vmatpush1.msra.mxu0 0.0
        %2422 = vmatprep.subr.mxu0 0.0
        %2423 = vmatpush1.msra.mxu0 0.0
        %2424 = vmatprep.subr.mxu0 0.0
        %2425 = vmatpush1.msra.mxu0 0.0
        %2426 = vmatprep.subr.mxu0 0.0
        %2427 = vmatpush1.msra.mxu0 0.0
        %2428 = vmatprep.subr.mxu0 0.0
        %2429 = vmatpush1.msra.mxu0 0.0
        %2430 = vmatprep.subr.mxu0 0.0
        %2431 = vmatpush1.msra.mxu0 0.0
        %2432 = vmatprep.subr.mxu0 0.0
        %2433 = vmatpush1.msra.mxu0 0.0
        %2434 = vmatprep.subr.mxu0 0.0
        %2435 = vmatpush1.msra.mxu0 0.0
        %2436 = vmatprep.subr.mxu0 0.0
        %2437 = vmatpush1.msra.mxu0 0.0
        %2438 = vmatprep.subr.mxu0 0.0
        %2439 = vmatpush1.msra.mxu0 0.0
        %2440 = vmatprep.subr.mxu0 0.0
        %2441 = vmatpush1.msra.mxu0 0.0
        %2442 = vmatprep.subr.mxu0 0.0
        %2443 = vmatpush1.msra.mxu0 0.0
        %2444 = vmatprep.subr.mxu0 0.0
        %2445 = vmatpush1.msra.mxu0 0.0
        %2446 = vmatprep.subr.mxu0 0.0
        %2447 = vmatpush1.msra.mxu0 0.0
        %2448 = vmatprep.subr.mxu0 0.0
        %2449 = vmatpush1.msra.mxu0 0.0
        %2450 = vmatprep.subr.mxu0 0.0
        %2451 = vmatpush1.msra.mxu0 0.0
        %2452 = vmatprep.subr.mxu0 0.0
        %2453 = vmatpush1.msra.mxu0 0.0
        %2454 = vmatprep.subr.mxu0 0.0
        %2455 = vmatpush1.msra.mxu0 0.0
        %2456 = vmatprep.mubr.bf16.mxu0 0
        %2457 = vmatmul.mubr.bf16.gmra.mrb[0].mxu0 %v2378
        %v2458 = vpop.f32.mrb[0].mxu0
        %v2459 = vadd.f32 0.0, %v2458
        %v2460 = vpop.f32.mrb[0].mxu0
        %v2461 = vadd.f32 0.0, %v2460
        %v2462 = vpop.f32.mrb[0].mxu0
        %v2463 = vadd.f32 0.0, %v2462
        %v2464 = vpop.f32.mrb[0].mxu0
        %v2465 = vadd.f32 0.0, %v2464
        %2466 = vmatprep.mubr.bf16.mxu0 0
        %2467 = vmatmul.mubr.bf16.gmra.mrb[0].mxu0 %v2381
        %v2468 = vpop.f32.mrb[0].mxu0
        %v2469 = vadd.f32 0.0, %v2468
        %v2470 = vpop.f32.mrb[0].mxu0
        %v2471 = vadd.f32 0.0, %v2470
        %v2472 = vpop.f32.mrb[0].mxu0
        %v2473 = vpop.f32.mrb[0].mxu0
        %2474 = vdwg.mxu0
        %2475 = vmatprep.subr.mxu0 0.0
        %2476 = vmatpush1.msra.mxu0 %v2349
        %2477 = vmatprep.subr.mxu0 0.0
        %2478 = vmatpush1.msra.mxu0 %v2352
        %2479 = vmatprep.subr.mxu0 0.0
        %2480 = vmatpush1.msra.mxu0 %v2355
        %2481 = vmatprep.subr.mxu0 0.0
        %2482 = vmatpush1.msra.mxu0 %v2358
        %2483 = vmatprep.subr.mxu0 0.0
        %2484 = vmatpush1.msra.mxu0 %v2361
        %2485 = vmatprep.subr.mxu0 0.0
        %2486 = vmatpush1.msra.mxu0 %v2390
        %2487 = vmatprep.subr.mxu0 0.0
        %2488 = vmatpush1.msra.mxu0 0.0
        %2489 = vmatprep.subr.mxu0 0.0
        %2490 = vmatpush1.msra.mxu0 0.0
        %2491 = vmatprep.subr.mxu0 0.0
        %2492 = vmatpush1.msra.mxu0 0.0
        %2493 = vmatprep.subr.mxu0 0.0
        %2494 = vmatpush1.msra.mxu0 0.0
        %2495 = vmatprep.subr.mxu0 0.0
        %2496 = vmatpush1.msra.mxu0 0.0
        %2497 = vmatprep.subr.mxu0 0.0
        %2498 = vmatpush1.msra.mxu0 0.0
        %2499 = vmatprep.subr.mxu0 0.0
        %2500 = vmatpush1.msra.mxu0 0.0
        %2501 = vmatprep.subr.mxu0 0.0
        %2502 = vmatpush1.msra.mxu0 0.0
        %2503 = vmatprep.subr.mxu0 0.0
        %2504 = vmatpush1.msra.mxu0 0.0
        %2505 = vmatprep.subr.mxu0 0.0
        %2506 = vmatpush1.msra.mxu0 0.0
        %2507 = vmatprep.subr.mxu0 0.0
        %2508 = vmatpush1.msra.mxu0 0.0
        %2509 = vmatprep.subr.mxu0 0.0
        %2510 = vmatpush1.msra.mxu0 0.0
        %2511 = vmatprep.subr.mxu0 0.0
        %2512 = vmatpush1.msra.mxu0 0.0
        %2513 = vmatprep.subr.mxu0 0.0
        %2514 = vmatpush1.msra.mxu0 0.0
        %2515 = vmatprep.subr.mxu0 0.0
        %2516 = vmatpush1.msra.mxu0 0.0
        %2517 = vmatprep.subr.mxu0 0.0
        %2518 = vmatpush1.msra.mxu0 0.0
        %2519 = vmatprep.subr.mxu0 0.0
        %2520 = vmatpush1.msra.mxu0 0.0
        %2521 = vmatprep.subr.mxu0 0.0
        %2522 = vmatpush1.msra.mxu0 0.0
        %2523 = vmatprep.subr.mxu0 0.0
        %2524 = vmatpush1.msra.mxu0 0.0
        %2525 = vmatprep.subr.mxu0 0.0
        %2526 = vmatpush1.msra.mxu0 0.0
        %2527 = vmatprep.subr.mxu0 0.0
        %2528 = vmatpush1.msra.mxu0 0.0
        %2529 = vmatprep.subr.mxu0 0.0
        %2530 = vmatpush1.msra.mxu0 0.0
        %2531 = vmatprep.subr.mxu0 0.0
        %2532 = vmatpush1.msra.mxu0 0.0
        %2533 = vmatprep.subr.mxu0 0.0
        %2534 = vmatpush1.msra.mxu0 0.0
        %2535 = vmatprep.subr.mxu0 0.0
        %2536 = vmatpush1.msra.mxu0 0.0
        %2537 = vmatprep.subr.mxu0 0.0
        %2538 = vmatpush1.msra.mxu0 0.0
        %2539 = vmatprep.mubr.bf16.mxu0 0
        %2540 = vmatmul.mubr.bf16.gmra.mrb[0].mxu0 %v2378
        %v2541 = vpop.f32.mrb[0].mxu0
        %v2542 = vadd.f32 0.0, %v2541
        %v2543 = vpop.f32.mrb[0].mxu0
        %v2544 = vpop.f32.mrb[0].mxu0
        %v2545 = vadd.f32 0.0, %v2544
        %v2546 = vpop.f32.mrb[0].mxu0
        %2547 = vmatprep.mubr.bf16.mxu0 0
        %2548 = vmatmul.mubr.bf16.gmra.mrb[0].mxu0 %v2381
        %v2549 = vpop.f32.mrb[0].mxu0
        %v2550 = vadd.f32 0.0, %v2549
        %v2551 = vpop.f32.mrb[0].mxu0
        %v2552 = vpop.f32.mrb[0].mxu0
        %v2553 = vpop.f32.mrb[0].mxu0
        %2554 = vdwg.mxu0
        %s2555 = scalar_lea.vmem %s3, 12
        %v2556 = vld [vmem:[%s2555] sm:$0xf]
        %v2557 = vld [vmem:[%s2555 + $0x4] sm:$0xf]
        %v2558 = vld [vmem:[%s2555 + $0x8] sm:$0x7]
        %v2562 = vunpack.c.l.b16 %v2556
        %v2563 = vunpack.c.l.b16 %v2557
        %v2564 = vunpack.c.l.b16 %v2558
        %v2565 = vpack.c.b16 %v2563, %v2562
        %v2566 = vpack.c.b16 %v2564, %v2564
        %v2568 = vsel %vm2376, %v2565, 0
        %v2571 = vsel %vm2376, %v2566, 0
        %2573 = vmatprep.subr.mxu0 %v2348
        %2574 = vmatpush1.msra.mxu0 %v2347
        %2575 = vmatprep.subr.mxu0 %v2351
        %2576 = vmatpush1.msra.mxu0 %v2350
        %2577 = vmatprep.subr.mxu0 %v2354
        %2578 = vmatpush1.msra.mxu0 %v2353
        %2579 = vmatprep.subr.mxu0 %v2357
        %2580 = vmatpush1.msra.mxu0 %v2356
        %2581 = vmatprep.subr.mxu0 %v2360
        %2582 = vmatpush1.msra.mxu0 %v2359
        %2583 = vmatprep.subr.mxu0 %v2387
        %2584 = vmatpush1.msra.mxu0 %v2384
        %2585 = vmatprep.subr.mxu0 0.0
        %2586 = vmatpush1.msra.mxu0 0.0
        %2587 = vmatprep.subr.mxu0 0.0
        %2588 = vmatpush1.msra.mxu0 0.0
        %2589 = vmatprep.subr.mxu0 0.0
        %2590 = vmatpush1.msra.mxu0 0.0
        %2591 = vmatprep.subr.mxu0 0.0
        %2592 = vmatpush1.msra.mxu0 0.0
        %2593 = vmatprep.subr.mxu0 0.0
        %2594 = vmatpush1.msra.mxu0 0.0
        %2595 = vmatprep.subr.mxu0 0.0
        %2596 = vmatpush1.msra.mxu0 0.0
        %2597 = vmatprep.subr.mxu0 0.0
        %2598 = vmatpush1.msra.mxu0 0.0
        %2599 = vmatprep.subr.mxu0 0.0
        %2600 = vmatpush1.msra.mxu0 0.0
        %2601 = vmatprep.subr.mxu0 0.0
        %2602 = vmatpush1.msra.mxu0 0.0
        %2603 = vmatprep.subr.mxu0 0.0
        %2604 = vmatpush1.msra.mxu0 0.0
        %2605 = vmatprep.subr.mxu0 0.0
        %2606 = vmatpush1.msra.mxu0 0.0
        %2607 = vmatprep.subr.mxu0 0.0
        %2608 = vmatpush1.msra.mxu0 0.0
        %2609 = vmatprep.subr.mxu0 0.0
        %2610 = vmatpush1.msra.mxu0 0.0
        %2611 = vmatprep.subr.mxu0 0.0
        %2612 = vmatpush1.msra.mxu0 0.0
        %2613 = vmatprep.subr.mxu0 0.0
        %2614 = vmatpush1.msra.mxu0 0.0
        %2615 = vmatprep.subr.mxu0 0.0
        %2616 = vmatpush1.msra.mxu0 0.0
        %2617 = vmatprep.subr.mxu0 0.0
        %2618 = vmatpush1.msra.mxu0 0.0
        %2619 = vmatprep.subr.mxu0 0.0
        %2620 = vmatpush1.msra.mxu0 0.0
        %2621 = vmatprep.subr.mxu0 0.0
        %2622 = vmatpush1.msra.mxu0 0.0
        %2623 = vmatprep.subr.mxu0 0.0
        %2624 = vmatpush1.msra.mxu0 0.0
        %2625 = vmatprep.subr.mxu0 0.0
        %2626 = vmatpush1.msra.mxu0 0.0
        %2627 = vmatprep.subr.mxu0 0.0
        %2628 = vmatpush1.msra.mxu0 0.0
        %2629 = vmatprep.subr.mxu0 0.0
        %2630 = vmatpush1.msra.mxu0 0.0
        %2631 = vmatprep.subr.mxu0 0.0
        %2632 = vmatpush1.msra.mxu0 0.0
        %2633 = vmatprep.subr.mxu0 0.0
        %2634 = vmatpush1.msra.mxu0 0.0
        %2635 = vmatprep.subr.mxu0 0.0
        %2636 = vmatpush1.msra.mxu0 0.0
        %2637 = vmatprep.mubr.bf16.mxu0 0
        %2638 = vmatmul.mubr.bf16.gmra.mrb[0].mxu0 %v2568
        %v2639 = vpop.f32.mrb[0].mxu0
        %v2640 = vadd.f32 0.0, %v2639
        %v2641 = vpop.f32.mrb[0].mxu0
        %v2642 = vadd.f32 0.0, %v2641
        %v2643 = vpop.f32.mrb[0].mxu0
        %v2644 = vadd.f32 0.0, %v2643
        %v2645 = vpop.f32.mrb[0].mxu0
        %v2646 = vadd.f32 0.0, %v2645
        %2647 = vmatprep.mubr.bf16.mxu0 0
        %2648 = vmatmul.mubr.bf16.gmra.mrb[0].mxu0 %v2571
        %v2649 = vpop.f32.mrb[0].mxu0
        %v2650 = vadd.f32 0.0, %v2649
        %v2651 = vpop.f32.mrb[0].mxu0
        %v2652 = vadd.f32 0.0, %v2651
        %v2653 = vpop.f32.mrb[0].mxu0
        %v2654 = vpop.f32.mrb[0].mxu0
        %2655 = vdwg.mxu0
        %2656 = vmatprep.subr.mxu0 0.0
        %2657 = vmatpush1.msra.mxu0 %v2349
        %2658 = vmatprep.subr.mxu0 0.0
        %2659 = vmatpush1.msra.mxu0 %v2352
        %2660 = vmatprep.subr.mxu0 0.0
        %2661 = vmatpush1.msra.mxu0 %v2355
        %2662 = vmatprep.subr.mxu0 0.0
        %2663 = vmatpush1.msra.mxu0 %v2358
        %2664 = vmatprep.subr.mxu0 0.0
        %2665 = vmatpush1.msra.mxu0 %v2361
        %2666 = vmatprep.subr.mxu0 0.0
        %2667 = vmatpush1.msra.mxu0 %v2390
        %2668 = vmatprep.subr.mxu0 0.0
        %2669 = vmatpush1.msra.mxu0 0.0
        %2670 = vmatprep.subr.mxu0 0.0
        %2671 = vmatpush1.msra.mxu0 0.0
        %2672 = vmatprep.subr.mxu0 0.0
        %2673 = vmatpush1.msra.mxu0 0.0
        %2674 = vmatprep.subr.mxu0 0.0
        %2675 = vmatpush1.msra.mxu0 0.0
        %2676 = vmatprep.subr.mxu0 0.0
        %2677 = vmatpush1.msra.mxu0 0.0
        %2678 = vmatprep.subr.mxu0 0.0
        %2679 = vmatpush1.msra.mxu0 0.0
        %2680 = vmatprep.subr.mxu0 0.0
        %2681 = vmatpush1.msra.mxu0 0.0
        %2682 = vmatprep.subr.mxu0 0.0
        %2683 = vmatpush1.msra.mxu0 0.0
        %2684 = vmatprep.subr.mxu0 0.0
        %2685 = vmatpush1.msra.mxu0 0.0
        %2686 = vmatprep.subr.mxu0 0.0
        %2687 = vmatpush1.msra.mxu0 0.0
        %2688 = vmatprep.subr.mxu0 0.0
        %2689 = vmatpush1.msra.mxu0 0.0
        %2690 = vmatprep.subr.mxu0 0.0
        %2691 = vmatpush1.msra.mxu0 0.0
        %2692 = vmatprep.subr.mxu0 0.0
        %2693 = vmatpush1.msra.mxu0 0.0
        %2694 = vmatprep.subr.mxu0 0.0
        %2695 = vmatpush1.msra.mxu0 0.0
        %2696 = vmatprep.subr.mxu0 0.0
        %2697 = vmatpush1.msra.mxu0 0.0
        %2698 = vmatprep.subr.mxu0 0.0
        %2699 = vmatpush1.msra.mxu0 0.0
        %2700 = vmatprep.subr.mxu0 0.0
        %2701 = vmatpush1.msra.mxu0 0.0
        %2702 = vmatprep.subr.mxu0 0.0
        %2703 = vmatpush1.msra.mxu0 0.0
        %2704 = vmatprep.subr.mxu0 0.0
        %2705 = vmatpush1.msra.mxu0 0.0
        %2706 = vmatprep.subr.mxu0 0.0
        %2707 = vmatpush1.msra.mxu0 0.0
        %2708 = vmatprep.subr.mxu0 0.0
        %2709 = vmatpush1.msra.mxu0 0.0
        %2710 = vmatprep.subr.mxu0 0.0
        %2711 = vmatpush1.msra.mxu0 0.0
        %2712 = vmatprep.subr.mxu0 0.0
        %2713 = vmatpush1.msra.mxu0 0.0
        %2714 = vmatprep.subr.mxu0 0.0
        %2715 = vmatpush1.msra.mxu0 0.0
        %2716 = vmatprep.subr.mxu0 0.0
        %2717 = vmatpush1.msra.mxu0 0.0
        %2718 = vmatprep.subr.mxu0 0.0
        %2719 = vmatpush1.msra.mxu0 0.0
        %2720 = vmatprep.mubr.bf16.mxu0 0
        %2721 = vmatmul.mubr.bf16.gmra.mrb[0].mxu0 %v2568
        %v2722 = vpop.f32.mrb[0].mxu0
        %v2723 = vadd.f32 0.0, %v2722
        %v2724 = vpop.f32.mrb[0].mxu0
        %v2725 = vpop.f32.mrb[0].mxu0
        %v2726 = vadd.f32 0.0, %v2725
        %v2727 = vpop.f32.mrb[0].mxu0
        %2728 = vmatprep.mubr.bf16.mxu0 0
        %2729 = vmatmul.mubr.bf16.gmra.mrb[0].mxu0 %v2571
        %v2730 = vpop.f32.mrb[0].mxu0
        %v2731 = vadd.f32 0.0, %v2730
        %v2732 = vpop.f32.mrb[0].mxu0
        %v2733 = vpop.f32.mrb[0].mxu0
        %v2734 = vpop.f32.mrb[0].mxu0
        %2735 = vdwg.mxu0
        %v2736 = vmax.f32 %v2459, %v2640
        %v2737 = vmax.f32 %v2461, %v2642
        %v2738 = vmax.f32 %v2542, %v2723
        %v2739 = vmax.f32 %v2463, %v2644
        %v2740 = vmax.f32 %v2465, %v2646
        %v2741 = vmax.f32 %v2545, %v2726
        %v2742 = vmax.f32 %v2469, %v2650
        %v2743 = vmax.f32 %v2471, %v2652
        %v2744 = vmax.f32 %v2550, %v2731
        %v2745 = vld [vmem:[%s4] sm:$0xff]
        %v2746 = vld [vmem:[%s4 + $0x8] sm:$0xff]
        %v2747 = vld [vmem:[%s4 + $0x10] sm:$0xff]
        %v2748 = vld [vmem:[%s4 + $0x18] sm:$0xff]
        %v2749 = vld [vmem:[%s4 + $0x20] sm:$0xff]
        %v2750 = vld [vmem:[%s4 + $0x28] sm:$0xff]
        %v2751 = vld [vmem:[%s4 + $0x30] sm:$0xff]
        %v2752 = vld [vmem:[%s4 + $0x38] sm:$0xff]
        %v2753 = vld [vmem:[%s4 + $0x40] sm:$0xff]
        %v2754 = vld [vmem:[%s4 + $0x48] sm:$0xff]
        %v2755 = vld [vmem:[%s4 + $0x50] sm:$0xff]
        %v2756 = vld [vmem:[%s4 + $0x58] sm:$0xff]
        %v2757 = vld [vmem:[%s4 + $0x60] sm:$0xff]
        %v2758 = vld [vmem:[%s4 + $0x68] sm:$0xff]
        %v2759 = vld [vmem:[%s4 + $0x70] sm:$0xff]
        %v2760 = vld [vmem:[%s4 + $0x78] sm:$0xff]
        %v2761 = vld [vmem:[%s4 + $0x80] sm:$0xff]
        %v2762 = vld [vmem:[%s4 + $0x88] sm:$0xff]
        %v2763 = vld [vmem:[%s4 + $0x90] sm:$0xff]
        %v2764 = vld [vmem:[%s4 + $0x98] sm:$0xff]
        %v2765 = vld [vmem:[%s4 + $0xa0] sm:$0xff]
        %v2766 = vld [vmem:[%s4 + $0xa8] sm:$0xff]
        %v2767 = vld [vmem:[%s4 + $0xb0] sm:$0xff]
        %v2768 = vld [vmem:[%s4 + $0xb8] sm:$0xff]
        %v2769 = vld [vmem:[%s4 + $0xc0] sm:$0xff]
        %v2770 = vld [vmem:[%s4 + $0xc8] sm:$0xff]
        %v2771 = vld [vmem:[%s4 + $0xd0] sm:$0xff]
        %v2772 = vld [vmem:[%s4 + $0xd8] sm:$0xff]
        %v2773 = vld [vmem:[%s4 + $0xe0] sm:$0xff]
        %v2774 = vld [vmem:[%s4 + $0xe8] sm:$0xff]
        %v2775 = vld [vmem:[%s4 + $0xf0] sm:$0xff]
        %v2776 = vld [vmem:[%s4 + $0xf8] sm:$0xff]
        %v2777 = vld [vmem:[%s4 + $0x100] sm:$0xff]
        %v2811 = vunpack.c.l.b16 %v2745
        %v2812 = vunpack.c.h.b16 %v2745
        %v2813 = vunpack.c.l.b16 %v2746
        %v2814 = vunpack.c.h.b16 %v2746
        %v2815 = vunpack.c.l.b16 %v2747
        %v2816 = vunpack.c.h.b16 %v2747
        %v2817 = vunpack.c.l.b16 %v2748
        %v2818 = vunpack.c.h.b16 %v2748
        %v2819 = vunpack.c.l.b16 %v2749
        %v2820 = vunpack.c.h.b16 %v2749
        %v2821 = vunpack.c.l.b16 %v2750
        %v2822 = vunpack.c.h.b16 %v2750
        %v2823 = vunpack.c.l.b16 %v2751
        %v2824 = vunpack.c.h.b16 %v2751
        %v2825 = vunpack.c.l.b16 %v2752
        %v2826 = vunpack.c.h.b16 %v2752
        %v2827 = vunpack.c.l.b16 %v2753
        %v2828 = vunpack.c.h.b16 %v2753
        %v2829 = vunpack.c.l.b16 %v2754
        %v2830 = vunpack.c.h.b16 %v2754
        %v2831 = vunpack.c.l.b16 %v2755
        %v2832 = vunpack.c.h.b16 %v2755
        %v2833 = vunpack.c.l.b16 %v2756
        %v2834 = vunpack.c.h.b16 %v2756
        %v2835 = vunpack.c.l.b16 %v2757
        %v2836 = vunpack.c.h.b16 %v2757
        %v2837 = vunpack.c.l.b16 %v2758
        %v2838 = vunpack.c.h.b16 %v2758
        %v2839 = vunpack.c.l.b16 %v2759
        %v2840 = vunpack.c.h.b16 %v2759
        %v2841 = vunpack.c.l.b16 %v2760
        %v2842 = vunpack.c.h.b16 %v2760
        %v2843 = vunpack.c.l.b16 %v2761
        %v2844 = vunpack.c.h.b16 %v2761
        %v2845 = vunpack.c.l.b16 %v2762
        %v2846 = vunpack.c.h.b16 %v2762
        %v2847 = vunpack.c.l.b16 %v2763
        %v2848 = vunpack.c.h.b16 %v2763
        %v2849 = vunpack.c.l.b16 %v2764
        %v2850 = vunpack.c.h.b16 %v2764
        %v2851 = vunpack.c.l.b16 %v2765
        %v2852 = vunpack.c.h.b16 %v2765
        %v2853 = vunpack.c.l.b16 %v2766
        %v2854 = vunpack.c.h.b16 %v2766
        %v2855 = vunpack.c.l.b16 %v2767
        %v2856 = vunpack.c.h.b16 %v2767
        %v2857 = vunpack.c.l.b16 %v2768
        %v2858 = vunpack.c.h.b16 %v2768
        %v2859 = vunpack.c.l.b16 %v2769
        %v2860 = vunpack.c.h.b16 %v2769
        %v2861 = vunpack.c.l.b16 %v2770
        %v2862 = vunpack.c.h.b16 %v2770
        %v2863 = vunpack.c.l.b16 %v2771
        %v2864 = vunpack.c.h.b16 %v2771
        %v2865 = vunpack.c.l.b16 %v2772
        %v2866 = vunpack.c.h.b16 %v2772
        %v2867 = vunpack.c.l.b16 %v2773
        %v2868 = vunpack.c.h.b16 %v2773
        %v2869 = vunpack.c.l.b16 %v2774
        %v2870 = vunpack.c.h.b16 %v2774
        %v2871 = vunpack.c.l.b16 %v2775
        %v2872 = vunpack.c.h.b16 %v2775
        %v2873 = vunpack.c.l.b16 %v2776
        %v2874 = vunpack.c.h.b16 %v2776
        %v2875 = vunpack.c.l.b16 %v2777
        %v2876 = vunpack.c.h.b16 %v2777
        %v2877 = vpack.c.b16 %v2813, %v2811
        %v2878 = vpack.c.b16 %v2814, %v2812
        %v2879 = vpack.c.b16 %v2817, %v2815
        %v2880 = vpack.c.b16 %v2818, %v2816
        %v2881 = vpack.c.b16 %v2821, %v2819
        %v2882 = vpack.c.b16 %v2822, %v2820
        %v2883 = vpack.c.b16 %v2825, %v2823
        %v2884 = vpack.c.b16 %v2826, %v2824
        %v2885 = vpack.c.b16 %v2829, %v2827
        %v2886 = vpack.c.b16 %v2830, %v2828
        %v2887 = vpack.c.b16 %v2833, %v2831
        %v2888 = vpack.c.b16 %v2834, %v2832
        %v2889 = vpack.c.b16 %v2837, %v2835
        %v2890 = vpack.c.b16 %v2838, %v2836
        %v2891 = vpack.c.b16 %v2841, %v2839
        %v2892 = vpack.c.b16 %v2842, %v2840
        %v2893 = vpack.c.b16 %v2845, %v2843
        %v2894 = vpack.c.b16 %v2846, %v2844
        %v2895 = vpack.c.b16 %v2849, %v2847
        %v2896 = vpack.c.b16 %v2850, %v2848
        %v2897 = vpack.c.b16 %v2853, %v2851
        %v2898 = vpack.c.b16 %v2854, %v2852
        %v2899 = vpack.c.b16 %v2857, %v2855
        %v2900 = vpack.c.b16 %v2858, %v2856
        %v2901 = vpack.c.b16 %v2861, %v2859
        %v2902 = vpack.c.b16 %v2862, %v2860
        %v2903 = vpack.c.b16 %v2865, %v2863
        %v2904 = vpack.c.b16 %v2866, %v2864
        %v2905 = vpack.c.b16 %v2869, %v2867
        %v2906 = vpack.c.b16 %v2870, %v2868
        %v2907 = vpack.c.b16 %v2873, %v2871
        %v2908 = vpack.c.b16 %v2874, %v2872
        %v2909 = vpack.c.b16 %v2875, %v2875
        %v2910 = vpack.c.b16 %v2876, %v2876
        %vm2943 = vcmask 64512
        %v2945 = vsel %vm2943, %v2738, 0
        %v2948 = vsel %vm2943, %v2741, 0
        %v2951 = vsel %vm2943, %v2744, 0
        %v2954 = vsel %vm1977, %v2909, 0
        %v2957 = vsel %vm1977, %v2910, 0
        %2959 = vmatprep.subr.bf16.mxu0 %v2878
        %2960 = vmatpush1.bf16.msra.mxu0 %v2877
        %2961 = vmatprep.subr.bf16.mxu0 %v2880
        %2962 = vmatpush1.bf16.msra.mxu0 %v2879
        %2963 = vmatprep.subr.bf16.mxu0 %v2882
        %2964 = vmatpush1.bf16.msra.mxu0 %v2881
        %2965 = vmatprep.subr.bf16.mxu0 %v2884
        %2966 = vmatpush1.bf16.msra.mxu0 %v2883
        %2967 = vmatprep.subr.bf16.mxu0 %v2886
        %2968 = vmatpush1.bf16.msra.mxu0 %v2885
        %2969 = vmatprep.subr.bf16.mxu0 %v2888
        %2970 = vmatpush1.bf16.msra.mxu0 %v2887
        %2971 = vmatprep.subr.bf16.mxu0 %v2890
        %2972 = vmatpush1.bf16.msra.mxu0 %v2889
        %2973 = vmatprep.subr.bf16.mxu0 %v2892
        %2974 = vmatpush1.bf16.msra.mxu0 %v2891
        %2975 = vmatprep.subr.bf16.mxu0 %v2894
        %2976 = vmatpush1.bf16.msra.mxu0 %v2893
        %2977 = vmatprep.subr.bf16.mxu0 %v2896
        %2978 = vmatpush1.bf16.msra.mxu0 %v2895
        %2979 = vmatprep.subr.bf16.mxu0 %v2898
        %2980 = vmatpush1.bf16.msra.mxu0 %v2897
        %2981 = vmatprep.subr.bf16.mxu0 %v2900
        %2982 = vmatpush1.bf16.msra.mxu0 %v2899
        %2983 = vmatprep.subr.bf16.mxu0 %v2902
        %2984 = vmatpush1.bf16.msra.mxu0 %v2901
        %2985 = vmatprep.subr.bf16.mxu0 %v2904
        %2986 = vmatpush1.bf16.msra.mxu0 %v2903
        %2987 = vmatprep.subr.bf16.mxu0 %v2906
        %2988 = vmatpush1.bf16.msra.mxu0 %v2905
        %2989 = vmatprep.subr.bf16.mxu0 %v2908
        %2990 = vmatpush1.bf16.msra.mxu0 %v2907
        %2991 = vmatprep.mubr.f32.mxu0 %v2737
        %2992 = vmatmul.mubr.f32.gmra.mrb[0].mxu0 %v2736
        %v2993 = vpop.f32.mrb[0].mxu0
        %v2994 = vadd.f32 0.0, %v2993
        %v2995 = vpop.f32.mrb[0].mxu0
        %v2996 = vadd.f32 0.0, %v2995
        %2997 = vmatprep.mubr.f32.mxu0 %v2740
        %2998 = vmatmul.mubr.f32.gmra.mrb[0].mxu0 %v2739
        %v2999 = vpop.f32.mrb[0].mxu0
        %v3000 = vadd.f32 0.0, %v2999
        %v3001 = vpop.f32.mrb[0].mxu0
        %v3002 = vadd.f32 0.0, %v3001
        %3003 = vmatprep.mubr.f32.mxu0 %v2743
        %3004 = vmatmul.mubr.f32.gmra.mrb[0].mxu0 %v2742
        %v3005 = vpop.f32.mrb[0].mxu0
        %v3006 = vadd.f32 0.0, %v3005
        %v3007 = vpop.f32.mrb[0].mxu0
        %v3008 = vadd.f32 0.0, %v3007
        %3009 = vdwg.mxu0
        %3010 = vmatprep.subr.bf16.mxu0 %v2957
        %3011 = vmatpush1.bf16.msra.mxu0 %v2954
        %3012 = vmatprep.subr.bf16.mxu0 0
        %3013 = vmatpush1.bf16.msra.mxu0 0
        %3014 = vmatprep.subr.bf16.mxu0 0
        %3015 = vmatpush1.bf16.msra.mxu0 0
        %3016 = vmatprep.subr.bf16.mxu0 0
        %3017 = vmatpush1.bf16.msra.mxu0 0
        %3018 = vmatprep.subr.bf16.mxu0 0
        %3019 = vmatpush1.bf16.msra.mxu0 0
        %3020 = vmatprep.subr.bf16.mxu0 0
        %3021 = vmatpush1.bf16.msra.mxu0 0
        %3022 = vmatprep.subr.bf16.mxu0 0
        %3023 = vmatpush1.bf16.msra.mxu0 0
        %3024 = vmatprep.subr.bf16.mxu0 0
        %3025 = vmatpush1.bf16.msra.mxu0 0
        %3026 = vmatprep.subr.bf16.mxu0 0
        %3027 = vmatpush1.bf16.msra.mxu0 0
        %3028 = vmatprep.subr.bf16.mxu0 0
        %3029 = vmatpush1.bf16.msra.mxu0 0
        %3030 = vmatprep.subr.bf16.mxu0 0
        %3031 = vmatpush1.bf16.msra.mxu0 0
        %3032 = vmatprep.subr.bf16.mxu0 0
        %3033 = vmatpush1.bf16.msra.mxu0 0
        %3034 = vmatprep.subr.bf16.mxu0 0
        %3035 = vmatpush1.bf16.msra.mxu0 0
        %3036 = vmatprep.subr.bf16.mxu0 0
        %3037 = vmatpush1.bf16.msra.mxu0 0
        %3038 = vmatprep.subr.bf16.mxu0 0
        %3039 = vmatpush1.bf16.msra.mxu0 0
        %3040 = vmatprep.subr.bf16.mxu0 0
        %3041 = vmatpush1.bf16.msra.mxu0 0
        %3042 = vmatprep.mubr.f32.mxu0 0.0
        %3043 = vmatmul.mubr.f32.gmra.mrb[0].mxu0 %v2945
        %v3044 = vpop.f32.mrb[0].mxu0
        %v3045 = vadd.f32 %v2994, %v3044
        %v3046 = vpop.f32.mrb[0].mxu0
        %v3047 = vadd.f32 %v2996, %v3046
        %3048 = vmatprep.mubr.f32.mxu0 0.0
        %3049 = vmatmul.mubr.f32.gmra.mrb[0].mxu0 %v2948
        %v3050 = vpop.f32.mrb[0].mxu0
        %v3051 = vadd.f32 %v3000, %v3050
        %v3052 = vpop.f32.mrb[0].mxu0
        %v3053 = vadd.f32 %v3002, %v3052
        %3054 = vmatprep.mubr.f32.mxu0 0.0
        %3055 = vmatmul.mubr.f32.gmra.mrb[0].mxu0 %v2951
        %v3056 = vpop.f32.mrb[0].mxu0
        %v3057 = vadd.f32 %v3006, %v3056
        %v3058 = vpop.f32.mrb[0].mxu0
        %v3059 = vadd.f32 %v3008, %v3058
        %3060 = vdwg.mxu0
        %s3061 = scalar_lea.vmem %s4, 264
        %v3062 = vld [vmem:[%s3061] sm:$0xff]
        %v3063 = vld [vmem:[%s3061 + $0x8] sm:$0xff]
        %v3064 = vld [vmem:[%s3061 + $0x10] sm:$0xff]
        %v3065 = vld [vmem:[%s3061 + $0x18] sm:$0xff]
        %v3066 = vld [vmem:[%s3061 + $0x20] sm:$0xff]
        %v3067 = vld [vmem:[%s3061 + $0x28] sm:$0xff]
        %v3068 = vld [vmem:[%s3061 + $0x30] sm:$0xff]
        %v3069 = vld [vmem:[%s3061 + $0x38] sm:$0xff]
        %v3070 = vld [vmem:[%s3061 + $0x40] sm:$0xff]
        %v3071 = vld [vmem:[%s3061 + $0x48] sm:$0xff]
        %v3072 = vld [vmem:[%s3061 + $0x50] sm:$0xff]
        %v3073 = vld [vmem:[%s3061 + $0x58] sm:$0xff]
        %v3074 = vld [vmem:[%s3061 + $0x60] sm:$0xff]
        %v3075 = vld [vmem:[%s3061 + $0x68] sm:$0xff]
        %v3076 = vld [vmem:[%s3061 + $0x70] sm:$0xff]
        %v3077 = vld [vmem:[%s3061 + $0x78] sm:$0xff]
        %v3078 = vld [vmem:[%s3061 + $0x80] sm:$0xff]
        %v3079 = vld [vmem:[%s3061 + $0x88] sm:$0xff]
        %v3080 = vld [vmem:[%s3061 + $0x90] sm:$0xff]
        %v3081 = vld [vmem:[%s3061 + $0x98] sm:$0xff]
        %v3082 = vld [vmem:[%s3061 + $0xa0] sm:$0xff]
        %v3083 = vld [vmem:[%s3061 + $0xa8] sm:$0xff]
        %v3084 = vld [vmem:[%s3061 + $0xb0] sm:$0xff]
        %v3085 = vld [vmem:[%s3061 + $0xb8] sm:$0xff]
        %v3086 = vld [vmem:[%s3061 + $0xc0] sm:$0xff]
        %v3087 = vld [vmem:[%s3061 + $0xc8] sm:$0xff]
        %v3088 = vld [vmem:[%s3061 + $0xd0] sm:$0xff]
        %v3089 = vld [vmem:[%s3061 + $0xd8] sm:$0xff]
        %v3090 = vld [vmem:[%s3061 + $0xe0] sm:$0xff]
        %v3091 = vld [vmem:[%s3061 + $0xe8] sm:$0xff]
        %v3092 = vld [vmem:[%s3061 + $0xf0] sm:$0xff]
        %v3093 = vld [vmem:[%s3061 + $0xf8] sm:$0xff]
        %v3094 = vld [vmem:[%s3061 + $0x100] sm:$0xff]
        %v3128 = vunpack.c.l.b16 %v3062
        %v3129 = vunpack.c.h.b16 %v3062
        %v3130 = vunpack.c.l.b16 %v3063
        %v3131 = vunpack.c.h.b16 %v3063
        %v3132 = vunpack.c.l.b16 %v3064
        %v3133 = vunpack.c.h.b16 %v3064
        %v3134 = vunpack.c.l.b16 %v3065
        %v3135 = vunpack.c.h.b16 %v3065
        %v3136 = vunpack.c.l.b16 %v3066
        %v3137 = vunpack.c.h.b16 %v3066
        %v3138 = vunpack.c.l.b16 %v3067
        %v3139 = vunpack.c.h.b16 %v3067
        %v3140 = vunpack.c.l.b16 %v3068
        %v3141 = vunpack.c.h.b16 %v3068
        %v3142 = vunpack.c.l.b16 %v3069
        %v3143 = vunpack.c.h.b16 %v3069
        %v3144 = vunpack.c.l.b16 %v3070
        %v3145 = vunpack.c.h.b16 %v3070
        %v3146 = vunpack.c.l.b16 %v3071
        %v3147 = vunpack.c.h.b16 %v3071
        %v3148 = vunpack.c.l.b16 %v3072
        %v3149 = vunpack.c.h.b16 %v3072
        %v3150 = vunpack.c.l.b16 %v3073
        %v3151 = vunpack.c.h.b16 %v3073
        %v3152 = vunpack.c.l.b16 %v3074
        %v3153 = vunpack.c.h.b16 %v3074
        %v3154 = vunpack.c.l.b16 %v3075
        %v3155 = vunpack.c.h.b16 %v3075
        %v3156 = vunpack.c.l.b16 %v3076
        %v3157 = vunpack.c.h.b16 %v3076
        %v3158 = vunpack.c.l.b16 %v3077
        %v3159 = vunpack.c.h.b16 %v3077
        %v3160 = vunpack.c.l.b16 %v3078
        %v3161 = vunpack.c.h.b16 %v3078
        %v3162 = vunpack.c.l.b16 %v3079
        %v3163 = vunpack.c.h.b16 %v3079
        %v3164 = vunpack.c.l.b16 %v3080
        %v3165 = vunpack.c.h.b16 %v3080
        %v3166 = vunpack.c.l.b16 %v3081
        %v3167 = vunpack.c.h.b16 %v3081
        %v3168 = vunpack.c.l.b16 %v3082
        %v3169 = vunpack.c.h.b16 %v3082
        %v3170 = vunpack.c.l.b16 %v3083
        %v3171 = vunpack.c.h.b16 %v3083
        %v3172 = vunpack.c.l.b16 %v3084
        %v3173 = vunpack.c.h.b16 %v3084
        %v3174 = vunpack.c.l.b16 %v3085
        %v3175 = vunpack.c.h.b16 %v3085
        %v3176 = vunpack.c.l.b16 %v3086
        %v3177 = vunpack.c.h.b16 %v3086
        %v3178 = vunpack.c.l.b16 %v3087
        %v3179 = vunpack.c.h.b16 %v3087
        %v3180 = vunpack.c.l.b16 %v3088
        %v3181 = vunpack.c.h.b16 %v3088
        %v3182 = vunpack.c.l.b16 %v3089
        %v3183 = vunpack.c.h.b16 %v3089
        %v3184 = vunpack.c.l.b16 %v3090
        %v3185 = vunpack.c.h.b16 %v3090
        %v3186 = vunpack.c.l.b16 %v3091
        %v3187 = vunpack.c.h.b16 %v3091
        %v3188 = vunpack.c.l.b16 %v3092
        %v3189 = vunpack.c.h.b16 %v3092
        %v3190 = vunpack.c.l.b16 %v3093
        %v3191 = vunpack.c.h.b16 %v3093
        %v3192 = vunpack.c.l.b16 %v3094
        %v3193 = vunpack.c.h.b16 %v3094
        %v3194 = vpack.c.b16 %v3130, %v3128
        %v3195 = vpack.c.b16 %v3131, %v3129
        %v3196 = vpack.c.b16 %v3134, %v3132
        %v3197 = vpack.c.b16 %v3135, %v3133
        %v3198 = vpack.c.b16 %v3138, %v3136
        %v3199 = vpack.c.b16 %v3139, %v3137
        %v3200 = vpack.c.b16 %v3142, %v3140
        %v3201 = vpack.c.b16 %v3143, %v3141
        %v3202 = vpack.c.b16 %v3146, %v3144
        %v3203 = vpack.c.b16 %v3147, %v3145
        %v3204 = vpack.c.b16 %v3150, %v3148
        %v3205 = vpack.c.b16 %v3151, %v3149
        %v3206 = vpack.c.b16 %v3154, %v3152
        %v3207 = vpack.c.b16 %v3155, %v3153
        %v3208 = vpack.c.b16 %v3158, %v3156
        %v3209 = vpack.c.b16 %v3159, %v3157
        %v3210 = vpack.c.b16 %v3162, %v3160
        %v3211 = vpack.c.b16 %v3163, %v3161
        %v3212 = vpack.c.b16 %v3166, %v3164
        %v3213 = vpack.c.b16 %v3167, %v3165
        %v3214 = vpack.c.b16 %v3170, %v3168
        %v3215 = vpack.c.b16 %v3171, %v3169
        %v3216 = vpack.c.b16 %v3174, %v3172
        %v3217 = vpack.c.b16 %v3175, %v3173
        %v3218 = vpack.c.b16 %v3178, %v3176
        %v3219 = vpack.c.b16 %v3179, %v3177
        %v3220 = vpack.c.b16 %v3182, %v3180
        %v3221 = vpack.c.b16 %v3183, %v3181
        %v3222 = vpack.c.b16 %v3186, %v3184
        %v3223 = vpack.c.b16 %v3187, %v3185
        %v3224 = vpack.c.b16 %v3190, %v3188
        %v3225 = vpack.c.b16 %v3191, %v3189
        %v3226 = vpack.c.b16 %v3192, %v3192
        %v3227 = vpack.c.b16 %v3193, %v3193
        %v3261 = vsel %vm1977, %v3226, 0
        %v3264 = vsel %vm1977, %v3227, 0
        %3266 = vmatprep.subr.bf16.mxu0 %v3195
        %3267 = vmatpush1.bf16.msra.mxu0 %v3194
        %3268 = vmatprep.subr.bf16.mxu0 %v3197
        %3269 = vmatpush1.bf16.msra.mxu0 %v3196
        %3270 = vmatprep.subr.bf16.mxu0 %v3199
        %3271 = vmatpush1.bf16.msra.mxu0 %v3198
        %3272 = vmatprep.subr.bf16.mxu0 %v3201
        %3273 = vmatpush1.bf16.msra.mxu0 %v3200
        %3274 = vmatprep.subr.bf16.mxu0 %v3203
        %3275 = vmatpush1.bf16.msra.mxu0 %v3202
        %3276 = vmatprep.subr.bf16.mxu0 %v3205
        %3277 = vmatpush1.bf16.msra.mxu0 %v3204
        %3278 = vmatprep.subr.bf16.mxu0 %v3207
        %3279 = vmatpush1.bf16.msra.mxu0 %v3206
        %3280 = vmatprep.subr.bf16.mxu0 %v3209
        %3281 = vmatpush1.bf16.msra.mxu0 %v3208
        %3282 = vmatprep.subr.bf16.mxu0 %v3211
        %3283 = vmatpush1.bf16.msra.mxu0 %v3210
        %3284 = vmatprep.subr.bf16.mxu0 %v3213
        %3285 = vmatpush1.bf16.msra.mxu0 %v3212
        %3286 = vmatprep.subr.bf16.mxu0 %v3215
        %3287 = vmatpush1.bf16.msra.mxu0 %v3214
        %3288 = vmatprep.subr.bf16.mxu0 %v3217
        %3289 = vmatpush1.bf16.msra.mxu0 %v3216
        %3290 = vmatprep.subr.bf16.mxu0 %v3219
        %3291 = vmatpush1.bf16.msra.mxu0 %v3218
        %3292 = vmatprep.subr.bf16.mxu0 %v3221
        %3293 = vmatpush1.bf16.msra.mxu0 %v3220
        %3294 = vmatprep.subr.bf16.mxu0 %v3223
        %3295 = vmatpush1.bf16.msra.mxu0 %v3222
        %3296 = vmatprep.subr.bf16.mxu0 %v3225
        %3297 = vmatpush1.bf16.msra.mxu0 %v3224
        %3298 = vmatprep.mubr.f32.mxu0 %v2737
        %3299 = vmatmul.mubr.f32.gmra.mrb[0].mxu0 %v2736
        %v3300 = vpop.f32.mrb[0].mxu0
        %v3301 = vadd.f32 0.0, %v3300
        %v3302 = vpop.f32.mrb[0].mxu0
        %v3303 = vadd.f32 0.0, %v3302
        %3304 = vmatprep.mubr.f32.mxu0 %v2740
        %3305 = vmatmul.mubr.f32.gmra.mrb[0].mxu0 %v2739
        %v3306 = vpop.f32.mrb[0].mxu0
        %v3307 = vadd.f32 0.0, %v3306
        %v3308 = vpop.f32.mrb[0].mxu0
        %v3309 = vadd.f32 0.0, %v3308
        %3310 = vmatprep.mubr.f32.mxu0 %v2743
        %3311 = vmatmul.mubr.f32.gmra.mrb[0].mxu0 %v2742
        %v3312 = vpop.f32.mrb[0].mxu0
        %v3313 = vadd.f32 0.0, %v3312
        %v3314 = vpop.f32.mrb[0].mxu0
        %v3315 = vadd.f32 0.0, %v3314
        %3316 = vdwg.mxu0
        %3317 = vmatprep.subr.bf16.mxu0 %v3264
        %3318 = vmatpush1.bf16.msra.mxu0 %v3261
        %3319 = vmatprep.subr.bf16.mxu0 0
        %3320 = vmatpush1.bf16.msra.mxu0 0
        %3321 = vmatprep.subr.bf16.mxu0 0
        %3322 = vmatpush1.bf16.msra.mxu0 0
        %3323 = vmatprep.subr.bf16.mxu0 0
        %3324 = vmatpush1.bf16.msra.mxu0 0
        %3325 = vmatprep.subr.bf16.mxu0 0
        %3326 = vmatpush1.bf16.msra.mxu0 0
        %3327 = vmatprep.subr.bf16.mxu0 0
        %3328 = vmatpush1.bf16.msra.mxu0 0
        %3329 = vmatprep.subr.bf16.mxu0 0
        %3330 = vmatpush1.bf16.msra.mxu0 0
        %3331 = vmatprep.subr.bf16.mxu0 0
        %3332 = vmatpush1.bf16.msra.mxu0 0
        %3333 = vmatprep.subr.bf16.mxu0 0
        %3334 = vmatpush1.bf16.msra.mxu0 0
        %3335 = vmatprep.subr.bf16.mxu0 0
        %3336 = vmatpush1.bf16.msra.mxu0 0
        %3337 = vmatprep.subr.bf16.mxu0 0
        %3338 = vmatpush1.bf16.msra.mxu0 0
        %3339 = vmatprep.subr.bf16.mxu0 0
        %3340 = vmatpush1.bf16.msra.mxu0 0
        %3341 = vmatprep.subr.bf16.mxu0 0
        %3342 = vmatpush1.bf16.msra.mxu0 0
        %3343 = vmatprep.subr.bf16.mxu0 0
        %3344 = vmatpush1.bf16.msra.mxu0 0
        %3345 = vmatprep.subr.bf16.mxu0 0
        %3346 = vmatpush1.bf16.msra.mxu0 0
        %3347 = vmatprep.subr.bf16.mxu0 0
        %3348 = vmatpush1.bf16.msra.mxu0 0
        %3349 = vmatprep.mubr.f32.mxu0 0.0
        %3350 = vmatmul.mubr.f32.gmra.mrb[0].mxu0 %v2945
        %v3351 = vpop.f32.mrb[0].mxu0
        %v3352 = vadd.f32 %v3301, %v3351
        %v3353 = vpop.f32.mrb[0].mxu0
        %v3354 = vadd.f32 %v3303, %v3353
        %3355 = vmatprep.mubr.f32.mxu0 0.0
        %3356 = vmatmul.mubr.f32.gmra.mrb[0].mxu0 %v2948
        %v3357 = vpop.f32.mrb[0].mxu0
        %v3358 = vadd.f32 %v3307, %v3357
        %v3359 = vpop.f32.mrb[0].mxu0
        %v3360 = vadd.f32 %v3309, %v3359
        %3361 = vmatprep.mubr.f32.mxu0 0.0
        %3362 = vmatmul.mubr.f32.gmra.mrb[0].mxu0 %v2951
        %v3363 = vpop.f32.mrb[0].mxu0
        %v3364 = vadd.f32 %v3313, %v3363
        %v3365 = vpop.f32.mrb[0].mxu0
        %v3366 = vadd.f32 %v3315, %v3365
        %3367 = vdwg.mxu0
        %v3368 = vmax.f32 %v3045, %v3352
        %v3369 = vmax.f32 %v3047, %v3354
        %v3370 = vmax.f32 %v3051, %v3358
        %v3371 = vmax.f32 %v3053, %v3360
        %v3372 = vmax.f32 %v3057, %v3364
        %v3373 = vmax.f32 %v3059, %v3366
        %v3374 = vld [vmem:[%s5] sm:$0xff]
        %v3375 = vld [vmem:[%s5 + $0x8] sm:$0xf]
        %v3376 = vld [vmem:[%s5 + $0xc] sm:$0xff]
        %v3377 = vld [vmem:[%s5 + $0x14] sm:$0xf]
        %v3378 = vld [vmem:[%s5 + $0x18] sm:$0xff]
        %v3379 = vld [vmem:[%s5 + $0x20] sm:$0xf]
        %v3380 = vld [vmem:[%s5 + $0x24] sm:$0xff]
        %v3381 = vld [vmem:[%s5 + $0x2c] sm:$0xf]
        %v3382 = vld [vmem:[%s5 + $0x30] sm:$0xff]
        %v3383 = vld [vmem:[%s5 + $0x38] sm:$0xf]
        %v3384 = vld [vmem:[%s5 + $0x3c] sm:$0xff]
        %v3385 = vld [vmem:[%s5 + $0x44] sm:$0xf]
        %v3386 = vld [vmem:[%s5 + $0x48] sm:$0xff]
        %v3387 = vld [vmem:[%s5 + $0x50] sm:$0xf]
        %v3388 = vld [vmem:[%s5 + $0x54] sm:$0xff]
        %v3389 = vld [vmem:[%s5 + $0x5c] sm:$0xf]
        %v3390 = vld [vmem:[%s5 + $0x60] sm:$0xff]
        %v3391 = vld [vmem:[%s5 + $0x68] sm:$0xf]
        %v3392 = vld [vmem:[%s5 + $0x6c] sm:$0xff]
        %v3393 = vld [vmem:[%s5 + $0x74] sm:$0xf]
        %v3394 = vld [vmem:[%s5 + $0x78] sm:$0xff]
        %v3395 = vld [vmem:[%s5 + $0x80] sm:$0xf]
        %v3396 = vld [vmem:[%s5 + $0x84] sm:$0xff]
        %v3397 = vld [vmem:[%s5 + $0x8c] sm:$0xf]
        %v3398 = vld [vmem:[%s5 + $0x90] sm:$0xff]
        %v3399 = vld [vmem:[%s5 + $0x98] sm:$0xf]
        %v3400 = vld [vmem:[%s5 + $0x9c] sm:$0xff]
        %v3401 = vld [vmem:[%s5 + $0xa4] sm:$0xf]
        %v3402 = vld [vmem:[%s5 + $0xa8] sm:$0xff]
        %v3403 = vld [vmem:[%s5 + $0xb0] sm:$0xf]
        %v3404 = vld [vmem:[%s5 + $0xb4] sm:$0xff]
        %v3405 = vld [vmem:[%s5 + $0xbc] sm:$0xf]
        %v3406 = vld [vmem:[%s5 + $0xc0] sm:$0x33]
        %v3407 = vld [vmem:[%s5 + $0xc8] sm:$0x3]
        %s3408 = scalar_lea.vmem %s5, 204
        %v3409 = vld [vmem:[%s3408] sm:$0xff]
        %v3410 = vld [vmem:[%s3408 + $0x8] sm:$0xf]
        %v3411 = vld [vmem:[%s3408 + $0xc] sm:$0xff]
        %v3412 = vld [vmem:[%s3408 + $0x14] sm:$0xf]
        %v3413 = vld [vmem:[%s3408 + $0x18] sm:$0xff]
        %v3414 = vld [vmem:[%s3408 + $0x20] sm:$0xf]
        %v3415 = vld [vmem:[%s3408 + $0x24] sm:$0xff]
        %v3416 = vld [vmem:[%s3408 + $0x2c] sm:$0xf]
        %v3417 = vld [vmem:[%s3408 + $0x30] sm:$0xff]
        %v3418 = vld [vmem:[%s3408 + $0x38] sm:$0xf]
        %v3419 = vld [vmem:[%s3408 + $0x3c] sm:$0xff]
        %v3420 = vld [vmem:[%s3408 + $0x44] sm:$0xf]
        %v3421 = vld [vmem:[%s3408 + $0x48] sm:$0xff]
        %v3422 = vld [vmem:[%s3408 + $0x50] sm:$0xf]
        %v3423 = vld [vmem:[%s3408 + $0x54] sm:$0xff]
        %v3424 = vld [vmem:[%s3408 + $0x5c] sm:$0xf]
        %v3425 = vld [vmem:[%s3408 + $0x60] sm:$0xff]
        %v3426 = vld [vmem:[%s3408 + $0x68] sm:$0xf]
        %v3427 = vld [vmem:[%s3408 + $0x6c] sm:$0xff]
        %v3428 = vld [vmem:[%s3408 + $0x74] sm:$0xf]
        %v3429 = vld [vmem:[%s3408 + $0x78] sm:$0xff]
        %v3430 = vld [vmem:[%s3408 + $0x80] sm:$0xf]
        %v3431 = vld [vmem:[%s3408 + $0x84] sm:$0xff]
        %v3432 = vld [vmem:[%s3408 + $0x8c] sm:$0xf]
        %v3433 = vld [vmem:[%s3408 + $0x90] sm:$0xff]
        %v3434 = vld [vmem:[%s3408 + $0x98] sm:$0xf]
        %v3435 = vld [vmem:[%s3408 + $0x9c] sm:$0xff]
        %v3436 = vld [vmem:[%s3408 + $0xa4] sm:$0xf]
        %v3437 = vld [vmem:[%s3408 + $0xa8] sm:$0xff]
        %v3438 = vld [vmem:[%s3408 + $0xb0] sm:$0xf]
        %v3439 = vld [vmem:[%s3408 + $0xb4] sm:$0xff]
        %v3440 = vld [vmem:[%s3408 + $0xbc] sm:$0xf]
        %v3441 = vld [vmem:[%s3408 + $0xc0] sm:$0x33]
        %v3442 = vld [vmem:[%s3408 + $0xc8] sm:$0x3]
        %v3449 = vrot.slane %v3368, 1
        %v3450 = vrot.slane %v3370, 1
        %v3451 = vsel %vm590, %v3449, %v3450
        %v3452 = vrot.slane %v3369, 1
        %v3453 = vrot.slane %v3371, 1
        %v3454 = vsel %vm590, %v3452, %v3453
        %v3455 = vrot.slane %v3372, 1
        %v3456 = vsel %vm590, %v3450, %v3455
        %v3457 = vrot.slane %v3373, 1
        %v3458 = vsel %vm590, %v3453, %v3457
        %v3496 = vunpack.c.l.b16 %v3409
        %v3497 = vunpack.c.h.b16 %v3409
        %v3498 = vunpack.c.l.b16 %v3410
        %v3499 = vunpack.c.l.b16 %v3411
        %v3500 = vunpack.c.h.b16 %v3411
        %v3501 = vunpack.c.l.b16 %v3412
        %v3502 = vunpack.c.l.b16 %v3413
        %v3503 = vunpack.c.h.b16 %v3413
        %v3504 = vunpack.c.l.b16 %v3414
        %v3505 = vunpack.c.l.b16 %v3415
        %v3506 = vunpack.c.h.b16 %v3415
        %v3507 = vunpack.c.l.b16 %v3416
        %v3508 = vunpack.c.l.b16 %v3417
        %v3509 = vunpack.c.h.b16 %v3417
        %v3510 = vunpack.c.l.b16 %v3418
        %v3511 = vunpack.c.l.b16 %v3419
        %v3512 = vunpack.c.h.b16 %v3419
        %v3513 = vunpack.c.l.b16 %v3420
        %v3514 = vunpack.c.l.b16 %v3421
        %v3515 = vunpack.c.h.b16 %v3421
        %v3516 = vunpack.c.l.b16 %v3422
        %v3517 = vunpack.c.l.b16 %v3423
        %v3518 = vunpack.c.h.b16 %v3423
        %v3519 = vunpack.c.l.b16 %v3424
        %v3520 = vunpack.c.l.b16 %v3425
        %v3521 = vunpack.c.h.b16 %v3425
        %v3522 = vunpack.c.l.b16 %v3426
        %v3523 = vunpack.c.l.b16 %v3427
        %v3524 = vunpack.c.h.b16 %v3427
        %v3525 = vunpack.c.l.b16 %v3428
        %v3526 = vunpack.c.l.b16 %v3429
        %v3527 = vunpack.c.h.b16 %v3429
        %v3528 = vunpack.c.l.b16 %v3430
        %v3529 = vunpack.c.l.b16 %v3431
        %v3530 = vunpack.c.h.b16 %v3431
        %v3531 = vunpack.c.l.b16 %v3432
        %v3532 = vunpack.c.l.b16 %v3433
        %v3533 = vunpack.c.h.b16 %v3433
        %v3534 = vunpack.c.l.b16 %v3434
        %v3535 = vunpack.c.l.b16 %v3435
        %v3536 = vunpack.c.h.b16 %v3435
        %v3537 = vunpack.c.l.b16 %v3436
        %v3538 = vunpack.c.l.b16 %v3437
        %v3539 = vunpack.c.h.b16 %v3437
        %v3540 = vunpack.c.l.b16 %v3438
        %v3541 = vunpack.c.l.b16 %v3439
        %v3542 = vunpack.c.h.b16 %v3439
        %v3543 = vunpack.c.l.b16 %v3440
        %v3544 = vunpack.c.l.b16 %v3441
        %v3545 = vunpack.c.h.b16 %v3441
        %v3546 = vunpack.c.l.b16 %v3442
        %v3547 = vpack.c.b16 %v3499, %v3496
        %v3548 = vpack.c.b16 %v3500, %v3497
        %v3549 = vpack.c.b16 %v3501, %v3498
        %v3550 = vpack.c.b16 %v3505, %v3502
        %v3551 = vpack.c.b16 %v3506, %v3503
        %v3552 = vpack.c.b16 %v3507, %v3504
        %v3553 = vpack.c.b16 %v3511, %v3508
        %v3554 = vpack.c.b16 %v3512, %v3509
        %v3555 = vpack.c.b16 %v3513, %v3510
        %v3556 = vpack.c.b16 %v3517, %v3514
        %v3557 = vpack.c.b16 %v3518, %v3515
        %v3558 = vpack.c.b16 %v3519, %v3516
        %v3559 = vpack.c.b16 %v3523, %v3520
        %v3560 = vpack.c.b16 %v3524, %v3521
        %v3561 = vpack.c.b16 %v3525, %v3522
        %v3562 = vpack.c.b16 %v3529, %v3526
        %v3563 = vpack.c.b16 %v3530, %v3527
        %v3564 = vpack.c.b16 %v3531, %v3528
        %v3565 = vpack.c.b16 %v3535, %v3532
        %v3566 = vpack.c.b16 %v3536, %v3533
        %v3567 = vpack.c.b16 %v3537, %v3534
        %v3568 = vpack.c.b16 %v3541, %v3538
        %v3569 = vpack.c.b16 %v3542, %v3539
        %v3570 = vpack.c.b16 %v3543, %v3540
        %v3571 = vpack.c.b16 %v3544, %v3544
        %v3572 = vpack.c.b16 %v3545, %v3545
        %v3573 = vpack.c.b16 %v3546, %v3546
        %vm3598 = vcmask 31744
        %v3599 = vsel %vm3598, %v3454, 0
        %v3601 = vsel %vm3598, %v3458, 0
        %v3603 = vsel %vm3598, %v3457, 0
        %vm3605 = vcmask 1041408
        %v3607 = vsel %vm3605, %v3571, 0
        %v3610 = vsel %vm3605, %v3572, 0
        %v3613 = vsel %vm3605, %v3573, 0
        %3615 = vmatprep.subr.bf16.mxu0 %v3548
        %3616 = vmatpush1.bf16.msra.mxu0 %v3547
        %3617 = vmatprep.subr.bf16.mxu0 %v3551
        %3618 = vmatpush1.bf16.msra.mxu0 %v3550
        %3619 = vmatprep.subr.bf16.mxu0 %v3554
        %3620 = vmatpush1.bf16.msra.mxu0 %v3553
        %3621 = vmatprep.subr.bf16.mxu0 %v3557
        %3622 = vmatpush1.bf16.msra.mxu0 %v3556
        %3623 = vmatprep.subr.bf16.mxu0 %v3560
        %3624 = vmatpush1.bf16.msra.mxu0 %v3559
        %3625 = vmatprep.subr.bf16.mxu0 %v3563
        %3626 = vmatpush1.bf16.msra.mxu0 %v3562
        %3627 = vmatprep.subr.bf16.mxu0 %v3566
        %3628 = vmatpush1.bf16.msra.mxu0 %v3565
        %3629 = vmatprep.subr.bf16.mxu0 %v3569
        %3630 = vmatpush1.bf16.msra.mxu0 %v3568
        %3631 = vmatprep.subr.bf16.mxu0 %v3610
        %3632 = vmatpush1.bf16.msra.mxu0 %v3607
        %3633 = vmatprep.subr.bf16.mxu0 0
        %3634 = vmatpush1.bf16.msra.mxu0 0
        %3635 = vmatprep.subr.bf16.mxu0 0
        %3636 = vmatpush1.bf16.msra.mxu0 0
        %3637 = vmatprep.subr.bf16.mxu0 0
        %3638 = vmatpush1.bf16.msra.mxu0 0
        %3639 = vmatprep.subr.bf16.mxu0 0
        %3640 = vmatpush1.bf16.msra.mxu0 0
        %3641 = vmatprep.subr.bf16.mxu0 0
        %3642 = vmatpush1.bf16.msra.mxu0 0
        %3643 = vmatprep.subr.bf16.mxu0 0
        %3644 = vmatpush1.bf16.msra.mxu0 0
        %3645 = vmatprep.subr.bf16.mxu0 0
        %3646 = vmatpush1.bf16.msra.mxu0 0
        %3647 = vmatprep.mubr.f32.mxu0 %v3599
        %3648 = vmatmul.mubr.f32.gmra.mrb[0].mxu0 %v3451
        %v3649 = vpop.f32.mrb[0].mxu0
        %v3650 = vadd.f32 0.0, %v3649
        %v3651 = vpop.f32.mrb[0].mxu0
        %v3652 = vadd.f32 0.0, %v3651
        %3653 = vmatprep.mubr.f32.mxu0 %v3601
        %3654 = vmatmul.mubr.f32.gmra.mrb[0].mxu0 %v3456
        %v3655 = vpop.f32.mrb[0].mxu0
        %v3656 = vadd.f32 0.0, %v3655
        %v3657 = vpop.f32.mrb[0].mxu0
        %v3658 = vadd.f32 0.0, %v3657
        %3659 = vmatprep.mubr.f32.mxu0 %v3603
        %3660 = vmatmul.mubr.f32.gmra.mrb[0].mxu0 %v3455
        %v3661 = vpop.f32.mrb[0].mxu0
        %v3662 = vadd.f32 0.0, %v3661
        %v3663 = vpop.f32.mrb[0].mxu0
        %v3664 = vadd.f32 0.0, %v3663
        %3665 = vdwg.mxu0
        %3666 = vmatprep.subr.bf16.mxu0 0
        %3667 = vmatpush1.bf16.msra.mxu0 %v3549
        %3668 = vmatprep.subr.bf16.mxu0 0
        %3669 = vmatpush1.bf16.msra.mxu0 %v3552
        %3670 = vmatprep.subr.bf16.mxu0 0
        %3671 = vmatpush1.bf16.msra.mxu0 %v3555
        %3672 = vmatprep.subr.bf16.mxu0 0
        %3673 = vmatpush1.bf16.msra.mxu0 %v3558
        %3674 = vmatprep.subr.bf16.mxu0 0
        %3675 = vmatpush1.bf16.msra.mxu0 %v3561
        %3676 = vmatprep.subr.bf16.mxu0 0
        %3677 = vmatpush1.bf16.msra.mxu0 %v3564
        %3678 = vmatprep.subr.bf16.mxu0 0
        %3679 = vmatpush1.bf16.msra.mxu0 %v3567
        %3680 = vmatprep.subr.bf16.mxu0 0
        %3681 = vmatpush1.bf16.msra.mxu0 %v3570
        %3682 = vmatprep.subr.bf16.mxu0 0
        %3683 = vmatpush1.bf16.msra.mxu0 %v3613
        %3684 = vmatprep.subr.bf16.mxu0 0
        %3685 = vmatpush1.bf16.msra.mxu0 0
        %3686 = vmatprep.subr.bf16.mxu0 0
        %3687 = vmatpush1.bf16.msra.mxu0 0
        %3688 = vmatprep.subr.bf16.mxu0 0
        %3689 = vmatpush1.bf16.msra.mxu0 0
        %3690 = vmatprep.subr.bf16.mxu0 0
        %3691 = vmatpush1.bf16.msra.mxu0 0
        %3692 = vmatprep.subr.bf16.mxu0 0
        %3693 = vmatpush1.bf16.msra.mxu0 0
        %3694 = vmatprep.subr.bf16.mxu0 0
        %3695 = vmatpush1.bf16.msra.mxu0 0
        %3696 = vmatprep.subr.bf16.mxu0 0
        %3697 = vmatpush1.bf16.msra.mxu0 0
        %3698 = vmatprep.mubr.f32.mxu0 %v3599
        %3699 = vmatmul.mubr.f32.gmra.mrb[0].mxu0 %v3451
        %v3700 = vpop.f32.mrb[0].mxu0
        %v3701 = vadd.f32 0.0, %v3700
        %v3702 = vpop.f32.mrb[0].mxu0
        %3703 = vmatprep.mubr.f32.mxu0 %v3601
        %3704 = vmatmul.mubr.f32.gmra.mrb[0].mxu0 %v3456
        %v3705 = vpop.f32.mrb[0].mxu0
        %v3706 = vadd.f32 0.0, %v3705
        %v3707 = vpop.f32.mrb[0].mxu0
        %3708 = vmatprep.mubr.f32.mxu0 %v3603
        %3709 = vmatmul.mubr.f32.gmra.mrb[0].mxu0 %v3455
        %v3710 = vpop.f32.mrb[0].mxu0
        %v3711 = vadd.f32 0.0, %v3710
        %v3712 = vpop.f32.mrb[0].mxu0
        %3713 = vdwg.mxu0
        %v3748 = vunpack.c.l.b16 %v3374
        %v3749 = vunpack.c.h.b16 %v3374
        %v3750 = vunpack.c.l.b16 %v3375
        %v3751 = vunpack.c.l.b16 %v3376
        %v3752 = vunpack.c.h.b16 %v3376
        %v3753 = vunpack.c.l.b16 %v3377
        %v3754 = vunpack.c.l.b16 %v3378
        %v3755 = vunpack.c.h.b16 %v3378
        %v3756 = vunpack.c.l.b16 %v3379
        %v3757 = vunpack.c.l.b16 %v3380
        %v3758 = vunpack.c.h.b16 %v3380
        %v3759 = vunpack.c.l.b16 %v3381
        %v3760 = vunpack.c.l.b16 %v3382
        %v3761 = vunpack.c.h.b16 %v3382
        %v3762 = vunpack.c.l.b16 %v3383
        %v3763 = vunpack.c.l.b16 %v3384
        %v3764 = vunpack.c.h.b16 %v3384
        %v3765 = vunpack.c.l.b16 %v3385
        %v3766 = vunpack.c.l.b16 %v3386
        %v3767 = vunpack.c.h.b16 %v3386
        %v3768 = vunpack.c.l.b16 %v3387
        %v3769 = vunpack.c.l.b16 %v3388
        %v3770 = vunpack.c.h.b16 %v3388
        %v3771 = vunpack.c.l.b16 %v3389
        %v3772 = vunpack.c.l.b16 %v3390
        %v3773 = vunpack.c.h.b16 %v3390
        %v3774 = vunpack.c.l.b16 %v3391
        %v3775 = vunpack.c.l.b16 %v3392
        %v3776 = vunpack.c.h.b16 %v3392
        %v3777 = vunpack.c.l.b16 %v3393
        %v3778 = vunpack.c.l.b16 %v3394
        %v3779 = vunpack.c.h.b16 %v3394
        %v3780 = vunpack.c.l.b16 %v3395
        %v3781 = vunpack.c.l.b16 %v3396
        %v3782 = vunpack.c.h.b16 %v3396
        %v3783 = vunpack.c.l.b16 %v3397
        %v3784 = vunpack.c.l.b16 %v3398
        %v3785 = vunpack.c.h.b16 %v3398
        %v3786 = vunpack.c.l.b16 %v3399
        %v3787 = vunpack.c.l.b16 %v3400
        %v3788 = vunpack.c.h.b16 %v3400
        %v3789 = vunpack.c.l.b16 %v3401
        %v3790 = vunpack.c.l.b16 %v3402
        %v3791 = vunpack.c.h.b16 %v3402
        %v3792 = vunpack.c.l.b16 %v3403
        %v3793 = vunpack.c.l.b16 %v3404
        %v3794 = vunpack.c.h.b16 %v3404
        %v3795 = vunpack.c.l.b16 %v3405
        %v3796 = vunpack.c.l.b16 %v3406
        %v3797 = vunpack.c.h.b16 %v3406
        %v3798 = vunpack.c.l.b16 %v3407
        %v3799 = vpack.c.b16 %v3751, %v3748
        %v3800 = vpack.c.b16 %v3752, %v3749
        %v3801 = vpack.c.b16 %v3753, %v3750
        %v3802 = vpack.c.b16 %v3757, %v3754
        %v3803 = vpack.c.b16 %v3758, %v3755
        %v3804 = vpack.c.b16 %v3759, %v3756
        %v3805 = vpack.c.b16 %v3763, %v3760
        %v3806 = vpack.c.b16 %v3764, %v3761
        %v3807 = vpack.c.b16 %v3765, %v3762
        %v3808 = vpack.c.b16 %v3769, %v3766
        %v3809 = vpack.c.b16 %v3770, %v3767
        %v3810 = vpack.c.b16 %v3771, %v3768
        %v3811 = vpack.c.b16 %v3775, %v3772
        %v3812 = vpack.c.b16 %v3776, %v3773
        %v3813 = vpack.c.b16 %v3777, %v3774
        %v3814 = vpack.c.b16 %v3781, %v3778
        %v3815 = vpack.c.b16 %v3782, %v3779
        %v3816 = vpack.c.b16 %v3783, %v3780
        %v3817 = vpack.c.b16 %v3787, %v3784
        %v3818 = vpack.c.b16 %v3788, %v3785
        %v3819 = vpack.c.b16 %v3789, %v3786
        %v3820 = vpack.c.b16 %v3793, %v3790
        %v3821 = vpack.c.b16 %v3794, %v3791
        %v3822 = vpack.c.b16 %v3795, %v3792
        %v3823 = vpack.c.b16 %v3796, %v3796
        %v3824 = vpack.c.b16 %v3797, %v3797
        %v3825 = vpack.c.b16 %v3798, %v3798
        %v3850 = vsel %vm3598, %v3369, 0
        %v3852 = vsel %vm3598, %v3371, 0
        %v3854 = vsel %vm3598, %v3373, 0
        %v3857 = vsel %vm3605, %v3823, 0
        %v3860 = vsel %vm3605, %v3824, 0
        %v3863 = vsel %vm3605, %v3825, 0
        %3865 = vmatprep.subr.bf16.mxu0 %v3800
        %3866 = vmatpush1.bf16.msra.mxu0 %v3799
        %3867 = vmatprep.subr.bf16.mxu0 %v3803
        %3868 = vmatpush1.bf16.msra.mxu0 %v3802
        %3869 = vmatprep.subr.bf16.mxu0 %v3806
        %3870 = vmatpush1.bf16.msra.mxu0 %v3805
        %3871 = vmatprep.subr.bf16.mxu0 %v3809
        %3872 = vmatpush1.bf16.msra.mxu0 %v3808
        %3873 = vmatprep.subr.bf16.mxu0 %v3812
        %3874 = vmatpush1.bf16.msra.mxu0 %v3811
        %3875 = vmatprep.subr.bf16.mxu0 %v3815
        %3876 = vmatpush1.bf16.msra.mxu0 %v3814
        %3877 = vmatprep.subr.bf16.mxu0 %v3818
        %3878 = vmatpush1.bf16.msra.mxu0 %v3817
        %3879 = vmatprep.subr.bf16.mxu0 %v3821
        %3880 = vmatpush1.bf16.msra.mxu0 %v3820
        %3881 = vmatprep.subr.bf16.mxu0 %v3860
        %3882 = vmatpush1.bf16.msra.mxu0 %v3857
        %3883 = vmatprep.subr.bf16.mxu0 0
        %3884 = vmatpush1.bf16.msra.mxu0 0
        %3885 = vmatprep.subr.bf16.mxu0 0
        %3886 = vmatpush1.bf16.msra.mxu0 0
        %3887 = vmatprep.subr.bf16.mxu0 0
        %3888 = vmatpush1.bf16.msra.mxu0 0
        %3889 = vmatprep.subr.bf16.mxu0 0
        %3890 = vmatpush1.bf16.msra.mxu0 0
        %3891 = vmatprep.subr.bf16.mxu0 0
        %3892 = vmatpush1.bf16.msra.mxu0 0
        %3893 = vmatprep.subr.bf16.mxu0 0
        %3894 = vmatpush1.bf16.msra.mxu0 0
        %3895 = vmatprep.subr.bf16.mxu0 0
        %3896 = vmatpush1.bf16.msra.mxu0 0
        %3897 = vmatprep.mubr.f32.mxu0 %v3850
        %3898 = vmatmul.mubr.f32.gmra.mrb[0].mxu0 %v3368
        %v3899 = vpop.f32.mrb[0].mxu0
        %v3900 = vadd.f32 %v3650, %v3899
        %v3901 = vpop.f32.mrb[0].mxu0
        %v3902 = vadd.f32 %v3652, %v3901
        %3903 = vmatprep.mubr.f32.mxu0 %v3852
        %3904 = vmatmul.mubr.f32.gmra.mrb[0].mxu0 %v3370
        %v3905 = vpop.f32.mrb[0].mxu0
        %v3906 = vadd.f32 %v3656, %v3905
        %v3907 = vpop.f32.mrb[0].mxu0
        %v3908 = vadd.f32 %v3658, %v3907
        %3909 = vmatprep.mubr.f32.mxu0 %v3854
        %3910 = vmatmul.mubr.f32.gmra.mrb[0].mxu0 %v3372
        %v3911 = vpop.f32.mrb[0].mxu0
        %v3912 = vadd.f32 %v3662, %v3911
        %v3913 = vpop.f32.mrb[0].mxu0
        %v3914 = vadd.f32 %v3664, %v3913
        %3915 = vdwg.mxu0
        %3916 = vmatprep.subr.bf16.mxu0 0
        %3917 = vmatpush1.bf16.msra.mxu0 %v3801
        %3918 = vmatprep.subr.bf16.mxu0 0
        %3919 = vmatpush1.bf16.msra.mxu0 %v3804
        %3920 = vmatprep.subr.bf16.mxu0 0
        %3921 = vmatpush1.bf16.msra.mxu0 %v3807
        %3922 = vmatprep.subr.bf16.mxu0 0
        %3923 = vmatpush1.bf16.msra.mxu0 %v3810
        %3924 = vmatprep.subr.bf16.mxu0 0
        %3925 = vmatpush1.bf16.msra.mxu0 %v3813
        %3926 = vmatprep.subr.bf16.mxu0 0
        %3927 = vmatpush1.bf16.msra.mxu0 %v3816
        %3928 = vmatprep.subr.bf16.mxu0 0
        %3929 = vmatpush1.bf16.msra.mxu0 %v3819
        %3930 = vmatprep.subr.bf16.mxu0 0
        %3931 = vmatpush1.bf16.msra.mxu0 %v3822
        %3932 = vmatprep.subr.bf16.mxu0 0
        %3933 = vmatpush1.bf16.msra.mxu0 %v3863
        %3934 = vmatprep.subr.bf16.mxu0 0
        %3935 = vmatpush1.bf16.msra.mxu0 0
        %3936 = vmatprep.subr.bf16.mxu0 0
        %3937 = vmatpush1.bf16.msra.mxu0 0
        %3938 = vmatprep.subr.bf16.mxu0 0
        %3939 = vmatpush1.bf16.msra.mxu0 0
        %3940 = vmatprep.subr.bf16.mxu0 0
        %3941 = vmatpush1.bf16.msra.mxu0 0
        %3942 = vmatprep.subr.bf16.mxu0 0
        %3943 = vmatpush1.bf16.msra.mxu0 0
        %3944 = vmatprep.subr.bf16.mxu0 0
        %3945 = vmatpush1.bf16.msra.mxu0 0
        %3946 = vmatprep.subr.bf16.mxu0 0
        %3947 = vmatpush1.bf16.msra.mxu0 0
        %3948 = vmatprep.mubr.f32.mxu0 %v3850
        %3949 = vmatmul.mubr.f32.gmra.mrb[0].mxu0 %v3368
        %v3950 = vpop.f32.mrb[0].mxu0
        %v3951 = vadd.f32 %v3701, %v3950
        %v3952 = vpop.f32.mrb[0].mxu0
        %3953 = vmatprep.mubr.f32.mxu0 %v3852
        %3954 = vmatmul.mubr.f32.gmra.mrb[0].mxu0 %v3370
        %v3955 = vpop.f32.mrb[0].mxu0
        %v3956 = vadd.f32 %v3706, %v3955
        %v3957 = vpop.f32.mrb[0].mxu0
        %3958 = vmatprep.mubr.f32.mxu0 %v3854
        %3959 = vmatmul.mubr.f32.gmra.mrb[0].mxu0 %v3372
        %v3960 = vpop.f32.mrb[0].mxu0
        %v3961 = vadd.f32 %v3711, %v3960
        %v3962 = vpop.f32.mrb[0].mxu0
        %3963 = vdwg.mxu0
        %s3964 = scalar_lea.vmem %s5, 408
        %v3965 = vld [vmem:[%s3964] sm:$0xff]
        %v3966 = vld [vmem:[%s3964 + $0x8] sm:$0xf]
        %v3967 = vld [vmem:[%s3964 + $0xc] sm:$0xff]
        %v3968 = vld [vmem:[%s3964 + $0x14] sm:$0xf]
        %v3969 = vld [vmem:[%s3964 + $0x18] sm:$0xff]
        %v3970 = vld [vmem:[%s3964 + $0x20] sm:$0xf]
        %v3971 = vld [vmem:[%s3964 + $0x24] sm:$0xff]
        %v3972 = vld [vmem:[%s3964 + $0x2c] sm:$0xf]
        %v3973 = vld [vmem:[%s3964 + $0x30] sm:$0xff]
        %v3974 = vld [vmem:[%s3964 + $0x38] sm:$0xf]
        %v3975 = vld [vmem:[%s3964 + $0x3c] sm:$0xff]
        %v3976 = vld [vmem:[%s3964 + $0x44] sm:$0xf]
        %v3977 = vld [vmem:[%s3964 + $0x48] sm:$0xff]
        %v3978 = vld [vmem:[%s3964 + $0x50] sm:$0xf]
        %v3979 = vld [vmem:[%s3964 + $0x54] sm:$0xff]
        %v3980 = vld [vmem:[%s3964 + $0x5c] sm:$0xf]
        %v3981 = vld [vmem:[%s3964 + $0x60] sm:$0xff]
        %v3982 = vld [vmem:[%s3964 + $0x68] sm:$0xf]
        %v3983 = vld [vmem:[%s3964 + $0x6c] sm:$0xff]
        %v3984 = vld [vmem:[%s3964 + $0x74] sm:$0xf]
        %v3985 = vld [vmem:[%s3964 + $0x78] sm:$0xff]
        %v3986 = vld [vmem:[%s3964 + $0x80] sm:$0xf]
        %v3987 = vld [vmem:[%s3964 + $0x84] sm:$0xff]
        %v3988 = vld [vmem:[%s3964 + $0x8c] sm:$0xf]
        %v3989 = vld [vmem:[%s3964 + $0x90] sm:$0xff]
        %v3990 = vld [vmem:[%s3964 + $0x98] sm:$0xf]
        %v3991 = vld [vmem:[%s3964 + $0x9c] sm:$0xff]
        %v3992 = vld [vmem:[%s3964 + $0xa4] sm:$0xf]
        %v3993 = vld [vmem:[%s3964 + $0xa8] sm:$0xff]
        %v3994 = vld [vmem:[%s3964 + $0xb0] sm:$0xf]
        %v3995 = vld [vmem:[%s3964 + $0xb4] sm:$0xff]
        %v3996 = vld [vmem:[%s3964 + $0xbc] sm:$0xf]
        %v3997 = vld [vmem:[%s3964 + $0xc0] sm:$0x33]
        %v3998 = vld [vmem:[%s3964 + $0xc8] sm:$0x3]
        %v3999 = vrot.slane %v3368, 2
        %v4000 = vrot.slane %v3370, 2
        %v4001 = vsel %vm1233, %v3999, %v4000
        %v4002 = vrot.slane %v3369, 2
        %v4003 = vrot.slane %v3371, 2
        %v4004 = vsel %vm1233, %v4002, %v4003
        %v4005 = vrot.slane %v3372, 2
        %v4006 = vsel %vm1233, %v4000, %v4005
        %v4007 = vrot.slane %v3373, 2
        %v4008 = vsel %vm1233, %v4003, %v4007
        %v4046 = vunpack.c.l.b16 %v3965
        %v4047 = vunpack.c.h.b16 %v3965
        %v4048 = vunpack.c.l.b16 %v3966
        %v4049 = vunpack.c.l.b16 %v3967
        %v4050 = vunpack.c.h.b16 %v3967
        %v4051 = vunpack.c.l.b16 %v3968
        %v4052 = vunpack.c.l.b16 %v3969
        %v4053 = vunpack.c.h.b16 %v3969
        %v4054 = vunpack.c.l.b16 %v3970
        %v4055 = vunpack.c.l.b16 %v3971
        %v4056 = vunpack.c.h.b16 %v3971
        %v4057 = vunpack.c.l.b16 %v3972
        %v4058 = vunpack.c.l.b16 %v3973
        %v4059 = vunpack.c.h.b16 %v3973
        %v4060 = vunpack.c.l.b16 %v3974
        %v4061 = vunpack.c.l.b16 %v3975
        %v4062 = vunpack.c.h.b16 %v3975
        %v4063 = vunpack.c.l.b16 %v3976
        %v4064 = vunpack.c.l.b16 %v3977
        %v4065 = vunpack.c.h.b16 %v3977
        %v4066 = vunpack.c.l.b16 %v3978
        %v4067 = vunpack.c.l.b16 %v3979
        %v4068 = vunpack.c.h.b16 %v3979
        %v4069 = vunpack.c.l.b16 %v3980
        %v4070 = vunpack.c.l.b16 %v3981
        %v4071 = vunpack.c.h.b16 %v3981
        %v4072 = vunpack.c.l.b16 %v3982
        %v4073 = vunpack.c.l.b16 %v3983
        %v4074 = vunpack.c.h.b16 %v3983
        %v4075 = vunpack.c.l.b16 %v3984
        %v4076 = vunpack.c.l.b16 %v3985
        %v4077 = vunpack.c.h.b16 %v3985
        %v4078 = vunpack.c.l.b16 %v3986
        %v4079 = vunpack.c.l.b16 %v3987
        %v4080 = vunpack.c.h.b16 %v3987
        %v4081 = vunpack.c.l.b16 %v3988
        %v4082 = vunpack.c.l.b16 %v3989
        %v4083 = vunpack.c.h.b16 %v3989
        %v4084 = vunpack.c.l.b16 %v3990
        %v4085 = vunpack.c.l.b16 %v3991
        %v4086 = vunpack.c.h.b16 %v3991
        %v4087 = vunpack.c.l.b16 %v3992
        %v4088 = vunpack.c.l.b16 %v3993
        %v4089 = vunpack.c.h.b16 %v3993
        %v4090 = vunpack.c.l.b16 %v3994
        %v4091 = vunpack.c.l.b16 %v3995
        %v4092 = vunpack.c.h.b16 %v3995
        %v4093 = vunpack.c.l.b16 %v3996
        %v4094 = vunpack.c.l.b16 %v3997
        %v4095 = vunpack.c.h.b16 %v3997
        %v4096 = vunpack.c.l.b16 %v3998
        %v4097 = vpack.c.b16 %v4049, %v4046
        %v4098 = vpack.c.b16 %v4050, %v4047
        %v4099 = vpack.c.b16 %v4051, %v4048
        %v4100 = vpack.c.b16 %v4055, %v4052
        %v4101 = vpack.c.b16 %v4056, %v4053
        %v4102 = vpack.c.b16 %v4057, %v4054
        %v4103 = vpack.c.b16 %v4061, %v4058
        %v4104 = vpack.c.b16 %v4062, %v4059
        %v4105 = vpack.c.b16 %v4063, %v4060
        %v4106 = vpack.c.b16 %v4067, %v4064
        %v4107 = vpack.c.b16 %v4068, %v4065
        %v4108 = vpack.c.b16 %v4069, %v4066
        %v4109 = vpack.c.b16 %v4073, %v4070
        %v4110 = vpack.c.b16 %v4074, %v4071
        %v4111 = vpack.c.b16 %v4075, %v4072
        %v4112 = vpack.c.b16 %v4079, %v4076
        %v4113 = vpack.c.b16 %v4080, %v4077
        %v4114 = vpack.c.b16 %v4081, %v4078
        %v4115 = vpack.c.b16 %v4085, %v4082
        %v4116 = vpack.c.b16 %v4086, %v4083
        %v4117 = vpack.c.b16 %v4087, %v4084
        %v4118 = vpack.c.b16 %v4091, %v4088
        %v4119 = vpack.c.b16 %v4092, %v4089
        %v4120 = vpack.c.b16 %v4093, %v4090
        %v4121 = vpack.c.b16 %v4094, %v4094
        %v4122 = vpack.c.b16 %v4095, %v4095
        %v4123 = vpack.c.b16 %v4096, %v4096
        %v4148 = vsel %vm3598, %v4004, 0
        %v4150 = vsel %vm3598, %v4008, 0
        %v4152 = vsel %vm3598, %v4007, 0
        %v4155 = vsel %vm3605, %v4121, 0
        %v4158 = vsel %vm3605, %v4122, 0
        %v4161 = vsel %vm3605, %v4123, 0
        %4163 = vmatprep.subr.bf16.mxu0 %v4098
        %4164 = vmatpush1.bf16.msra.mxu0 %v4097
        %4165 = vmatprep.subr.bf16.mxu0 %v4101
        %4166 = vmatpush1.bf16.msra.mxu0 %v4100
        %4167 = vmatprep.subr.bf16.mxu0 %v4104
        %4168 = vmatpush1.bf16.msra.mxu0 %v4103
        %4169 = vmatprep.subr.bf16.mxu0 %v4107
        %4170 = vmatpush1.bf16.msra.mxu0 %v4106
        %4171 = vmatprep.subr.bf16.mxu0 %v4110
        %4172 = vmatpush1.bf16.msra.mxu0 %v4109
        %4173 = vmatprep.subr.bf16.mxu0 %v4113
        %4174 = vmatpush1.bf16.msra.mxu0 %v4112
        %4175 = vmatprep.subr.bf16.mxu0 %v4116
        %4176 = vmatpush1.bf16.msra.mxu0 %v4115
        %4177 = vmatprep.subr.bf16.mxu0 %v4119
        %4178 = vmatpush1.bf16.msra.mxu0 %v4118
        %4179 = vmatprep.subr.bf16.mxu0 %v4158
        %4180 = vmatpush1.bf16.msra.mxu0 %v4155
        %4181 = vmatprep.subr.bf16.mxu0 0
        %4182 = vmatpush1.bf16.msra.mxu0 0
        %4183 = vmatprep.subr.bf16.mxu0 0
        %4184 = vmatpush1.bf16.msra.mxu0 0
        %4185 = vmatprep.subr.bf16.mxu0 0
        %4186 = vmatpush1.bf16.msra.mxu0 0
        %4187 = vmatprep.subr.bf16.mxu0 0
        %4188 = vmatpush1.bf16.msra.mxu0 0
        %4189 = vmatprep.subr.bf16.mxu0 0
        %4190 = vmatpush1.bf16.msra.mxu0 0
        %4191 = vmatprep.subr.bf16.mxu0 0
        %4192 = vmatpush1.bf16.msra.mxu0 0
        %4193 = vmatprep.subr.bf16.mxu0 0
        %4194 = vmatpush1.bf16.msra.mxu0 0
        %4195 = vmatprep.mubr.f32.mxu0 %v4148
        %4196 = vmatmul.mubr.f32.gmra.mrb[0].mxu0 %v4001
        %v4197 = vpop.f32.mrb[0].mxu0
        %v4198 = vadd.f32 0.0, %v4197
        %v4199 = vpop.f32.mrb[0].mxu0
        %v4200 = vadd.f32 0.0, %v4199
        %4201 = vmatprep.mubr.f32.mxu0 %v4150
        %4202 = vmatmul.mubr.f32.gmra.mrb[0].mxu0 %v4006
        %v4203 = vpop.f32.mrb[0].mxu0
        %v4204 = vadd.f32 0.0, %v4203
        %v4205 = vpop.f32.mrb[0].mxu0
        %v4206 = vadd.f32 0.0, %v4205
        %4207 = vmatprep.mubr.f32.mxu0 %v4152
        %4208 = vmatmul.mubr.f32.gmra.mrb[0].mxu0 %v4005
        %v4209 = vpop.f32.mrb[0].mxu0
        %v4210 = vadd.f32 0.0, %v4209
        %v4211 = vpop.f32.mrb[0].mxu0
        %v4212 = vadd.f32 0.0, %v4211
        %4213 = vdwg.mxu0
        %4214 = vmatprep.subr.bf16.mxu0 0
        %4215 = vmatpush1.bf16.msra.mxu0 %v4099
        %4216 = vmatprep.subr.bf16.mxu0 0
        %4217 = vmatpush1.bf16.msra.mxu0 %v4102
        %4218 = vmatprep.subr.bf16.mxu0 0
        %4219 = vmatpush1.bf16.msra.mxu0 %v4105
        %4220 = vmatprep.subr.bf16.mxu0 0
        %4221 = vmatpush1.bf16.msra.mxu0 %v4108
        %4222 = vmatprep.subr.bf16.mxu0 0
        %4223 = vmatpush1.bf16.msra.mxu0 %v4111
        %4224 = vmatprep.subr.bf16.mxu0 0
        %4225 = vmatpush1.bf16.msra.mxu0 %v4114
        %4226 = vmatprep.subr.bf16.mxu0 0
        %4227 = vmatpush1.bf16.msra.mxu0 %v4117
        %4228 = vmatprep.subr.bf16.mxu0 0
        %4229 = vmatpush1.bf16.msra.mxu0 %v4120
        %4230 = vmatprep.subr.bf16.mxu0 0
        %4231 = vmatpush1.bf16.msra.mxu0 %v4161
        %4232 = vmatprep.subr.bf16.mxu0 0
        %4233 = vmatpush1.bf16.msra.mxu0 0
        %4234 = vmatprep.subr.bf16.mxu0 0
        %4235 = vmatpush1.bf16.msra.mxu0 0
        %4236 = vmatprep.subr.bf16.mxu0 0
        %4237 = vmatpush1.bf16.msra.mxu0 0
        %4238 = vmatprep.subr.bf16.mxu0 0
        %4239 = vmatpush1.bf16.msra.mxu0 0
        %4240 = vmatprep.subr.bf16.mxu0 0
        %4241 = vmatpush1.bf16.msra.mxu0 0
        %4242 = vmatprep.subr.bf16.mxu0 0
        %4243 = vmatpush1.bf16.msra.mxu0 0
        %4244 = vmatprep.subr.bf16.mxu0 0
        %4245 = vmatpush1.bf16.msra.mxu0 0
        %4246 = vmatprep.mubr.f32.mxu0 %v4148
        %4247 = vmatmul.mubr.f32.gmra.mrb[0].mxu0 %v4001
        %v4248 = vpop.f32.mrb[0].mxu0
        %v4249 = vadd.f32 0.0, %v4248
        %v4250 = vpop.f32.mrb[0].mxu0
        %4251 = vmatprep.mubr.f32.mxu0 %v4150
        %4252 = vmatmul.mubr.f32.gmra.mrb[0].mxu0 %v4006
        %v4253 = vpop.f32.mrb[0].mxu0
        %v4254 = vadd.f32 0.0, %v4253
        %v4255 = vpop.f32.mrb[0].mxu0
        %4256 = vmatprep.mubr.f32.mxu0 %v4152
        %4257 = vmatmul.mubr.f32.gmra.mrb[0].mxu0 %v4005
        %v4258 = vpop.f32.mrb[0].mxu0
        %v4259 = vadd.f32 0.0, %v4258
        %v4260 = vpop.f32.mrb[0].mxu0
        %4261 = vdwg.mxu0
        %v4262 = vadd.f32 %v3900, %v4198
        %v4263 = vadd.f32 %v3902, %v4200
        %v4264 = vadd.f32 %v3951, %v4249
        %v4265 = vadd.f32 %v3906, %v4204
        %v4266 = vadd.f32 %v3908, %v4206
        %v4267 = vadd.f32 %v3956, %v4254
        %v4268 = vadd.f32 %v3912, %v4210
        %v4269 = vadd.f32 %v3914, %v4212
        %v4270 = vadd.f32 %v3961, %v4259
        %s4271 = scalar_lea.vmem %s5, 612
        %v4272 = vld [vmem:[%s4271] sm:$0xff]
        %v4273 = vld [vmem:[%s4271 + $0x8] sm:$0xf]
        %v4274 = vld [vmem:[%s4271 + $0xc] sm:$0xff]
        %v4275 = vld [vmem:[%s4271 + $0x14] sm:$0xf]
        %v4276 = vld [vmem:[%s4271 + $0x18] sm:$0xff]
        %v4277 = vld [vmem:[%s4271 + $0x20] sm:$0xf]
        %v4278 = vld [vmem:[%s4271 + $0x24] sm:$0xff]
        %v4279 = vld [vmem:[%s4271 + $0x2c] sm:$0xf]
        %v4280 = vld [vmem:[%s4271 + $0x30] sm:$0xff]
        %v4281 = vld [vmem:[%s4271 + $0x38] sm:$0xf]
        %v4282 = vld [vmem:[%s4271 + $0x3c] sm:$0xff]
        %v4283 = vld [vmem:[%s4271 + $0x44] sm:$0xf]
        %v4284 = vld [vmem:[%s4271 + $0x48] sm:$0xff]
        %v4285 = vld [vmem:[%s4271 + $0x50] sm:$0xf]
        %v4286 = vld [vmem:[%s4271 + $0x54] sm:$0xff]
        %v4287 = vld [vmem:[%s4271 + $0x5c] sm:$0xf]
        %v4288 = vld [vmem:[%s4271 + $0x60] sm:$0xff]
        %v4289 = vld [vmem:[%s4271 + $0x68] sm:$0xf]
        %v4290 = vld [vmem:[%s4271 + $0x6c] sm:$0xff]
        %v4291 = vld [vmem:[%s4271 + $0x74] sm:$0xf]
        %v4292 = vld [vmem:[%s4271 + $0x78] sm:$0xff]
        %v4293 = vld [vmem:[%s4271 + $0x80] sm:$0xf]
        %v4294 = vld [vmem:[%s4271 + $0x84] sm:$0xff]
        %v4295 = vld [vmem:[%s4271 + $0x8c] sm:$0xf]
        %v4296 = vld [vmem:[%s4271 + $0x90] sm:$0xff]
        %v4297 = vld [vmem:[%s4271 + $0x98] sm:$0xf]
        %v4298 = vld [vmem:[%s4271 + $0x9c] sm:$0xff]
        %v4299 = vld [vmem:[%s4271 + $0xa4] sm:$0xf]
        %v4300 = vld [vmem:[%s4271 + $0xa8] sm:$0xff]
        %v4301 = vld [vmem:[%s4271 + $0xb0] sm:$0xf]
        %v4302 = vld [vmem:[%s4271 + $0xb4] sm:$0xff]
        %v4303 = vld [vmem:[%s4271 + $0xbc] sm:$0xf]
        %v4304 = vld [vmem:[%s4271 + $0xc0] sm:$0x33]
        %v4305 = vld [vmem:[%s4271 + $0xc8] sm:$0x3]
        %v4306 = vrot.slane %v3368, 3
        %v4307 = vrot.slane %v3370, 3
        %v4308 = vsel %vm1605, %v4306, %v4307
        %v4309 = vrot.slane %v3369, 3
        %v4310 = vrot.slane %v3371, 3
        %v4311 = vsel %vm1605, %v4309, %v4310
        %v4312 = vrot.slane %v3372, 3
        %v4313 = vsel %vm1605, %v4307, %v4312
        %v4314 = vrot.slane %v3373, 3
        %v4315 = vsel %vm1605, %v4310, %v4314
        %v4353 = vunpack.c.l.b16 %v4272
        %v4354 = vunpack.c.h.b16 %v4272
        %v4355 = vunpack.c.l.b16 %v4273
        %v4356 = vunpack.c.l.b16 %v4274
        %v4357 = vunpack.c.h.b16 %v4274
        %v4358 = vunpack.c.l.b16 %v4275
        %v4359 = vunpack.c.l.b16 %v4276
        %v4360 = vunpack.c.h.b16 %v4276
        %v4361 = vunpack.c.l.b16 %v4277
        %v4362 = vunpack.c.l.b16 %v4278
        %v4363 = vunpack.c.h.b16 %v4278
        %v4364 = vunpack.c.l.b16 %v4279
        %v4365 = vunpack.c.l.b16 %v4280
        %v4366 = vunpack.c.h.b16 %v4280
        %v4367 = vunpack.c.l.b16 %v4281
        %v4368 = vunpack.c.l.b16 %v4282
        %v4369 = vunpack.c.h.b16 %v4282
        %v4370 = vunpack.c.l.b16 %v4283
        %v4371 = vunpack.c.l.b16 %v4284
        %v4372 = vunpack.c.h.b16 %v4284
        %v4373 = vunpack.c.l.b16 %v4285
        %v4374 = vunpack.c.l.b16 %v4286
        %v4375 = vunpack.c.h.b16 %v4286
        %v4376 = vunpack.c.l.b16 %v4287
        %v4377 = vunpack.c.l.b16 %v4288
        %v4378 = vunpack.c.h.b16 %v4288
        %v4379 = vunpack.c.l.b16 %v4289
        %v4380 = vunpack.c.l.b16 %v4290
        %v4381 = vunpack.c.h.b16 %v4290
        %v4382 = vunpack.c.l.b16 %v4291
        %v4383 = vunpack.c.l.b16 %v4292
        %v4384 = vunpack.c.h.b16 %v4292
        %v4385 = vunpack.c.l.b16 %v4293
        %v4386 = vunpack.c.l.b16 %v4294
        %v4387 = vunpack.c.h.b16 %v4294
        %v4388 = vunpack.c.l.b16 %v4295
        %v4389 = vunpack.c.l.b16 %v4296
        %v4390 = vunpack.c.h.b16 %v4296
        %v4391 = vunpack.c.l.b16 %v4297
        %v4392 = vunpack.c.l.b16 %v4298
        %v4393 = vunpack.c.h.b16 %v4298
        %v4394 = vunpack.c.l.b16 %v4299
        %v4395 = vunpack.c.l.b16 %v4300
        %v4396 = vunpack.c.h.b16 %v4300
        %v4397 = vunpack.c.l.b16 %v4301
        %v4398 = vunpack.c.l.b16 %v4302
        %v4399 = vunpack.c.h.b16 %v4302
        %v4400 = vunpack.c.l.b16 %v4303
        %v4401 = vunpack.c.l.b16 %v4304
        %v4402 = vunpack.c.h.b16 %v4304
        %v4403 = vunpack.c.l.b16 %v4305
        %v4404 = vpack.c.b16 %v4356, %v4353
        %v4405 = vpack.c.b16 %v4357, %v4354
        %v4406 = vpack.c.b16 %v4358, %v4355
        %v4407 = vpack.c.b16 %v4362, %v4359
        %v4408 = vpack.c.b16 %v4363, %v4360
        %v4409 = vpack.c.b16 %v4364, %v4361
        %v4410 = vpack.c.b16 %v4368, %v4365
        %v4411 = vpack.c.b16 %v4369, %v4366
        %v4412 = vpack.c.b16 %v4370, %v4367
        %v4413 = vpack.c.b16 %v4374, %v4371
        %v4414 = vpack.c.b16 %v4375, %v4372
        %v4415 = vpack.c.b16 %v4376, %v4373
        %v4416 = vpack.c.b16 %v4380, %v4377
        %v4417 = vpack.c.b16 %v4381, %v4378
        %v4418 = vpack.c.b16 %v4382, %v4379
        %v4419 = vpack.c.b16 %v4386, %v4383
        %v4420 = vpack.c.b16 %v4387, %v4384
        %v4421 = vpack.c.b16 %v4388, %v4385
        %v4422 = vpack.c.b16 %v4392, %v4389
        %v4423 = vpack.c.b16 %v4393, %v4390
        %v4424 = vpack.c.b16 %v4394, %v4391
        %v4425 = vpack.c.b16 %v4398, %v4395
        %v4426 = vpack.c.b16 %v4399, %v4396
        %v4427 = vpack.c.b16 %v4400, %v4397
        %v4428 = vpack.c.b16 %v4401, %v4401
        %v4429 = vpack.c.b16 %v4402, %v4402
        %v4430 = vpack.c.b16 %v4403, %v4403
        %v4455 = vsel %vm3598, %v4311, 0
        %v4457 = vsel %vm3598, %v4315, 0
        %v4459 = vsel %vm3598, %v4314, 0
        %v4462 = vsel %vm3605, %v4428, 0
        %v4465 = vsel %vm3605, %v4429, 0
        %v4468 = vsel %vm3605, %v4430, 0
        %4470 = vmatprep.subr.bf16.mxu0 %v4405
        %4471 = vmatpush1.bf16.msra.mxu0 %v4404
        %4472 = vmatprep.subr.bf16.mxu0 %v4408
        %4473 = vmatpush1.bf16.msra.mxu0 %v4407
        %4474 = vmatprep.subr.bf16.mxu0 %v4411
        %4475 = vmatpush1.bf16.msra.mxu0 %v4410
        %4476 = vmatprep.subr.bf16.mxu0 %v4414
        %4477 = vmatpush1.bf16.msra.mxu0 %v4413
        %4478 = vmatprep.subr.bf16.mxu0 %v4417
        %4479 = vmatpush1.bf16.msra.mxu0 %v4416
        %4480 = vmatprep.subr.bf16.mxu0 %v4420
        %4481 = vmatpush1.bf16.msra.mxu0 %v4419
        %4482 = vmatprep.subr.bf16.mxu0 %v4423
        %4483 = vmatpush1.bf16.msra.mxu0 %v4422
        %4484 = vmatprep.subr.bf16.mxu0 %v4426
        %4485 = vmatpush1.bf16.msra.mxu0 %v4425
        %4486 = vmatprep.subr.bf16.mxu0 %v4465
        %4487 = vmatpush1.bf16.msra.mxu0 %v4462
        %4488 = vmatprep.subr.bf16.mxu0 0
        %4489 = vmatpush1.bf16.msra.mxu0 0
        %4490 = vmatprep.subr.bf16.mxu0 0
        %4491 = vmatpush1.bf16.msra.mxu0 0
        %4492 = vmatprep.subr.bf16.mxu0 0
        %4493 = vmatpush1.bf16.msra.mxu0 0
        %4494 = vmatprep.subr.bf16.mxu0 0
        %4495 = vmatpush1.bf16.msra.mxu0 0
        %4496 = vmatprep.subr.bf16.mxu0 0
        %4497 = vmatpush1.bf16.msra.mxu0 0
        %4498 = vmatprep.subr.bf16.mxu0 0
        %4499 = vmatpush1.bf16.msra.mxu0 0
        %4500 = vmatprep.subr.bf16.mxu0 0
        %4501 = vmatpush1.bf16.msra.mxu0 0
        %4502 = vmatprep.mubr.f32.mxu0 %v4455
        %4503 = vmatmul.mubr.f32.gmra.mrb[0].mxu0 %v4308
        %v4504 = vpop.f32.mrb[0].mxu0
        %v4505 = vadd.f32 0.0, %v4504
        %v4506 = vpop.f32.mrb[0].mxu0
        %v4507 = vadd.f32 0.0, %v4506
        %4508 = vmatprep.mubr.f32.mxu0 %v4457
        %4509 = vmatmul.mubr.f32.gmra.mrb[0].mxu0 %v4313
        %v4510 = vpop.f32.mrb[0].mxu0
        %v4511 = vadd.f32 0.0, %v4510
        %v4512 = vpop.f32.mrb[0].mxu0
        %v4513 = vadd.f32 0.0, %v4512
        %4514 = vmatprep.mubr.f32.mxu0 %v4459
        %4515 = vmatmul.mubr.f32.gmra.mrb[0].mxu0 %v4312
        %v4516 = vpop.f32.mrb[0].mxu0
        %v4517 = vadd.f32 0.0, %v4516
        %v4518 = vpop.f32.mrb[0].mxu0
        %v4519 = vadd.f32 0.0, %v4518
        %4520 = vdwg.mxu0
        %4521 = vmatprep.subr.bf16.mxu0 0
        %4522 = vmatpush1.bf16.msra.mxu0 %v4406
        %4523 = vmatprep.subr.bf16.mxu0 0
        %4524 = vmatpush1.bf16.msra.mxu0 %v4409
        %4525 = vmatprep.subr.bf16.mxu0 0
        %4526 = vmatpush1.bf16.msra.mxu0 %v4412
        %4527 = vmatprep.subr.bf16.mxu0 0
        %4528 = vmatpush1.bf16.msra.mxu0 %v4415
        %4529 = vmatprep.subr.bf16.mxu0 0
        %4530 = vmatpush1.bf16.msra.mxu0 %v4418
        %4531 = vmatprep.subr.bf16.mxu0 0
        %4532 = vmatpush1.bf16.msra.mxu0 %v4421
        %4533 = vmatprep.subr.bf16.mxu0 0
        %4534 = vmatpush1.bf16.msra.mxu0 %v4424
        %4535 = vmatprep.subr.bf16.mxu0 0
        %4536 = vmatpush1.bf16.msra.mxu0 %v4427
        %4537 = vmatprep.subr.bf16.mxu0 0
        %4538 = vmatpush1.bf16.msra.mxu0 %v4468
        %4539 = vmatprep.subr.bf16.mxu0 0
        %4540 = vmatpush1.bf16.msra.mxu0 0
        %4541 = vmatprep.subr.bf16.mxu0 0
        %4542 = vmatpush1.bf16.msra.mxu0 0
        %4543 = vmatprep.subr.bf16.mxu0 0
        %4544 = vmatpush1.bf16.msra.mxu0 0
        %4545 = vmatprep.subr.bf16.mxu0 0
        %4546 = vmatpush1.bf16.msra.mxu0 0
        %4547 = vmatprep.subr.bf16.mxu0 0
        %4548 = vmatpush1.bf16.msra.mxu0 0
        %4549 = vmatprep.subr.bf16.mxu0 0
        %4550 = vmatpush1.bf16.msra.mxu0 0
        %4551 = vmatprep.subr.bf16.mxu0 0
        %4552 = vmatpush1.bf16.msra.mxu0 0
        %4553 = vmatprep.mubr.f32.mxu0 %v4455
        %4554 = vmatmul.mubr.f32.gmra.mrb[0].mxu0 %v4308
        %v4555 = vpop.f32.mrb[0].mxu0
        %v4556 = vadd.f32 0.0, %v4555
        %v4557 = vpop.f32.mrb[0].mxu0
        %4558 = vmatprep.mubr.f32.mxu0 %v4457
        %4559 = vmatmul.mubr.f32.gmra.mrb[0].mxu0 %v4313
        %v4560 = vpop.f32.mrb[0].mxu0
        %v4561 = vadd.f32 0.0, %v4560
        %v4562 = vpop.f32.mrb[0].mxu0
        %4563 = vmatprep.mubr.f32.mxu0 %v4459
        %4564 = vmatmul.mubr.f32.gmra.mrb[0].mxu0 %v4312
        %v4565 = vpop.f32.mrb[0].mxu0
        %v4566 = vadd.f32 0.0, %v4565
        %v4567 = vpop.f32.mrb[0].mxu0
        %4568 = vdwg.mxu0
        %v4569 = vadd.f32 %v4262, %v4505
        %v4570 = vadd.f32 %v4263, %v4507
        %v4571 = vadd.f32 %v4264, %v4556
        %v4572 = vadd.f32 %v4265, %v4511
        %v4573 = vadd.f32 %v4266, %v4513
        %v4574 = vadd.f32 %v4267, %v4561
        %v4575 = vadd.f32 %v4268, %v4517
        %v4576 = vadd.f32 %v4269, %v4519
        %v4577 = vadd.f32 %v4270, %v4566
        %s4578 = scalar_lea.vmem %s5, 816
        %v4579 = vld [vmem:[%s4578] sm:$0xff]
        %v4580 = vld [vmem:[%s4578 + $0x8] sm:$0xf]
        %v4581 = vld [vmem:[%s4578 + $0xc] sm:$0xff]
        %v4582 = vld [vmem:[%s4578 + $0x14] sm:$0xf]
        %v4583 = vld [vmem:[%s4578 + $0x18] sm:$0xff]
        %v4584 = vld [vmem:[%s4578 + $0x20] sm:$0xf]
        %v4585 = vld [vmem:[%s4578 + $0x24] sm:$0xff]
        %v4586 = vld [vmem:[%s4578 + $0x2c] sm:$0xf]
        %v4587 = vld [vmem:[%s4578 + $0x30] sm:$0xff]
        %v4588 = vld [vmem:[%s4578 + $0x38] sm:$0xf]
        %v4589 = vld [vmem:[%s4578 + $0x3c] sm:$0xff]
        %v4590 = vld [vmem:[%s4578 + $0x44] sm:$0xf]
        %v4591 = vld [vmem:[%s4578 + $0x48] sm:$0xff]
        %v4592 = vld [vmem:[%s4578 + $0x50] sm:$0xf]
        %v4593 = vld [vmem:[%s4578 + $0x54] sm:$0xff]
        %v4594 = vld [vmem:[%s4578 + $0x5c] sm:$0xf]
        %v4595 = vld [vmem:[%s4578 + $0x60] sm:$0xff]
        %v4596 = vld [vmem:[%s4578 + $0x68] sm:$0xf]
        %v4597 = vld [vmem:[%s4578 + $0x6c] sm:$0xff]
        %v4598 = vld [vmem:[%s4578 + $0x74] sm:$0xf]
        %v4599 = vld [vmem:[%s4578 + $0x78] sm:$0xff]
        %v4600 = vld [vmem:[%s4578 + $0x80] sm:$0xf]
        %v4601 = vld [vmem:[%s4578 + $0x84] sm:$0xff]
        %v4602 = vld [vmem:[%s4578 + $0x8c] sm:$0xf]
        %v4603 = vld [vmem:[%s4578 + $0x90] sm:$0xff]
        %v4604 = vld [vmem:[%s4578 + $0x98] sm:$0xf]
        %v4605 = vld [vmem:[%s4578 + $0x9c] sm:$0xff]
        %v4606 = vld [vmem:[%s4578 + $0xa4] sm:$0xf]
        %v4607 = vld [vmem:[%s4578 + $0xa8] sm:$0xff]
        %v4608 = vld [vmem:[%s4578 + $0xb0] sm:$0xf]
        %v4609 = vld [vmem:[%s4578 + $0xb4] sm:$0xff]
        %v4610 = vld [vmem:[%s4578 + $0xbc] sm:$0xf]
        %v4611 = vld [vmem:[%s4578 + $0xc0] sm:$0x33]
        %v4612 = vld [vmem:[%s4578 + $0xc8] sm:$0x3]
        %v4613 = vrot.slane %v3368, 4
        %v4614 = vrot.slane %v3370, 4
        %v4615 = vsel %vm1977, %v4613, %v4614
        %v4616 = vrot.slane %v3369, 4
        %v4617 = vrot.slane %v3371, 4
        %v4618 = vsel %vm1977, %v4616, %v4617
        %v4619 = vrot.slane %v3372, 4
        %v4620 = vsel %vm1977, %v4614, %v4619
        %v4621 = vrot.slane %v3373, 4
        %v4622 = vsel %vm1977, %v4617, %v4621
        %v4660 = vunpack.c.l.b16 %v4579
        %v4661 = vunpack.c.h.b16 %v4579
        %v4662 = vunpack.c.l.b16 %v4580
        %v4663 = vunpack.c.l.b16 %v4581
        %v4664 = vunpack.c.h.b16 %v4581
        %v4665 = vunpack.c.l.b16 %v4582
        %v4666 = vunpack.c.l.b16 %v4583
        %v4667 = vunpack.c.h.b16 %v4583
        %v4668 = vunpack.c.l.b16 %v4584
        %v4669 = vunpack.c.l.b16 %v4585
        %v4670 = vunpack.c.h.b16 %v4585
        %v4671 = vunpack.c.l.b16 %v4586
        %v4672 = vunpack.c.l.b16 %v4587
        %v4673 = vunpack.c.h.b16 %v4587
        %v4674 = vunpack.c.l.b16 %v4588
        %v4675 = vunpack.c.l.b16 %v4589
        %v4676 = vunpack.c.h.b16 %v4589
        %v4677 = vunpack.c.l.b16 %v4590
        %v4678 = vunpack.c.l.b16 %v4591
        %v4679 = vunpack.c.h.b16 %v4591
        %v4680 = vunpack.c.l.b16 %v4592
        %v4681 = vunpack.c.l.b16 %v4593
        %v4682 = vunpack.c.h.b16 %v4593
        %v4683 = vunpack.c.l.b16 %v4594
        %v4684 = vunpack.c.l.b16 %v4595
        %v4685 = vunpack.c.h.b16 %v4595
        %v4686 = vunpack.c.l.b16 %v4596
        %v4687 = vunpack.c.l.b16 %v4597
        %v4688 = vunpack.c.h.b16 %v4597
        %v4689 = vunpack.c.l.b16 %v4598
        %v4690 = vunpack.c.l.b16 %v4599
        %v4691 = vunpack.c.h.b16 %v4599
        %v4692 = vunpack.c.l.b16 %v4600
        %v4693 = vunpack.c.l.b16 %v4601
        %v4694 = vunpack.c.h.b16 %v4601
        %v4695 = vunpack.c.l.b16 %v4602
        %v4696 = vunpack.c.l.b16 %v4603
        %v4697 = vunpack.c.h.b16 %v4603
        %v4698 = vunpack.c.l.b16 %v4604
        %v4699 = vunpack.c.l.b16 %v4605
        %v4700 = vunpack.c.h.b16 %v4605
        %v4701 = vunpack.c.l.b16 %v4606
        %v4702 = vunpack.c.l.b16 %v4607
        %v4703 = vunpack.c.h.b16 %v4607
        %v4704 = vunpack.c.l.b16 %v4608
        %v4705 = vunpack.c.l.b16 %v4609
        %v4706 = vunpack.c.h.b16 %v4609
        %v4707 = vunpack.c.l.b16 %v4610
        %v4708 = vunpack.c.l.b16 %v4611
        %v4709 = vunpack.c.h.b16 %v4611
        %v4710 = vunpack.c.l.b16 %v4612
        %v4711 = vpack.c.b16 %v4663, %v4660
        %v4712 = vpack.c.b16 %v4664, %v4661
        %v4713 = vpack.c.b16 %v4665, %v4662
        %v4714 = vpack.c.b16 %v4669, %v4666
        %v4715 = vpack.c.b16 %v4670, %v4667
        %v4716 = vpack.c.b16 %v4671, %v4668
        %v4717 = vpack.c.b16 %v4675, %v4672
        %v4718 = vpack.c.b16 %v4676, %v4673
        %v4719 = vpack.c.b16 %v4677, %v4674
        %v4720 = vpack.c.b16 %v4681, %v4678
        %v4721 = vpack.c.b16 %v4682, %v4679
        %v4722 = vpack.c.b16 %v4683, %v4680
        %v4723 = vpack.c.b16 %v4687, %v4684
        %v4724 = vpack.c.b16 %v4688, %v4685
        %v4725 = vpack.c.b16 %v4689, %v4686
        %v4726 = vpack.c.b16 %v4693, %v4690
        %v4727 = vpack.c.b16 %v4694, %v4691
        %v4728 = vpack.c.b16 %v4695, %v4692
        %v4729 = vpack.c.b16 %v4699, %v4696
        %v4730 = vpack.c.b16 %v4700, %v4697
        %v4731 = vpack.c.b16 %v4701, %v4698
        %v4732 = vpack.c.b16 %v4705, %v4702
        %v4733 = vpack.c.b16 %v4706, %v4703
        %v4734 = vpack.c.b16 %v4707, %v4704
        %v4735 = vpack.c.b16 %v4708, %v4708
        %v4736 = vpack.c.b16 %v4709, %v4709
        %v4737 = vpack.c.b16 %v4710, %v4710
        %v4762 = vsel %vm3598, %v4618, 0
        %v4764 = vsel %vm3598, %v4622, 0
        %v4766 = vsel %vm3598, %v4621, 0
        %v4769 = vsel %vm3605, %v4735, 0
        %v4772 = vsel %vm3605, %v4736, 0
        %v4775 = vsel %vm3605, %v4737, 0
        %4777 = vmatprep.subr.bf16.mxu0 %v4712
        %4778 = vmatpush1.bf16.msra.mxu0 %v4711
        %4779 = vmatprep.subr.bf16.mxu0 %v4715
        %4780 = vmatpush1.bf16.msra.mxu0 %v4714
        %4781 = vmatprep.subr.bf16.mxu0 %v4718
        %4782 = vmatpush1.bf16.msra.mxu0 %v4717
        %4783 = vmatprep.subr.bf16.mxu0 %v4721
        %4784 = vmatpush1.bf16.msra.mxu0 %v4720
        %4785 = vmatprep.subr.bf16.mxu0 %v4724
        %4786 = vmatpush1.bf16.msra.mxu0 %v4723
        %4787 = vmatprep.subr.bf16.mxu0 %v4727
        %4788 = vmatpush1.bf16.msra.mxu0 %v4726
        %4789 = vmatprep.subr.bf16.mxu0 %v4730
        %4790 = vmatpush1.bf16.msra.mxu0 %v4729
        %4791 = vmatprep.subr.bf16.mxu0 %v4733
        %4792 = vmatpush1.bf16.msra.mxu0 %v4732
        %4793 = vmatprep.subr.bf16.mxu0 %v4772
        %4794 = vmatpush1.bf16.msra.mxu0 %v4769
        %4795 = vmatprep.subr.bf16.mxu0 0
        %4796 = vmatpush1.bf16.msra.mxu0 0
        %4797 = vmatprep.subr.bf16.mxu0 0
        %4798 = vmatpush1.bf16.msra.mxu0 0
        %4799 = vmatprep.subr.bf16.mxu0 0
        %4800 = vmatpush1.bf16.msra.mxu0 0
        %4801 = vmatprep.subr.bf16.mxu0 0
        %4802 = vmatpush1.bf16.msra.mxu0 0
        %4803 = vmatprep.subr.bf16.mxu0 0
        %4804 = vmatpush1.bf16.msra.mxu0 0
        %4805 = vmatprep.subr.bf16.mxu0 0
        %4806 = vmatpush1.bf16.msra.mxu0 0
        %4807 = vmatprep.subr.bf16.mxu0 0
        %4808 = vmatpush1.bf16.msra.mxu0 0
        %4809 = vmatprep.mubr.f32.mxu0 %v4762
        %4810 = vmatmul.mubr.f32.gmra.mrb[0].mxu0 %v4615
        %v4811 = vpop.f32.mrb[0].mxu0
        %v4812 = vadd.f32 0.0, %v4811
        %v4813 = vpop.f32.mrb[0].mxu0
        %v4814 = vadd.f32 0.0, %v4813
        %4815 = vmatprep.mubr.f32.mxu0 %v4764
        %4816 = vmatmul.mubr.f32.gmra.mrb[0].mxu0 %v4620
        %v4817 = vpop.f32.mrb[0].mxu0
        %v4818 = vadd.f32 0.0, %v4817
        %v4819 = vpop.f32.mrb[0].mxu0
        %v4820 = vadd.f32 0.0, %v4819
        %4821 = vmatprep.mubr.f32.mxu0 %v4766
        %4822 = vmatmul.mubr.f32.gmra.mrb[0].mxu0 %v4619
        %v4823 = vpop.f32.mrb[0].mxu0
        %v4824 = vadd.f32 0.0, %v4823
        %v4825 = vpop.f32.mrb[0].mxu0
        %v4826 = vadd.f32 0.0, %v4825
        %4827 = vdwg.mxu0
        %4828 = vmatprep.subr.bf16.mxu0 0
        %4829 = vmatpush1.bf16.msra.mxu0 %v4713
        %4830 = vmatprep.subr.bf16.mxu0 0
        %4831 = vmatpush1.bf16.msra.mxu0 %v4716
        %4832 = vmatprep.subr.bf16.mxu0 0
        %4833 = vmatpush1.bf16.msra.mxu0 %v4719
        %4834 = vmatprep.subr.bf16.mxu0 0
        %4835 = vmatpush1.bf16.msra.mxu0 %v4722
        %4836 = vmatprep.subr.bf16.mxu0 0
        %4837 = vmatpush1.bf16.msra.mxu0 %v4725
        %4838 = vmatprep.subr.bf16.mxu0 0
        %4839 = vmatpush1.bf16.msra.mxu0 %v4728
        %4840 = vmatprep.subr.bf16.mxu0 0
        %4841 = vmatpush1.bf16.msra.mxu0 %v4731
        %4842 = vmatprep.subr.bf16.mxu0 0
        %4843 = vmatpush1.bf16.msra.mxu0 %v4734
        %4844 = vmatprep.subr.bf16.mxu0 0
        %4845 = vmatpush1.bf16.msra.mxu0 %v4775
        %4846 = vmatprep.subr.bf16.mxu0 0
        %4847 = vmatpush1.bf16.msra.mxu0 0
        %4848 = vmatprep.subr.bf16.mxu0 0
        %4849 = vmatpush1.bf16.msra.mxu0 0
        %4850 = vmatprep.subr.bf16.mxu0 0
        %4851 = vmatpush1.bf16.msra.mxu0 0
        %4852 = vmatprep.subr.bf16.mxu0 0
        %4853 = vmatpush1.bf16.msra.mxu0 0
        %4854 = vmatprep.subr.bf16.mxu0 0
        %4855 = vmatpush1.bf16.msra.mxu0 0
        %4856 = vmatprep.subr.bf16.mxu0 0
        %4857 = vmatpush1.bf16.msra.mxu0 0
        %4858 = vmatprep.subr.bf16.mxu0 0
        %4859 = vmatpush1.bf16.msra.mxu0 0
        %4860 = vmatprep.mubr.f32.mxu0 %v4762
        %4861 = vmatmul.mubr.f32.gmra.mrb[0].mxu0 %v4615
        %v4862 = vpop.f32.mrb[0].mxu0
        %v4863 = vadd.f32 0.0, %v4862
        %v4864 = vpop.f32.mrb[0].mxu0
        %4865 = vmatprep.mubr.f32.mxu0 %v4764
        %4866 = vmatmul.mubr.f32.gmra.mrb[0].mxu0 %v4620
        %v4867 = vpop.f32.mrb[0].mxu0
        %v4868 = vadd.f32 0.0, %v4867
        %v4869 = vpop.f32.mrb[0].mxu0
        %4870 = vmatprep.mubr.f32.mxu0 %v4766
        %4871 = vmatmul.mubr.f32.gmra.mrb[0].mxu0 %v4619
        %v4872 = vpop.f32.mrb[0].mxu0
        %v4873 = vadd.f32 0.0, %v4872
        %v4874 = vpop.f32.mrb[0].mxu0
        %4875 = vdwg.mxu0
        %v4876 = vadd.f32 %v4569, %v4812
        %v4877 = vadd.f32 %v4570, %v4814
        %v4878 = vadd.f32 %v4571, %v4863
        %v4879 = vadd.f32 %v4572, %v4818
        %v4880 = vadd.f32 %v4573, %v4820
        %v4881 = vadd.f32 %v4574, %v4868
        %v4882 = vadd.f32 %v4575, %v4824
        %v4883 = vadd.f32 %v4576, %v4826
        %v4884 = vadd.f32 %v4577, %v4873
        %v4885 = vld [vmem:[%s6] sm:$0x7]
        %v4887 = vlaneseq
        %v4888 = vshrl.u32 %v4887, 7
        %v4889 = vsub.s32 0, %v4888
        %v4890 = vrot.slane %v4885, %v4889
        %v4891 = vlaneseq
        %v4892 = vshrl.u32 %v4891, 7
        %v4893 = vsub.s32 1, %v4892
        %v4894 = vrot.slane %v4885, %v4893
        %v4895 = vlaneseq
        %v4896 = vshrl.u32 %v4895, 7
        %v4897 = vsub.s32 2, %v4896
        %v4898 = vrot.slane %v4885, %v4897
        %v4902 = vadd.f32 %v4876, %v4890
        %v4903 = vadd.f32 %v4877, %v4894
        %v4904 = vadd.f32 %v4878, %v4898
        %v4905 = vadd.f32 %v4879, %v4890
        %v4906 = vadd.f32 %v4880, %v4894
        %v4907 = vadd.f32 %v4881, %v4898
        %v4908 = vadd.f32 %v4882, %v4890
        %v4909 = vadd.f32 %v4883, %v4894
        %v4910 = vadd.f32 %v4884, %v4898
        %v4911 = vmax.f32 %v4902, 0.0
        %v4912 = vmax.f32 %v4903, 0.0
        %v4913 = vmax.f32 %v4904, 0.0
        %v4914 = vmax.f32 %v4905, 0.0
        %v4915 = vmax.f32 %v4906, 0.0
        %v4916 = vmax.f32 %v4907, 0.0
        %v4917 = vmax.f32 %v4908, 0.0
        %v4918 = vmax.f32 %v4909, 0.0
        %v4919 = vmax.f32 %v4910, 0.0
        %v4920 = vld [vmem:[%s7] sm:$0xf]
        %v4921 = vld [vmem:[%s7 + $0x4] sm:$0x1]
        %v4924 = vunpack.c.l.b16 %v4920
        %v4925 = vunpack.c.l.b16 %v4921
        %v4926 = vpack.c.b16 %v4925, %v4924
        %vm4927 = vcmask 146432
        %v4929 = vsel %vm4927, %v4926, 0
        %v4932 = vsel %vm3605, %v4917, 0
        %v4935 = vsel %vm3605, %v4918, 0
        %v4938 = vsel %vm3605, %v4919, 0
        %4940 = vmatprep.subr.mxu0 %v4912
        %4941 = vmatpush1.msra.mxu0 %v4911
        %4942 = vmatprep.subr.mxu0 %v4915
        %4943 = vmatpush1.msra.mxu0 %v4914
        %4944 = vmatprep.subr.mxu0 %v4935
        %4945 = vmatpush1.msra.mxu0 %v4932
        %4946 = vmatprep.subr.mxu0 0.0
        %4947 = vmatpush1.msra.mxu0 0.0
        %4948 = vmatprep.subr.mxu0 0.0
        %4949 = vmatpush1.msra.mxu0 0.0
        %4950 = vmatprep.subr.mxu0 0.0
        %4951 = vmatpush1.msra.mxu0 0.0
        %4952 = vmatprep.subr.mxu0 0.0
        %4953 = vmatpush1.msra.mxu0 0.0
        %4954 = vmatprep.subr.mxu0 0.0
        %4955 = vmatpush1.msra.mxu0 0.0
        %4956 = vmatprep.subr.mxu0 0.0
        %4957 = vmatpush1.msra.mxu0 0.0
        %4958 = vmatprep.subr.mxu0 0.0
        %4959 = vmatpush1.msra.mxu0 0.0
        %4960 = vmatprep.subr.mxu0 0.0
        %4961 = vmatpush1.msra.mxu0 0.0
        %4962 = vmatprep.subr.mxu0 0.0
        %4963 = vmatpush1.msra.mxu0 0.0
        %4964 = vmatprep.subr.mxu0 0.0
        %4965 = vmatpush1.msra.mxu0 0.0
        %4966 = vmatprep.subr.mxu0 0.0
        %4967 = vmatpush1.msra.mxu0 0.0
        %4968 = vmatprep.subr.mxu0 0.0
        %4969 = vmatpush1.msra.mxu0 0.0
        %4970 = vmatprep.subr.mxu0 0.0
        %4971 = vmatpush1.msra.mxu0 0.0
        %4972 = vmatprep.subr.mxu0 0.0
        %4973 = vmatpush1.msra.mxu0 0.0
        %4974 = vmatprep.subr.mxu0 0.0
        %4975 = vmatpush1.msra.mxu0 0.0
        %4976 = vmatprep.subr.mxu0 0.0
        %4977 = vmatpush1.msra.mxu0 0.0
        %4978 = vmatprep.subr.mxu0 0.0
        %4979 = vmatpush1.msra.mxu0 0.0
        %4980 = vmatprep.subr.mxu0 0.0
        %4981 = vmatpush1.msra.mxu0 0.0
        %4982 = vmatprep.subr.mxu0 0.0
        %4983 = vmatpush1.msra.mxu0 0.0
        %4984 = vmatprep.subr.mxu0 0.0
        %4985 = vmatpush1.msra.mxu0 0.0
        %4986 = vmatprep.subr.mxu0 0.0
        %4987 = vmatpush1.msra.mxu0 0.0
        %4988 = vmatprep.subr.mxu0 0.0
        %4989 = vmatpush1.msra.mxu0 0.0
        %4990 = vmatprep.subr.mxu0 0.0
        %4991 = vmatpush1.msra.mxu0 0.0
        %4992 = vmatprep.subr.mxu0 0.0
        %4993 = vmatpush1.msra.mxu0 0.0
        %4994 = vmatprep.subr.mxu0 0.0
        %4995 = vmatpush1.msra.mxu0 0.0
        %4996 = vmatprep.subr.mxu0 0.0
        %4997 = vmatpush1.msra.mxu0 0.0
        %4998 = vmatprep.subr.mxu0 0.0
        %4999 = vmatpush1.msra.mxu0 0.0
        %5000 = vmatprep.subr.mxu0 0.0
        %5001 = vmatpush1.msra.mxu0 0.0
        %5002 = vmatprep.subr.mxu0 0.0
        %5003 = vmatpush1.msra.mxu0 0.0
        %5004 = vmatprep.mubr.bf16.mxu0 0
        %5005 = vmatmul.mubr.bf16.gmra.mrb[0].mxu0 %v4929
        %v5006 = vpop.f32.mrb[0].mxu0
        %v5007 = vadd.f32 0.0, %v5006
        %v5008 = vpop.f32.mrb[0].mxu0
        %v5009 = vadd.f32 0.0, %v5008
        %v5010 = vpop.f32.mrb[0].mxu0
        %v5011 = vadd.f32 0.0, %v5010
        %v5012 = vpop.f32.mrb[0].mxu0
        %v5013 = vadd.f32 0.0, %v5012
        %5014 = vdwg.mxu0
        %5015 = vmatprep.subr.mxu0 0.0
        %5016 = vmatpush1.msra.mxu0 %v4913
        %5017 = vmatprep.subr.mxu0 0.0
        %5018 = vmatpush1.msra.mxu0 %v4916
        %5019 = vmatprep.subr.mxu0 0.0
        %5020 = vmatpush1.msra.mxu0 %v4938
        %5021 = vmatprep.subr.mxu0 0.0
        %5022 = vmatpush1.msra.mxu0 0.0
        %5023 = vmatprep.subr.mxu0 0.0
        %5024 = vmatpush1.msra.mxu0 0.0
        %5025 = vmatprep.subr.mxu0 0.0
        %5026 = vmatpush1.msra.mxu0 0.0
        %5027 = vmatprep.subr.mxu0 0.0
        %5028 = vmatpush1.msra.mxu0 0.0
        %5029 = vmatprep.subr.mxu0 0.0
        %5030 = vmatpush1.msra.mxu0 0.0
        %5031 = vmatprep.subr.mxu0 0.0
        %5032 = vmatpush1.msra.mxu0 0.0
        %5033 = vmatprep.subr.mxu0 0.0
        %5034 = vmatpush1.msra.mxu0 0.0
        %5035 = vmatprep.subr.mxu0 0.0
        %5036 = vmatpush1.msra.mxu0 0.0
        %5037 = vmatprep.subr.mxu0 0.0
        %5038 = vmatpush1.msra.mxu0 0.0
        %5039 = vmatprep.subr.mxu0 0.0
        %5040 = vmatpush1.msra.mxu0 0.0
        %5041 = vmatprep.subr.mxu0 0.0
        %5042 = vmatpush1.msra.mxu0 0.0
        %5043 = vmatprep.subr.mxu0 0.0
        %5044 = vmatpush1.msra.mxu0 0.0
        %5045 = vmatprep.subr.mxu0 0.0
        %5046 = vmatpush1.msra.mxu0 0.0
        %5047 = vmatprep.subr.mxu0 0.0
        %5048 = vmatpush1.msra.mxu0 0.0
        %5049 = vmatprep.subr.mxu0 0.0
        %5050 = vmatpush1.msra.mxu0 0.0
        %5051 = vmatprep.subr.mxu0 0.0
        %5052 = vmatpush1.msra.mxu0 0.0
        %5053 = vmatprep.subr.mxu0 0.0
        %5054 = vmatpush1.msra.mxu0 0.0
        %5055 = vmatprep.subr.mxu0 0.0
        %5056 = vmatpush1.msra.mxu0 0.0
        %5057 = vmatprep.subr.mxu0 0.0
        %5058 = vmatpush1.msra.mxu0 0.0
        %5059 = vmatprep.subr.mxu0 0.0
        %5060 = vmatpush1.msra.mxu0 0.0
        %5061 = vmatprep.subr.mxu0 0.0
        %5062 = vmatpush1.msra.mxu0 0.0
        %5063 = vmatprep.subr.mxu0 0.0
        %5064 = vmatpush1.msra.mxu0 0.0
        %5065 = vmatprep.subr.mxu0 0.0
        %5066 = vmatpush1.msra.mxu0 0.0
        %5067 = vmatprep.subr.mxu0 0.0
        %5068 = vmatpush1.msra.mxu0 0.0
        %5069 = vmatprep.subr.mxu0 0.0
        %5070 = vmatpush1.msra.mxu0 0.0
        %5071 = vmatprep.subr.mxu0 0.0
        %5072 = vmatpush1.msra.mxu0 0.0
        %5073 = vmatprep.subr.mxu0 0.0
        %5074 = vmatpush1.msra.mxu0 0.0
        %5075 = vmatprep.subr.mxu0 0.0
        %5076 = vmatpush1.msra.mxu0 0.0
        %5077 = vmatprep.subr.mxu0 0.0
        %5078 = vmatpush1.msra.mxu0 0.0
        %5079 = vmatprep.mubr.bf16.mxu0 0
        %5080 = vmatmul.mubr.bf16.gmra.mrb[0].mxu0 %v4929
        %v5081 = vpop.f32.mrb[0].mxu0
        %v5082 = vadd.f32 0.0, %v5081
        %v5083 = vpop.f32.mrb[0].mxu0
        %v5084 = vpop.f32.mrb[0].mxu0
        %v5085 = vadd.f32 0.0, %v5084
        %v5086 = vpop.f32.mrb[0].mxu0
        %5087 = vdwg.mxu0
        %s5088 = scalar_lea.vmem %s7, 8
        %v5089 = vld [vmem:[%s5088] sm:$0xf]
        %v5090 = vld [vmem:[%s5088 + $0x4] sm:$0x1]
        %v5093 = vunpack.c.l.b16 %v5089
        %v5094 = vunpack.c.l.b16 %v5090
        %v5095 = vpack.c.b16 %v5094, %v5093
        %v5097 = vsel %vm4927, %v5095, 0
        %5099 = vmatprep.subr.mxu0 %v4912
        %5100 = vmatpush1.msra.mxu0 %v4911
        %5101 = vmatprep.subr.mxu0 %v4915
        %5102 = vmatpush1.msra.mxu0 %v4914
        %5103 = vmatprep.subr.mxu0 %v4935
        %5104 = vmatpush1.msra.mxu0 %v4932
        %5105 = vmatprep.subr.mxu0 0.0
        %5106 = vmatpush1.msra.mxu0 0.0
        %5107 = vmatprep.subr.mxu0 0.0
        %5108 = vmatpush1.msra.mxu0 0.0
        %5109 = vmatprep.subr.mxu0 0.0
        %5110 = vmatpush1.msra.mxu0 0.0
        %5111 = vmatprep.subr.mxu0 0.0
        %5112 = vmatpush1.msra.mxu0 0.0
        %5113 = vmatprep.subr.mxu0 0.0
        %5114 = vmatpush1.msra.mxu0 0.0
        %5115 = vmatprep.subr.mxu0 0.0
        %5116 = vmatpush1.msra.mxu0 0.0
        %5117 = vmatprep.subr.mxu0 0.0
        %5118 = vmatpush1.msra.mxu0 0.0
        %5119 = vmatprep.subr.mxu0 0.0
        %5120 = vmatpush1.msra.mxu0 0.0
        %5121 = vmatprep.subr.mxu0 0.0
        %5122 = vmatpush1.msra.mxu0 0.0
        %5123 = vmatprep.subr.mxu0 0.0
        %5124 = vmatpush1.msra.mxu0 0.0
        %5125 = vmatprep.subr.mxu0 0.0
        %5126 = vmatpush1.msra.mxu0 0.0
        %5127 = vmatprep.subr.mxu0 0.0
        %5128 = vmatpush1.msra.mxu0 0.0
        %5129 = vmatprep.subr.mxu0 0.0
        %5130 = vmatpush1.msra.mxu0 0.0
        %5131 = vmatprep.subr.mxu0 0.0
        %5132 = vmatpush1.msra.mxu0 0.0
        %5133 = vmatprep.subr.mxu0 0.0
        %5134 = vmatpush1.msra.mxu0 0.0
        %5135 = vmatprep.subr.mxu0 0.0
        %5136 = vmatpush1.msra.mxu0 0.0
        %5137 = vmatprep.subr.mxu0 0.0
        %5138 = vmatpush1.msra.mxu0 0.0
        %5139 = vmatprep.subr.mxu0 0.0
        %5140 = vmatpush1.msra.mxu0 0.0
        %5141 = vmatprep.subr.mxu0 0.0
        %5142 = vmatpush1.msra.mxu0 0.0
        %5143 = vmatprep.subr.mxu0 0.0
        %5144 = vmatpush1.msra.mxu0 0.0
        %5145 = vmatprep.subr.mxu0 0.0
        %5146 = vmatpush1.msra.mxu0 0.0
        %5147 = vmatprep.subr.mxu0 0.0
        %5148 = vmatpush1.msra.mxu0 0.0
        %5149 = vmatprep.subr.mxu0 0.0
        %5150 = vmatpush1.msra.mxu0 0.0
        %5151 = vmatprep.subr.mxu0 0.0
        %5152 = vmatpush1.msra.mxu0 0.0
        %5153 = vmatprep.subr.mxu0 0.0
        %5154 = vmatpush1.msra.mxu0 0.0
        %5155 = vmatprep.subr.mxu0 0.0
        %5156 = vmatpush1.msra.mxu0 0.0
        %5157 = vmatprep.subr.mxu0 0.0
        %5158 = vmatpush1.msra.mxu0 0.0
        %5159 = vmatprep.subr.mxu0 0.0
        %5160 = vmatpush1.msra.mxu0 0.0
        %5161 = vmatprep.subr.mxu0 0.0
        %5162 = vmatpush1.msra.mxu0 0.0
        %5163 = vmatprep.mubr.bf16.mxu0 0
        %5164 = vmatmul.mubr.bf16.gmra.mrb[0].mxu0 %v5097
        %v5165 = vpop.f32.mrb[0].mxu0
        %v5166 = vadd.f32 0.0, %v5165
        %v5167 = vpop.f32.mrb[0].mxu0
        %v5168 = vadd.f32 0.0, %v5167
        %v5169 = vpop.f32.mrb[0].mxu0
        %v5170 = vadd.f32 0.0, %v5169
        %v5171 = vpop.f32.mrb[0].mxu0
        %v5172 = vadd.f32 0.0, %v5171
        %5173 = vdwg.mxu0
        %5174 = vmatprep.subr.mxu0 0.0
        %5175 = vmatpush1.msra.mxu0 %v4913
        %5176 = vmatprep.subr.mxu0 0.0
        %5177 = vmatpush1.msra.mxu0 %v4916
        %5178 = vmatprep.subr.mxu0 0.0
        %5179 = vmatpush1.msra.mxu0 %v4938
        %5180 = vmatprep.subr.mxu0 0.0
        %5181 = vmatpush1.msra.mxu0 0.0
        %5182 = vmatprep.subr.mxu0 0.0
        %5183 = vmatpush1.msra.mxu0 0.0
        %5184 = vmatprep.subr.mxu0 0.0
        %5185 = vmatpush1.msra.mxu0 0.0
        %5186 = vmatprep.subr.mxu0 0.0
        %5187 = vmatpush1.msra.mxu0 0.0
        %5188 = vmatprep.subr.mxu0 0.0
        %5189 = vmatpush1.msra.mxu0 0.0
        %5190 = vmatprep.subr.mxu0 0.0
        %5191 = vmatpush1.msra.mxu0 0.0
        %5192 = vmatprep.subr.mxu0 0.0
        %5193 = vmatpush1.msra.mxu0 0.0
        %5194 = vmatprep.subr.mxu0 0.0
        %5195 = vmatpush1.msra.mxu0 0.0
        %5196 = vmatprep.subr.mxu0 0.0
        %5197 = vmatpush1.msra.mxu0 0.0
        %5198 = vmatprep.subr.mxu0 0.0
        %5199 = vmatpush1.msra.mxu0 0.0
        %5200 = vmatprep.subr.mxu0 0.0
        %5201 = vmatpush1.msra.mxu0 0.0
        %5202 = vmatprep.subr.mxu0 0.0
        %5203 = vmatpush1.msra.mxu0 0.0
        %5204 = vmatprep.subr.mxu0 0.0
        %5205 = vmatpush1.msra.mxu0 0.0
        %5206 = vmatprep.subr.mxu0 0.0
        %5207 = vmatpush1.msra.mxu0 0.0
        %5208 = vmatprep.subr.mxu0 0.0
        %5209 = vmatpush1.msra.mxu0 0.0
        %5210 = vmatprep.subr.mxu0 0.0
        %5211 = vmatpush1.msra.mxu0 0.0
        %5212 = vmatprep.subr.mxu0 0.0
        %5213 = vmatpush1.msra.mxu0 0.0
        %5214 = vmatprep.subr.mxu0 0.0
        %5215 = vmatpush1.msra.mxu0 0.0
        %5216 = vmatprep.subr.mxu0 0.0
        %5217 = vmatpush1.msra.mxu0 0.0
        %5218 = vmatprep.subr.mxu0 0.0
        %5219 = vmatpush1.msra.mxu0 0.0
        %5220 = vmatprep.subr.mxu0 0.0
        %5221 = vmatpush1.msra.mxu0 0.0
        %5222 = vmatprep.subr.mxu0 0.0
        %5223 = vmatpush1.msra.mxu0 0.0
        %5224 = vmatprep.subr.mxu0 0.0
        %5225 = vmatpush1.msra.mxu0 0.0
        %5226 = vmatprep.subr.mxu0 0.0
        %5227 = vmatpush1.msra.mxu0 0.0
        %5228 = vmatprep.subr.mxu0 0.0
        %5229 = vmatpush1.msra.mxu0 0.0
        %5230 = vmatprep.subr.mxu0 0.0
        %5231 = vmatpush1.msra.mxu0 0.0
        %5232 = vmatprep.subr.mxu0 0.0
        %5233 = vmatpush1.msra.mxu0 0.0
        %5234 = vmatprep.subr.mxu0 0.0
        %5235 = vmatpush1.msra.mxu0 0.0
        %5236 = vmatprep.subr.mxu0 0.0
        %5237 = vmatpush1.msra.mxu0 0.0
        %5238 = vmatprep.mubr.bf16.mxu0 0
        %5239 = vmatmul.mubr.bf16.gmra.mrb[0].mxu0 %v5097
        %v5240 = vpop.f32.mrb[0].mxu0
        %v5241 = vadd.f32 0.0, %v5240
        %v5242 = vpop.f32.mrb[0].mxu0
        %v5243 = vpop.f32.mrb[0].mxu0
        %v5244 = vadd.f32 0.0, %v5243
        %v5245 = vpop.f32.mrb[0].mxu0
        %5246 = vdwg.mxu0
        %v5247 = vmax.f32 %v5007, %v5166
        %v5248 = vmax.f32 %v5009, %v5168
        %v5249 = vmax.f32 %v5082, %v5241
        %v5250 = vmax.f32 %v5011, %v5170
        %v5251 = vmax.f32 %v5013, %v5172
        %v5252 = vmax.f32 %v5085, %v5244
        %v5253 = vld [vmem:[%s8] sm:$0xff]
        %v5254 = vld [vmem:[%s8 + $0x8] sm:$0xff]
        %v5255 = vld [vmem:[%s8 + $0x10] sm:$0xff]
        %v5256 = vld [vmem:[%s8 + $0x18] sm:$0xff]
        %v5257 = vld [vmem:[%s8 + $0x20] sm:$0xff]
        %v5258 = vld [vmem:[%s8 + $0x28] sm:$0xff]
        %v5259 = vld [vmem:[%s8 + $0x30] sm:$0xff]
        %v5260 = vld [vmem:[%s8 + $0x38] sm:$0xff]
        %v5261 = vld [vmem:[%s8 + $0x40] sm:$0xff]
        %v5262 = vld [vmem:[%s8 + $0x48] sm:$0xff]
        %v5263 = vld [vmem:[%s8 + $0x50] sm:$0xff]
        %v5264 = vld [vmem:[%s8 + $0x58] sm:$0xff]
        %v5265 = vld [vmem:[%s8 + $0x60] sm:$0xff]
        %v5266 = vld [vmem:[%s8 + $0x68] sm:$0xff]
        %v5267 = vld [vmem:[%s8 + $0x70] sm:$0xff]
        %v5268 = vld [vmem:[%s8 + $0x78] sm:$0xff]
        %v5269 = vld [vmem:[%s8 + $0x80] sm:$0xff]
        %v5270 = vld [vmem:[%s8 + $0x88] sm:$0xff]
        %v5271 = vld [vmem:[%s8 + $0x90] sm:$0xff]
        %v5272 = vld [vmem:[%s8 + $0x98] sm:$0xff]
        %v5273 = vld [vmem:[%s8 + $0xa0] sm:$0xff]
        %v5274 = vld [vmem:[%s8 + $0xa8] sm:$0xff]
        %v5275 = vld [vmem:[%s8 + $0xb0] sm:$0xff]
        %v5276 = vld [vmem:[%s8 + $0xb8] sm:$0xff]
        %v5277 = vld [vmem:[%s8 + $0xc0] sm:$0xff]
        %v5278 = vld [vmem:[%s8 + $0xc8] sm:$0xff]
        %v5279 = vld [vmem:[%s8 + $0xd0] sm:$0xff]
        %v5280 = vld [vmem:[%s8 + $0xd8] sm:$0xff]
        %v5281 = vld [vmem:[%s8 + $0xe0] sm:$0xff]
        %v5282 = vld [vmem:[%s8 + $0xe8] sm:$0xff]
        %v5283 = vld [vmem:[%s8 + $0xf0] sm:$0xff]
        %v5284 = vld [vmem:[%s8 + $0xf8] sm:$0xff]
        %v5285 = vld [vmem:[%s8 + $0x100] sm:$0xff]
        %v5286 = vld [vmem:[%s8 + $0x108] sm:$0xff]
        %v5287 = vld [vmem:[%s8 + $0x110] sm:$0xff]
        %v5288 = vld [vmem:[%s8 + $0x118] sm:$0xff]
        %v5325 = vunpack.c.l.b16 %v5253
        %v5326 = vunpack.c.h.b16 %v5253
        %v5327 = vunpack.c.l.b16 %v5254
        %v5328 = vunpack.c.h.b16 %v5254
        %v5329 = vunpack.c.l.b16 %v5255
        %v5330 = vunpack.c.h.b16 %v5255
        %v5331 = vunpack.c.l.b16 %v5256
        %v5332 = vunpack.c.h.b16 %v5256
        %v5333 = vunpack.c.l.b16 %v5257
        %v5334 = vunpack.c.h.b16 %v5257
        %v5335 = vunpack.c.l.b16 %v5258
        %v5336 = vunpack.c.h.b16 %v5258
        %v5337 = vunpack.c.l.b16 %v5259
        %v5338 = vunpack.c.h.b16 %v5259
        %v5339 = vunpack.c.l.b16 %v5260
        %v5340 = vunpack.c.h.b16 %v5260
        %v5341 = vunpack.c.l.b16 %v5261
        %v5342 = vunpack.c.h.b16 %v5261
        %v5343 = vunpack.c.l.b16 %v5262
        %v5344 = vunpack.c.h.b16 %v5262
        %v5345 = vunpack.c.l.b16 %v5263
        %v5346 = vunpack.c.h.b16 %v5263
        %v5347 = vunpack.c.l.b16 %v5264
        %v5348 = vunpack.c.h.b16 %v5264
        %v5349 = vunpack.c.l.b16 %v5265
        %v5350 = vunpack.c.h.b16 %v5265
        %v5351 = vunpack.c.l.b16 %v5266
        %v5352 = vunpack.c.h.b16 %v5266
        %v5353 = vunpack.c.l.b16 %v5267
        %v5354 = vunpack.c.h.b16 %v5267
        %v5355 = vunpack.c.l.b16 %v5268
        %v5356 = vunpack.c.h.b16 %v5268
        %v5357 = vunpack.c.l.b16 %v5269
        %v5358 = vunpack.c.h.b16 %v5269
        %v5359 = vunpack.c.l.b16 %v5270
        %v5360 = vunpack.c.h.b16 %v5270
        %v5361 = vunpack.c.l.b16 %v5271
        %v5362 = vunpack.c.h.b16 %v5271
        %v5363 = vunpack.c.l.b16 %v5272
        %v5364 = vunpack.c.h.b16 %v5272
        %v5365 = vunpack.c.l.b16 %v5273
        %v5366 = vunpack.c.h.b16 %v5273
        %v5367 = vunpack.c.l.b16 %v5274
        %v5368 = vunpack.c.h.b16 %v5274
        %v5369 = vunpack.c.l.b16 %v5275
        %v5370 = vunpack.c.h.b16 %v5275
        %v5371 = vunpack.c.l.b16 %v5276
        %v5372 = vunpack.c.h.b16 %v5276
        %v5373 = vunpack.c.l.b16 %v5277
        %v5374 = vunpack.c.h.b16 %v5277
        %v5375 = vunpack.c.l.b16 %v5278
        %v5376 = vunpack.c.h.b16 %v5278
        %v5377 = vunpack.c.l.b16 %v5279
        %v5378 = vunpack.c.h.b16 %v5279
        %v5379 = vunpack.c.l.b16 %v5280
        %v5380 = vunpack.c.h.b16 %v5280
        %v5381 = vunpack.c.l.b16 %v5281
        %v5382 = vunpack.c.h.b16 %v5281
        %v5383 = vunpack.c.l.b16 %v5282
        %v5384 = vunpack.c.h.b16 %v5282
        %v5385 = vunpack.c.l.b16 %v5283
        %v5386 = vunpack.c.h.b16 %v5283
        %v5387 = vunpack.c.l.b16 %v5284
        %v5388 = vunpack.c.h.b16 %v5284
        %v5389 = vunpack.c.l.b16 %v5285
        %v5390 = vunpack.c.h.b16 %v5285
        %v5391 = vunpack.c.l.b16 %v5286
        %v5392 = vunpack.c.h.b16 %v5286
        %v5393 = vunpack.c.l.b16 %v5287
        %v5394 = vunpack.c.h.b16 %v5287
        %v5395 = vunpack.c.l.b16 %v5288
        %v5396 = vunpack.c.h.b16 %v5288
        %v5397 = vpack.c.b16 %v5327, %v5325
        %v5398 = vpack.c.b16 %v5328, %v5326
        %v5399 = vpack.c.b16 %v5331, %v5329
        %v5400 = vpack.c.b16 %v5332, %v5330
        %v5401 = vpack.c.b16 %v5335, %v5333
        %v5402 = vpack.c.b16 %v5336, %v5334
        %v5403 = vpack.c.b16 %v5339, %v5337
        %v5404 = vpack.c.b16 %v5340, %v5338
        %v5405 = vpack.c.b16 %v5343, %v5341
        %v5406 = vpack.c.b16 %v5344, %v5342
        %v5407 = vpack.c.b16 %v5347, %v5345
        %v5408 = vpack.c.b16 %v5348, %v5346
        %v5409 = vpack.c.b16 %v5351, %v5349
        %v5410 = vpack.c.b16 %v5352, %v5350
        %v5411 = vpack.c.b16 %v5355, %v5353
        %v5412 = vpack.c.b16 %v5356, %v5354
        %v5413 = vpack.c.b16 %v5359, %v5357
        %v5414 = vpack.c.b16 %v5360, %v5358
        %v5415 = vpack.c.b16 %v5363, %v5361
        %v5416 = vpack.c.b16 %v5364, %v5362
        %v5417 = vpack.c.b16 %v5367, %v5365
        %v5418 = vpack.c.b16 %v5368, %v5366
        %v5419 = vpack.c.b16 %v5371, %v5369
        %v5420 = vpack.c.b16 %v5372, %v5370
        %v5421 = vpack.c.b16 %v5375, %v5373
        %v5422 = vpack.c.b16 %v5376, %v5374
        %v5423 = vpack.c.b16 %v5379, %v5377
        %v5424 = vpack.c.b16 %v5380, %v5378
        %v5425 = vpack.c.b16 %v5383, %v5381
        %v5426 = vpack.c.b16 %v5384, %v5382
        %v5427 = vpack.c.b16 %v5387, %v5385
        %v5428 = vpack.c.b16 %v5388, %v5386
        %v5429 = vpack.c.b16 %v5391, %v5389
        %v5430 = vpack.c.b16 %v5392, %v5390
        %v5431 = vpack.c.b16 %v5395, %v5393
        %v5432 = vpack.c.b16 %v5396, %v5394
        %vm5469 = vcmask 261120
        %v5471 = vsel %vm5469, %v5249, 0
        %v5474 = vsel %vm5469, %v5252, 0
        %5476 = vmatprep.subr.bf16.mxu0 %v5398
        %5477 = vmatpush1.bf16.msra.mxu0 %v5397
        %5478 = vmatprep.subr.bf16.mxu0 %v5400
        %5479 = vmatpush1.bf16.msra.mxu0 %v5399
        %5480 = vmatprep.subr.bf16.mxu0 %v5402
        %5481 = vmatpush1.bf16.msra.mxu0 %v5401
        %5482 = vmatprep.subr.bf16.mxu0 %v5404
        %5483 = vmatpush1.bf16.msra.mxu0 %v5403
        %5484 = vmatprep.subr.bf16.mxu0 %v5406
        %5485 = vmatpush1.bf16.msra.mxu0 %v5405
        %5486 = vmatprep.subr.bf16.mxu0 %v5408
        %5487 = vmatpush1.bf16.msra.mxu0 %v5407
        %5488 = vmatprep.subr.bf16.mxu0 %v5410
        %5489 = vmatpush1.bf16.msra.mxu0 %v5409
        %5490 = vmatprep.subr.bf16.mxu0 %v5412
        %5491 = vmatpush1.bf16.msra.mxu0 %v5411
        %5492 = vmatprep.subr.bf16.mxu0 %v5414
        %5493 = vmatpush1.bf16.msra.mxu0 %v5413
        %5494 = vmatprep.subr.bf16.mxu0 %v5416
        %5495 = vmatpush1.bf16.msra.mxu0 %v5415
        %5496 = vmatprep.subr.bf16.mxu0 %v5418
        %5497 = vmatpush1.bf16.msra.mxu0 %v5417
        %5498 = vmatprep.subr.bf16.mxu0 %v5420
        %5499 = vmatpush1.bf16.msra.mxu0 %v5419
        %5500 = vmatprep.subr.bf16.mxu0 %v5422
        %5501 = vmatpush1.bf16.msra.mxu0 %v5421
        %5502 = vmatprep.subr.bf16.mxu0 %v5424
        %5503 = vmatpush1.bf16.msra.mxu0 %v5423
        %5504 = vmatprep.subr.bf16.mxu0 %v5426
        %5505 = vmatpush1.bf16.msra.mxu0 %v5425
        %5506 = vmatprep.subr.bf16.mxu0 %v5428
        %5507 = vmatpush1.bf16.msra.mxu0 %v5427
        %5508 = vmatprep.mubr.f32.mxu0 %v5248
        %5509 = vmatmul.mubr.f32.gmra.mrb[0].mxu0 %v5247
        %v5510 = vpop.f32.mrb[0].mxu0
        %v5511 = vadd.f32 0.0, %v5510
        %v5512 = vpop.f32.mrb[0].mxu0
        %v5513 = vadd.f32 0.0, %v5512
        %5514 = vmatprep.mubr.f32.mxu0 %v5251
        %5515 = vmatmul.mubr.f32.gmra.mrb[0].mxu0 %v5250
        %v5516 = vpop.f32.mrb[0].mxu0
        %v5517 = vadd.f32 0.0, %v5516
        %v5518 = vpop.f32.mrb[0].mxu0
        %v5519 = vadd.f32 0.0, %v5518
        %5520 = vdwg.mxu0
        %5521 = vmatprep.subr.bf16.mxu0 %v5430
        %5522 = vmatpush1.bf16.msra.mxu0 %v5429
        %5523 = vmatprep.subr.bf16.mxu0 %v5432
        %5524 = vmatpush1.bf16.msra.mxu0 %v5431
        %5525 = vmatprep.subr.bf16.mxu0 0
        %5526 = vmatpush1.bf16.msra.mxu0 0
        %5527 = vmatprep.subr.bf16.mxu0 0
        %5528 = vmatpush1.bf16.msra.mxu0 0
        %5529 = vmatprep.subr.bf16.mxu0 0
        %5530 = vmatpush1.bf16.msra.mxu0 0
        %5531 = vmatprep.subr.bf16.mxu0 0
        %5532 = vmatpush1.bf16.msra.mxu0 0
        %5533 = vmatprep.subr.bf16.mxu0 0
        %5534 = vmatpush1.bf16.msra.mxu0 0
        %5535 = vmatprep.subr.bf16.mxu0 0
        %5536 = vmatpush1.bf16.msra.mxu0 0
        %5537 = vmatprep.subr.bf16.mxu0 0
        %5538 = vmatpush1.bf16.msra.mxu0 0
        %5539 = vmatprep.subr.bf16.mxu0 0
        %5540 = vmatpush1.bf16.msra.mxu0 0
        %5541 = vmatprep.subr.bf16.mxu0 0
        %5542 = vmatpush1.bf16.msra.mxu0 0
        %5543 = vmatprep.subr.bf16.mxu0 0
        %5544 = vmatpush1.bf16.msra.mxu0 0
        %5545 = vmatprep.subr.bf16.mxu0 0
        %5546 = vmatpush1.bf16.msra.mxu0 0
        %5547 = vmatprep.subr.bf16.mxu0 0
        %5548 = vmatpush1.bf16.msra.mxu0 0
        %5549 = vmatprep.subr.bf16.mxu0 0
        %5550 = vmatpush1.bf16.msra.mxu0 0
        %5551 = vmatprep.subr.bf16.mxu0 0
        %5552 = vmatpush1.bf16.msra.mxu0 0
        %5553 = vmatprep.mubr.f32.mxu0 0.0
        %5554 = vmatmul.mubr.f32.gmra.mrb[0].mxu0 %v5471
        %v5555 = vpop.f32.mrb[0].mxu0
        %v5556 = vadd.f32 %v5511, %v5555
        %v5557 = vpop.f32.mrb[0].mxu0
        %v5558 = vadd.f32 %v5513, %v5557
        %5559 = vmatprep.mubr.f32.mxu0 0.0
        %5560 = vmatmul.mubr.f32.gmra.mrb[0].mxu0 %v5474
        %v5561 = vpop.f32.mrb[0].mxu0
        %v5562 = vadd.f32 %v5517, %v5561
        %v5563 = vpop.f32.mrb[0].mxu0
        %v5564 = vadd.f32 %v5519, %v5563
        %5565 = vdwg.mxu0
        %s5566 = scalar_lea.vmem %s8, 288
        %v5567 = vld [vmem:[%s5566] sm:$0xff]
        %v5568 = vld [vmem:[%s5566 + $0x8] sm:$0xff]
        %v5569 = vld [vmem:[%s5566 + $0x10] sm:$0xff]
        %v5570 = vld [vmem:[%s5566 + $0x18] sm:$0xff]
        %v5571 = vld [vmem:[%s5566 + $0x20] sm:$0xff]
        %v5572 = vld [vmem:[%s5566 + $0x28] sm:$0xff]
        %v5573 = vld [vmem:[%s5566 + $0x30] sm:$0xff]
        %v5574 = vld [vmem:[%s5566 + $0x38] sm:$0xff]
        %v5575 = vld [vmem:[%s5566 + $0x40] sm:$0xff]
        %v5576 = vld [vmem:[%s5566 + $0x48] sm:$0xff]
        %v5577 = vld [vmem:[%s5566 + $0x50] sm:$0xff]
        %v5578 = vld [vmem:[%s5566 + $0x58] sm:$0xff]
        %v5579 = vld [vmem:[%s5566 + $0x60] sm:$0xff]
        %v5580 = vld [vmem:[%s5566 + $0x68] sm:$0xff]
        %v5581 = vld [vmem:[%s5566 + $0x70] sm:$0xff]
        %v5582 = vld [vmem:[%s5566 + $0x78] sm:$0xff]
        %v5583 = vld [vmem:[%s5566 + $0x80] sm:$0xff]
        %v5584 = vld [vmem:[%s5566 + $0x88] sm:$0xff]
        %v5585 = vld [vmem:[%s5566 + $0x90] sm:$0xff]
        %v5586 = vld [vmem:[%s5566 + $0x98] sm:$0xff]
        %v5587 = vld [vmem:[%s5566 + $0xa0] sm:$0xff]
        %v5588 = vld [vmem:[%s5566 + $0xa8] sm:$0xff]
        %v5589 = vld [vmem:[%s5566 + $0xb0] sm:$0xff]
        %v5590 = vld [vmem:[%s5566 + $0xb8] sm:$0xff]
        %v5591 = vld [vmem:[%s5566 + $0xc0] sm:$0xff]
        %v5592 = vld [vmem:[%s5566 + $0xc8] sm:$0xff]
        %v5593 = vld [vmem:[%s5566 + $0xd0] sm:$0xff]
        %v5594 = vld [vmem:[%s5566 + $0xd8] sm:$0xff]
        %v5595 = vld [vmem:[%s5566 + $0xe0] sm:$0xff]
        %v5596 = vld [vmem:[%s5566 + $0xe8] sm:$0xff]
        %v5597 = vld [vmem:[%s5566 + $0xf0] sm:$0xff]
        %v5598 = vld [vmem:[%s5566 + $0xf8] sm:$0xff]
        %v5599 = vld [vmem:[%s5566 + $0x100] sm:$0xff]
        %v5600 = vld [vmem:[%s5566 + $0x108] sm:$0xff]
        %v5601 = vld [vmem:[%s5566 + $0x110] sm:$0xff]
        %v5602 = vld [vmem:[%s5566 + $0x118] sm:$0xff]
        %v5639 = vunpack.c.l.b16 %v5567
        %v5640 = vunpack.c.h.b16 %v5567
        %v5641 = vunpack.c.l.b16 %v5568
        %v5642 = vunpack.c.h.b16 %v5568
        %v5643 = vunpack.c.l.b16 %v5569
        %v5644 = vunpack.c.h.b16 %v5569
        %v5645 = vunpack.c.l.b16 %v5570
        %v5646 = vunpack.c.h.b16 %v5570
        %v5647 = vunpack.c.l.b16 %v5571
        %v5648 = vunpack.c.h.b16 %v5571
        %v5649 = vunpack.c.l.b16 %v5572
        %v5650 = vunpack.c.h.b16 %v5572
        %v5651 = vunpack.c.l.b16 %v5573
        %v5652 = vunpack.c.h.b16 %v5573
        %v5653 = vunpack.c.l.b16 %v5574
        %v5654 = vunpack.c.h.b16 %v5574
        %v5655 = vunpack.c.l.b16 %v5575
        %v5656 = vunpack.c.h.b16 %v5575
        %v5657 = vunpack.c.l.b16 %v5576
        %v5658 = vunpack.c.h.b16 %v5576
        %v5659 = vunpack.c.l.b16 %v5577
        %v5660 = vunpack.c.h.b16 %v5577
        %v5661 = vunpack.c.l.b16 %v5578
        %v5662 = vunpack.c.h.b16 %v5578
        %v5663 = vunpack.c.l.b16 %v5579
        %v5664 = vunpack.c.h.b16 %v5579
        %v5665 = vunpack.c.l.b16 %v5580
        %v5666 = vunpack.c.h.b16 %v5580
        %v5667 = vunpack.c.l.b16 %v5581
        %v5668 = vunpack.c.h.b16 %v5581
        %v5669 = vunpack.c.l.b16 %v5582
        %v5670 = vunpack.c.h.b16 %v5582
        %v5671 = vunpack.c.l.b16 %v5583
        %v5672 = vunpack.c.h.b16 %v5583
        %v5673 = vunpack.c.l.b16 %v5584
        %v5674 = vunpack.c.h.b16 %v5584
        %v5675 = vunpack.c.l.b16 %v5585
        %v5676 = vunpack.c.h.b16 %v5585
        %v5677 = vunpack.c.l.b16 %v5586
        %v5678 = vunpack.c.h.b16 %v5586
        %v5679 = vunpack.c.l.b16 %v5587
        %v5680 = vunpack.c.h.b16 %v5587
        %v5681 = vunpack.c.l.b16 %v5588
        %v5682 = vunpack.c.h.b16 %v5588
        %v5683 = vunpack.c.l.b16 %v5589
        %v5684 = vunpack.c.h.b16 %v5589
        %v5685 = vunpack.c.l.b16 %v5590
        %v5686 = vunpack.c.h.b16 %v5590
        %v5687 = vunpack.c.l.b16 %v5591
        %v5688 = vunpack.c.h.b16 %v5591
        %v5689 = vunpack.c.l.b16 %v5592
        %v5690 = vunpack.c.h.b16 %v5592
        %v5691 = vunpack.c.l.b16 %v5593
        %v5692 = vunpack.c.h.b16 %v5593
        %v5693 = vunpack.c.l.b16 %v5594
        %v5694 = vunpack.c.h.b16 %v5594
        %v5695 = vunpack.c.l.b16 %v5595
        %v5696 = vunpack.c.h.b16 %v5595
        %v5697 = vunpack.c.l.b16 %v5596
        %v5698 = vunpack.c.h.b16 %v5596
        %v5699 = vunpack.c.l.b16 %v5597
        %v5700 = vunpack.c.h.b16 %v5597
        %v5701 = vunpack.c.l.b16 %v5598
        %v5702 = vunpack.c.h.b16 %v5598
        %v5703 = vunpack.c.l.b16 %v5599
        %v5704 = vunpack.c.h.b16 %v5599
        %v5705 = vunpack.c.l.b16 %v5600
        %v5706 = vunpack.c.h.b16 %v5600
        %v5707 = vunpack.c.l.b16 %v5601
        %v5708 = vunpack.c.h.b16 %v5601
        %v5709 = vunpack.c.l.b16 %v5602
        %v5710 = vunpack.c.h.b16 %v5602
        %v5711 = vpack.c.b16 %v5641, %v5639
        %v5712 = vpack.c.b16 %v5642, %v5640
        %v5713 = vpack.c.b16 %v5645, %v5643
        %v5714 = vpack.c.b16 %v5646, %v5644
        %v5715 = vpack.c.b16 %v5649, %v5647
        %v5716 = vpack.c.b16 %v5650, %v5648
        %v5717 = vpack.c.b16 %v5653, %v5651
        %v5718 = vpack.c.b16 %v5654, %v5652
        %v5719 = vpack.c.b16 %v5657, %v5655
        %v5720 = vpack.c.b16 %v5658, %v5656
        %v5721 = vpack.c.b16 %v5661, %v5659
        %v5722 = vpack.c.b16 %v5662, %v5660
        %v5723 = vpack.c.b16 %v5665, %v5663
        %v5724 = vpack.c.b16 %v5666, %v5664
        %v5725 = vpack.c.b16 %v5669, %v5667
        %v5726 = vpack.c.b16 %v5670, %v5668
        %v5727 = vpack.c.b16 %v5673, %v5671
        %v5728 = vpack.c.b16 %v5674, %v5672
        %v5729 = vpack.c.b16 %v5677, %v5675
        %v5730 = vpack.c.b16 %v5678, %v5676
        %v5731 = vpack.c.b16 %v5681, %v5679
        %v5732 = vpack.c.b16 %v5682, %v5680
        %v5733 = vpack.c.b16 %v5685, %v5683
        %v5734 = vpack.c.b16 %v5686, %v5684
        %v5735 = vpack.c.b16 %v5689, %v5687
        %v5736 = vpack.c.b16 %v5690, %v5688
        %v5737 = vpack.c.b16 %v5693, %v5691
        %v5738 = vpack.c.b16 %v5694, %v5692
        %v5739 = vpack.c.b16 %v5697, %v5695
        %v5740 = vpack.c.b16 %v5698, %v5696
        %v5741 = vpack.c.b16 %v5701, %v5699
        %v5742 = vpack.c.b16 %v5702, %v5700
        %v5743 = vpack.c.b16 %v5705, %v5703
        %v5744 = vpack.c.b16 %v5706, %v5704
        %v5745 = vpack.c.b16 %v5709, %v5707
        %v5746 = vpack.c.b16 %v5710, %v5708
        %5783 = vmatprep.subr.bf16.mxu0 %v5712
        %5784 = vmatpush1.bf16.msra.mxu0 %v5711
        %5785 = vmatprep.subr.bf16.mxu0 %v5714
        %5786 = vmatpush1.bf16.msra.mxu0 %v5713
        %5787 = vmatprep.subr.bf16.mxu0 %v5716
        %5788 = vmatpush1.bf16.msra.mxu0 %v5715
        %5789 = vmatprep.subr.bf16.mxu0 %v5718
        %5790 = vmatpush1.bf16.msra.mxu0 %v5717
        %5791 = vmatprep.subr.bf16.mxu0 %v5720
        %5792 = vmatpush1.bf16.msra.mxu0 %v5719
        %5793 = vmatprep.subr.bf16.mxu0 %v5722
        %5794 = vmatpush1.bf16.msra.mxu0 %v5721
        %5795 = vmatprep.subr.bf16.mxu0 %v5724
        %5796 = vmatpush1.bf16.msra.mxu0 %v5723
        %5797 = vmatprep.subr.bf16.mxu0 %v5726
        %5798 = vmatpush1.bf16.msra.mxu0 %v5725
        %5799 = vmatprep.subr.bf16.mxu0 %v5728
        %5800 = vmatpush1.bf16.msra.mxu0 %v5727
        %5801 = vmatprep.subr.bf16.mxu0 %v5730
        %5802 = vmatpush1.bf16.msra.mxu0 %v5729
        %5803 = vmatprep.subr.bf16.mxu0 %v5732
        %5804 = vmatpush1.bf16.msra.mxu0 %v5731
        %5805 = vmatprep.subr.bf16.mxu0 %v5734
        %5806 = vmatpush1.bf16.msra.mxu0 %v5733
        %5807 = vmatprep.subr.bf16.mxu0 %v5736
        %5808 = vmatpush1.bf16.msra.mxu0 %v5735
        %5809 = vmatprep.subr.bf16.mxu0 %v5738
        %5810 = vmatpush1.bf16.msra.mxu0 %v5737
        %5811 = vmatprep.subr.bf16.mxu0 %v5740
        %5812 = vmatpush1.bf16.msra.mxu0 %v5739
        %5813 = vmatprep.subr.bf16.mxu0 %v5742
        %5814 = vmatpush1.bf16.msra.mxu0 %v5741
        %5815 = vmatprep.mubr.f32.mxu0 %v5248
        %5816 = vmatmul.mubr.f32.gmra.mrb[0].mxu0 %v5247
        %v5817 = vpop.f32.mrb[0].mxu0
        %v5818 = vadd.f32 0.0, %v5817
        %v5819 = vpop.f32.mrb[0].mxu0
        %v5820 = vadd.f32 0.0, %v5819
        %5821 = vmatprep.mubr.f32.mxu0 %v5251
        %5822 = vmatmul.mubr.f32.gmra.mrb[0].mxu0 %v5250
        %v5823 = vpop.f32.mrb[0].mxu0
        %v5824 = vadd.f32 0.0, %v5823
        %v5825 = vpop.f32.mrb[0].mxu0
        %v5826 = vadd.f32 0.0, %v5825
        %5827 = vdwg.mxu0
        %5828 = vmatprep.subr.bf16.mxu0 %v5744
        %5829 = vmatpush1.bf16.msra.mxu0 %v5743
        %5830 = vmatprep.subr.bf16.mxu0 %v5746
        %5831 = vmatpush1.bf16.msra.mxu0 %v5745
        %5832 = vmatprep.subr.bf16.mxu0 0
        %5833 = vmatpush1.bf16.msra.mxu0 0
        %5834 = vmatprep.subr.bf16.mxu0 0
        %5835 = vmatpush1.bf16.msra.mxu0 0
        %5836 = vmatprep.subr.bf16.mxu0 0
        %5837 = vmatpush1.bf16.msra.mxu0 0
        %5838 = vmatprep.subr.bf16.mxu0 0
        %5839 = vmatpush1.bf16.msra.mxu0 0
        %5840 = vmatprep.subr.bf16.mxu0 0
        %5841 = vmatpush1.bf16.msra.mxu0 0
        %5842 = vmatprep.subr.bf16.mxu0 0
        %5843 = vmatpush1.bf16.msra.mxu0 0
        %5844 = vmatprep.subr.bf16.mxu0 0
        %5845 = vmatpush1.bf16.msra.mxu0 0
        %5846 = vmatprep.subr.bf16.mxu0 0
        %5847 = vmatpush1.bf16.msra.mxu0 0
        %5848 = vmatprep.subr.bf16.mxu0 0
        %5849 = vmatpush1.bf16.msra.mxu0 0
        %5850 = vmatprep.subr.bf16.mxu0 0
        %5851 = vmatpush1.bf16.msra.mxu0 0
        %5852 = vmatprep.subr.bf16.mxu0 0
        %5853 = vmatpush1.bf16.msra.mxu0 0
        %5854 = vmatprep.subr.bf16.mxu0 0
        %5855 = vmatpush1.bf16.msra.mxu0 0
        %5856 = vmatprep.subr.bf16.mxu0 0
        %5857 = vmatpush1.bf16.msra.mxu0 0
        %5858 = vmatprep.subr.bf16.mxu0 0
        %5859 = vmatpush1.bf16.msra.mxu0 0
        %5860 = vmatprep.mubr.f32.mxu0 0.0
        %5861 = vmatmul.mubr.f32.gmra.mrb[0].mxu0 %v5471
        %v5862 = vpop.f32.mrb[0].mxu0
        %v5863 = vadd.f32 %v5818, %v5862
        %v5864 = vpop.f32.mrb[0].mxu0
        %v5865 = vadd.f32 %v5820, %v5864
        %5866 = vmatprep.mubr.f32.mxu0 0.0
        %5867 = vmatmul.mubr.f32.gmra.mrb[0].mxu0 %v5474
        %v5868 = vpop.f32.mrb[0].mxu0
        %v5869 = vadd.f32 %v5824, %v5868
        %v5870 = vpop.f32.mrb[0].mxu0
        %v5871 = vadd.f32 %v5826, %v5870
        %5872 = vdwg.mxu0
        %v5873 = vmax.f32 %v5556, %v5863
        %v5874 = vmax.f32 %v5558, %v5865
        %v5875 = vmax.f32 %v5562, %v5869
        %v5876 = vmax.f32 %v5564, %v5871
        %v5877 = vld [vmem:[%s9] sm:$0xf]
        %v5878 = vld [vmem:[%s9 + $0x4] sm:$0xf]
        %v5879 = vld [vmem:[%s9 + $0x8] sm:$0xf]
        %v5880 = vld [vmem:[%s9 + $0xc] sm:$0xf]
        %v5881 = vld [vmem:[%s9 + $0x10] sm:$0xf]
        %v5882 = vld [vmem:[%s9 + $0x14] sm:$0xf]
        %v5883 = vld [vmem:[%s9 + $0x18] sm:$0xf]
        %v5884 = vld [vmem:[%s9 + $0x1c] sm:$0xf]
        %v5885 = vld [vmem:[%s9 + $0x20] sm:$0xf]
        %v5886 = vld [vmem:[%s9 + $0x24] sm:$0xf]
        %v5887 = vld [vmem:[%s9 + $0x28] sm:$0xf]
        %v5888 = vld [vmem:[%s9 + $0x2c] sm:$0xf]
        %v5889 = vld [vmem:[%s9 + $0x30] sm:$0xf]
        %v5890 = vld [vmem:[%s9 + $0x34] sm:$0xf]
        %v5891 = vld [vmem:[%s9 + $0x38] sm:$0xf]
        %v5892 = vld [vmem:[%s9 + $0x3c] sm:$0xf]
        %v5893 = vld [vmem:[%s9 + $0x40] sm:$0xf]
        %v5894 = vld [vmem:[%s9 + $0x44] sm:$0xf]
        %s5895 = scalar_lea.vmem %s9, 72
        %v5896 = vld [vmem:[%s5895] sm:$0xf]
        %v5897 = vld [vmem:[%s5895 + $0x4] sm:$0xf]
        %v5898 = vld [vmem:[%s5895 + $0x8] sm:$0xf]
        %v5899 = vld [vmem:[%s5895 + $0xc] sm:$0xf]
        %v5900 = vld [vmem:[%s5895 + $0x10] sm:$0xf]
        %v5901 = vld [vmem:[%s5895 + $0x14] sm:$0xf]
        %v5902 = vld [vmem:[%s5895 + $0x18] sm:$0xf]
        %v5903 = vld [vmem:[%s5895 + $0x1c] sm:$0xf]
        %v5904 = vld [vmem:[%s5895 + $0x20] sm:$0xf]
        %v5905 = vld [vmem:[%s5895 + $0x24] sm:$0xf]
        %v5906 = vld [vmem:[%s5895 + $0x28] sm:$0xf]
        %v5907 = vld [vmem:[%s5895 + $0x2c] sm:$0xf]
        %v5908 = vld [vmem:[%s5895 + $0x30] sm:$0xf]
        %v5909 = vld [vmem:[%s5895 + $0x34] sm:$0xf]
        %v5910 = vld [vmem:[%s5895 + $0x38] sm:$0xf]
        %v5911 = vld [vmem:[%s5895 + $0x3c] sm:$0xf]
        %v5912 = vld [vmem:[%s5895 + $0x40] sm:$0xf]
        %v5913 = vld [vmem:[%s5895 + $0x44] sm:$0xf]
        %v5916 = vrot.slane %v5873, 1
        %v5917 = vrot.slane %v5874, 1
        %v5937 = vunpack.c.l.b16 %v5896
        %v5938 = vunpack.c.l.b16 %v5897
        %v5939 = vunpack.c.l.b16 %v5898
        %v5940 = vunpack.c.l.b16 %v5899
        %v5941 = vunpack.c.l.b16 %v5900
        %v5942 = vunpack.c.l.b16 %v5901
        %v5943 = vunpack.c.l.b16 %v5902
        %v5944 = vunpack.c.l.b16 %v5903
        %v5945 = vunpack.c.l.b16 %v5904
        %v5946 = vunpack.c.l.b16 %v5905
        %v5947 = vunpack.c.l.b16 %v5906
        %v5948 = vunpack.c.l.b16 %v5907
        %v5949 = vunpack.c.l.b16 %v5908
        %v5950 = vunpack.c.l.b16 %v5909
        %v5951 = vunpack.c.l.b16 %v5910
        %v5952 = vunpack.c.l.b16 %v5911
        %v5953 = vunpack.c.l.b16 %v5912
        %v5954 = vunpack.c.l.b16 %v5913
        %v5955 = vpack.c.b16 %v5938, %v5937
        %v5956 = vpack.c.b16 %v5940, %v5939
        %v5957 = vpack.c.b16 %v5942, %v5941
        %v5958 = vpack.c.b16 %v5944, %v5943
        %v5959 = vpack.c.b16 %v5946, %v5945
        %v5960 = vpack.c.b16 %v5948, %v5947
        %v5961 = vpack.c.b16 %v5950, %v5949
        %v5962 = vpack.c.b16 %v5952, %v5951
        %v5963 = vpack.c.b16 %v5954, %v5953
        %v5973 = vsel %vm763, %v5917, 0
        %5975 = vmatprep.subr.bf16.mxu0 0
        %5976 = vmatpush1.bf16.msra.mxu0 %v5955
        %5977 = vmatprep.subr.bf16.mxu0 0
        %5978 = vmatpush1.bf16.msra.mxu0 %v5956
        %5979 = vmatprep.subr.bf16.mxu0 0
        %5980 = vmatpush1.bf16.msra.mxu0 %v5957
        %5981 = vmatprep.subr.bf16.mxu0 0
        %5982 = vmatpush1.bf16.msra.mxu0 %v5958
        %5983 = vmatprep.subr.bf16.mxu0 0
        %5984 = vmatpush1.bf16.msra.mxu0 %v5959
        %5985 = vmatprep.subr.bf16.mxu0 0
        %5986 = vmatpush1.bf16.msra.mxu0 %v5960
        %5987 = vmatprep.subr.bf16.mxu0 0
        %5988 = vmatpush1.bf16.msra.mxu0 %v5961
        %5989 = vmatprep.subr.bf16.mxu0 0
        %5990 = vmatpush1.bf16.msra.mxu0 %v5962
        %5991 = vmatprep.subr.bf16.mxu0 0
        %5992 = vmatpush1.bf16.msra.mxu0 %v5963
        %5993 = vmatprep.subr.bf16.mxu0 0
        %5994 = vmatpush1.bf16.msra.mxu0 0
        %5995 = vmatprep.subr.bf16.mxu0 0
        %5996 = vmatpush1.bf16.msra.mxu0 0
        %5997 = vmatprep.subr.bf16.mxu0 0
        %5998 = vmatpush1.bf16.msra.mxu0 0
        %5999 = vmatprep.subr.bf16.mxu0 0
        %6000 = vmatpush1.bf16.msra.mxu0 0
        %6001 = vmatprep.subr.bf16.mxu0 0
        %6002 = vmatpush1.bf16.msra.mxu0 0
        %6003 = vmatprep.subr.bf16.mxu0 0
        %6004 = vmatpush1.bf16.msra.mxu0 0
        %6005 = vmatprep.subr.bf16.mxu0 0
        %6006 = vmatpush1.bf16.msra.mxu0 0
        %6007 = vmatprep.mubr.f32.mxu0 %v5973
        %6008 = vmatmul.mubr.f32.gmra.mrb[0].mxu0 %v5916
        %v6009 = vpop.f32.mrb[0].mxu0
        %v6010 = vadd.f32 0.0, %v6009
        %v6011 = vpop.f32.mrb[0].mxu0
        %6012 = vdwg.mxu0
        %v6031 = vunpack.c.l.b16 %v5877
        %v6032 = vunpack.c.l.b16 %v5878
        %v6033 = vunpack.c.l.b16 %v5879
        %v6034 = vunpack.c.l.b16 %v5880
        %v6035 = vunpack.c.l.b16 %v5881
        %v6036 = vunpack.c.l.b16 %v5882
        %v6037 = vunpack.c.l.b16 %v5883
        %v6038 = vunpack.c.l.b16 %v5884
        %v6039 = vunpack.c.l.b16 %v5885
        %v6040 = vunpack.c.l.b16 %v5886
        %v6041 = vunpack.c.l.b16 %v5887
        %v6042 = vunpack.c.l.b16 %v5888
        %v6043 = vunpack.c.l.b16 %v5889
        %v6044 = vunpack.c.l.b16 %v5890
        %v6045 = vunpack.c.l.b16 %v5891
        %v6046 = vunpack.c.l.b16 %v5892
        %v6047 = vunpack.c.l.b16 %v5893
        %v6048 = vunpack.c.l.b16 %v5894
        %v6049 = vpack.c.b16 %v6032, %v6031
        %v6050 = vpack.c.b16 %v6034, %v6033
        %v6051 = vpack.c.b16 %v6036, %v6035
        %v6052 = vpack.c.b16 %v6038, %v6037
        %v6053 = vpack.c.b16 %v6040, %v6039
        %v6054 = vpack.c.b16 %v6042, %v6041
        %v6055 = vpack.c.b16 %v6044, %v6043
        %v6056 = vpack.c.b16 %v6046, %v6045
        %v6057 = vpack.c.b16 %v6048, %v6047
        %v6067 = vsel %vm763, %v5874, 0
        %6069 = vmatprep.subr.bf16.mxu0 0
        %6070 = vmatpush1.bf16.msra.mxu0 %v6049
        %6071 = vmatprep.subr.bf16.mxu0 0
        %6072 = vmatpush1.bf16.msra.mxu0 %v6050
        %6073 = vmatprep.subr.bf16.mxu0 0
        %6074 = vmatpush1.bf16.msra.mxu0 %v6051
        %6075 = vmatprep.subr.bf16.mxu0 0
        %6076 = vmatpush1.bf16.msra.mxu0 %v6052
        %6077 = vmatprep.subr.bf16.mxu0 0
        %6078 = vmatpush1.bf16.msra.mxu0 %v6053
        %6079 = vmatprep.subr.bf16.mxu0 0
        %6080 = vmatpush1.bf16.msra.mxu0 %v6054
        %6081 = vmatprep.subr.bf16.mxu0 0
        %6082 = vmatpush1.bf16.msra.mxu0 %v6055
        %6083 = vmatprep.subr.bf16.mxu0 0
        %6084 = vmatpush1.bf16.msra.mxu0 %v6056
        %6085 = vmatprep.subr.bf16.mxu0 0
        %6086 = vmatpush1.bf16.msra.mxu0 %v6057
        %6087 = vmatprep.subr.bf16.mxu0 0
        %6088 = vmatpush1.bf16.msra.mxu0 0
        %6089 = vmatprep.subr.bf16.mxu0 0
        %6090 = vmatpush1.bf16.msra.mxu0 0
        %6091 = vmatprep.subr.bf16.mxu0 0
        %6092 = vmatpush1.bf16.msra.mxu0 0
        %6093 = vmatprep.subr.bf16.mxu0 0
        %6094 = vmatpush1.bf16.msra.mxu0 0
        %6095 = vmatprep.subr.bf16.mxu0 0
        %6096 = vmatpush1.bf16.msra.mxu0 0
        %6097 = vmatprep.subr.bf16.mxu0 0
        %6098 = vmatpush1.bf16.msra.mxu0 0
        %6099 = vmatprep.subr.bf16.mxu0 0
        %6100 = vmatpush1.bf16.msra.mxu0 0
        %6101 = vmatprep.mubr.f32.mxu0 %v6067
        %6102 = vmatmul.mubr.f32.gmra.mrb[0].mxu0 %v5873
        %v6103 = vpop.f32.mrb[0].mxu0
        %v6104 = vadd.f32 %v6010, %v6103
        %v6105 = vpop.f32.mrb[0].mxu0
        %6106 = vdwg.mxu0
        %s6107 = scalar_lea.vmem %s9, 144
        %v6108 = vld [vmem:[%s6107] sm:$0xf]
        %v6109 = vld [vmem:[%s6107 + $0x4] sm:$0xf]
        %v6110 = vld [vmem:[%s6107 + $0x8] sm:$0xf]
        %v6111 = vld [vmem:[%s6107 + $0xc] sm:$0xf]
        %v6112 = vld [vmem:[%s6107 + $0x10] sm:$0xf]
        %v6113 = vld [vmem:[%s6107 + $0x14] sm:$0xf]
        %v6114 = vld [vmem:[%s6107 + $0x18] sm:$0xf]
        %v6115 = vld [vmem:[%s6107 + $0x1c] sm:$0xf]
        %v6116 = vld [vmem:[%s6107 + $0x20] sm:$0xf]
        %v6117 = vld [vmem:[%s6107 + $0x24] sm:$0xf]
        %v6118 = vld [vmem:[%s6107 + $0x28] sm:$0xf]
        %v6119 = vld [vmem:[%s6107 + $0x2c] sm:$0xf]
        %v6120 = vld [vmem:[%s6107 + $0x30] sm:$0xf]
        %v6121 = vld [vmem:[%s6107 + $0x34] sm:$0xf]
        %v6122 = vld [vmem:[%s6107 + $0x38] sm:$0xf]
        %v6123 = vld [vmem:[%s6107 + $0x3c] sm:$0xf]
        %v6124 = vld [vmem:[%s6107 + $0x40] sm:$0xf]
        %v6125 = vld [vmem:[%s6107 + $0x44] sm:$0xf]
        %v6126 = vrot.slane %v5873, 2
        %v6127 = vrot.slane %v5874, 2
        %v6147 = vunpack.c.l.b16 %v6108
        %v6148 = vunpack.c.l.b16 %v6109
        %v6149 = vunpack.c.l.b16 %v6110
        %v6150 = vunpack.c.l.b16 %v6111
        %v6151 = vunpack.c.l.b16 %v6112
        %v6152 = vunpack.c.l.b16 %v6113
        %v6153 = vunpack.c.l.b16 %v6114
        %v6154 = vunpack.c.l.b16 %v6115
        %v6155 = vunpack.c.l.b16 %v6116
        %v6156 = vunpack.c.l.b16 %v6117
        %v6157 = vunpack.c.l.b16 %v6118
        %v6158 = vunpack.c.l.b16 %v6119
        %v6159 = vunpack.c.l.b16 %v6120
        %v6160 = vunpack.c.l.b16 %v6121
        %v6161 = vunpack.c.l.b16 %v6122
        %v6162 = vunpack.c.l.b16 %v6123
        %v6163 = vunpack.c.l.b16 %v6124
        %v6164 = vunpack.c.l.b16 %v6125
        %v6165 = vpack.c.b16 %v6148, %v6147
        %v6166 = vpack.c.b16 %v6150, %v6149
        %v6167 = vpack.c.b16 %v6152, %v6151
        %v6168 = vpack.c.b16 %v6154, %v6153
        %v6169 = vpack.c.b16 %v6156, %v6155
        %v6170 = vpack.c.b16 %v6158, %v6157
        %v6171 = vpack.c.b16 %v6160, %v6159
        %v6172 = vpack.c.b16 %v6162, %v6161
        %v6173 = vpack.c.b16 %v6164, %v6163
        %v6183 = vsel %vm763, %v6127, 0
        %6185 = vmatprep.subr.bf16.mxu0 0
        %6186 = vmatpush1.bf16.msra.mxu0 %v6165
        %6187 = vmatprep.subr.bf16.mxu0 0
        %6188 = vmatpush1.bf16.msra.mxu0 %v6166
        %6189 = vmatprep.subr.bf16.mxu0 0
        %6190 = vmatpush1.bf16.msra.mxu0 %v6167
        %6191 = vmatprep.subr.bf16.mxu0 0
        %6192 = vmatpush1.bf16.msra.mxu0 %v6168
        %6193 = vmatprep.subr.bf16.mxu0 0
        %6194 = vmatpush1.bf16.msra.mxu0 %v6169
        %6195 = vmatprep.subr.bf16.mxu0 0
        %6196 = vmatpush1.bf16.msra.mxu0 %v6170
        %6197 = vmatprep.subr.bf16.mxu0 0
        %6198 = vmatpush1.bf16.msra.mxu0 %v6171
        %6199 = vmatprep.subr.bf16.mxu0 0
        %6200 = vmatpush1.bf16.msra.mxu0 %v6172
        %6201 = vmatprep.subr.bf16.mxu0 0
        %6202 = vmatpush1.bf16.msra.mxu0 %v6173
        %6203 = vmatprep.subr.bf16.mxu0 0
        %6204 = vmatpush1.bf16.msra.mxu0 0
        %6205 = vmatprep.subr.bf16.mxu0 0
        %6206 = vmatpush1.bf16.msra.mxu0 0
        %6207 = vmatprep.subr.bf16.mxu0 0
        %6208 = vmatpush1.bf16.msra.mxu0 0
        %6209 = vmatprep.subr.bf16.mxu0 0
        %6210 = vmatpush1.bf16.msra.mxu0 0
        %6211 = vmatprep.subr.bf16.mxu0 0
        %6212 = vmatpush1.bf16.msra.mxu0 0
        %6213 = vmatprep.subr.bf16.mxu0 0
        %6214 = vmatpush1.bf16.msra.mxu0 0
        %6215 = vmatprep.subr.bf16.mxu0 0
        %6216 = vmatpush1.bf16.msra.mxu0 0
        %6217 = vmatprep.mubr.f32.mxu0 %v6183
        %6218 = vmatmul.mubr.f32.gmra.mrb[0].mxu0 %v6126
        %v6219 = vpop.f32.mrb[0].mxu0
        %v6220 = vadd.f32 0.0, %v6219
        %v6221 = vpop.f32.mrb[0].mxu0
        %6222 = vdwg.mxu0
        %v6223 = vadd.f32 %v6104, %v6220
        %s6224 = scalar_lea.vmem %s9, 216
        %v6225 = vld [vmem:[%s6224] sm:$0xf]
        %v6226 = vld [vmem:[%s6224 + $0x4] sm:$0xf]
        %v6227 = vld [vmem:[%s6224 + $0x8] sm:$0xf]
        %v6228 = vld [vmem:[%s6224 + $0xc] sm:$0xf]
        %v6229 = vld [vmem:[%s6224 + $0x10] sm:$0xf]
        %v6230 = vld [vmem:[%s6224 + $0x14] sm:$0xf]
        %v6231 = vld [vmem:[%s6224 + $0x18] sm:$0xf]
        %v6232 = vld [vmem:[%s6224 + $0x1c] sm:$0xf]
        %v6233 = vld [vmem:[%s6224 + $0x20] sm:$0xf]
        %v6234 = vld [vmem:[%s6224 + $0x24] sm:$0xf]
        %v6235 = vld [vmem:[%s6224 + $0x28] sm:$0xf]
        %v6236 = vld [vmem:[%s6224 + $0x2c] sm:$0xf]
        %v6237 = vld [vmem:[%s6224 + $0x30] sm:$0xf]
        %v6238 = vld [vmem:[%s6224 + $0x34] sm:$0xf]
        %v6239 = vld [vmem:[%s6224 + $0x38] sm:$0xf]
        %v6240 = vld [vmem:[%s6224 + $0x3c] sm:$0xf]
        %v6241 = vld [vmem:[%s6224 + $0x40] sm:$0xf]
        %v6242 = vld [vmem:[%s6224 + $0x44] sm:$0xf]
        %v6243 = vrot.slane %v5873, 3
        %v6244 = vrot.slane %v5874, 3
        %v6264 = vunpack.c.l.b16 %v6225
        %v6265 = vunpack.c.l.b16 %v6226
        %v6266 = vunpack.c.l.b16 %v6227
        %v6267 = vunpack.c.l.b16 %v6228
        %v6268 = vunpack.c.l.b16 %v6229
        %v6269 = vunpack.c.l.b16 %v6230
        %v6270 = vunpack.c.l.b16 %v6231
        %v6271 = vunpack.c.l.b16 %v6232
        %v6272 = vunpack.c.l.b16 %v6233
        %v6273 = vunpack.c.l.b16 %v6234
        %v6274 = vunpack.c.l.b16 %v6235
        %v6275 = vunpack.c.l.b16 %v6236
        %v6276 = vunpack.c.l.b16 %v6237
        %v6277 = vunpack.c.l.b16 %v6238
        %v6278 = vunpack.c.l.b16 %v6239
        %v6279 = vunpack.c.l.b16 %v6240
        %v6280 = vunpack.c.l.b16 %v6241
        %v6281 = vunpack.c.l.b16 %v6242
        %v6282 = vpack.c.b16 %v6265, %v6264
        %v6283 = vpack.c.b16 %v6267, %v6266
        %v6284 = vpack.c.b16 %v6269, %v6268
        %v6285 = vpack.c.b16 %v6271, %v6270
        %v6286 = vpack.c.b16 %v6273, %v6272
        %v6287 = vpack.c.b16 %v6275, %v6274
        %v6288 = vpack.c.b16 %v6277, %v6276
        %v6289 = vpack.c.b16 %v6279, %v6278
        %v6290 = vpack.c.b16 %v6281, %v6280
        %v6300 = vsel %vm763, %v6244, 0
        %6302 = vmatprep.subr.bf16.mxu0 0
        %6303 = vmatpush1.bf16.msra.mxu0 %v6282
        %6304 = vmatprep.subr.bf16.mxu0 0
        %6305 = vmatpush1.bf16.msra.mxu0 %v6283
        %6306 = vmatprep.subr.bf16.mxu0 0
        %6307 = vmatpush1.bf16.msra.mxu0 %v6284
        %6308 = vmatprep.subr.bf16.mxu0 0
        %6309 = vmatpush1.bf16.msra.mxu0 %v6285
        %6310 = vmatprep.subr.bf16.mxu0 0
        %6311 = vmatpush1.bf16.msra.mxu0 %v6286
        %6312 = vmatprep.subr.bf16.mxu0 0
        %6313 = vmatpush1.bf16.msra.mxu0 %v6287
        %6314 = vmatprep.subr.bf16.mxu0 0
        %6315 = vmatpush1.bf16.msra.mxu0 %v6288
        %6316 = vmatprep.subr.bf16.mxu0 0
        %6317 = vmatpush1.bf16.msra.mxu0 %v6289
        %6318 = vmatprep.subr.bf16.mxu0 0
        %6319 = vmatpush1.bf16.msra.mxu0 %v6290
        %6320 = vmatprep.subr.bf16.mxu0 0
        %6321 = vmatpush1.bf16.msra.mxu0 0
        %6322 = vmatprep.subr.bf16.mxu0 0
        %6323 = vmatpush1.bf16.msra.mxu0 0
        %6324 = vmatprep.subr.bf16.mxu0 0
        %6325 = vmatpush1.bf16.msra.mxu0 0
        %6326 = vmatprep.subr.bf16.mxu0 0
        %6327 = vmatpush1.bf16.msra.mxu0 0
        %6328 = vmatprep.subr.bf16.mxu0 0
        %6329 = vmatpush1.bf16.msra.mxu0 0
        %6330 = vmatprep.subr.bf16.mxu0 0
        %6331 = vmatpush1.bf16.msra.mxu0 0
        %6332 = vmatprep.subr.bf16.mxu0 0
        %6333 = vmatpush1.bf16.msra.mxu0 0
        %6334 = vmatprep.mubr.f32.mxu0 %v6300
        %6335 = vmatmul.mubr.f32.gmra.mrb[0].mxu0 %v6243
        %v6336 = vpop.f32.mrb[0].mxu0
        %v6337 = vadd.f32 0.0, %v6336
        %v6338 = vpop.f32.mrb[0].mxu0
        %6339 = vdwg.mxu0
        %v6340 = vadd.f32 %v6223, %v6337
        %s6341 = scalar_lea.vmem %s9, 288
        %v6342 = vld [vmem:[%s6341] sm:$0xf]
        %v6343 = vld [vmem:[%s6341 + $0x4] sm:$0xf]
        %v6344 = vld [vmem:[%s6341 + $0x8] sm:$0xf]
        %v6345 = vld [vmem:[%s6341 + $0xc] sm:$0xf]
        %v6346 = vld [vmem:[%s6341 + $0x10] sm:$0xf]
        %v6347 = vld [vmem:[%s6341 + $0x14] sm:$0xf]
        %v6348 = vld [vmem:[%s6341 + $0x18] sm:$0xf]
        %v6349 = vld [vmem:[%s6341 + $0x1c] sm:$0xf]
        %v6350 = vld [vmem:[%s6341 + $0x20] sm:$0xf]
        %v6351 = vld [vmem:[%s6341 + $0x24] sm:$0xf]
        %v6352 = vld [vmem:[%s6341 + $0x28] sm:$0xf]
        %v6353 = vld [vmem:[%s6341 + $0x2c] sm:$0xf]
        %v6354 = vld [vmem:[%s6341 + $0x30] sm:$0xf]
        %v6355 = vld [vmem:[%s6341 + $0x34] sm:$0xf]
        %v6356 = vld [vmem:[%s6341 + $0x38] sm:$0xf]
        %v6357 = vld [vmem:[%s6341 + $0x3c] sm:$0xf]
        %v6358 = vld [vmem:[%s6341 + $0x40] sm:$0xf]
        %v6359 = vld [vmem:[%s6341 + $0x44] sm:$0xf]
        %v6360 = vrot.slane %v5873, 4
        %v6361 = vrot.slane %v5874, 4
        %v6381 = vunpack.c.l.b16 %v6342
        %v6382 = vunpack.c.l.b16 %v6343
        %v6383 = vunpack.c.l.b16 %v6344
        %v6384 = vunpack.c.l.b16 %v6345
        %v6385 = vunpack.c.l.b16 %v6346
        %v6386 = vunpack.c.l.b16 %v6347
        %v6387 = vunpack.c.l.b16 %v6348
        %v6388 = vunpack.c.l.b16 %v6349
        %v6389 = vunpack.c.l.b16 %v6350
        %v6390 = vunpack.c.l.b16 %v6351
        %v6391 = vunpack.c.l.b16 %v6352
        %v6392 = vunpack.c.l.b16 %v6353
        %v6393 = vunpack.c.l.b16 %v6354
        %v6394 = vunpack.c.l.b16 %v6355
        %v6395 = vunpack.c.l.b16 %v6356
        %v6396 = vunpack.c.l.b16 %v6357
        %v6397 = vunpack.c.l.b16 %v6358
        %v6398 = vunpack.c.l.b16 %v6359
        %v6399 = vpack.c.b16 %v6382, %v6381
        %v6400 = vpack.c.b16 %v6384, %v6383
        %v6401 = vpack.c.b16 %v6386, %v6385
        %v6402 = vpack.c.b16 %v6388, %v6387
        %v6403 = vpack.c.b16 %v6390, %v6389
        %v6404 = vpack.c.b16 %v6392, %v6391
        %v6405 = vpack.c.b16 %v6394, %v6393
        %v6406 = vpack.c.b16 %v6396, %v6395
        %v6407 = vpack.c.b16 %v6398, %v6397
        %v6417 = vsel %vm763, %v6361, 0
        %6419 = vmatprep.subr.bf16.mxu0 0
        %6420 = vmatpush1.bf16.msra.mxu0 %v6399
        %6421 = vmatprep.subr.bf16.mxu0 0
        %6422 = vmatpush1.bf16.msra.mxu0 %v6400
        %6423 = vmatprep.subr.bf16.mxu0 0
        %6424 = vmatpush1.bf16.msra.mxu0 %v6401
        %6425 = vmatprep.subr.bf16.mxu0 0
        %6426 = vmatpush1.bf16.msra.mxu0 %v6402
        %6427 = vmatprep.subr.bf16.mxu0 0
        %6428 = vmatpush1.bf16.msra.mxu0 %v6403
        %6429 = vmatprep.subr.bf16.mxu0 0
        %6430 = vmatpush1.bf16.msra.mxu0 %v6404
        %6431 = vmatprep.subr.bf16.mxu0 0
        %6432 = vmatpush1.bf16.msra.mxu0 %v6405
        %6433 = vmatprep.subr.bf16.mxu0 0
        %6434 = vmatpush1.bf16.msra.mxu0 %v6406
        %6435 = vmatprep.subr.bf16.mxu0 0
        %6436 = vmatpush1.bf16.msra.mxu0 %v6407
        %6437 = vmatprep.subr.bf16.mxu0 0
        %6438 = vmatpush1.bf16.msra.mxu0 0
        %6439 = vmatprep.subr.bf16.mxu0 0
        %6440 = vmatpush1.bf16.msra.mxu0 0
        %6441 = vmatprep.subr.bf16.mxu0 0
        %6442 = vmatpush1.bf16.msra.mxu0 0
        %6443 = vmatprep.subr.bf16.mxu0 0
        %6444 = vmatpush1.bf16.msra.mxu0 0
        %6445 = vmatprep.subr.bf16.mxu0 0
        %6446 = vmatpush1.bf16.msra.mxu0 0
        %6447 = vmatprep.subr.bf16.mxu0 0
        %6448 = vmatpush1.bf16.msra.mxu0 0
        %6449 = vmatprep.subr.bf16.mxu0 0
        %6450 = vmatpush1.bf16.msra.mxu0 0
        %6451 = vmatprep.mubr.f32.mxu0 %v6417
        %6452 = vmatmul.mubr.f32.gmra.mrb[0].mxu0 %v6360
        %v6453 = vpop.f32.mrb[0].mxu0
        %v6454 = vadd.f32 0.0, %v6453
        %v6455 = vpop.f32.mrb[0].mxu0
        %6456 = vdwg.mxu0
        %v6457 = vadd.f32 %v6340, %v6454
        %s6458 = scalar_lea.vmem %s9, 360
        %v6459 = vld [vmem:[%s6458] sm:$0xf]
        %v6460 = vld [vmem:[%s6458 + $0x4] sm:$0xf]
        %v6461 = vld [vmem:[%s6458 + $0x8] sm:$0xf]
        %v6462 = vld [vmem:[%s6458 + $0xc] sm:$0xf]
        %v6463 = vld [vmem:[%s6458 + $0x10] sm:$0xf]
        %v6464 = vld [vmem:[%s6458 + $0x14] sm:$0xf]
        %v6465 = vld [vmem:[%s6458 + $0x18] sm:$0xf]
        %v6466 = vld [vmem:[%s6458 + $0x1c] sm:$0xf]
        %v6467 = vld [vmem:[%s6458 + $0x20] sm:$0xf]
        %v6468 = vld [vmem:[%s6458 + $0x24] sm:$0xf]
        %v6469 = vld [vmem:[%s6458 + $0x28] sm:$0xf]
        %v6470 = vld [vmem:[%s6458 + $0x2c] sm:$0xf]
        %v6471 = vld [vmem:[%s6458 + $0x30] sm:$0xf]
        %v6472 = vld [vmem:[%s6458 + $0x34] sm:$0xf]
        %v6473 = vld [vmem:[%s6458 + $0x38] sm:$0xf]
        %v6474 = vld [vmem:[%s6458 + $0x3c] sm:$0xf]
        %v6475 = vld [vmem:[%s6458 + $0x40] sm:$0xf]
        %v6476 = vld [vmem:[%s6458 + $0x44] sm:$0xf]
        %v6477 = vrot.slane %v5873, 5
        %v6478 = vrot.slane %v5874, 5
        %v6498 = vunpack.c.l.b16 %v6459
        %v6499 = vunpack.c.l.b16 %v6460
        %v6500 = vunpack.c.l.b16 %v6461
        %v6501 = vunpack.c.l.b16 %v6462
        %v6502 = vunpack.c.l.b16 %v6463
        %v6503 = vunpack.c.l.b16 %v6464
        %v6504 = vunpack.c.l.b16 %v6465
        %v6505 = vunpack.c.l.b16 %v6466
        %v6506 = vunpack.c.l.b16 %v6467
        %v6507 = vunpack.c.l.b16 %v6468
        %v6508 = vunpack.c.l.b16 %v6469
        %v6509 = vunpack.c.l.b16 %v6470
        %v6510 = vunpack.c.l.b16 %v6471
        %v6511 = vunpack.c.l.b16 %v6472
        %v6512 = vunpack.c.l.b16 %v6473
        %v6513 = vunpack.c.l.b16 %v6474
        %v6514 = vunpack.c.l.b16 %v6475
        %v6515 = vunpack.c.l.b16 %v6476
        %v6516 = vpack.c.b16 %v6499, %v6498
        %v6517 = vpack.c.b16 %v6501, %v6500
        %v6518 = vpack.c.b16 %v6503, %v6502
        %v6519 = vpack.c.b16 %v6505, %v6504
        %v6520 = vpack.c.b16 %v6507, %v6506
        %v6521 = vpack.c.b16 %v6509, %v6508
        %v6522 = vpack.c.b16 %v6511, %v6510
        %v6523 = vpack.c.b16 %v6513, %v6512
        %v6524 = vpack.c.b16 %v6515, %v6514
        %v6534 = vsel %vm763, %v6478, 0
        %6536 = vmatprep.subr.bf16.mxu0 0
        %6537 = vmatpush1.bf16.msra.mxu0 %v6516
        %6538 = vmatprep.subr.bf16.mxu0 0
        %6539 = vmatpush1.bf16.msra.mxu0 %v6517
        %6540 = vmatprep.subr.bf16.mxu0 0
        %6541 = vmatpush1.bf16.msra.mxu0 %v6518
        %6542 = vmatprep.subr.bf16.mxu0 0
        %6543 = vmatpush1.bf16.msra.mxu0 %v6519
        %6544 = vmatprep.subr.bf16.mxu0 0
        %6545 = vmatpush1.bf16.msra.mxu0 %v6520
        %6546 = vmatprep.subr.bf16.mxu0 0
        %6547 = vmatpush1.bf16.msra.mxu0 %v6521
        %6548 = vmatprep.subr.bf16.mxu0 0
        %6549 = vmatpush1.bf16.msra.mxu0 %v6522
        %6550 = vmatprep.subr.bf16.mxu0 0
        %6551 = vmatpush1.bf16.msra.mxu0 %v6523
        %6552 = vmatprep.subr.bf16.mxu0 0
        %6553 = vmatpush1.bf16.msra.mxu0 %v6524
        %6554 = vmatprep.subr.bf16.mxu0 0
        %6555 = vmatpush1.bf16.msra.mxu0 0
        %6556 = vmatprep.subr.bf16.mxu0 0
        %6557 = vmatpush1.bf16.msra.mxu0 0
        %6558 = vmatprep.subr.bf16.mxu0 0
        %6559 = vmatpush1.bf16.msra.mxu0 0
        %6560 = vmatprep.subr.bf16.mxu0 0
        %6561 = vmatpush1.bf16.msra.mxu0 0
        %6562 = vmatprep.subr.bf16.mxu0 0
        %6563 = vmatpush1.bf16.msra.mxu0 0
        %6564 = vmatprep.subr.bf16.mxu0 0
        %6565 = vmatpush1.bf16.msra.mxu0 0
        %6566 = vmatprep.subr.bf16.mxu0 0
        %6567 = vmatpush1.bf16.msra.mxu0 0
        %6568 = vmatprep.mubr.f32.mxu0 %v6534
        %6569 = vmatmul.mubr.f32.gmra.mrb[0].mxu0 %v6477
        %v6570 = vpop.f32.mrb[0].mxu0
        %v6571 = vadd.f32 0.0, %v6570
        %v6572 = vpop.f32.mrb[0].mxu0
        %6573 = vdwg.mxu0
        %v6574 = vadd.f32 %v6457, %v6571
        %s6575 = scalar_lea.vmem %s9, 432
        %v6576 = vld [vmem:[%s6575] sm:$0xf]
        %v6577 = vld [vmem:[%s6575 + $0x4] sm:$0xf]
        %v6578 = vld [vmem:[%s6575 + $0x8] sm:$0xf]
        %v6579 = vld [vmem:[%s6575 + $0xc] sm:$0xf]
        %v6580 = vld [vmem:[%s6575 + $0x10] sm:$0xf]
        %v6581 = vld [vmem:[%s6575 + $0x14] sm:$0xf]
        %v6582 = vld [vmem:[%s6575 + $0x18] sm:$0xf]
        %v6583 = vld [vmem:[%s6575 + $0x1c] sm:$0xf]
        %v6584 = vld [vmem:[%s6575 + $0x20] sm:$0xf]
        %v6585 = vld [vmem:[%s6575 + $0x24] sm:$0xf]
        %v6586 = vld [vmem:[%s6575 + $0x28] sm:$0xf]
        %v6587 = vld [vmem:[%s6575 + $0x2c] sm:$0xf]
        %v6588 = vld [vmem:[%s6575 + $0x30] sm:$0xf]
        %v6589 = vld [vmem:[%s6575 + $0x34] sm:$0xf]
        %v6590 = vld [vmem:[%s6575 + $0x38] sm:$0xf]
        %v6591 = vld [vmem:[%s6575 + $0x3c] sm:$0xf]
        %v6592 = vld [vmem:[%s6575 + $0x40] sm:$0xf]
        %v6593 = vld [vmem:[%s6575 + $0x44] sm:$0xf]
        %v6594 = vrot.slane %v5873, 6
        %v6595 = vrot.slane %v5874, 6
        %v6615 = vunpack.c.l.b16 %v6576
        %v6616 = vunpack.c.l.b16 %v6577
        %v6617 = vunpack.c.l.b16 %v6578
        %v6618 = vunpack.c.l.b16 %v6579
        %v6619 = vunpack.c.l.b16 %v6580
        %v6620 = vunpack.c.l.b16 %v6581
        %v6621 = vunpack.c.l.b16 %v6582
        %v6622 = vunpack.c.l.b16 %v6583
        %v6623 = vunpack.c.l.b16 %v6584
        %v6624 = vunpack.c.l.b16 %v6585
        %v6625 = vunpack.c.l.b16 %v6586
        %v6626 = vunpack.c.l.b16 %v6587
        %v6627 = vunpack.c.l.b16 %v6588
        %v6628 = vunpack.c.l.b16 %v6589
        %v6629 = vunpack.c.l.b16 %v6590
        %v6630 = vunpack.c.l.b16 %v6591
        %v6631 = vunpack.c.l.b16 %v6592
        %v6632 = vunpack.c.l.b16 %v6593
        %v6633 = vpack.c.b16 %v6616, %v6615
        %v6634 = vpack.c.b16 %v6618, %v6617
        %v6635 = vpack.c.b16 %v6620, %v6619
        %v6636 = vpack.c.b16 %v6622, %v6621
        %v6637 = vpack.c.b16 %v6624, %v6623
        %v6638 = vpack.c.b16 %v6626, %v6625
        %v6639 = vpack.c.b16 %v6628, %v6627
        %v6640 = vpack.c.b16 %v6630, %v6629
        %v6641 = vpack.c.b16 %v6632, %v6631
        %v6651 = vsel %vm763, %v6595, 0
        %6653 = vmatprep.subr.bf16.mxu0 0
        %6654 = vmatpush1.bf16.msra.mxu0 %v6633
        %6655 = vmatprep.subr.bf16.mxu0 0
        %6656 = vmatpush1.bf16.msra.mxu0 %v6634
        %6657 = vmatprep.subr.bf16.mxu0 0
        %6658 = vmatpush1.bf16.msra.mxu0 %v6635
        %6659 = vmatprep.subr.bf16.mxu0 0
        %6660 = vmatpush1.bf16.msra.mxu0 %v6636
        %6661 = vmatprep.subr.bf16.mxu0 0
        %6662 = vmatpush1.bf16.msra.mxu0 %v6637
        %6663 = vmatprep.subr.bf16.mxu0 0
        %6664 = vmatpush1.bf16.msra.mxu0 %v6638
        %6665 = vmatprep.subr.bf16.mxu0 0
        %6666 = vmatpush1.bf16.msra.mxu0 %v6639
        %6667 = vmatprep.subr.bf16.mxu0 0
        %6668 = vmatpush1.bf16.msra.mxu0 %v6640
        %6669 = vmatprep.subr.bf16.mxu0 0
        %6670 = vmatpush1.bf16.msra.mxu0 %v6641
        %6671 = vmatprep.subr.bf16.mxu0 0
        %6672 = vmatpush1.bf16.msra.mxu0 0
        %6673 = vmatprep.subr.bf16.mxu0 0
        %6674 = vmatpush1.bf16.msra.mxu0 0
        %6675 = vmatprep.subr.bf16.mxu0 0
        %6676 = vmatpush1.bf16.msra.mxu0 0
        %6677 = vmatprep.subr.bf16.mxu0 0
        %6678 = vmatpush1.bf16.msra.mxu0 0
        %6679 = vmatprep.subr.bf16.mxu0 0
        %6680 = vmatpush1.bf16.msra.mxu0 0
        %6681 = vmatprep.subr.bf16.mxu0 0
        %6682 = vmatpush1.bf16.msra.mxu0 0
        %6683 = vmatprep.subr.bf16.mxu0 0
        %6684 = vmatpush1.bf16.msra.mxu0 0
        %6685 = vmatprep.mubr.f32.mxu0 %v6651
        %6686 = vmatmul.mubr.f32.gmra.mrb[0].mxu0 %v6594
        %v6687 = vpop.f32.mrb[0].mxu0
        %v6688 = vadd.f32 0.0, %v6687
        %v6689 = vpop.f32.mrb[0].mxu0
        %6690 = vdwg.mxu0
        %v6691 = vadd.f32 %v6574, %v6688
        %s6692 = scalar_lea.vmem %s9, 504
        %v6693 = vld [vmem:[%s6692] sm:$0xf]
        %v6694 = vld [vmem:[%s6692 + $0x4] sm:$0xf]
        %v6695 = vld [vmem:[%s6692 + $0x8] sm:$0xf]
        %v6696 = vld [vmem:[%s6692 + $0xc] sm:$0xf]
        %v6697 = vld [vmem:[%s6692 + $0x10] sm:$0xf]
        %v6698 = vld [vmem:[%s6692 + $0x14] sm:$0xf]
        %v6699 = vld [vmem:[%s6692 + $0x18] sm:$0xf]
        %v6700 = vld [vmem:[%s6692 + $0x1c] sm:$0xf]
        %v6701 = vld [vmem:[%s6692 + $0x20] sm:$0xf]
        %v6702 = vld [vmem:[%s6692 + $0x24] sm:$0xf]
        %v6703 = vld [vmem:[%s6692 + $0x28] sm:$0xf]
        %v6704 = vld [vmem:[%s6692 + $0x2c] sm:$0xf]
        %v6705 = vld [vmem:[%s6692 + $0x30] sm:$0xf]
        %v6706 = vld [vmem:[%s6692 + $0x34] sm:$0xf]
        %v6707 = vld [vmem:[%s6692 + $0x38] sm:$0xf]
        %v6708 = vld [vmem:[%s6692 + $0x3c] sm:$0xf]
        %v6709 = vld [vmem:[%s6692 + $0x40] sm:$0xf]
        %v6710 = vld [vmem:[%s6692 + $0x44] sm:$0xf]
        %v6711 = vrot.slane %v5873, 7
        %v6712 = vrot.slane %v5874, 7
        %v6732 = vunpack.c.l.b16 %v6693
        %v6733 = vunpack.c.l.b16 %v6694
        %v6734 = vunpack.c.l.b16 %v6695
        %v6735 = vunpack.c.l.b16 %v6696
        %v6736 = vunpack.c.l.b16 %v6697
        %v6737 = vunpack.c.l.b16 %v6698
        %v6738 = vunpack.c.l.b16 %v6699
        %v6739 = vunpack.c.l.b16 %v6700
        %v6740 = vunpack.c.l.b16 %v6701
        %v6741 = vunpack.c.l.b16 %v6702
        %v6742 = vunpack.c.l.b16 %v6703
        %v6743 = vunpack.c.l.b16 %v6704
        %v6744 = vunpack.c.l.b16 %v6705
        %v6745 = vunpack.c.l.b16 %v6706
        %v6746 = vunpack.c.l.b16 %v6707
        %v6747 = vunpack.c.l.b16 %v6708
        %v6748 = vunpack.c.l.b16 %v6709
        %v6749 = vunpack.c.l.b16 %v6710
        %v6750 = vpack.c.b16 %v6733, %v6732
        %v6751 = vpack.c.b16 %v6735, %v6734
        %v6752 = vpack.c.b16 %v6737, %v6736
        %v6753 = vpack.c.b16 %v6739, %v6738
        %v6754 = vpack.c.b16 %v6741, %v6740
        %v6755 = vpack.c.b16 %v6743, %v6742
        %v6756 = vpack.c.b16 %v6745, %v6744
        %v6757 = vpack.c.b16 %v6747, %v6746
        %v6758 = vpack.c.b16 %v6749, %v6748
        %v6768 = vsel %vm763, %v6712, 0
        %6770 = vmatprep.subr.bf16.mxu0 0
        %6771 = vmatpush1.bf16.msra.mxu0 %v6750
        %6772 = vmatprep.subr.bf16.mxu0 0
        %6773 = vmatpush1.bf16.msra.mxu0 %v6751
        %6774 = vmatprep.subr.bf16.mxu0 0
        %6775 = vmatpush1.bf16.msra.mxu0 %v6752
        %6776 = vmatprep.subr.bf16.mxu0 0
        %6777 = vmatpush1.bf16.msra.mxu0 %v6753
        %6778 = vmatprep.subr.bf16.mxu0 0
        %6779 = vmatpush1.bf16.msra.mxu0 %v6754
        %6780 = vmatprep.subr.bf16.mxu0 0
        %6781 = vmatpush1.bf16.msra.mxu0 %v6755
        %6782 = vmatprep.subr.bf16.mxu0 0
        %6783 = vmatpush1.bf16.msra.mxu0 %v6756
        %6784 = vmatprep.subr.bf16.mxu0 0
        %6785 = vmatpush1.bf16.msra.mxu0 %v6757
        %6786 = vmatprep.subr.bf16.mxu0 0
        %6787 = vmatpush1.bf16.msra.mxu0 %v6758
        %6788 = vmatprep.subr.bf16.mxu0 0
        %6789 = vmatpush1.bf16.msra.mxu0 0
        %6790 = vmatprep.subr.bf16.mxu0 0
        %6791 = vmatpush1.bf16.msra.mxu0 0
        %6792 = vmatprep.subr.bf16.mxu0 0
        %6793 = vmatpush1.bf16.msra.mxu0 0
        %6794 = vmatprep.subr.bf16.mxu0 0
        %6795 = vmatpush1.bf16.msra.mxu0 0
        %6796 = vmatprep.subr.bf16.mxu0 0
        %6797 = vmatpush1.bf16.msra.mxu0 0
        %6798 = vmatprep.subr.bf16.mxu0 0
        %6799 = vmatpush1.bf16.msra.mxu0 0
        %6800 = vmatprep.subr.bf16.mxu0 0
        %6801 = vmatpush1.bf16.msra.mxu0 0
        %6802 = vmatprep.mubr.f32.mxu0 %v6768
        %6803 = vmatmul.mubr.f32.gmra.mrb[0].mxu0 %v6711
        %v6804 = vpop.f32.mrb[0].mxu0
        %v6805 = vadd.f32 0.0, %v6804
        %v6806 = vpop.f32.mrb[0].mxu0
        %6807 = vdwg.mxu0
        %v6808 = vadd.f32 %v6691, %v6805
        %s6809 = scalar_lea.vmem %s9, 576
        %v6810 = vld [vmem:[%s6809] sm:$0xf]
        %v6811 = vld [vmem:[%s6809 + $0x4] sm:$0xf]
        %v6812 = vld [vmem:[%s6809 + $0x8] sm:$0xf]
        %v6813 = vld [vmem:[%s6809 + $0xc] sm:$0xf]
        %v6814 = vld [vmem:[%s6809 + $0x10] sm:$0xf]
        %v6815 = vld [vmem:[%s6809 + $0x14] sm:$0xf]
        %v6816 = vld [vmem:[%s6809 + $0x18] sm:$0xf]
        %v6817 = vld [vmem:[%s6809 + $0x1c] sm:$0xf]
        %v6818 = vld [vmem:[%s6809 + $0x20] sm:$0xf]
        %v6819 = vld [vmem:[%s6809 + $0x24] sm:$0xf]
        %v6820 = vld [vmem:[%s6809 + $0x28] sm:$0xf]
        %v6821 = vld [vmem:[%s6809 + $0x2c] sm:$0xf]
        %v6822 = vld [vmem:[%s6809 + $0x30] sm:$0xf]
        %v6823 = vld [vmem:[%s6809 + $0x34] sm:$0xf]
        %v6824 = vld [vmem:[%s6809 + $0x38] sm:$0xf]
        %v6825 = vld [vmem:[%s6809 + $0x3c] sm:$0xf]
        %v6826 = vld [vmem:[%s6809 + $0x40] sm:$0xf]
        %v6827 = vld [vmem:[%s6809 + $0x44] sm:$0xf]
        %v6846 = vunpack.c.l.b16 %v6810
        %v6847 = vunpack.c.l.b16 %v6811
        %v6848 = vunpack.c.l.b16 %v6812
        %v6849 = vunpack.c.l.b16 %v6813
        %v6850 = vunpack.c.l.b16 %v6814
        %v6851 = vunpack.c.l.b16 %v6815
        %v6852 = vunpack.c.l.b16 %v6816
        %v6853 = vunpack.c.l.b16 %v6817
        %v6854 = vunpack.c.l.b16 %v6818
        %v6855 = vunpack.c.l.b16 %v6819
        %v6856 = vunpack.c.l.b16 %v6820
        %v6857 = vunpack.c.l.b16 %v6821
        %v6858 = vunpack.c.l.b16 %v6822
        %v6859 = vunpack.c.l.b16 %v6823
        %v6860 = vunpack.c.l.b16 %v6824
        %v6861 = vunpack.c.l.b16 %v6825
        %v6862 = vunpack.c.l.b16 %v6826
        %v6863 = vunpack.c.l.b16 %v6827
        %v6864 = vpack.c.b16 %v6847, %v6846
        %v6865 = vpack.c.b16 %v6849, %v6848
        %v6866 = vpack.c.b16 %v6851, %v6850
        %v6867 = vpack.c.b16 %v6853, %v6852
        %v6868 = vpack.c.b16 %v6855, %v6854
        %v6869 = vpack.c.b16 %v6857, %v6856
        %v6870 = vpack.c.b16 %v6859, %v6858
        %v6871 = vpack.c.b16 %v6861, %v6860
        %v6872 = vpack.c.b16 %v6863, %v6862
        %v6883 = vsel %vm763, %v5876, 0
        %6885 = vmatprep.subr.bf16.mxu0 0
        %6886 = vmatpush1.bf16.msra.mxu0 %v6864
        %6887 = vmatprep.subr.bf16.mxu0 0
        %6888 = vmatpush1.bf16.msra.mxu0 %v6865
        %6889 = vmatprep.subr.bf16.mxu0 0
        %6890 = vmatpush1.bf16.msra.mxu0 %v6866
        %6891 = vmatprep.subr.bf16.mxu0 0
        %6892 = vmatpush1.bf16.msra.mxu0 %v6867
        %6893 = vmatprep.subr.bf16.mxu0 0
        %6894 = vmatpush1.bf16.msra.mxu0 %v6868
        %6895 = vmatprep.subr.bf16.mxu0 0
        %6896 = vmatpush1.bf16.msra.mxu0 %v6869
        %6897 = vmatprep.subr.bf16.mxu0 0
        %6898 = vmatpush1.bf16.msra.mxu0 %v6870
        %6899 = vmatprep.subr.bf16.mxu0 0
        %6900 = vmatpush1.bf16.msra.mxu0 %v6871
        %6901 = vmatprep.subr.bf16.mxu0 0
        %6902 = vmatpush1.bf16.msra.mxu0 %v6872
        %6903 = vmatprep.subr.bf16.mxu0 0
        %6904 = vmatpush1.bf16.msra.mxu0 0
        %6905 = vmatprep.subr.bf16.mxu0 0
        %6906 = vmatpush1.bf16.msra.mxu0 0
        %6907 = vmatprep.subr.bf16.mxu0 0
        %6908 = vmatpush1.bf16.msra.mxu0 0
        %6909 = vmatprep.subr.bf16.mxu0 0
        %6910 = vmatpush1.bf16.msra.mxu0 0
        %6911 = vmatprep.subr.bf16.mxu0 0
        %6912 = vmatpush1.bf16.msra.mxu0 0
        %6913 = vmatprep.subr.bf16.mxu0 0
        %6914 = vmatpush1.bf16.msra.mxu0 0
        %6915 = vmatprep.subr.bf16.mxu0 0
        %6916 = vmatpush1.bf16.msra.mxu0 0
        %6917 = vmatprep.mubr.f32.mxu0 %v6883
        %6918 = vmatmul.mubr.f32.gmra.mrb[0].mxu0 %v5875
        %v6919 = vpop.f32.mrb[0].mxu0
        %v6920 = vadd.f32 0.0, %v6919
        %v6921 = vpop.f32.mrb[0].mxu0
        %6922 = vdwg.mxu0
        %v6923 = vadd.f32 %v6808, %v6920
        %v6924 = vld [vmem:[%s10] sm:$0x1]
        %v6925 = vadd.f32 %v6923, %v6924
        %v6926 = vmax.f32 %v6925, 0.0
        %v6927 = vld [vmem:[%s11] sm:$0xf]
        %v6928 = vld [vmem:[%s11 + $0x4] sm:$0xf]
        %v6929 = vld [vmem:[%s11 + $0x8] sm:$0xf]
        %v6930 = vld [vmem:[%s11 + $0xc] sm:$0xf]
        %v6931 = vld [vmem:[%s11 + $0x10] sm:$0xf]
        %v6932 = vld [vmem:[%s11 + $0x14] sm:$0xf]
        %v6933 = vld [vmem:[%s11 + $0x18] sm:$0xf]
        %v6934 = vld [vmem:[%s11 + $0x1c] sm:$0xf]
        %v6935 = vld [vmem:[%s11 + $0x20] sm:$0xf]
        %v6936 = vld [vmem:[%s11 + $0x24] sm:$0xf]
        %v6937 = vld [vmem:[%s11 + $0x28] sm:$0xf]
        %v6938 = vld [vmem:[%s11 + $0x2c] sm:$0xf]
        %v6939 = vld [vmem:[%s11 + $0x30] sm:$0xf]
        %v6940 = vld [vmem:[%s11 + $0x34] sm:$0xf]
        %v6941 = vld [vmem:[%s11 + $0x38] sm:$0xf]
        %v6942 = vld [vmem:[%s11 + $0x3c] sm:$0xf]
        %v6943 = vld [vmem:[%s12] sm:$0x1]
        %v6960 = vunpack.c.l.b16 %v6927
        %v6961 = vunpack.c.l.b16 %v6928
        %v6962 = vunpack.c.l.b16 %v6929
        %v6963 = vunpack.c.l.b16 %v6930
        %v6964 = vunpack.c.l.b16 %v6931
        %v6965 = vunpack.c.l.b16 %v6932
        %v6966 = vunpack.c.l.b16 %v6933
        %v6967 = vunpack.c.l.b16 %v6934
        %v6968 = vunpack.c.l.b16 %v6935
        %v6969 = vunpack.c.l.b16 %v6936
        %v6970 = vunpack.c.l.b16 %v6937
        %v6971 = vunpack.c.l.b16 %v6938
        %v6972 = vunpack.c.l.b16 %v6939
        %v6973 = vunpack.c.l.b16 %v6940
        %v6974 = vunpack.c.l.b16 %v6941
        %v6975 = vunpack.c.l.b16 %v6942
        %v6976 = vpack.c.b16 %v6961, %v6960
        %v6977 = vpack.c.b16 %v6963, %v6962
        %v6978 = vpack.c.b16 %v6965, %v6964
        %v6979 = vpack.c.b16 %v6967, %v6966
        %v6980 = vpack.c.b16 %v6969, %v6968
        %v6981 = vpack.c.b16 %v6971, %v6970
        %v6982 = vpack.c.b16 %v6973, %v6972
        %v6983 = vpack.c.b16 %v6975, %v6974
        %6992 = vmatprep.subr.bf16.mxu0 0
        %6993 = vmatpush1.bf16.msra.mxu0 %v6976
        %6994 = vmatprep.subr.bf16.mxu0 0
        %6995 = vmatpush1.bf16.msra.mxu0 %v6977
        %6996 = vmatprep.subr.bf16.mxu0 0
        %6997 = vmatpush1.bf16.msra.mxu0 %v6978
        %6998 = vmatprep.subr.bf16.mxu0 0
        %6999 = vmatpush1.bf16.msra.mxu0 %v6979
        %7000 = vmatprep.subr.bf16.mxu0 0
        %7001 = vmatpush1.bf16.msra.mxu0 %v6980
        %7002 = vmatprep.subr.bf16.mxu0 0
        %7003 = vmatpush1.bf16.msra.mxu0 %v6981
        %7004 = vmatprep.subr.bf16.mxu0 0
        %7005 = vmatpush1.bf16.msra.mxu0 %v6982
        %7006 = vmatprep.subr.bf16.mxu0 0
        %7007 = vmatpush1.bf16.msra.mxu0 %v6983
        %7008 = vmatprep.subr.bf16.mxu0 0
        %7009 = vmatpush1.bf16.msra.mxu0 0
        %7010 = vmatprep.subr.bf16.mxu0 0
        %7011 = vmatpush1.bf16.msra.mxu0 0
        %7012 = vmatprep.subr.bf16.mxu0 0
        %7013 = vmatpush1.bf16.msra.mxu0 0
        %7014 = vmatprep.subr.bf16.mxu0 0
        %7015 = vmatpush1.bf16.msra.mxu0 0
        %7016 = vmatprep.subr.bf16.mxu0 0
        %7017 = vmatpush1.bf16.msra.mxu0 0
        %7018 = vmatprep.subr.bf16.mxu0 0
        %7019 = vmatpush1.bf16.msra.mxu0 0
        %7020 = vmatprep.subr.bf16.mxu0 0
        %7021 = vmatpush1.bf16.msra.mxu0 0
        %7022 = vmatprep.subr.bf16.mxu0 0
        %7023 = vmatpush1.bf16.msra.mxu0 0
        %7024 = vmatprep.mubr.f32.mxu0 0.0
        %7025 = vmatmul.mubr.f32.gmra.mrb[0].mxu0 %v6926
        %v7026 = vpop.f32.mrb[0].mxu0
        %v7027 = vadd.f32 %v6943, %v7026
        %v7028 = vpop.f32.mrb[0].mxu0
        %7029 = vdwg.mxu0
        %v7030 = vmax.f32 %v7027, 0.0
        %v7031 = vld [vmem:[%s13] sm:$0xf]
        %v7032 = vld [vmem:[%s13 + $0x4] sm:$0xf]
        %v7033 = vld [vmem:[%s13 + $0x8] sm:$0xf]
        %v7034 = vld [vmem:[%s13 + $0xc] sm:$0xf]
        %v7035 = vld [vmem:[%s13 + $0x10] sm:$0xf]
        %v7036 = vld [vmem:[%s13 + $0x14] sm:$0xf]
        %v7037 = vld [vmem:[%s13 + $0x18] sm:$0xf]
        %v7038 = vld [vmem:[%s13 + $0x1c] sm:$0xf]
        %v7039 = vld [vmem:[%s13 + $0x20] sm:$0xf]
        %v7040 = vld [vmem:[%s13 + $0x24] sm:$0xf]
        %v7041 = vld [vmem:[%s13 + $0x28] sm:$0xf]
        %v7042 = vld [vmem:[%s13 + $0x2c] sm:$0xf]
        %v7043 = vld [vmem:[%s13 + $0x30] sm:$0xf]
        %v7044 = vld [vmem:[%s13 + $0x34] sm:$0xf]
        %v7045 = vld [vmem:[%s13 + $0x38] sm:$0xf]
        %v7046 = vld [vmem:[%s13 + $0x3c] sm:$0xf]
        %v7047 = vld [vmem:[%s14] sm:$0x1]
        %v7064 = vunpack.c.l.b16 %v7031
        %v7065 = vunpack.c.l.b16 %v7032
        %v7066 = vunpack.c.l.b16 %v7033
        %v7067 = vunpack.c.l.b16 %v7034
        %v7068 = vunpack.c.l.b16 %v7035
        %v7069 = vunpack.c.l.b16 %v7036
        %v7070 = vunpack.c.l.b16 %v7037
        %v7071 = vunpack.c.l.b16 %v7038
        %v7072 = vunpack.c.l.b16 %v7039
        %v7073 = vunpack.c.l.b16 %v7040
        %v7074 = vunpack.c.l.b16 %v7041
        %v7075 = vunpack.c.l.b16 %v7042
        %v7076 = vunpack.c.l.b16 %v7043
        %v7077 = vunpack.c.l.b16 %v7044
        %v7078 = vunpack.c.l.b16 %v7045
        %v7079 = vunpack.c.l.b16 %v7046
        %v7080 = vpack.c.b16 %v7065, %v7064
        %v7081 = vpack.c.b16 %v7067, %v7066
        %v7082 = vpack.c.b16 %v7069, %v7068
        %v7083 = vpack.c.b16 %v7071, %v7070
        %v7084 = vpack.c.b16 %v7073, %v7072
        %v7085 = vpack.c.b16 %v7075, %v7074
        %v7086 = vpack.c.b16 %v7077, %v7076
        %v7087 = vpack.c.b16 %v7079, %v7078
        %7096 = vmatprep.subr.bf16.mxu0 0
        %7097 = vmatpush1.bf16.msra.mxu0 %v7080
        %7098 = vmatprep.subr.bf16.mxu0 0
        %7099 = vmatpush1.bf16.msra.mxu0 %v7081
        %7100 = vmatprep.subr.bf16.mxu0 0
        %7101 = vmatpush1.bf16.msra.mxu0 %v7082
        %7102 = vmatprep.subr.bf16.mxu0 0
        %7103 = vmatpush1.bf16.msra.mxu0 %v7083
        %7104 = vmatprep.subr.bf16.mxu0 0
        %7105 = vmatpush1.bf16.msra.mxu0 %v7084
        %7106 = vmatprep.subr.bf16.mxu0 0
        %7107 = vmatpush1.bf16.msra.mxu0 %v7085
        %7108 = vmatprep.subr.bf16.mxu0 0
        %7109 = vmatpush1.bf16.msra.mxu0 %v7086
        %7110 = vmatprep.subr.bf16.mxu0 0
        %7111 = vmatpush1.bf16.msra.mxu0 %v7087
        %7112 = vmatprep.subr.bf16.mxu0 0
        %7113 = vmatpush1.bf16.msra.mxu0 0
        %7114 = vmatprep.subr.bf16.mxu0 0
        %7115 = vmatpush1.bf16.msra.mxu0 0
        %7116 = vmatprep.subr.bf16.mxu0 0
        %7117 = vmatpush1.bf16.msra.mxu0 0
        %7118 = vmatprep.subr.bf16.mxu0 0
        %7119 = vmatpush1.bf16.msra.mxu0 0
        %7120 = vmatprep.subr.bf16.mxu0 0
        %7121 = vmatpush1.bf16.msra.mxu0 0
        %7122 = vmatprep.subr.bf16.mxu0 0
        %7123 = vmatpush1.bf16.msra.mxu0 0
        %7124 = vmatprep.subr.bf16.mxu0 0
        %7125 = vmatpush1.bf16.msra.mxu0 0
        %7126 = vmatprep.subr.bf16.mxu0 0
        %7127 = vmatpush1.bf16.msra.mxu0 0
        %7128 = vmatprep.mubr.f32.mxu0 0.0
        %7129 = vmatmul.mubr.f32.gmra.mrb[0].mxu0 %v7030
        %v7130 = vpop.f32.mrb[0].mxu0
        %v7131 = vadd.f32 %v7047, %v7130
        %v7132 = vpop.f32.mrb[0].mxu0
        %7133 = vdwg.mxu0
        %7134 = vst [vmem:[%s486] sm:$0x1] %v7131
        %s7135 = sand.u32 %s357, 1
        %s7136 = scalar_lea.sflag [#allocation3], %s7135
        %s7137 = sand.u32 %s357, 1
        %s7138 = scalar_lea.vmem [#allocation2], %s7137
        // Predicated region
        $region81: #{cnn_forward.1} parent=79 // pred_check
          %p7139 = pneg %p367
        $region82: #{cnn_forward.1} parent=79 // pred_check_branch
          %7141 = sbr.rel (%p7139) target = $region84
        $region83: #{cnn_forward.1} parent=79 // pred_region
          %s7143 = ssub.s32 16, 16
          %7144 = vsyncadd %s7136, %s7143
          %s7145 = smul.addr %s29, 16
          %s7146 = scalar_lea.hbm %s15, %s7145
          %s7148 = sshll.u32 %s7138, 4
          %s7149 = int_to_ptr.vmem [resolvable:$true] %s7148
          %7151 = dma.vmem_to_hbm [thread:$0]  %s7149, 16, %s7146, %s7136
        $region84: #{cnn_forward.1} parent=79 // pred_fallthru
          _
      $region80: #{cnn_forward.1} parent=5 // pred_fallthru
        _
      %p7152 = scmp.le.s32.totalorder 2, %s24
      // Predicated region
      $region85: #{cnn_forward.1} parent=5 // pred_check
        %p7153 = pneg %p7152
      $region86: #{cnn_forward.1} parent=5 // pred_check_branch
        %7155 = sbr.rel (%p7153) target = $region88
      $region87: #{cnn_forward.1} parent=5 // pred_region
        %s7156 = ssub.s32 %s24, 2
        // Predicated region
        $region89: #{cnn_forward.1} parent=87 // pred_check
          %p7157 = pneg %p373
        $region90: #{cnn_forward.1} parent=87 // pred_check_branch
          %7159 = sbr.rel (%p7157) target = $region92
        $region91: #{cnn_forward.1} parent=87 // pred_region
          %s7160 = sand.u32 %s358, 1
          %s7161 = scalar_lea.sflag [#allocation3], %s7160
          %s7162 = sand.u32 %s358, 1
          %s7163 = scalar_lea.vmem [#allocation2], %s7162
          %7164 = dma.done %s7161, 16
        $region92: #{cnn_forward.1} parent=87 // pred_fallthru
          _
      $region88: #{cnn_forward.1} parent=5 // pred_fallthru
        _
    $region6: #{cnn_forward.1} parent=1 // loop_footer
      %s28 = sadd.s32 1, %s24
    $region7: #{cnn_forward.1} parent=1 // loop_footer_branch
      %23 = sbr.rel target = $region3
    $region8: #{cnn_forward.1} parent=1 // loop_exit
      _
    %7165 = vsyncpa [#allocation3], 1
    %s7166 = scalar_lea.sflag [#allocation3], 1
    %7167 = vsyncpa %s7166, 1

</llo_original>
